<compile_context>
chip_gen: v7x
topology: tpu7x:2x2x1
jax: 0.10.0
libtpu: 0.0.40
codegen_flags: <defaults>
</compile_context>

<pallas_src>
import functools

import jax
import jax.numpy as jnp
from jax.experimental import pallas as pl
from jax.experimental.pallas import tpu as pltpu


def _fused_conv3x3x2_relu_kernel(p1_ref, w1_ref, w2_ref, o_ref, h1_ref,
                                 *, bb, H, W, Cmid):
    """conv1 (single im2col matmul) + ReLU -> conv2 (9 accumulating tap matmuls) + ReLU.

    p1_ref: (bb*H*W, 9*Cin)      bf16 layer-1 im2col patches (batch folded into rows)
    w1_ref: (9*Cin, Cmid)        bf16 layer-1 weights, rows ordered (ky, kx, cin)
    w2_ref: (9*Cmid, Cout)       bf16 layer-2 weights, rows ordered (ky, kx, cmid)
    o_ref : (bb*H*W, Cout)       f32 output block
    h1_ref: (bb, H+2, W+2, Cmid) bf16 VMEM scratch: ReLU(conv1) with a zero halo
                                 (per-image halo => batch folding can't bleed
                                  across images)
    """
    M = bb * H * W
    bf16 = jnp.bfloat16

    # ---- layer 1: one (M, 9Cin) x (9Cin, Cmid) MXU matmul + ReLU ------------
    h1 = jnp.dot(p1_ref[...], w1_ref[...], preferred_element_type=jnp.float32)
    h1 = jnp.maximum(h1, 0.0).astype(bf16)

    # ---- zero ONLY the 4 halo border strips (interior is overwritten) -------
    # (done every step; never under pl.when -> safe with a "parallel" batch split)
    h1_ref[:, 0:1, :, :] = jnp.zeros((bb, 1, W + 2, Cmid), bf16)
    h1_ref[:, H + 1:H + 2, :, :] = jnp.zeros((bb, 1, W + 2, Cmid), bf16)
    h1_ref[:, :, 0:1, :] = jnp.zeros((bb, H + 2, 1, Cmid), bf16)
    h1_ref[:, :, W + 1:W + 2, :] = jnp.zeros((bb, H + 2, 1, Cmid), bf16)

    # ---- stash h1 interior (in-kernel padding=1, no HBM roundtrip) ----------
    h1_ref[:, 1:H + 1, 1:W + 1, :] = h1.reshape(bb, H, W, Cmid)

    # ---- layer 2: 9 taps straight into an accumulating f32 matmul -----------
    # (no p2 patch scratch -> no 288 KB VMEM store+reload round trip)
    acc = None
    for idx in range(9):                       # static tap loop (unrolled)
        ky, kx = idx // 3, idx % 3
        tap = h1_ref[:, ky:ky + H, kx:kx + W, :].reshape(M, Cmid)
        part = jnp.dot(tap, w2_ref[idx * Cmid:(idx + 1) * Cmid, :],
                       preferred_element_type=jnp.float32)
        acc = part if acc is None else acc + part

    o_ref[...] = jnp.maximum(acc, 0.0).astype(o_ref.dtype)


def _im2col_3x3(x_nhwc):
    """(B, H, W, C) -> (B, H*W, 9*C) patches with padding=1, tap order (ky, kx, c)."""
    B, H, W, C = x_nhwc.shape
    xp = jnp.pad(x_nhwc, ((0, 0), (1, 1), (1, 1), (0, 0)))
    cols = [xp[:, ky:ky + H, kx:kx + W, :]
            for ky in range(3) for kx in range(3)]
    return jnp.concatenate(cols, axis=-1).reshape(B, H * W, 9 * C)


def prepare_weights(w1, w2):
    """Hoisted out of the forward path: OIHW -> (ky,kx,i)-rows x o-cols, bf16."""
    Cmid, Cin = w1.shape[0], w1.shape[1]
    Cout = w2.shape[0]
    w1_mat = jnp.transpose(w1, (2, 3, 1, 0)).reshape(9 * Cin, Cmid).astype(jnp.bfloat16)
    w2_mat = jnp.transpose(w2, (2, 3, 1, 0)).reshape(9 * Cmid, Cout).astype(jnp.bfloat16)
    return w1_mat, w2_mat


def conv_module_forward(x_nchw, w1_mat, w2_mat, *, batch_block=None):
    """Pallas equivalent of the PyTorch `conv` module forward.

    x_nchw: (B, Cin, H, W) f32
    w1_mat: (9*Cin, embed)  bf16, w2_mat: (9*embed, embed) bf16  (from prepare_weights)
    returns (B, H*W, embed) f32  ==  proj(x).flatten(2).transpose(1, 2)

    batch_block: images per grid step.  Default = B (whole batch folded into a
    single M = B*H*W matmul -> best on single-TC v5e/v6e).  On v7x pass
    batch_block = B // 2 so the "parallel" grid axis feeds both TensorCores.
    """
    B, Cin, H, W = x_nchw.shape
    Cmid = w1_mat.shape[1]
    Cout = w2_mat.shape[1]
    assert w1_mat.shape[0] == 9 * Cin
    assert w2_mat.shape[0] == 9 * Cmid

    bb = B if batch_block is None else batch_block
    assert B % bb == 0
    nb = B // bb

    # NCHW -> NHWC (channels on the lane dim), bf16 MXU operands, layer-1 im2col.
    # TODO(synk): long-term, build the layer-1 patches in-kernel from a haloed
    # NHWC block to drop the 9x-blown-up p1 HBM round trip.
    x_nhwc = jnp.transpose(x_nchw, (0, 2, 3, 1)).astype(jnp.bfloat16)
    p1 = _im2col_3x3(x_nhwc).reshape(B * H * W, 9 * Cin)

    kernel = functools.partial(
        _fused_conv3x3x2_relu_kernel, bb=bb, H=H, W=W, Cmid=Cmid)

    out = pl.pallas_call(
        kernel,
        out_shape=jax.ShapeDtypeStruct((B * H * W, Cout), jnp.float32),
        grid=(nb,),
        in_specs=[
            # One batch-block's layer-1 patches per grid step.
            pl.BlockSpec((bb * H * W, 9 * Cin), lambda b: (b, 0)),
            # Weights resident in VMEM across the whole grid.
            pl.BlockSpec((9 * Cin, Cmid), lambda b: (0, 0)),
            pl.BlockSpec((9 * Cmid, Cout), lambda b: (0, 0)),
        ],
        out_specs=pl.BlockSpec((bb * H * W, Cout), lambda b: (b, 0)),
        scratch_shapes=[
            pltpu.VMEM((bb, H + 2, W + 2, Cmid), jnp.bfloat16),   # haloed h1
        ],
        compiler_params=pltpu.CompilerParams(
            dimension_semantics=("parallel",)),   # batch blocks are independent
    )(p1, w1_mat, w2_mat)

    # (B*H*W, Cout) row-major == (B, H*W, Cout) row-major: free reshape.
    return out.reshape(B, H * W, Cout)


def _reference(x_nchw, w1, w2):
    """Pure-JAX reference with the SAME bf16-operand / f32-accumulate numerics
    as the kernel (operands rounded to bf16, accumulation in full f32)."""
    f32, bf16 = jnp.float32, jnp.bfloat16
    xb = x_nchw.astype(bf16).astype(f32)
    w1b = w1.astype(bf16).astype(f32)
    w2b = w2.astype(bf16).astype(f32)
    dn = jax.lax.conv_dimension_numbers(
        xb.shape, w1b.shape, ("NCHW", "OIHW", "NCHW"))
    h = jax.lax.conv_general_dilated(
        xb, w1b, (1, 1), ((1, 1), (1, 1)), dimension_numbers=dn,
        precision=jax.lax.Precision.HIGHEST)
    h = jnp.maximum(h, 0.0)
    h = h.astype(bf16).astype(f32)          # kernel stashes h1 in bf16
    y = jax.lax.conv_general_dilated(
        h, w2b, (1, 1), ((1, 1), (1, 1)), dimension_numbers=dn,
        precision=jax.lax.Precision.HIGHEST)
    y = jnp.maximum(y, 0.0)
    B, C, Hh, Ww = y.shape
    return jnp.transpose(y.reshape(B, C, Hh * Ww), (0, 2, 1))


if __name__ == "__main__":
    # Small shapes consistent with the module: input_dim=4, embed_dim=32.
    B, Cin, H, W = 2, 4, 16, 16
    embed = 32

    key = jax.random.PRNGKey(0)
    k_x, k_w1, k_w2 = jax.random.split(key, 3)

    x = jax.random.normal(k_x, (B, Cin, H, W), dtype=jnp.float32)
    # Deterministic synthetic weights (PyTorch Conv2d OIHW layout, no bias).
    w1 = jax.random.normal(k_w1, (embed, Cin, 3, 3), dtype=jnp.float32) * 0.1
    w2 = jax.random.normal(k_w2, (embed, embed, 3, 3), dtype=jnp.float32) * 0.1

    # Weight repack/cast hoisted out of the per-call forward path.
    w1_mat, w2_mat = prepare_weights(w1, w2)

    fwd = jax.jit(conv_module_forward)
    out = fwd(x, w1_mat, w2_mat)
    out = jax.block_until_ready(out)

    ref = _reference(x, w1, w2)
    assert out.shape == (B, H * W, embed), out.shape
    # Kernel and reference use identical bf16 operands + f32 accumulation, so
    # only summation-order / bf16-rounding-boundary differences remain.
    assert jnp.allclose(out, ref, atol=1e-2, rtol=1e-2), (
        float(jnp.max(jnp.abs(out - ref))))

    print("KERNEL_OK")
</pallas_src>

<mosaic_0001>
module attributes {stable_mosaic.version = 11 : i64} {
  func.func @_fused_conv3x3x2_relu_kernel(%arg0: i32, %arg1: memref<512x36xbf16, #tpu.memory_space<vmem>>, %arg2: memref<36x32xbf16, #tpu.memory_space<vmem>>, %arg3: memref<288x32xbf16, #tpu.memory_space<vmem>>, %arg4: memref<512x32xf32, #tpu.memory_space<vmem>>, %arg5: memref<2x18x18x32xbf16, #tpu.memory_space<vmem>>) attributes {dimension_semantics = [#tpu.dimension_semantics<parallel>], iteration_bounds = array<i64: 1>, scalar_prefetch = 0 : i64, scratch_operands = 1 : i64, tpu.core_type = #tpu.core_type<tc>, window_params = [{transform_indices = @transform_0, window_bounds = array<i64: 512, 36>}, {pipeline_mode = #tpu.pipeline_mode<synchronous>, transform_indices = @transform_1, window_bounds = array<i64: 36, 32>}, {pipeline_mode = #tpu.pipeline_mode<synchronous>, transform_indices = @transform_2, window_bounds = array<i64: 288, 32>}, {transform_indices = @transform_3, window_bounds = array<i64: 512, 32>}]} {
    %c0 = arith.constant 0 : index
    %c0_0 = arith.constant 0 : index
    %0 = vector.load %arg1[%c0, %c0_0] : memref<512x36xbf16, #tpu.memory_space<vmem>>, vector<512x36xbf16>
    %c0_1 = arith.constant 0 : index
    %c0_2 = arith.constant 0 : index
    %1 = vector.load %arg2[%c0_1, %c0_2] : memref<36x32xbf16, #tpu.memory_space<vmem>>, vector<36x32xbf16>
    %cst = arith.constant dense<0.000000e+00> : vector<512x32xf32>
    %2 = tpu.matmul %0, %1, %cst {dimension_numbers = #tpu.dot_dimension_numbers<[1], [0], [0], [1], [0, 0, 1, 1], [], []>} : vector<512x36xbf16>, vector<36x32xbf16>, vector<512x32xf32> -> vector<512x32xf32>
    %cst_3 = arith.constant 0.000000e+00 : f32
    %3 = vector.broadcast %cst_3 : f32 to vector<512x32xf32>
    %4 = arith.maximumf %2, %3 : vector<512x32xf32>
    %5 = arith.truncf %4 : vector<512x32xf32> to vector<512x32xbf16>
    %cst_4 = arith.constant 0.000000e+00 : bf16
    %6 = vector.broadcast %cst_4 : bf16 to vector<2x1x18x32xbf16>
    %c0_5 = arith.constant 0 : index
    %c0_6 = arith.constant 0 : index
    %c0_7 = arith.constant 0 : index
    %c0_8 = arith.constant 0 : index
    %7 = vector.load %arg5[%c0_5, %c0_6, %c0_7, %c0_8] : memref<2x18x18x32xbf16, #tpu.memory_space<vmem>>, vector<2x1x18x32xbf16>
    tpu.vector_store %arg5[%c0_5, %c0_6, %c0_7, %c0_8], %6 {strides = array<i32>} : memref<2x18x18x32xbf16, #tpu.memory_space<vmem>>, vector<2x1x18x32xbf16>,
    %cst_9 = arith.constant 0.000000e+00 : bf16
    %8 = vector.broadcast %cst_9 : bf16 to vector<2x1x18x32xbf16>
    %c0_10 = arith.constant 0 : index
    %c17 = arith.constant 17 : index
    %c0_11 = arith.constant 0 : index
    %c0_12 = arith.constant 0 : index
    %9 = vector.load %arg5[%c0_10, %c17, %c0_11, %c0_12] : memref<2x18x18x32xbf16, #tpu.memory_space<vmem>>, vector<2x1x18x32xbf16>
    tpu.vector_store %arg5[%c0_10, %c17, %c0_11, %c0_12], %8 {strides = array<i32>} : memref<2x18x18x32xbf16, #tpu.memory_space<vmem>>, vector<2x1x18x32xbf16>,
    %cst_13 = arith.constant 0.000000e+00 : bf16
    %10 = vector.broadcast %cst_13 : bf16 to vector<2x18x1x32xbf16>
    %c0_14 = arith.constant 0 : index
    %c0_15 = arith.constant 0 : index
    %c0_16 = arith.constant 0 : index
    %c0_17 = arith.constant 0 : index
    %11 = vector.load %arg5[%c0_14, %c0_15, %c0_16, %c0_17] : memref<2x18x18x32xbf16, #tpu.memory_space<vmem>>, vector<2x18x1x32xbf16>
    tpu.vector_store %arg5[%c0_14, %c0_15, %c0_16, %c0_17], %10 {strides = array<i32>} : memref<2x18x18x32xbf16, #tpu.memory_space<vmem>>, vector<2x18x1x32xbf16>,
    %cst_18 = arith.constant 0.000000e+00 : bf16
    %12 = vector.broadcast %cst_18 : bf16 to vector<2x18x1x32xbf16>
    %c0_19 = arith.constant 0 : index
    %c0_20 = arith.constant 0 : index
    %c17_21 = arith.constant 17 : index
    %c0_22 = arith.constant 0 : index
    %13 = vector.load %arg5[%c0_19, %c0_20, %c17_21, %c0_22] : memref<2x18x18x32xbf16, #tpu.memory_space<vmem>>, vector<2x18x1x32xbf16>
    tpu.vector_store %arg5[%c0_19, %c0_20, %c17_21, %c0_22], %12 {strides = array<i32>} : memref<2x18x18x32xbf16, #tpu.memory_space<vmem>>, vector<2x18x1x32xbf16>,
    %14 = vector.shape_cast %5 : vector<512x32xbf16> to vector<2x16x16x32xbf16>
    %c0_23 = arith.constant 0 : index
    %c1 = arith.constant 1 : index
    %c1_24 = arith.constant 1 : index
    %c0_25 = arith.constant 0 : index
    %15 = vector.load %arg5[%c0_23, %c1, %c1_24, %c0_25] : memref<2x18x18x32xbf16, #tpu.memory_space<vmem>>, vector<2x16x16x32xbf16>
    tpu.vector_store %arg5[%c0_23, %c1, %c1_24, %c0_25], %14 {strides = array<i32>} : memref<2x18x18x32xbf16, #tpu.memory_space<vmem>>, vector<2x16x16x32xbf16>,
    %c0_26 = arith.constant 0 : index
    %c0_27 = arith.constant 0 : index
    %c0_28 = arith.constant 0 : index
    %c0_29 = arith.constant 0 : index
    %16 = vector.load %arg5[%c0_26, %c0_27, %c0_28, %c0_29] : memref<2x18x18x32xbf16, #tpu.memory_space<vmem>>, vector<2x16x16x32xbf16>
    %17 = vector.shape_cast %16 : vector<2x16x16x32xbf16> to vector<512x32xbf16>
    %c0_30 = arith.constant 0 : index
    %c0_31 = arith.constant 0 : index
    %18 = vector.load %arg3[%c0_30, %c0_31] : memref<288x32xbf16, #tpu.memory_space<vmem>>, vector<32x32xbf16>
    %cst_32 = arith.constant dense<0.000000e+00> : vector<512x32xf32>
    %19 = tpu.matmul %17, %18, %cst_32 {dimension_numbers = #tpu.dot_dimension_numbers<[1], [0], [0], [1], [0, 0, 1, 1], [], []>} : vector<512x32xbf16>, vector<32x32xbf16>, vector<512x32xf32> -> vector<512x32xf32>
    %c0_33 = arith.constant 0 : index
    %c0_34 = arith.constant 0 : index
    %c1_35 = arith.constant 1 : index
    %c0_36 = arith.constant 0 : index
    %20 = vector.load %arg5[%c0_33, %c0_34, %c1_35, %c0_36] : memref<2x18x18x32xbf16, #tpu.memory_space<vmem>>, vector<2x16x16x32xbf16>
    %21 = vector.shape_cast %20 : vector<2x16x16x32xbf16> to vector<512x32xbf16>
    %c32 = arith.constant 32 : index
    %c0_37 = arith.constant 0 : index
    %22 = vector.load %arg3[%c32, %c0_37] : memref<288x32xbf16, #tpu.memory_space<vmem>>, vector<32x32xbf16>
    %cst_38 = arith.constant dense<0.000000e+00> : vector<512x32xf32>
    %23 = tpu.matmul %21, %22, %cst_38 {dimension_numbers = #tpu.dot_dimension_numbers<[1], [0], [0], [1], [0, 0, 1, 1], [], []>} : vector<512x32xbf16>, vector<32x32xbf16>, vector<512x32xf32> -> vector<512x32xf32>
    %24 = arith.addf %19, %23 : vector<512x32xf32>
    %c0_39 = arith.constant 0 : index
    %c0_40 = arith.constant 0 : index
    %c2 = arith.constant 2 : index
    %c0_41 = arith.constant 0 : index
    %25 = vector.load %arg5[%c0_39, %c0_40, %c2, %c0_41] : memref<2x18x18x32xbf16, #tpu.memory_space<vmem>>, vector<2x16x16x32xbf16>
    %26 = vector.shape_cast %25 : vector<2x16x16x32xbf16> to vector<512x32xbf16>
    %c64 = arith.constant 64 : index
    %c0_42 = arith.constant 0 : index
    %27 = vector.load %arg3[%c64, %c0_42] : memref<288x32xbf16, #tpu.memory_space<vmem>>, vector<32x32xbf16>
    %cst_43 = arith.constant dense<0.000000e+00> : vector<512x32xf32>
    %28 = tpu.matmul %26, %27, %cst_43 {dimension_numbers = #tpu.dot_dimension_numbers<[1], [0], [0], [1], [0, 0, 1, 1], [], []>} : vector<512x32xbf16>, vector<32x32xbf16>, vector<512x32xf32> -> vector<512x32xf32>
    %29 = arith.addf %24, %28 : vector<512x32xf32>
    %c0_44 = arith.constant 0 : index
    %c1_45 = arith.constant 1 : index
    %c0_46 = arith.constant 0 : index
    %c0_47 = arith.constant 0 : index
    %30 = vector.load %arg5[%c0_44, %c1_45, %c0_46, %c0_47] : memref<2x18x18x32xbf16, #tpu.memory_space<vmem>>, vector<2x16x16x32xbf16>
    %31 = vector.shape_cast %30 : vector<2x16x16x32xbf16> to vector<512x32xbf16>
    %c96 = arith.constant 96 : index
    %c0_48 = arith.constant 0 : index
    %32 = vector.load %arg3[%c96, %c0_48] : memref<288x32xbf16, #tpu.memory_space<vmem>>, vector<32x32xbf16>
    %cst_49 = arith.constant dense<0.000000e+00> : vector<512x32xf32>
    %33 = tpu.matmul %31, %32, %cst_49 {dimension_numbers = #tpu.dot_dimension_numbers<[1], [0], [0], [1], [0, 0, 1, 1], [], []>} : vector<512x32xbf16>, vector<32x32xbf16>, vector<512x32xf32> -> vector<512x32xf32>
    %34 = arith.addf %29, %33 : vector<512x32xf32>
    %c0_50 = arith.constant 0 : index
    %c1_51 = arith.constant 1 : index
    %c1_52 = arith.constant 1 : index
    %c0_53 = arith.constant 0 : index
    %35 = vector.load %arg5[%c0_50, %c1_51, %c1_52, %c0_53] : memref<2x18x18x32xbf16, #tpu.memory_space<vmem>>, vector<2x16x16x32xbf16>
    %36 = vector.shape_cast %35 : vector<2x16x16x32xbf16> to vector<512x32xbf16>
    %c128 = arith.constant 128 : index
    %c0_54 = arith.constant 0 : index
    %37 = vector.load %arg3[%c128, %c0_54] : memref<288x32xbf16, #tpu.memory_space<vmem>>, vector<32x32xbf16>
    %cst_55 = arith.constant dense<0.000000e+00> : vector<512x32xf32>
    %38 = tpu.matmul %36, %37, %cst_55 {dimension_numbers = #tpu.dot_dimension_numbers<[1], [0], [0], [1], [0, 0, 1, 1], [], []>} : vector<512x32xbf16>, vector<32x32xbf16>, vector<512x32xf32> -> vector<512x32xf32>
    %39 = arith.addf %34, %38 : vector<512x32xf32>
    %c0_56 = arith.constant 0 : index
    %c1_57 = arith.constant 1 : index
    %c2_58 = arith.constant 2 : index
    %c0_59 = arith.constant 0 : index
    %40 = vector.load %arg5[%c0_56, %c1_57, %c2_58, %c0_59] : memref<2x18x18x32xbf16, #tpu.memory_space<vmem>>, vector<2x16x16x32xbf16>
    %41 = vector.shape_cast %40 : vector<2x16x16x32xbf16> to vector<512x32xbf16>
    %c160 = arith.constant 160 : index
    %c0_60 = arith.constant 0 : index
    %42 = vector.load %arg3[%c160, %c0_60] : memref<288x32xbf16, #tpu.memory_space<vmem>>, vector<32x32xbf16>
    %cst_61 = arith.constant dense<0.000000e+00> : vector<512x32xf32>
    %43 = tpu.matmul %41, %42, %cst_61 {dimension_numbers = #tpu.dot_dimension_numbers<[1], [0], [0], [1], [0, 0, 1, 1], [], []>} : vector<512x32xbf16>, vector<32x32xbf16>, vector<512x32xf32> -> vector<512x32xf32>
    %44 = arith.addf %39, %43 : vector<512x32xf32>
    %c0_62 = arith.constant 0 : index
    %c2_63 = arith.constant 2 : index
    %c0_64 = arith.constant 0 : index
    %c0_65 = arith.constant 0 : index
    %45 = vector.load %arg5[%c0_62, %c2_63, %c0_64, %c0_65] : memref<2x18x18x32xbf16, #tpu.memory_space<vmem>>, vector<2x16x16x32xbf16>
    %46 = vector.shape_cast %45 : vector<2x16x16x32xbf16> to vector<512x32xbf16>
    %c192 = arith.constant 192 : index
    %c0_66 = arith.constant 0 : index
    %47 = vector.load %arg3[%c192, %c0_66] : memref<288x32xbf16, #tpu.memory_space<vmem>>, vector<32x32xbf16>
    %cst_67 = arith.constant dense<0.000000e+00> : vector<512x32xf32>
    %48 = tpu.matmul %46, %47, %cst_67 {dimension_numbers = #tpu.dot_dimension_numbers<[1], [0], [0], [1], [0, 0, 1, 1], [], []>} : vector<512x32xbf16>, vector<32x32xbf16>, vector<512x32xf32> -> vector<512x32xf32>
    %49 = arith.addf %44, %48 : vector<512x32xf32>
    %c0_68 = arith.constant 0 : index
    %c2_69 = arith.constant 2 : index
    %c1_70 = arith.constant 1 : index
    %c0_71 = arith.constant 0 : index
    %50 = vector.load %arg5[%c0_68, %c2_69, %c1_70, %c0_71] : memref<2x18x18x32xbf16, #tpu.memory_space<vmem>>, vector<2x16x16x32xbf16>
    %51 = vector.shape_cast %50 : vector<2x16x16x32xbf16> to vector<512x32xbf16>
    %c224 = arith.constant 224 : index
    %c0_72 = arith.constant 0 : index
    %52 = vector.load %arg3[%c224, %c0_72] : memref<288x32xbf16, #tpu.memory_space<vmem>>, vector<32x32xbf16>
    %cst_73 = arith.constant dense<0.000000e+00> : vector<512x32xf32>
    %53 = tpu.matmul %51, %52, %cst_73 {dimension_numbers = #tpu.dot_dimension_numbers<[1], [0], [0], [1], [0, 0, 1, 1], [], []>} : vector<512x32xbf16>, vector<32x32xbf16>, vector<512x32xf32> -> vector<512x32xf32>
    %54 = arith.addf %49, %53 : vector<512x32xf32>
    %c0_74 = arith.constant 0 : index
    %c2_75 = arith.constant 2 : index
    %c2_76 = arith.constant 2 : index
    %c0_77 = arith.constant 0 : index
    %55 = vector.load %arg5[%c0_74, %c2_75, %c2_76, %c0_77] : memref<2x18x18x32xbf16, #tpu.memory_space<vmem>>, vector<2x16x16x32xbf16>
    %56 = vector.shape_cast %55 : vector<2x16x16x32xbf16> to vector<512x32xbf16>
    %c256 = arith.constant 256 : index
    %c0_78 = arith.constant 0 : index
    %57 = vector.load %arg3[%c256, %c0_78] : memref<288x32xbf16, #tpu.memory_space<vmem>>, vector<32x32xbf16>
    %cst_79 = arith.constant dense<0.000000e+00> : vector<512x32xf32>
    %58 = tpu.matmul %56, %57, %cst_79 {dimension_numbers = #tpu.dot_dimension_numbers<[1], [0], [0], [1], [0, 0, 1, 1], [], []>} : vector<512x32xbf16>, vector<32x32xbf16>, vector<512x32xf32> -> vector<512x32xf32>
    %59 = arith.addf %54, %58 : vector<512x32xf32>
    %cst_80 = arith.constant 0.000000e+00 : f32
    %60 = vector.broadcast %cst_80 : f32 to vector<512x32xf32>
    %61 = arith.maximumf %59, %60 : vector<512x32xf32>
    %c0_81 = arith.constant 0 : index
    %c0_82 = arith.constant 0 : index
    %62 = vector.load %arg4[%c0_81, %c0_82] : memref<512x32xf32, #tpu.memory_space<vmem>>, vector<512x32xf32>
    tpu.vector_store %arg4[%c0_81, %c0_82], %61 {strides = array<i32>} : memref<512x32xf32, #tpu.memory_space<vmem>>, vector<512x32xf32>,
    return
  }
  func.func @transform_0(%arg0: i32) -> (i32, i32) {
    %c0_i32 = arith.constant 0 : i32
    %c0_i32_0 = arith.constant 0 : i32
    return %arg0, %c0_i32 : i32, i32
  }
  func.func @transform_1(%arg0: i32) -> (i32, i32) {
    %c0_i32 = arith.constant 0 : i32
    %c0_i32_0 = arith.constant 0 : i32
    %c0_i32_1 = arith.constant 0 : i32
    return %c0_i32, %c0_i32_0 : i32, i32
  }
  func.func @transform_2(%arg0: i32) -> (i32, i32) {
    %c0_i32 = arith.constant 0 : i32
    %c0_i32_0 = arith.constant 0 : i32
    %c0_i32_1 = arith.constant 0 : i32
    return %c0_i32, %c0_i32_0 : i32, i32
  }
  func.func @transform_3(%arg0: i32) -> (i32, i32) {
    %c0_i32 = arith.constant 0 : i32
    %c0_i32_0 = arith.constant 0 : i32
    return %arg0, %c0_i32 : i32, i32
  }
}

</mosaic_0001>

<llo_original>
// kernel: conv_module_forward.1
$region0: #{conv_module_forward.1}
  #allocation0 [shape = 'u32[]', space=smem, size = 0x4, offset = 0x4, fixed_abs, tag = 'smem constant byte address 0x4 - core index']
  #allocation1 [shape = 'u32[144,128]{1,0:T(1,128)}', space=vmem, size = 0x12000, scoped, tag = 'internal scratch']
  #allocation2 [shape = 'bf16[2,18,18,32]{3,2,1,0:T(8,128)(2,1)}', space=vmem, size = 0x36000, scoped, tag = 'scratch operand']
  %s0 = inlined_call_operand.vmem [shape: bf16[512,36], index: 0, kind: input, shape index: {}]
  %s1 = inlined_call_operand.vmem [shape: bf16[36,32], index: 1, kind: input, shape index: {}]
  %s2 = inlined_call_operand.vmem [shape: bf16[288,32], index: 2, kind: input, shape index: {}]
  %s3 = inlined_call_operand.vmem [shape: f32[512,32], index: 3, kind: output, shape index: {}]
  %s4 = sld [smem:[#allocation0]]
  $region22: #{conv_module_forward.1} parent=0
    _
  %s6 = ssub.s32 1, %s4
  %s7 = scalar_select 0, %s6, %s4
  // Predicated region
  $region2: #{conv_module_forward.1} parent=0 // pred_check
    _
  $region3: #{conv_module_forward.1} parent=0 // pred_check_branch
    %9 = sbr.rel (0) target = $region5
  $region4: #{conv_module_forward.1} parent=0 // pred_region
    _
  $region5: #{conv_module_forward.1} parent=0 // pred_fallthru
    _
  // Predicated region
  $region6: #{conv_module_forward.1} parent=0 // pred_check
    _
  $region7: #{conv_module_forward.1} parent=0 // pred_check_branch
    %11 = sbr.rel (0) target = $region9
  $region8: #{conv_module_forward.1} parent=0 // pred_region
    _
  $region9: #{conv_module_forward.1} parent=0 // pred_fallthru
    _
  // Predicated region
  $region10: #{conv_module_forward.1} parent=0 // pred_check
    _
  $region11: #{conv_module_forward.1} parent=0 // pred_check_branch
    %13 = sbr.rel (0) target = $region13
  $region12: #{conv_module_forward.1} parent=0 // pred_region
    _
  $region13: #{conv_module_forward.1} parent=0 // pred_fallthru
    _
  %v15 = vld [vmem:[%s0] sm:$0xf]
  %v16 = vld [vmem:[%s0 + $0x4] sm:$0xf]
  %v17 = vld [vmem:[%s0 + $0x8] sm:$0xf]
  %v18 = vld [vmem:[%s0 + $0xc] sm:$0xf]
  %v19 = vld [vmem:[%s0 + $0x10] sm:$0xf]
  %v20 = vld [vmem:[%s0 + $0x14] sm:$0xf]
  %v21 = vld [vmem:[%s0 + $0x18] sm:$0xf]
  %v22 = vld [vmem:[%s0 + $0x1c] sm:$0xf]
  %v23 = vld [vmem:[%s0 + $0x20] sm:$0xf]
  %v24 = vld [vmem:[%s0 + $0x24] sm:$0xf]
  %v25 = vld [vmem:[%s0 + $0x28] sm:$0xf]
  %v26 = vld [vmem:[%s0 + $0x2c] sm:$0xf]
  %v27 = vld [vmem:[%s0 + $0x30] sm:$0xf]
  %v28 = vld [vmem:[%s0 + $0x34] sm:$0xf]
  %v29 = vld [vmem:[%s0 + $0x38] sm:$0xf]
  %v30 = vld [vmem:[%s0 + $0x3c] sm:$0xf]
  %v31 = vld [vmem:[%s0 + $0x40] sm:$0xf]
  %v32 = vld [vmem:[%s0 + $0x44] sm:$0xf]
  %v33 = vld [vmem:[%s0 + $0x48] sm:$0xf]
  %v34 = vld [vmem:[%s0 + $0x4c] sm:$0xf]
  %v35 = vld [vmem:[%s0 + $0x50] sm:$0xf]
  %v36 = vld [vmem:[%s0 + $0x54] sm:$0xf]
  %v37 = vld [vmem:[%s0 + $0x58] sm:$0xf]
  %v38 = vld [vmem:[%s0 + $0x5c] sm:$0xf]
  %v39 = vld [vmem:[%s0 + $0x60] sm:$0xf]
  %v40 = vld [vmem:[%s0 + $0x64] sm:$0xf]
  %v41 = vld [vmem:[%s0 + $0x68] sm:$0xf]
  %v42 = vld [vmem:[%s0 + $0x6c] sm:$0xf]
  %v43 = vld [vmem:[%s0 + $0x70] sm:$0xf]
  %v44 = vld [vmem:[%s0 + $0x74] sm:$0xf]
  %v45 = vld [vmem:[%s0 + $0x78] sm:$0xf]
  %v46 = vld [vmem:[%s0 + $0x7c] sm:$0xf]
  %v47 = vld [vmem:[%s0 + $0x80] sm:$0xf]
  %v48 = vld [vmem:[%s0 + $0x84] sm:$0xf]
  %v49 = vld [vmem:[%s0 + $0x88] sm:$0xf]
  %v50 = vld [vmem:[%s0 + $0x8c] sm:$0xf]
  %v51 = vld [vmem:[%s0 + $0x90] sm:$0xf]
  %v52 = vld [vmem:[%s0 + $0x94] sm:$0xf]
  %v53 = vld [vmem:[%s0 + $0x98] sm:$0xf]
  %v54 = vld [vmem:[%s0 + $0x9c] sm:$0xf]
  %v55 = vld [vmem:[%s0 + $0xa0] sm:$0xf]
  %v56 = vld [vmem:[%s0 + $0xa4] sm:$0xf]
  %v57 = vld [vmem:[%s0 + $0xa8] sm:$0xf]
  %v58 = vld [vmem:[%s0 + $0xac] sm:$0xf]
  %v59 = vld [vmem:[%s0 + $0xb0] sm:$0xf]
  %v60 = vld [vmem:[%s0 + $0xb4] sm:$0xf]
  %v61 = vld [vmem:[%s0 + $0xb8] sm:$0xf]
  %v62 = vld [vmem:[%s0 + $0xbc] sm:$0xf]
  %v63 = vld [vmem:[%s0 + $0xc0] sm:$0xf]
  %v64 = vld [vmem:[%s0 + $0xc4] sm:$0xf]
  %v65 = vld [vmem:[%s0 + $0xc8] sm:$0xf]
  %v66 = vld [vmem:[%s0 + $0xcc] sm:$0xf]
  %v67 = vld [vmem:[%s0 + $0xd0] sm:$0xf]
  %v68 = vld [vmem:[%s0 + $0xd4] sm:$0xf]
  %v69 = vld [vmem:[%s0 + $0xd8] sm:$0xf]
  %v70 = vld [vmem:[%s0 + $0xdc] sm:$0xf]
  %v71 = vld [vmem:[%s0 + $0xe0] sm:$0xf]
  %v72 = vld [vmem:[%s0 + $0xe4] sm:$0xf]
  %v73 = vld [vmem:[%s0 + $0xe8] sm:$0xf]
  %v74 = vld [vmem:[%s0 + $0xec] sm:$0xf]
  %v75 = vld [vmem:[%s0 + $0xf0] sm:$0xf]
  %v76 = vld [vmem:[%s0 + $0xf4] sm:$0xf]
  %v77 = vld [vmem:[%s0 + $0xf8] sm:$0xf]
  %v78 = vld [vmem:[%s0 + $0xfc] sm:$0xf]
  %v79 = vld [vmem:[%s1] sm:$0xf]
  %v80 = vld [vmem:[%s1 + $0x4] sm:$0xf]
  %v81 = vld [vmem:[%s1 + $0x8] sm:$0xf]
  %v82 = vld [vmem:[%s1 + $0xc] sm:$0xf]
  %v83 = vld [vmem:[%s1 + $0x10] sm:$0x3]
  %v148 = vunpack.c.l.b16 %v15
  %v149 = vunpack.c.l.b16 %v16
  %v150 = vunpack.c.l.b16 %v17
  %v151 = vunpack.c.l.b16 %v18
  %v152 = vunpack.c.l.b16 %v19
  %v153 = vunpack.c.l.b16 %v20
  %v154 = vunpack.c.l.b16 %v21
  %v155 = vunpack.c.l.b16 %v22
  %v156 = vunpack.c.l.b16 %v23
  %v157 = vunpack.c.l.b16 %v24
  %v158 = vunpack.c.l.b16 %v25
  %v159 = vunpack.c.l.b16 %v26
  %v160 = vunpack.c.l.b16 %v27
  %v161 = vunpack.c.l.b16 %v28
  %v162 = vunpack.c.l.b16 %v29
  %v163 = vunpack.c.l.b16 %v30
  %v164 = vunpack.c.l.b16 %v31
  %v165 = vunpack.c.l.b16 %v32
  %v166 = vunpack.c.l.b16 %v33
  %v167 = vunpack.c.l.b16 %v34
  %v168 = vunpack.c.l.b16 %v35
  %v169 = vunpack.c.l.b16 %v36
  %v170 = vunpack.c.l.b16 %v37
  %v171 = vunpack.c.l.b16 %v38
  %v172 = vunpack.c.l.b16 %v39
  %v173 = vunpack.c.l.b16 %v40
  %v174 = vunpack.c.l.b16 %v41
  %v175 = vunpack.c.l.b16 %v42
  %v176 = vunpack.c.l.b16 %v43
  %v177 = vunpack.c.l.b16 %v44
  %v178 = vunpack.c.l.b16 %v45
  %v179 = vunpack.c.l.b16 %v46
  %v180 = vunpack.c.l.b16 %v47
  %v181 = vunpack.c.l.b16 %v48
  %v182 = vunpack.c.l.b16 %v49
  %v183 = vunpack.c.l.b16 %v50
  %v184 = vunpack.c.l.b16 %v51
  %v185 = vunpack.c.l.b16 %v52
  %v186 = vunpack.c.l.b16 %v53
  %v187 = vunpack.c.l.b16 %v54
  %v188 = vunpack.c.l.b16 %v55
  %v189 = vunpack.c.l.b16 %v56
  %v190 = vunpack.c.l.b16 %v57
  %v191 = vunpack.c.l.b16 %v58
  %v192 = vunpack.c.l.b16 %v59
  %v193 = vunpack.c.l.b16 %v60
  %v194 = vunpack.c.l.b16 %v61
  %v195 = vunpack.c.l.b16 %v62
  %v196 = vunpack.c.l.b16 %v63
  %v197 = vunpack.c.l.b16 %v64
  %v198 = vunpack.c.l.b16 %v65
  %v199 = vunpack.c.l.b16 %v66
  %v200 = vunpack.c.l.b16 %v67
  %v201 = vunpack.c.l.b16 %v68
  %v202 = vunpack.c.l.b16 %v69
  %v203 = vunpack.c.l.b16 %v70
  %v204 = vunpack.c.l.b16 %v71
  %v205 = vunpack.c.l.b16 %v72
  %v206 = vunpack.c.l.b16 %v73
  %v207 = vunpack.c.l.b16 %v74
  %v208 = vunpack.c.l.b16 %v75
  %v209 = vunpack.c.l.b16 %v76
  %v210 = vunpack.c.l.b16 %v77
  %v211 = vunpack.c.l.b16 %v78
  %v212 = vpack.c.b16 %v149, %v148
  %v213 = vpack.c.b16 %v151, %v150
  %v214 = vpack.c.b16 %v153, %v152
  %v215 = vpack.c.b16 %v155, %v154
  %v216 = vpack.c.b16 %v157, %v156
  %v217 = vpack.c.b16 %v159, %v158
  %v218 = vpack.c.b16 %v161, %v160
  %v219 = vpack.c.b16 %v163, %v162
  %v220 = vpack.c.b16 %v165, %v164
  %v221 = vpack.c.b16 %v167, %v166
  %v222 = vpack.c.b16 %v169, %v168
  %v223 = vpack.c.b16 %v171, %v170
  %v224 = vpack.c.b16 %v173, %v172
  %v225 = vpack.c.b16 %v175, %v174
  %v226 = vpack.c.b16 %v177, %v176
  %v227 = vpack.c.b16 %v179, %v178
  %v228 = vpack.c.b16 %v181, %v180
  %v229 = vpack.c.b16 %v183, %v182
  %v230 = vpack.c.b16 %v185, %v184
  %v231 = vpack.c.b16 %v187, %v186
  %v232 = vpack.c.b16 %v189, %v188
  %v233 = vpack.c.b16 %v191, %v190
  %v234 = vpack.c.b16 %v193, %v192
  %v235 = vpack.c.b16 %v195, %v194
  %v236 = vpack.c.b16 %v197, %v196
  %v237 = vpack.c.b16 %v199, %v198
  %v238 = vpack.c.b16 %v201, %v200
  %v239 = vpack.c.b16 %v203, %v202
  %v240 = vpack.c.b16 %v205, %v204
  %v241 = vpack.c.b16 %v207, %v206
  %v242 = vpack.c.b16 %v209, %v208
  %v243 = vpack.c.b16 %v211, %v210
  %v249 = vunpack.c.l.b16 %v79
  %v250 = vunpack.c.l.b16 %v80
  %v251 = vunpack.c.l.b16 %v81
  %v252 = vunpack.c.l.b16 %v82
  %v253 = vunpack.c.l.b16 %v83
  %v254 = vpack.c.b16 %v250, %v249
  %v255 = vpack.c.b16 %v252, %v251
  %v256 = vpack.c.b16 %v253, %v253
  %vm259 = vcmask 293888
  %v261 = vsel %vm259, %v212, 0
  %v264 = vsel %vm259, %v213, 0
  %v267 = vsel %vm259, %v214, 0
  %v270 = vsel %vm259, %v215, 0
  %v273 = vsel %vm259, %v216, 0
  %v276 = vsel %vm259, %v217, 0
  %v279 = vsel %vm259, %v218, 0
  %v282 = vsel %vm259, %v219, 0
  %v285 = vsel %vm259, %v220, 0
  %v288 = vsel %vm259, %v221, 0
  %v291 = vsel %vm259, %v222, 0
  %v294 = vsel %vm259, %v223, 0
  %v297 = vsel %vm259, %v224, 0
  %v300 = vsel %vm259, %v225, 0
  %v303 = vsel %vm259, %v226, 0
  %v306 = vsel %vm259, %v227, 0
  %v309 = vsel %vm259, %v228, 0
  %v312 = vsel %vm259, %v229, 0
  %v315 = vsel %vm259, %v230, 0
  %v318 = vsel %vm259, %v231, 0
  %v321 = vsel %vm259, %v232, 0
  %v324 = vsel %vm259, %v233, 0
  %v327 = vsel %vm259, %v234, 0
  %v330 = vsel %vm259, %v235, 0
  %v333 = vsel %vm259, %v236, 0
  %v336 = vsel %vm259, %v237, 0
  %v339 = vsel %vm259, %v238, 0
  %v342 = vsel %vm259, %v239, 0
  %v345 = vsel %vm259, %v240, 0
  %v348 = vsel %vm259, %v241, 0
  %v351 = vsel %vm259, %v242, 0
  %v354 = vsel %vm259, %v243, 0
  %vm356 = vcmask 1041408
  %v358 = vsel %vm356, %v256, 0
  %360 = vmatprep.subr.bf16.mxu0 0
  %361 = vmatpush1.bf16.msra.mxu0 %v254
  %362 = vmatprep.subr.bf16.mxu0 0
  %363 = vmatpush1.bf16.msra.mxu0 %v255
  %364 = vmatprep.subr.bf16.mxu0 0
  %365 = vmatpush1.bf16.msra.mxu0 %v358
  %366 = vmatprep.subr.bf16.mxu0 0
  %367 = vmatpush1.bf16.msra.mxu0 0
  %368 = vmatprep.subr.bf16.mxu0 0
  %369 = vmatpush1.bf16.msra.mxu0 0
  %370 = vmatprep.subr.bf16.mxu0 0
  %371 = vmatpush1.bf16.msra.mxu0 0
  %372 = vmatprep.subr.bf16.mxu0 0
  %373 = vmatpush1.bf16.msra.mxu0 0
  %374 = vmatprep.subr.bf16.mxu0 0
  %375 = vmatpush1.bf16.msra.mxu0 0
  %376 = vmatprep.subr.bf16.mxu0 0
  %377 = vmatpush1.bf16.msra.mxu0 0
  %378 = vmatprep.subr.bf16.mxu0 0
  %379 = vmatpush1.bf16.msra.mxu0 0
  %380 = vmatprep.subr.bf16.mxu0 0
  %381 = vmatpush1.bf16.msra.mxu0 0
  %382 = vmatprep.subr.bf16.mxu0 0
  %383 = vmatpush1.bf16.msra.mxu0 0
  %384 = vmatprep.subr.bf16.mxu0 0
  %385 = vmatpush1.bf16.msra.mxu0 0
  %386 = vmatprep.subr.bf16.mxu0 0
  %387 = vmatpush1.bf16.msra.mxu0 0
  %388 = vmatprep.subr.bf16.mxu0 0
  %389 = vmatpush1.bf16.msra.mxu0 0
  %390 = vmatprep.subr.bf16.mxu0 0
  %391 = vmatpush1.bf16.msra.mxu0 0
  %392 = vmatprep.mubr.bf16.mxu0 0
  %393 = vmatmul.mubr.bf16.gmra.mrb[0].mxu0 %v261
  %v394 = vpop.f32.mrb[0].mxu0
  %v395 = vadd.f32 0.0, %v394
  %v396 = vpop.f32.mrb[0].mxu0
  %v397 = vpop.f32.mrb[0].mxu0
  %v398 = vadd.f32 0.0, %v397
  %v399 = vpop.f32.mrb[0].mxu0
  %400 = vmatprep.mubr.bf16.mxu0 0
  %401 = vmatmul.mubr.bf16.gmra.mrb[0].mxu0 %v264
  %v402 = vpop.f32.mrb[0].mxu0
  %v403 = vadd.f32 0.0, %v402
  %v404 = vpop.f32.mrb[0].mxu0
  %v405 = vpop.f32.mrb[0].mxu0
  %v406 = vadd.f32 0.0, %v405
  %v407 = vpop.f32.mrb[0].mxu0
  %408 = vmatprep.mubr.bf16.mxu0 0
  %409 = vmatmul.mubr.bf16.gmra.mrb[0].mxu0 %v267
  %v410 = vpop.f32.mrb[0].mxu0
  %v411 = vadd.f32 0.0, %v410
  %v412 = vpop.f32.mrb[0].mxu0
  %v413 = vpop.f32.mrb[0].mxu0
  %v414 = vadd.f32 0.0, %v413
  %v415 = vpop.f32.mrb[0].mxu0
  %416 = vmatprep.mubr.bf16.mxu0 0
  %417 = vmatmul.mubr.bf16.gmra.mrb[0].mxu0 %v270
  %v418 = vpop.f32.mrb[0].mxu0
  %v419 = vadd.f32 0.0, %v418
  %v420 = vpop.f32.mrb[0].mxu0
  %v421 = vpop.f32.mrb[0].mxu0
  %v422 = vadd.f32 0.0, %v421
  %v423 = vpop.f32.mrb[0].mxu0
  %424 = vmatprep.mubr.bf16.mxu0 0
  %425 = vmatmul.mubr.bf16.gmra.mrb[0].mxu0 %v273
  %v426 = vpop.f32.mrb[0].mxu0
  %v427 = vadd.f32 0.0, %v426
  %v428 = vpop.f32.mrb[0].mxu0
  %v429 = vpop.f32.mrb[0].mxu0
  %v430 = vadd.f32 0.0, %v429
  %v431 = vpop.f32.mrb[0].mxu0
  %432 = vmatprep.mubr.bf16.mxu0 0
  %433 = vmatmul.mubr.bf16.gmra.mrb[0].mxu0 %v276
  %v434 = vpop.f32.mrb[0].mxu0
  %v435 = vadd.f32 0.0, %v434
  %v436 = vpop.f32.mrb[0].mxu0
  %v437 = vpop.f32.mrb[0].mxu0
  %v438 = vadd.f32 0.0, %v437
  %v439 = vpop.f32.mrb[0].mxu0
  %440 = vmatprep.mubr.bf16.mxu0 0
  %441 = vmatmul.mubr.bf16.gmra.mrb[0].mxu0 %v279
  %v442 = vpop.f32.mrb[0].mxu0
  %v443 = vadd.f32 0.0, %v442
  %v444 = vpop.f32.mrb[0].mxu0
  %v445 = vpop.f32.mrb[0].mxu0
  %v446 = vadd.f32 0.0, %v445
  %v447 = vpop.f32.mrb[0].mxu0
  %448 = vmatprep.mubr.bf16.mxu0 0
  %449 = vmatmul.mubr.bf16.gmra.mrb[0].mxu0 %v282
  %v450 = vpop.f32.mrb[0].mxu0
  %v451 = vadd.f32 0.0, %v450
  %v452 = vpop.f32.mrb[0].mxu0
  %v453 = vpop.f32.mrb[0].mxu0
  %v454 = vadd.f32 0.0, %v453
  %v455 = vpop.f32.mrb[0].mxu0
  %456 = vmatprep.mubr.bf16.mxu0 0
  %457 = vmatmul.mubr.bf16.gmra.mrb[0].mxu0 %v285
  %v458 = vpop.f32.mrb[0].mxu0
  %v459 = vadd.f32 0.0, %v458
  %v460 = vpop.f32.mrb[0].mxu0
  %v461 = vpop.f32.mrb[0].mxu0
  %v462 = vadd.f32 0.0, %v461
  %v463 = vpop.f32.mrb[0].mxu0
  %464 = vmatprep.mubr.bf16.mxu0 0
  %465 = vmatmul.mubr.bf16.gmra.mrb[0].mxu0 %v288
  %v466 = vpop.f32.mrb[0].mxu0
  %v467 = vadd.f32 0.0, %v466
  %v468 = vpop.f32.mrb[0].mxu0
  %v469 = vpop.f32.mrb[0].mxu0
  %v470 = vadd.f32 0.0, %v469
  %v471 = vpop.f32.mrb[0].mxu0
  %472 = vmatprep.mubr.bf16.mxu0 0
  %473 = vmatmul.mubr.bf16.gmra.mrb[0].mxu0 %v291
  %v474 = vpop.f32.mrb[0].mxu0
  %v475 = vadd.f32 0.0, %v474
  %v476 = vpop.f32.mrb[0].mxu0
  %v477 = vpop.f32.mrb[0].mxu0
  %v478 = vadd.f32 0.0, %v477
  %v479 = vpop.f32.mrb[0].mxu0
  %480 = vmatprep.mubr.bf16.mxu0 0
  %481 = vmatmul.mubr.bf16.gmra.mrb[0].mxu0 %v294
  %v482 = vpop.f32.mrb[0].mxu0
  %v483 = vadd.f32 0.0, %v482
  %v484 = vpop.f32.mrb[0].mxu0
  %v485 = vpop.f32.mrb[0].mxu0
  %v486 = vadd.f32 0.0, %v485
  %v487 = vpop.f32.mrb[0].mxu0
  %488 = vmatprep.mubr.bf16.mxu0 0
  %489 = vmatmul.mubr.bf16.gmra.mrb[0].mxu0 %v297
  %v490 = vpop.f32.mrb[0].mxu0
  %v491 = vadd.f32 0.0, %v490
  %v492 = vpop.f32.mrb[0].mxu0
  %v493 = vpop.f32.mrb[0].mxu0
  %v494 = vadd.f32 0.0, %v493
  %v495 = vpop.f32.mrb[0].mxu0
  %496 = vmatprep.mubr.bf16.mxu0 0
  %497 = vmatmul.mubr.bf16.gmra.mrb[0].mxu0 %v300
  %v498 = vpop.f32.mrb[0].mxu0
  %v499 = vadd.f32 0.0, %v498
  %v500 = vpop.f32.mrb[0].mxu0
  %v501 = vpop.f32.mrb[0].mxu0
  %v502 = vadd.f32 0.0, %v501
  %v503 = vpop.f32.mrb[0].mxu0
  %504 = vmatprep.mubr.bf16.mxu0 0
  %505 = vmatmul.mubr.bf16.gmra.mrb[0].mxu0 %v303
  %v506 = vpop.f32.mrb[0].mxu0
  %v507 = vadd.f32 0.0, %v506
  %v508 = vpop.f32.mrb[0].mxu0
  %v509 = vpop.f32.mrb[0].mxu0
  %v510 = vadd.f32 0.0, %v509
  %v511 = vpop.f32.mrb[0].mxu0
  %512 = vmatprep.mubr.bf16.mxu0 0
  %513 = vmatmul.mubr.bf16.gmra.mrb[0].mxu0 %v306
  %v514 = vpop.f32.mrb[0].mxu0
  %v515 = vadd.f32 0.0, %v514
  %v516 = vpop.f32.mrb[0].mxu0
  %v517 = vpop.f32.mrb[0].mxu0
  %v518 = vadd.f32 0.0, %v517
  %v519 = vpop.f32.mrb[0].mxu0
  %520 = vmatprep.mubr.bf16.mxu0 0
  %521 = vmatmul.mubr.bf16.gmra.mrb[0].mxu0 %v309
  %v522 = vpop.f32.mrb[0].mxu0
  %v523 = vadd.f32 0.0, %v522
  %v524 = vpop.f32.mrb[0].mxu0
  %v525 = vpop.f32.mrb[0].mxu0
  %v526 = vadd.f32 0.0, %v525
  %v527 = vpop.f32.mrb[0].mxu0
  %528 = vmatprep.mubr.bf16.mxu0 0
  %529 = vmatmul.mubr.bf16.gmra.mrb[0].mxu0 %v312
  %v530 = vpop.f32.mrb[0].mxu0
  %v531 = vadd.f32 0.0, %v530
  %v532 = vpop.f32.mrb[0].mxu0
  %v533 = vpop.f32.mrb[0].mxu0
  %v534 = vadd.f32 0.0, %v533
  %v535 = vpop.f32.mrb[0].mxu0
  %536 = vmatprep.mubr.bf16.mxu0 0
  %537 = vmatmul.mubr.bf16.gmra.mrb[0].mxu0 %v315
  %v538 = vpop.f32.mrb[0].mxu0
  %v539 = vadd.f32 0.0, %v538
  %v540 = vpop.f32.mrb[0].mxu0
  %v541 = vpop.f32.mrb[0].mxu0
  %v542 = vadd.f32 0.0, %v541
  %v543 = vpop.f32.mrb[0].mxu0
  %544 = vmatprep.mubr.bf16.mxu0 0
  %545 = vmatmul.mubr.bf16.gmra.mrb[0].mxu0 %v318
  %v546 = vpop.f32.mrb[0].mxu0
  %v547 = vadd.f32 0.0, %v546
  %v548 = vpop.f32.mrb[0].mxu0
  %v549 = vpop.f32.mrb[0].mxu0
  %v550 = vadd.f32 0.0, %v549
  %v551 = vpop.f32.mrb[0].mxu0
  %552 = vmatprep.mubr.bf16.mxu0 0
  %553 = vmatmul.mubr.bf16.gmra.mrb[0].mxu0 %v321
  %v554 = vpop.f32.mrb[0].mxu0
  %v555 = vadd.f32 0.0, %v554
  %v556 = vpop.f32.mrb[0].mxu0
  %v557 = vpop.f32.mrb[0].mxu0
  %v558 = vadd.f32 0.0, %v557
  %v559 = vpop.f32.mrb[0].mxu0
  %560 = vmatprep.mubr.bf16.mxu0 0
  %561 = vmatmul.mubr.bf16.gmra.mrb[0].mxu0 %v324
  %v562 = vpop.f32.mrb[0].mxu0
  %v563 = vadd.f32 0.0, %v562
  %v564 = vpop.f32.mrb[0].mxu0
  %v565 = vpop.f32.mrb[0].mxu0
  %v566 = vadd.f32 0.0, %v565
  %v567 = vpop.f32.mrb[0].mxu0
  %568 = vmatprep.mubr.bf16.mxu0 0
  %569 = vmatmul.mubr.bf16.gmra.mrb[0].mxu0 %v327
  %v570 = vpop.f32.mrb[0].mxu0
  %v571 = vadd.f32 0.0, %v570
  %v572 = vpop.f32.mrb[0].mxu0
  %v573 = vpop.f32.mrb[0].mxu0
  %v574 = vadd.f32 0.0, %v573
  %v575 = vpop.f32.mrb[0].mxu0
  %576 = vmatprep.mubr.bf16.mxu0 0
  %577 = vmatmul.mubr.bf16.gmra.mrb[0].mxu0 %v330
  %v578 = vpop.f32.mrb[0].mxu0
  %v579 = vadd.f32 0.0, %v578
  %v580 = vpop.f32.mrb[0].mxu0
  %v581 = vpop.f32.mrb[0].mxu0
  %v582 = vadd.f32 0.0, %v581
  %v583 = vpop.f32.mrb[0].mxu0
  %584 = vmatprep.mubr.bf16.mxu0 0
  %585 = vmatmul.mubr.bf16.gmra.mrb[0].mxu0 %v333
  %v586 = vpop.f32.mrb[0].mxu0
  %v587 = vadd.f32 0.0, %v586
  %v588 = vpop.f32.mrb[0].mxu0
  %v589 = vpop.f32.mrb[0].mxu0
  %v590 = vadd.f32 0.0, %v589
  %v591 = vpop.f32.mrb[0].mxu0
  %592 = vmatprep.mubr.bf16.mxu0 0
  %593 = vmatmul.mubr.bf16.gmra.mrb[0].mxu0 %v336
  %v594 = vpop.f32.mrb[0].mxu0
  %v595 = vadd.f32 0.0, %v594
  %v596 = vpop.f32.mrb[0].mxu0
  %v597 = vpop.f32.mrb[0].mxu0
  %v598 = vadd.f32 0.0, %v597
  %v599 = vpop.f32.mrb[0].mxu0
  %600 = vmatprep.mubr.bf16.mxu0 0
  %601 = vmatmul.mubr.bf16.gmra.mrb[0].mxu0 %v339
  %v602 = vpop.f32.mrb[0].mxu0
  %v603 = vadd.f32 0.0, %v602
  %v604 = vpop.f32.mrb[0].mxu0
  %v605 = vpop.f32.mrb[0].mxu0
  %v606 = vadd.f32 0.0, %v605
  %v607 = vpop.f32.mrb[0].mxu0
  %608 = vmatprep.mubr.bf16.mxu0 0
  %609 = vmatmul.mubr.bf16.gmra.mrb[0].mxu0 %v342
  %v610 = vpop.f32.mrb[0].mxu0
  %v611 = vadd.f32 0.0, %v610
  %v612 = vpop.f32.mrb[0].mxu0
  %v613 = vpop.f32.mrb[0].mxu0
  %v614 = vadd.f32 0.0, %v613
  %v615 = vpop.f32.mrb[0].mxu0
  %616 = vmatprep.mubr.bf16.mxu0 0
  %617 = vmatmul.mubr.bf16.gmra.mrb[0].mxu0 %v345
  %v618 = vpop.f32.mrb[0].mxu0
  %v619 = vadd.f32 0.0, %v618
  %v620 = vpop.f32.mrb[0].mxu0
  %v621 = vpop.f32.mrb[0].mxu0
  %v622 = vadd.f32 0.0, %v621
  %v623 = vpop.f32.mrb[0].mxu0
  %624 = vmatprep.mubr.bf16.mxu0 0
  %625 = vmatmul.mubr.bf16.gmra.mrb[0].mxu0 %v348
  %v626 = vpop.f32.mrb[0].mxu0
  %v627 = vadd.f32 0.0, %v626
  %v628 = vpop.f32.mrb[0].mxu0
  %v629 = vpop.f32.mrb[0].mxu0
  %v630 = vadd.f32 0.0, %v629
  %v631 = vpop.f32.mrb[0].mxu0
  %632 = vmatprep.mubr.bf16.mxu0 0
  %633 = vmatmul.mubr.bf16.gmra.mrb[0].mxu0 %v351
  %v634 = vpop.f32.mrb[0].mxu0
  %v635 = vadd.f32 0.0, %v634
  %v636 = vpop.f32.mrb[0].mxu0
  %v637 = vpop.f32.mrb[0].mxu0
  %v638 = vadd.f32 0.0, %v637
  %v639 = vpop.f32.mrb[0].mxu0
  %640 = vmatprep.mubr.bf16.mxu0 0
  %641 = vmatmul.mubr.bf16.gmra.mrb[0].mxu0 %v354
  %v642 = vpop.f32.mrb[0].mxu0
  %v643 = vadd.f32 0.0, %v642
  %v644 = vpop.f32.mrb[0].mxu0
  %v645 = vpop.f32.mrb[0].mxu0
  %v646 = vadd.f32 0.0, %v645
  %v647 = vpop.f32.mrb[0].mxu0
  %648 = vdwg.mxu0
  %v649 = vmax.f32 %v395, 0.0
  %v650 = vmax.f32 %v398, 0.0
  %v651 = vmax.f32 %v403, 0.0
  %v652 = vmax.f32 %v406, 0.0
  %v653 = vmax.f32 %v411, 0.0
  %v654 = vmax.f32 %v414, 0.0
  %v655 = vmax.f32 %v419, 0.0
  %v656 = vmax.f32 %v422, 0.0
  %v657 = vmax.f32 %v427, 0.0
  %v658 = vmax.f32 %v430, 0.0
  %v659 = vmax.f32 %v435, 0.0
  %v660 = vmax.f32 %v438, 0.0
  %v661 = vmax.f32 %v443, 0.0
  %v662 = vmax.f32 %v446, 0.0
  %v663 = vmax.f32 %v451, 0.0
  %v664 = vmax.f32 %v454, 0.0
  %v665 = vmax.f32 %v459, 0.0
  %v666 = vmax.f32 %v462, 0.0
  %v667 = vmax.f32 %v467, 0.0
  %v668 = vmax.f32 %v470, 0.0
  %v669 = vmax.f32 %v475, 0.0
  %v670 = vmax.f32 %v478, 0.0
  %v671 = vmax.f32 %v483, 0.0
  %v672 = vmax.f32 %v486, 0.0
  %v673 = vmax.f32 %v491, 0.0
  %v674 = vmax.f32 %v494, 0.0
  %v675 = vmax.f32 %v499, 0.0
  %v676 = vmax.f32 %v502, 0.0
  %v677 = vmax.f32 %v507, 0.0
  %v678 = vmax.f32 %v510, 0.0
  %v679 = vmax.f32 %v515, 0.0
  %v680 = vmax.f32 %v518, 0.0
  %v681 = vmax.f32 %v523, 0.0
  %v682 = vmax.f32 %v526, 0.0
  %v683 = vmax.f32 %v531, 0.0
  %v684 = vmax.f32 %v534, 0.0
  %v685 = vmax.f32 %v539, 0.0
  %v686 = vmax.f32 %v542, 0.0
  %v687 = vmax.f32 %v547, 0.0
  %v688 = vmax.f32 %v550, 0.0
  %v689 = vmax.f32 %v555, 0.0
  %v690 = vmax.f32 %v558, 0.0
  %v691 = vmax.f32 %v563, 0.0
  %v692 = vmax.f32 %v566, 0.0
  %v693 = vmax.f32 %v571, 0.0
  %v694 = vmax.f32 %v574, 0.0
  %v695 = vmax.f32 %v579, 0.0
  %v696 = vmax.f32 %v582, 0.0
  %v697 = vmax.f32 %v587, 0.0
  %v698 = vmax.f32 %v590, 0.0
  %v699 = vmax.f32 %v595, 0.0
  %v700 = vmax.f32 %v598, 0.0
  %v701 = vmax.f32 %v603, 0.0
  %v702 = vmax.f32 %v606, 0.0
  %v703 = vmax.f32 %v611, 0.0
  %v704 = vmax.f32 %v614, 0.0
  %v705 = vmax.f32 %v619, 0.0
  %v706 = vmax.f32 %v622, 0.0
  %v707 = vmax.f32 %v627, 0.0
  %v708 = vmax.f32 %v630, 0.0
  %v709 = vmax.f32 %v635, 0.0
  %v710 = vmax.f32 %v638, 0.0
  %v711 = vmax.f32 %v643, 0.0
  %v712 = vmax.f32 %v646, 0.0
  %v713 = vpack.c.bf16 %v650, %v649
  %v714 = vpack.c.bf16 %v652, %v651
  %v715 = vpack.c.bf16 %v654, %v653
  %v716 = vpack.c.bf16 %v656, %v655
  %v717 = vpack.c.bf16 %v658, %v657
  %v718 = vpack.c.bf16 %v660, %v659
  %v719 = vpack.c.bf16 %v662, %v661
  %v720 = vpack.c.bf16 %v664, %v663
  %v721 = vpack.c.bf16 %v666, %v665
  %v722 = vpack.c.bf16 %v668, %v667
  %v723 = vpack.c.bf16 %v670, %v669
  %v724 = vpack.c.bf16 %v672, %v671
  %v725 = vpack.c.bf16 %v674, %v673
  %v726 = vpack.c.bf16 %v676, %v675
  %v727 = vpack.c.bf16 %v678, %v677
  %v728 = vpack.c.bf16 %v680, %v679
  %v729 = vpack.c.bf16 %v682, %v681
  %v730 = vpack.c.bf16 %v684, %v683
  %v731 = vpack.c.bf16 %v686, %v685
  %v732 = vpack.c.bf16 %v688, %v687
  %v733 = vpack.c.bf16 %v690, %v689
  %v734 = vpack.c.bf16 %v692, %v691
  %v735 = vpack.c.bf16 %v694, %v693
  %v736 = vpack.c.bf16 %v696, %v695
  %v737 = vpack.c.bf16 %v698, %v697
  %v738 = vpack.c.bf16 %v700, %v699
  %v739 = vpack.c.bf16 %v702, %v701
  %v740 = vpack.c.bf16 %v704, %v703
  %v741 = vpack.c.bf16 %v706, %v705
  %v742 = vpack.c.bf16 %v708, %v707
  %v743 = vpack.c.bf16 %v710, %v709
  %v744 = vpack.c.bf16 %v712, %v711
  %vm745 = vcmask 257024
  %746 = vst.msk [vmem:[#allocation2] sm:$0xf] %vm745, 0
  %747 = vst.msk [vmem:[#allocation2 + $0x4] sm:$0xf] %vm745, 0
  %vm748 = vcmask 253952
  %749 = vst.msk [vmem:[#allocation2 + $0x8] sm:$0x1] %vm748, 0
  %750 = vst.msk [vmem:[#allocation2 + $0xd8] sm:$0xf] %vm745, 0
  %751 = vst.msk [vmem:[#allocation2 + $0xdc] sm:$0xf] %vm745, 0
  %752 = vst.msk [vmem:[#allocation2 + $0xe0] sm:$0x1] %vm748, 0
  %s753 = scalar_lea.vmem [#allocation2], 204
  %754 = vst.msk [vmem:[%s753] sm:$0xf] %vm745, 0
  %755 = vst.msk [vmem:[%s753 + $0x4] sm:$0xf] %vm745, 0
  %756 = vst.msk [vmem:[%s753 + $0x8] sm:$0x1] %vm748, 0
  %757 = vst.msk [vmem:[%s753 + $0xd8] sm:$0xf] %vm745, 0
  %758 = vst.msk [vmem:[%s753 + $0xdc] sm:$0xf] %vm745, 0
  %759 = vst.msk [vmem:[%s753 + $0xe0] sm:$0x1] %vm748, 0
  %vm760 = vcmask 253952
  %vm761 = vsmask.f32 256
  %vm762 = vmand %vm760, %vm761
  %v763 = vld [vmem:[#allocation2] sm:$0x1]
  %v764 = vsel %vm762, 0, %v763
  %765 = vst [vmem:[#allocation2] sm:$0x1] %v764
  %v766 = vld [vmem:[#allocation2 + $0xc] sm:$0x1]
  %v767 = vsel %vm762, 0, %v766
  %768 = vst [vmem:[#allocation2 + $0xc] sm:$0x1] %v767
  %v769 = vld [vmem:[#allocation2 + $0x18] sm:$0x1]
  %v770 = vsel %vm762, 0, %v769
  %771 = vst [vmem:[#allocation2 + $0x18] sm:$0x1] %v770
  %v772 = vld [vmem:[#allocation2 + $0x24] sm:$0x1]
  %v773 = vsel %vm762, 0, %v772
  %774 = vst [vmem:[#allocation2 + $0x24] sm:$0x1] %v773
  %v775 = vld [vmem:[#allocation2 + $0x30] sm:$0x1]
  %v776 = vsel %vm762, 0, %v775
  %777 = vst [vmem:[#allocation2 + $0x30] sm:$0x1] %v776
  %v778 = vld [vmem:[#allocation2 + $0x3c] sm:$0x1]
  %v779 = vsel %vm762, 0, %v778
  %780 = vst [vmem:[#allocation2 + $0x3c] sm:$0x1] %v779
  %v781 = vld [vmem:[#allocation2 + $0x48] sm:$0x1]
  %v782 = vsel %vm762, 0, %v781
  %783 = vst [vmem:[#allocation2 + $0x48] sm:$0x1] %v782
  %v784 = vld [vmem:[#allocation2 + $0x54] sm:$0x1]
  %v785 = vsel %vm762, 0, %v784
  %786 = vst [vmem:[#allocation2 + $0x54] sm:$0x1] %v785
  %v787 = vld [vmem:[#allocation2 + $0x60] sm:$0x1]
  %v788 = vsel %vm762, 0, %v787
  %789 = vst [vmem:[#allocation2 + $0x60] sm:$0x1] %v788
  %v790 = vld [vmem:[#allocation2 + $0x6c] sm:$0x1]
  %v791 = vsel %vm762, 0, %v790
  %792 = vst [vmem:[#allocation2 + $0x6c] sm:$0x1] %v791
  %v793 = vld [vmem:[#allocation2 + $0x78] sm:$0x1]
  %v794 = vsel %vm762, 0, %v793
  %795 = vst [vmem:[#allocation2 + $0x78] sm:$0x1] %v794
  %v796 = vld [vmem:[#allocation2 + $0x84] sm:$0x1]
  %v797 = vsel %vm762, 0, %v796
  %798 = vst [vmem:[#allocation2 + $0x84] sm:$0x1] %v797
  %v799 = vld [vmem:[#allocation2 + $0x90] sm:$0x1]
  %v800 = vsel %vm762, 0, %v799
  %801 = vst [vmem:[#allocation2 + $0x90] sm:$0x1] %v800
  %v802 = vld [vmem:[#allocation2 + $0x9c] sm:$0x1]
  %v803 = vsel %vm762, 0, %v802
  %804 = vst [vmem:[#allocation2 + $0x9c] sm:$0x1] %v803
  %v805 = vld [vmem:[#allocation2 + $0xa8] sm:$0x1]
  %v806 = vsel %vm762, 0, %v805
  %807 = vst [vmem:[#allocation2 + $0xa8] sm:$0x1] %v806
  %v808 = vld [vmem:[#allocation2 + $0xb4] sm:$0x1]
  %v809 = vsel %vm762, 0, %v808
  %810 = vst [vmem:[#allocation2 + $0xb4] sm:$0x1] %v809
  %v811 = vld [vmem:[#allocation2 + $0xc0] sm:$0x1]
  %v812 = vsel %vm762, 0, %v811
  %813 = vst [vmem:[#allocation2 + $0xc0] sm:$0x1] %v812
  %v814 = vld [vmem:[#allocation2 + $0xcc] sm:$0x1]
  %v815 = vsel %vm762, 0, %v814
  %816 = vst [vmem:[#allocation2 + $0xcc] sm:$0x1] %v815
  %v817 = vld [vmem:[#allocation2 + $0xd8] sm:$0x1]
  %v818 = vsel %vm762, 0, %v817
  %819 = vst [vmem:[#allocation2 + $0xd8] sm:$0x1] %v818
  %v820 = vld [vmem:[#allocation2 + $0xe4] sm:$0x1]
  %v821 = vsel %vm762, 0, %v820
  %822 = vst [vmem:[#allocation2 + $0xe4] sm:$0x1] %v821
  %v823 = vld [vmem:[#allocation2 + $0xf0] sm:$0x1]
  %v824 = vsel %vm762, 0, %v823
  %825 = vst [vmem:[#allocation2 + $0xf0] sm:$0x1] %v824
  %v826 = vld [vmem:[#allocation2 + $0xfc] sm:$0x1]
  %v827 = vsel %vm762, 0, %v826
  %828 = vst [vmem:[#allocation2 + $0xfc] sm:$0x1] %v827
  %v829 = vld [vmem:[#allocation2 + $0x108] sm:$0x1]
  %v830 = vsel %vm762, 0, %v829
  %831 = vst [vmem:[#allocation2 + $0x108] sm:$0x1] %v830
  %v832 = vld [vmem:[#allocation2 + $0x114] sm:$0x1]
  %v833 = vsel %vm762, 0, %v832
  %834 = vst [vmem:[#allocation2 + $0x114] sm:$0x1] %v833
  %v835 = vld [vmem:[#allocation2 + $0x120] sm:$0x1]
  %v836 = vsel %vm762, 0, %v835
  %837 = vst [vmem:[#allocation2 + $0x120] sm:$0x1] %v836
  %v838 = vld [vmem:[#allocation2 + $0x12c] sm:$0x1]
  %v839 = vsel %vm762, 0, %v838
  %840 = vst [vmem:[#allocation2 + $0x12c] sm:$0x1] %v839
  %v841 = vld [vmem:[#allocation2 + $0x138] sm:$0x1]
  %v842 = vsel %vm762, 0, %v841
  %843 = vst [vmem:[#allocation2 + $0x138] sm:$0x1] %v842
  %v844 = vld [vmem:[#allocation2 + $0x144] sm:$0x1]
  %v845 = vsel %vm762, 0, %v844
  %846 = vst [vmem:[#allocation2 + $0x144] sm:$0x1] %v845
  %v847 = vld [vmem:[#allocation2 + $0x150] sm:$0x1]
  %v848 = vsel %vm762, 0, %v847
  %849 = vst [vmem:[#allocation2 + $0x150] sm:$0x1] %v848
  %v850 = vld [vmem:[#allocation2 + $0x15c] sm:$0x1]
  %v851 = vsel %vm762, 0, %v850
  %852 = vst [vmem:[#allocation2 + $0x15c] sm:$0x1] %v851
  %v853 = vld [vmem:[#allocation2 + $0x168] sm:$0x1]
  %v854 = vsel %vm762, 0, %v853
  %855 = vst [vmem:[#allocation2 + $0x168] sm:$0x1] %v854
  %v856 = vld [vmem:[#allocation2 + $0x174] sm:$0x1]
  %v857 = vsel %vm762, 0, %v856
  %858 = vst [vmem:[#allocation2 + $0x174] sm:$0x1] %v857
  %v859 = vld [vmem:[#allocation2 + $0x180] sm:$0x1]
  %v860 = vsel %vm762, 0, %v859
  %861 = vst [vmem:[#allocation2 + $0x180] sm:$0x1] %v860
  %v862 = vld [vmem:[#allocation2 + $0x18c] sm:$0x1]
  %v863 = vsel %vm762, 0, %v862
  %864 = vst [vmem:[#allocation2 + $0x18c] sm:$0x1] %v863
  %v865 = vld [vmem:[#allocation2 + $0x198] sm:$0x1]
  %v866 = vsel %vm762, 0, %v865
  %867 = vst [vmem:[#allocation2 + $0x198] sm:$0x1] %v866
  %v868 = vld [vmem:[#allocation2 + $0x1a4] sm:$0x1]
  %v869 = vsel %vm762, 0, %v868
  %870 = vst [vmem:[#allocation2 + $0x1a4] sm:$0x1] %v869
  %vm871 = vsmask.f32 7938
  %vm872 = vmand %vm760, %vm871
  %v873 = vld [vmem:[#allocation2 + $0x8] sm:$0x1]
  %v874 = vsel %vm872, 0, %v873
  %875 = vst [vmem:[#allocation2 + $0x8] sm:$0x1] %v874
  %v876 = vld [vmem:[#allocation2 + $0x14] sm:$0x1]
  %v877 = vsel %vm872, 0, %v876
  %878 = vst [vmem:[#allocation2 + $0x14] sm:$0x1] %v877
  %v879 = vld [vmem:[#allocation2 + $0x20] sm:$0x1]
  %v880 = vsel %vm872, 0, %v879
  %881 = vst [vmem:[#allocation2 + $0x20] sm:$0x1] %v880
  %v882 = vld [vmem:[#allocation2 + $0x2c] sm:$0x1]
  %v883 = vsel %vm872, 0, %v882
  %884 = vst [vmem:[#allocation2 + $0x2c] sm:$0x1] %v883
  %v885 = vld [vmem:[#allocation2 + $0x38] sm:$0x1]
  %v886 = vsel %vm872, 0, %v885
  %887 = vst [vmem:[#allocation2 + $0x38] sm:$0x1] %v886
  %v888 = vld [vmem:[#allocation2 + $0x44] sm:$0x1]
  %v889 = vsel %vm872, 0, %v888
  %890 = vst [vmem:[#allocation2 + $0x44] sm:$0x1] %v889
  %v891 = vld [vmem:[#allocation2 + $0x50] sm:$0x1]
  %v892 = vsel %vm872, 0, %v891
  %893 = vst [vmem:[#allocation2 + $0x50] sm:$0x1] %v892
  %v894 = vld [vmem:[#allocation2 + $0x5c] sm:$0x1]
  %v895 = vsel %vm872, 0, %v894
  %896 = vst [vmem:[#allocation2 + $0x5c] sm:$0x1] %v895
  %v897 = vld [vmem:[#allocation2 + $0x68] sm:$0x1]
  %v898 = vsel %vm872, 0, %v897
  %899 = vst [vmem:[#allocation2 + $0x68] sm:$0x1] %v898
  %v900 = vld [vmem:[#allocation2 + $0x74] sm:$0x1]
  %v901 = vsel %vm872, 0, %v900
  %902 = vst [vmem:[#allocation2 + $0x74] sm:$0x1] %v901
  %v903 = vld [vmem:[#allocation2 + $0x80] sm:$0x1]
  %v904 = vsel %vm872, 0, %v903
  %905 = vst [vmem:[#allocation2 + $0x80] sm:$0x1] %v904
  %v906 = vld [vmem:[#allocation2 + $0x8c] sm:$0x1]
  %v907 = vsel %vm872, 0, %v906
  %908 = vst [vmem:[#allocation2 + $0x8c] sm:$0x1] %v907
  %v909 = vld [vmem:[#allocation2 + $0x98] sm:$0x1]
  %v910 = vsel %vm872, 0, %v909
  %911 = vst [vmem:[#allocation2 + $0x98] sm:$0x1] %v910
  %v912 = vld [vmem:[#allocation2 + $0xa4] sm:$0x1]
  %v913 = vsel %vm872, 0, %v912
  %914 = vst [vmem:[#allocation2 + $0xa4] sm:$0x1] %v913
  %v915 = vld [vmem:[#allocation2 + $0xb0] sm:$0x1]
  %v916 = vsel %vm872, 0, %v915
  %917 = vst [vmem:[#allocation2 + $0xb0] sm:$0x1] %v916
  %v918 = vld [vmem:[#allocation2 + $0xbc] sm:$0x1]
  %v919 = vsel %vm872, 0, %v918
  %920 = vst [vmem:[#allocation2 + $0xbc] sm:$0x1] %v919
  %v921 = vld [vmem:[#allocation2 + $0xc8] sm:$0x1]
  %v922 = vsel %vm872, 0, %v921
  %923 = vst [vmem:[#allocation2 + $0xc8] sm:$0x1] %v922
  %v924 = vld [vmem:[#allocation2 + $0xd4] sm:$0x1]
  %v925 = vsel %vm872, 0, %v924
  %926 = vst [vmem:[#allocation2 + $0xd4] sm:$0x1] %v925
  %v927 = vld [vmem:[#allocation2 + $0xe0] sm:$0x1]
  %v928 = vsel %vm872, 0, %v927
  %929 = vst [vmem:[#allocation2 + $0xe0] sm:$0x1] %v928
  %v930 = vld [vmem:[#allocation2 + $0xec] sm:$0x1]
  %v931 = vsel %vm872, 0, %v930
  %932 = vst [vmem:[#allocation2 + $0xec] sm:$0x1] %v931
  %v933 = vld [vmem:[#allocation2 + $0xf8] sm:$0x1]
  %v934 = vsel %vm872, 0, %v933
  %935 = vst [vmem:[#allocation2 + $0xf8] sm:$0x1] %v934
  %v936 = vld [vmem:[#allocation2 + $0x104] sm:$0x1]
  %v937 = vsel %vm872, 0, %v936
  %938 = vst [vmem:[#allocation2 + $0x104] sm:$0x1] %v937
  %v939 = vld [vmem:[#allocation2 + $0x110] sm:$0x1]
  %v940 = vsel %vm872, 0, %v939
  %941 = vst [vmem:[#allocation2 + $0x110] sm:$0x1] %v940
  %v942 = vld [vmem:[#allocation2 + $0x11c] sm:$0x1]
  %v943 = vsel %vm872, 0, %v942
  %944 = vst [vmem:[#allocation2 + $0x11c] sm:$0x1] %v943
  %v945 = vld [vmem:[#allocation2 + $0x128] sm:$0x1]
  %v946 = vsel %vm872, 0, %v945
  %947 = vst [vmem:[#allocation2 + $0x128] sm:$0x1] %v946
  %v948 = vld [vmem:[#allocation2 + $0x134] sm:$0x1]
  %v949 = vsel %vm872, 0, %v948
  %950 = vst [vmem:[#allocation2 + $0x134] sm:$0x1] %v949
  %v951 = vld [vmem:[#allocation2 + $0x140] sm:$0x1]
  %v952 = vsel %vm872, 0, %v951
  %953 = vst [vmem:[#allocation2 + $0x140] sm:$0x1] %v952
  %v954 = vld [vmem:[#allocation2 + $0x14c] sm:$0x1]
  %v955 = vsel %vm872, 0, %v954
  %956 = vst [vmem:[#allocation2 + $0x14c] sm:$0x1] %v955
  %v957 = vld [vmem:[#allocation2 + $0x158] sm:$0x1]
  %v958 = vsel %vm872, 0, %v957
  %959 = vst [vmem:[#allocation2 + $0x158] sm:$0x1] %v958
  %v960 = vld [vmem:[#allocation2 + $0x164] sm:$0x1]
  %v961 = vsel %vm872, 0, %v960
  %962 = vst [vmem:[#allocation2 + $0x164] sm:$0x1] %v961
  %v963 = vld [vmem:[#allocation2 + $0x170] sm:$0x1]
  %v964 = vsel %vm872, 0, %v963
  %965 = vst [vmem:[#allocation2 + $0x170] sm:$0x1] %v964
  %v966 = vld [vmem:[#allocation2 + $0x17c] sm:$0x1]
  %v967 = vsel %vm872, 0, %v966
  %968 = vst [vmem:[#allocation2 + $0x17c] sm:$0x1] %v967
  %v969 = vld [vmem:[#allocation2 + $0x188] sm:$0x1]
  %v970 = vsel %vm872, 0, %v969
  %971 = vst [vmem:[#allocation2 + $0x188] sm:$0x1] %v970
  %v972 = vld [vmem:[#allocation2 + $0x194] sm:$0x1]
  %v973 = vsel %vm872, 0, %v972
  %974 = vst [vmem:[#allocation2 + $0x194] sm:$0x1] %v973
  %v975 = vld [vmem:[#allocation2 + $0x1a0] sm:$0x1]
  %v976 = vsel %vm872, 0, %v975
  %977 = vst [vmem:[#allocation2 + $0x1a0] sm:$0x1] %v976
  %v978 = vld [vmem:[#allocation2 + $0x1ac] sm:$0x1]
  %v979 = vsel %vm872, 0, %v978
  %980 = vst [vmem:[#allocation2 + $0x1ac] sm:$0x1] %v979
  %v1013 = vunpack.c.l.b16 %v713
  %v1014 = vunpack.c.h.b16 %v713
  %v1015 = vunpack.c.l.b16 %v714
  %v1016 = vunpack.c.h.b16 %v714
  %v1017 = vunpack.c.l.b16 %v715
  %v1018 = vunpack.c.h.b16 %v715
  %v1019 = vunpack.c.l.b16 %v716
  %v1020 = vunpack.c.h.b16 %v716
  %v1021 = vunpack.c.l.b16 %v717
  %v1022 = vunpack.c.h.b16 %v717
  %v1023 = vunpack.c.l.b16 %v718
  %v1024 = vunpack.c.h.b16 %v718
  %v1025 = vunpack.c.l.b16 %v719
  %v1026 = vunpack.c.h.b16 %v719
  %v1027 = vunpack.c.l.b16 %v720
  %v1028 = vunpack.c.h.b16 %v720
  %v1029 = vunpack.c.l.b16 %v721
  %v1030 = vunpack.c.h.b16 %v721
  %v1031 = vunpack.c.l.b16 %v722
  %v1032 = vunpack.c.h.b16 %v722
  %v1033 = vunpack.c.l.b16 %v723
  %v1034 = vunpack.c.h.b16 %v723
  %v1035 = vunpack.c.l.b16 %v724
  %v1036 = vunpack.c.h.b16 %v724
  %v1037 = vunpack.c.l.b16 %v725
  %v1038 = vunpack.c.h.b16 %v725
  %v1039 = vunpack.c.l.b16 %v726
  %v1040 = vunpack.c.h.b16 %v726
  %v1041 = vunpack.c.l.b16 %v727
  %v1042 = vunpack.c.h.b16 %v727
  %v1043 = vunpack.c.l.b16 %v728
  %v1044 = vunpack.c.h.b16 %v728
  %v1045 = vunpack.c.l.b16 %v729
  %v1046 = vunpack.c.h.b16 %v729
  %v1047 = vunpack.c.l.b16 %v730
  %v1048 = vunpack.c.h.b16 %v730
  %v1049 = vunpack.c.l.b16 %v731
  %v1050 = vunpack.c.h.b16 %v731
  %v1051 = vunpack.c.l.b16 %v732
  %v1052 = vunpack.c.h.b16 %v732
  %v1053 = vunpack.c.l.b16 %v733
  %v1054 = vunpack.c.h.b16 %v733
  %v1055 = vunpack.c.l.b16 %v734
  %v1056 = vunpack.c.h.b16 %v734
  %v1057 = vunpack.c.l.b16 %v735
  %v1058 = vunpack.c.h.b16 %v735
  %v1059 = vunpack.c.l.b16 %v736
  %v1060 = vunpack.c.h.b16 %v736
  %v1061 = vunpack.c.l.b16 %v737
  %v1062 = vunpack.c.h.b16 %v737
  %v1063 = vunpack.c.l.b16 %v738
  %v1064 = vunpack.c.h.b16 %v738
  %v1065 = vunpack.c.l.b16 %v739
  %v1066 = vunpack.c.h.b16 %v739
  %v1067 = vunpack.c.l.b16 %v740
  %v1068 = vunpack.c.h.b16 %v740
  %v1069 = vunpack.c.l.b16 %v741
  %v1070 = vunpack.c.h.b16 %v741
  %v1071 = vunpack.c.l.b16 %v742
  %v1072 = vunpack.c.h.b16 %v742
  %v1073 = vunpack.c.l.b16 %v743
  %v1074 = vunpack.c.h.b16 %v743
  %v1075 = vunpack.c.l.b16 %v744
  %v1076 = vunpack.c.h.b16 %v744
  %v1077 = vpack.c.b16 %v1013, %v1013
  %v1078 = vpack.c.b16 %v1014, %v1014
  %v1079 = vpack.c.b16 %v1015, %v1015
  %v1080 = vpack.c.b16 %v1016, %v1016
  %v1081 = vpack.c.b16 %v1017, %v1017
  %v1082 = vpack.c.b16 %v1018, %v1018
  %v1083 = vpack.c.b16 %v1019, %v1019
  %v1084 = vpack.c.b16 %v1020, %v1020
  %v1085 = vpack.c.b16 %v1021, %v1021
  %v1086 = vpack.c.b16 %v1022, %v1022
  %v1087 = vpack.c.b16 %v1023, %v1023
  %v1088 = vpack.c.b16 %v1024, %v1024
  %v1089 = vpack.c.b16 %v1025, %v1025
  %v1090 = vpack.c.b16 %v1026, %v1026
  %v1091 = vpack.c.b16 %v1027, %v1027
  %v1092 = vpack.c.b16 %v1028, %v1028
  %v1093 = vpack.c.b16 %v1029, %v1029
  %v1094 = vpack.c.b16 %v1030, %v1030
  %v1095 = vpack.c.b16 %v1031, %v1031
  %v1096 = vpack.c.b16 %v1032, %v1032
  %v1097 = vpack.c.b16 %v1033, %v1033
  %v1098 = vpack.c.b16 %v1034, %v1034
  %v1099 = vpack.c.b16 %v1035, %v1035
  %v1100 = vpack.c.b16 %v1036, %v1036
  %v1101 = vpack.c.b16 %v1037, %v1037
  %v1102 = vpack.c.b16 %v1038, %v1038
  %v1103 = vpack.c.b16 %v1039, %v1039
  %v1104 = vpack.c.b16 %v1040, %v1040
  %v1105 = vpack.c.b16 %v1041, %v1041
  %v1106 = vpack.c.b16 %v1042, %v1042
  %v1107 = vpack.c.b16 %v1043, %v1043
  %v1108 = vpack.c.b16 %v1044, %v1044
  %v1109 = vpack.c.b16 %v1045, %v1045
  %v1110 = vpack.c.b16 %v1046, %v1046
  %v1111 = vpack.c.b16 %v1047, %v1047
  %v1112 = vpack.c.b16 %v1048, %v1048
  %v1113 = vpack.c.b16 %v1049, %v1049
  %v1114 = vpack.c.b16 %v1050, %v1050
  %v1115 = vpack.c.b16 %v1051, %v1051
  %v1116 = vpack.c.b16 %v1052, %v1052
  %v1117 = vpack.c.b16 %v1053, %v1053
  %v1118 = vpack.c.b16 %v1054, %v1054
  %v1119 = vpack.c.b16 %v1055, %v1055
  %v1120 = vpack.c.b16 %v1056, %v1056
  %v1121 = vpack.c.b16 %v1057, %v1057
  %v1122 = vpack.c.b16 %v1058, %v1058
  %v1123 = vpack.c.b16 %v1059, %v1059
  %v1124 = vpack.c.b16 %v1060, %v1060
  %v1125 = vpack.c.b16 %v1061, %v1061
  %v1126 = vpack.c.b16 %v1062, %v1062
  %v1127 = vpack.c.b16 %v1063, %v1063
  %v1128 = vpack.c.b16 %v1064, %v1064
  %v1129 = vpack.c.b16 %v1065, %v1065
  %v1130 = vpack.c.b16 %v1066, %v1066
  %v1131 = vpack.c.b16 %v1067, %v1067
  %v1132 = vpack.c.b16 %v1068, %v1068
  %v1133 = vpack.c.b16 %v1069, %v1069
  %v1134 = vpack.c.b16 %v1070, %v1070
  %v1135 = vpack.c.b16 %v1071, %v1071
  %v1136 = vpack.c.b16 %v1072, %v1072
  %v1137 = vpack.c.b16 %v1073, %v1073
  %v1138 = vpack.c.b16 %v1074, %v1074
  %v1139 = vpack.c.b16 %v1075, %v1075
  %v1140 = vpack.c.b16 %v1076, %v1076
  %vm1141 = vsmask.f32 4368
  %vm1142 = vmor %vm761, %vm1141
  %v1144 = vshrl.u32 %v1077, 16
  %v1146 = vrot.slane %v1144, 7
  %v1147 = vshll.u32 %v1077, 16
  %v1149 = vor.u32 %v1146, %v1147
  %v1150 = vrot.slane %v1146, 4
  %v1152 = vshrl.u32 %v1078, 16
  %v1154 = vrot.slane %v1152, 7
  %v1155 = vshll.u32 %v1078, 16
  %v1157 = vor.u32 %v1154, %v1155
  %v1158 = vsel %vm1142, %v1150, %v1157
  %v1159 = vrot.slane %v1154, 4
  %v1161 = vshrl.u32 %v1079, 16
  %v1163 = vrot.slane %v1161, 7
  %v1164 = vshll.u32 %v1079, 16
  %v1166 = vor.u32 %v1163, %v1164
  %v1167 = vrot.slane %v1163, 4
  %v1169 = vshrl.u32 %v1080, 16
  %v1171 = vrot.slane %v1169, 7
  %v1172 = vshll.u32 %v1080, 16
  %v1174 = vor.u32 %v1171, %v1172
  %v1175 = vsel %vm1142, %v1167, %v1174
  %v1176 = vrot.slane %v1171, 4
  %v1178 = vshrl.u32 %v1081, 16
  %v1180 = vrot.slane %v1178, 7
  %v1181 = vshll.u32 %v1081, 16
  %v1183 = vor.u32 %v1180, %v1181
  %v1184 = vrot.slane %v1180, 4
  %v1186 = vshrl.u32 %v1082, 16
  %v1188 = vrot.slane %v1186, 7
  %v1189 = vshll.u32 %v1082, 16
  %v1191 = vor.u32 %v1188, %v1189
  %v1192 = vsel %vm1142, %v1184, %v1191
  %v1193 = vrot.slane %v1188, 4
  %v1195 = vshrl.u32 %v1083, 16
  %v1197 = vrot.slane %v1195, 7
  %v1198 = vshll.u32 %v1083, 16
  %v1200 = vor.u32 %v1197, %v1198
  %v1201 = vrot.slane %v1197, 4
  %v1203 = vshrl.u32 %v1084, 16
  %v1205 = vrot.slane %v1203, 7
  %v1206 = vshll.u32 %v1084, 16
  %v1208 = vor.u32 %v1205, %v1206
  %v1209 = vsel %vm1142, %v1201, %v1208
  %v1210 = vrot.slane %v1205, 4
  %v1212 = vshrl.u32 %v1085, 16
  %v1214 = vrot.slane %v1212, 7
  %v1215 = vshll.u32 %v1085, 16
  %v1217 = vor.u32 %v1214, %v1215
  %v1218 = vrot.slane %v1214, 4
  %v1220 = vshrl.u32 %v1086, 16
  %v1222 = vrot.slane %v1220, 7
  %v1223 = vshll.u32 %v1086, 16
  %v1225 = vor.u32 %v1222, %v1223
  %v1226 = vsel %vm1142, %v1218, %v1225
  %v1227 = vrot.slane %v1222, 4
  %v1229 = vshrl.u32 %v1087, 16
  %v1231 = vrot.slane %v1229, 7
  %v1232 = vshll.u32 %v1087, 16
  %v1234 = vor.u32 %v1231, %v1232
  %v1235 = vrot.slane %v1231, 4
  %v1237 = vshrl.u32 %v1088, 16
  %v1239 = vrot.slane %v1237, 7
  %v1240 = vshll.u32 %v1088, 16
  %v1242 = vor.u32 %v1239, %v1240
  %v1243 = vsel %vm1142, %v1235, %v1242
  %v1244 = vrot.slane %v1239, 4
  %v1246 = vshrl.u32 %v1089, 16
  %v1248 = vrot.slane %v1246, 7
  %v1249 = vshll.u32 %v1089, 16
  %v1251 = vor.u32 %v1248, %v1249
  %v1252 = vrot.slane %v1248, 4
  %v1254 = vshrl.u32 %v1090, 16
  %v1256 = vrot.slane %v1254, 7
  %v1257 = vshll.u32 %v1090, 16
  %v1259 = vor.u32 %v1256, %v1257
  %v1260 = vsel %vm1142, %v1252, %v1259
  %v1261 = vrot.slane %v1256, 4
  %v1263 = vshrl.u32 %v1091, 16
  %v1265 = vrot.slane %v1263, 7
  %v1266 = vshll.u32 %v1091, 16
  %v1268 = vor.u32 %v1265, %v1266
  %v1269 = vrot.slane %v1265, 4
  %v1271 = vshrl.u32 %v1092, 16
  %v1273 = vrot.slane %v1271, 7
  %v1274 = vshll.u32 %v1092, 16
  %v1276 = vor.u32 %v1273, %v1274
  %v1277 = vsel %vm1142, %v1269, %v1276
  %v1278 = vrot.slane %v1273, 4
  %v1280 = vshrl.u32 %v1093, 16
  %v1282 = vrot.slane %v1280, 7
  %v1283 = vshll.u32 %v1093, 16
  %v1285 = vor.u32 %v1282, %v1283
  %v1286 = vrot.slane %v1282, 4
  %v1288 = vshrl.u32 %v1094, 16
  %v1290 = vrot.slane %v1288, 7
  %v1291 = vshll.u32 %v1094, 16
  %v1293 = vor.u32 %v1290, %v1291
  %v1294 = vsel %vm1142, %v1286, %v1293
  %v1295 = vrot.slane %v1290, 4
  %v1297 = vshrl.u32 %v1095, 16
  %v1299 = vrot.slane %v1297, 7
  %v1300 = vshll.u32 %v1095, 16
  %v1302 = vor.u32 %v1299, %v1300
  %v1303 = vrot.slane %v1299, 4
  %v1305 = vshrl.u32 %v1096, 16
  %v1307 = vrot.slane %v1305, 7
  %v1308 = vshll.u32 %v1096, 16
  %v1310 = vor.u32 %v1307, %v1308
  %v1311 = vsel %vm1142, %v1303, %v1310
  %v1312 = vrot.slane %v1307, 4
  %v1314 = vshrl.u32 %v1097, 16
  %v1316 = vrot.slane %v1314, 7
  %v1317 = vshll.u32 %v1097, 16
  %v1319 = vor.u32 %v1316, %v1317
  %v1320 = vrot.slane %v1316, 4
  %v1322 = vshrl.u32 %v1098, 16
  %v1324 = vrot.slane %v1322, 7
  %v1325 = vshll.u32 %v1098, 16
  %v1327 = vor.u32 %v1324, %v1325
  %v1328 = vsel %vm1142, %v1320, %v1327
  %v1329 = vrot.slane %v1324, 4
  %v1331 = vshrl.u32 %v1099, 16
  %v1333 = vrot.slane %v1331, 7
  %v1334 = vshll.u32 %v1099, 16
  %v1336 = vor.u32 %v1333, %v1334
  %v1337 = vrot.slane %v1333, 4
  %v1339 = vshrl.u32 %v1100, 16
  %v1341 = vrot.slane %v1339, 7
  %v1342 = vshll.u32 %v1100, 16
  %v1344 = vor.u32 %v1341, %v1342
  %v1345 = vsel %vm1142, %v1337, %v1344
  %v1346 = vrot.slane %v1341, 4
  %v1348 = vshrl.u32 %v1101, 16
  %v1350 = vrot.slane %v1348, 7
  %v1351 = vshll.u32 %v1101, 16
  %v1353 = vor.u32 %v1350, %v1351
  %v1354 = vrot.slane %v1350, 4
  %v1356 = vshrl.u32 %v1102, 16
  %v1358 = vrot.slane %v1356, 7
  %v1359 = vshll.u32 %v1102, 16
  %v1361 = vor.u32 %v1358, %v1359
  %v1362 = vsel %vm1142, %v1354, %v1361
  %v1363 = vrot.slane %v1358, 4
  %v1365 = vshrl.u32 %v1103, 16
  %v1367 = vrot.slane %v1365, 7
  %v1368 = vshll.u32 %v1103, 16
  %v1370 = vor.u32 %v1367, %v1368
  %v1371 = vrot.slane %v1367, 4
  %v1373 = vshrl.u32 %v1104, 16
  %v1375 = vrot.slane %v1373, 7
  %v1376 = vshll.u32 %v1104, 16
  %v1378 = vor.u32 %v1375, %v1376
  %v1379 = vsel %vm1142, %v1371, %v1378
  %v1380 = vrot.slane %v1375, 4
  %v1382 = vshrl.u32 %v1105, 16
  %v1384 = vrot.slane %v1382, 7
  %v1385 = vshll.u32 %v1105, 16
  %v1387 = vor.u32 %v1384, %v1385
  %v1388 = vrot.slane %v1384, 4
  %v1390 = vshrl.u32 %v1106, 16
  %v1392 = vrot.slane %v1390, 7
  %v1393 = vshll.u32 %v1106, 16
  %v1395 = vor.u32 %v1392, %v1393
  %v1396 = vsel %vm1142, %v1388, %v1395
  %v1397 = vrot.slane %v1392, 4
  %v1399 = vshrl.u32 %v1107, 16
  %v1401 = vrot.slane %v1399, 7
  %v1402 = vshll.u32 %v1107, 16
  %v1404 = vor.u32 %v1401, %v1402
  %v1405 = vrot.slane %v1401, 4
  %v1407 = vshrl.u32 %v1108, 16
  %v1409 = vrot.slane %v1407, 7
  %v1410 = vshll.u32 %v1108, 16
  %v1412 = vor.u32 %v1409, %v1410
  %v1413 = vsel %vm1142, %v1405, %v1412
  %v1414 = vrot.slane %v1409, 4
  %v1416 = vshrl.u32 %v1109, 16
  %v1418 = vrot.slane %v1416, 7
  %v1419 = vshll.u32 %v1109, 16
  %v1421 = vor.u32 %v1418, %v1419
  %v1422 = vrot.slane %v1418, 4
  %v1424 = vshrl.u32 %v1110, 16
  %v1426 = vrot.slane %v1424, 7
  %v1427 = vshll.u32 %v1110, 16
  %v1429 = vor.u32 %v1426, %v1427
  %v1430 = vsel %vm1142, %v1422, %v1429
  %v1431 = vrot.slane %v1426, 4
  %v1433 = vshrl.u32 %v1111, 16
  %v1435 = vrot.slane %v1433, 7
  %v1436 = vshll.u32 %v1111, 16
  %v1438 = vor.u32 %v1435, %v1436
  %v1439 = vrot.slane %v1435, 4
  %v1441 = vshrl.u32 %v1112, 16
  %v1443 = vrot.slane %v1441, 7
  %v1444 = vshll.u32 %v1112, 16
  %v1446 = vor.u32 %v1443, %v1444
  %v1447 = vsel %vm1142, %v1439, %v1446
  %v1448 = vrot.slane %v1443, 4
  %v1450 = vshrl.u32 %v1113, 16
  %v1452 = vrot.slane %v1450, 7
  %v1453 = vshll.u32 %v1113, 16
  %v1455 = vor.u32 %v1452, %v1453
  %v1456 = vrot.slane %v1452, 4
  %v1458 = vshrl.u32 %v1114, 16
  %v1460 = vrot.slane %v1458, 7
  %v1461 = vshll.u32 %v1114, 16
  %v1463 = vor.u32 %v1460, %v1461
  %v1464 = vsel %vm1142, %v1456, %v1463
  %v1465 = vrot.slane %v1460, 4
  %v1467 = vshrl.u32 %v1115, 16
  %v1469 = vrot.slane %v1467, 7
  %v1470 = vshll.u32 %v1115, 16
  %v1472 = vor.u32 %v1469, %v1470
  %v1473 = vrot.slane %v1469, 4
  %v1475 = vshrl.u32 %v1116, 16
  %v1477 = vrot.slane %v1475, 7
  %v1478 = vshll.u32 %v1116, 16
  %v1480 = vor.u32 %v1477, %v1478
  %v1481 = vsel %vm1142, %v1473, %v1480
  %v1482 = vrot.slane %v1477, 4
  %v1484 = vshrl.u32 %v1117, 16
  %v1486 = vrot.slane %v1484, 7
  %v1487 = vshll.u32 %v1117, 16
  %v1489 = vor.u32 %v1486, %v1487
  %v1490 = vrot.slane %v1486, 4
  %v1492 = vshrl.u32 %v1118, 16
  %v1494 = vrot.slane %v1492, 7
  %v1495 = vshll.u32 %v1118, 16
  %v1497 = vor.u32 %v1494, %v1495
  %v1498 = vsel %vm1142, %v1490, %v1497
  %v1499 = vrot.slane %v1494, 4
  %v1501 = vshrl.u32 %v1119, 16
  %v1503 = vrot.slane %v1501, 7
  %v1504 = vshll.u32 %v1119, 16
  %v1506 = vor.u32 %v1503, %v1504
  %v1507 = vrot.slane %v1503, 4
  %v1509 = vshrl.u32 %v1120, 16
  %v1511 = vrot.slane %v1509, 7
  %v1512 = vshll.u32 %v1120, 16
  %v1514 = vor.u32 %v1511, %v1512
  %v1515 = vsel %vm1142, %v1507, %v1514
  %v1516 = vrot.slane %v1511, 4
  %v1518 = vshrl.u32 %v1121, 16
  %v1520 = vrot.slane %v1518, 7
  %v1521 = vshll.u32 %v1121, 16
  %v1523 = vor.u32 %v1520, %v1521
  %v1524 = vrot.slane %v1520, 4
  %v1526 = vshrl.u32 %v1122, 16
  %v1528 = vrot.slane %v1526, 7
  %v1529 = vshll.u32 %v1122, 16
  %v1531 = vor.u32 %v1528, %v1529
  %v1532 = vsel %vm1142, %v1524, %v1531
  %v1533 = vrot.slane %v1528, 4
  %v1535 = vshrl.u32 %v1123, 16
  %v1537 = vrot.slane %v1535, 7
  %v1538 = vshll.u32 %v1123, 16
  %v1540 = vor.u32 %v1537, %v1538
  %v1541 = vrot.slane %v1537, 4
  %v1543 = vshrl.u32 %v1124, 16
  %v1545 = vrot.slane %v1543, 7
  %v1546 = vshll.u32 %v1124, 16
  %v1548 = vor.u32 %v1545, %v1546
  %v1549 = vsel %vm1142, %v1541, %v1548
  %v1550 = vrot.slane %v1545, 4
  %v1552 = vshrl.u32 %v1125, 16
  %v1554 = vrot.slane %v1552, 7
  %v1555 = vshll.u32 %v1125, 16
  %v1557 = vor.u32 %v1554, %v1555
  %v1558 = vrot.slane %v1554, 4
  %v1560 = vshrl.u32 %v1126, 16
  %v1562 = vrot.slane %v1560, 7
  %v1563 = vshll.u32 %v1126, 16
  %v1565 = vor.u32 %v1562, %v1563
  %v1566 = vsel %vm1142, %v1558, %v1565
  %v1567 = vrot.slane %v1562, 4
  %v1569 = vshrl.u32 %v1127, 16
  %v1571 = vrot.slane %v1569, 7
  %v1572 = vshll.u32 %v1127, 16
  %v1574 = vor.u32 %v1571, %v1572
  %v1575 = vrot.slane %v1571, 4
  %v1577 = vshrl.u32 %v1128, 16
  %v1579 = vrot.slane %v1577, 7
  %v1580 = vshll.u32 %v1128, 16
  %v1582 = vor.u32 %v1579, %v1580
  %v1583 = vsel %vm1142, %v1575, %v1582
  %v1584 = vrot.slane %v1579, 4
  %v1586 = vshrl.u32 %v1129, 16
  %v1588 = vrot.slane %v1586, 7
  %v1589 = vshll.u32 %v1129, 16
  %v1591 = vor.u32 %v1588, %v1589
  %v1592 = vrot.slane %v1588, 4
  %v1594 = vshrl.u32 %v1130, 16
  %v1596 = vrot.slane %v1594, 7
  %v1597 = vshll.u32 %v1130, 16
  %v1599 = vor.u32 %v1596, %v1597
  %v1600 = vsel %vm1142, %v1592, %v1599
  %v1601 = vrot.slane %v1596, 4
  %v1603 = vshrl.u32 %v1131, 16
  %v1605 = vrot.slane %v1603, 7
  %v1606 = vshll.u32 %v1131, 16
  %v1608 = vor.u32 %v1605, %v1606
  %v1609 = vrot.slane %v1605, 4
  %v1611 = vshrl.u32 %v1132, 16
  %v1613 = vrot.slane %v1611, 7
  %v1614 = vshll.u32 %v1132, 16
  %v1616 = vor.u32 %v1613, %v1614
  %v1617 = vsel %vm1142, %v1609, %v1616
  %v1618 = vrot.slane %v1613, 4
  %v1620 = vshrl.u32 %v1133, 16
  %v1622 = vrot.slane %v1620, 7
  %v1623 = vshll.u32 %v1133, 16
  %v1625 = vor.u32 %v1622, %v1623
  %v1626 = vrot.slane %v1622, 4
  %v1628 = vshrl.u32 %v1134, 16
  %v1630 = vrot.slane %v1628, 7
  %v1631 = vshll.u32 %v1134, 16
  %v1633 = vor.u32 %v1630, %v1631
  %v1634 = vsel %vm1142, %v1626, %v1633
  %v1635 = vrot.slane %v1630, 4
  %v1637 = vshrl.u32 %v1135, 16
  %v1639 = vrot.slane %v1637, 7
  %v1640 = vshll.u32 %v1135, 16
  %v1642 = vor.u32 %v1639, %v1640
  %v1643 = vrot.slane %v1639, 4
  %v1645 = vshrl.u32 %v1136, 16
  %v1647 = vrot.slane %v1645, 7
  %v1648 = vshll.u32 %v1136, 16
  %v1650 = vor.u32 %v1647, %v1648
  %v1651 = vsel %vm1142, %v1643, %v1650
  %v1652 = vrot.slane %v1647, 4
  %v1654 = vshrl.u32 %v1137, 16
  %v1656 = vrot.slane %v1654, 7
  %v1657 = vshll.u32 %v1137, 16
  %v1659 = vor.u32 %v1656, %v1657
  %v1660 = vrot.slane %v1656, 4
  %v1662 = vshrl.u32 %v1138, 16
  %v1664 = vrot.slane %v1662, 7
  %v1665 = vshll.u32 %v1138, 16
  %v1667 = vor.u32 %v1664, %v1665
  %v1668 = vsel %vm1142, %v1660, %v1667
  %v1669 = vrot.slane %v1664, 4
  %v1671 = vshrl.u32 %v1139, 16
  %v1673 = vrot.slane %v1671, 7
  %v1674 = vshll.u32 %v1139, 16
  %v1676 = vor.u32 %v1673, %v1674
  %v1677 = vrot.slane %v1673, 4
  %v1679 = vshrl.u32 %v1140, 16
  %v1681 = vrot.slane %v1679, 7
  %v1682 = vshll.u32 %v1140, 16
  %v1684 = vor.u32 %v1681, %v1682
  %v1685 = vsel %vm1142, %v1677, %v1684
  %v1686 = vrot.slane %v1681, 4
  %s1783 = scalar_lea.vmem [#allocation2], 12
  %vm1784 = vcmask 257024
  %vm1785 = vmand %vm1784, %vm871
  %v1786 = vld [vmem:[%s1783] sm:$0xf]
  %v1787 = vsel %vm1785, %v1149, %v1786
  %1788 = vst [vmem:[%s1783] sm:$0xf] %v1787
  %1789 = vst.msk [vmem:[%s1783 + $0x4] sm:$0xf] %vm745, %v1158
  %v1790 = vld [vmem:[%s1783 + $0x8] sm:$0x1]
  %v1791 = vsel %vm762, %v1159, %v1790
  %1792 = vst [vmem:[%s1783 + $0x8] sm:$0x1] %v1791
  %v1793 = vld [vmem:[%s1783 + $0xc] sm:$0xf]
  %v1794 = vsel %vm1785, %v1166, %v1793
  %1795 = vst [vmem:[%s1783 + $0xc] sm:$0xf] %v1794
  %1796 = vst.msk [vmem:[%s1783 + $0x10] sm:$0xf] %vm745, %v1175
  %v1797 = vld [vmem:[%s1783 + $0x14] sm:$0x1]
  %v1798 = vsel %vm762, %v1176, %v1797
  %1799 = vst [vmem:[%s1783 + $0x14] sm:$0x1] %v1798
  %v1800 = vld [vmem:[%s1783 + $0x18] sm:$0xf]
  %v1801 = vsel %vm1785, %v1183, %v1800
  %1802 = vst [vmem:[%s1783 + $0x18] sm:$0xf] %v1801
  %1803 = vst.msk [vmem:[%s1783 + $0x1c] sm:$0xf] %vm745, %v1192
  %v1804 = vld [vmem:[%s1783 + $0x20] sm:$0x1]
  %v1805 = vsel %vm762, %v1193, %v1804
  %1806 = vst [vmem:[%s1783 + $0x20] sm:$0x1] %v1805
  %v1807 = vld [vmem:[%s1783 + $0x24] sm:$0xf]
  %v1808 = vsel %vm1785, %v1200, %v1807
  %1809 = vst [vmem:[%s1783 + $0x24] sm:$0xf] %v1808
  %1810 = vst.msk [vmem:[%s1783 + $0x28] sm:$0xf] %vm745, %v1209
  %v1811 = vld [vmem:[%s1783 + $0x2c] sm:$0x1]
  %v1812 = vsel %vm762, %v1210, %v1811
  %1813 = vst [vmem:[%s1783 + $0x2c] sm:$0x1] %v1812
  %v1814 = vld [vmem:[%s1783 + $0x30] sm:$0xf]
  %v1815 = vsel %vm1785, %v1217, %v1814
  %1816 = vst [vmem:[%s1783 + $0x30] sm:$0xf] %v1815
  %1817 = vst.msk [vmem:[%s1783 + $0x34] sm:$0xf] %vm745, %v1226
  %v1818 = vld [vmem:[%s1783 + $0x38] sm:$0x1]
  %v1819 = vsel %vm762, %v1227, %v1818
  %1820 = vst [vmem:[%s1783 + $0x38] sm:$0x1] %v1819
  %v1821 = vld [vmem:[%s1783 + $0x3c] sm:$0xf]
  %v1822 = vsel %vm1785, %v1234, %v1821
  %1823 = vst [vmem:[%s1783 + $0x3c] sm:$0xf] %v1822
  %1824 = vst.msk [vmem:[%s1783 + $0x40] sm:$0xf] %vm745, %v1243
  %v1825 = vld [vmem:[%s1783 + $0x44] sm:$0x1]
  %v1826 = vsel %vm762, %v1244, %v1825
  %1827 = vst [vmem:[%s1783 + $0x44] sm:$0x1] %v1826
  %v1828 = vld [vmem:[%s1783 + $0x48] sm:$0xf]
  %v1829 = vsel %vm1785, %v1251, %v1828
  %1830 = vst [vmem:[%s1783 + $0x48] sm:$0xf] %v1829
  %1831 = vst.msk [vmem:[%s1783 + $0x4c] sm:$0xf] %vm745, %v1260
  %v1832 = vld [vmem:[%s1783 + $0x50] sm:$0x1]
  %v1833 = vsel %vm762, %v1261, %v1832
  %1834 = vst [vmem:[%s1783 + $0x50] sm:$0x1] %v1833
  %v1835 = vld [vmem:[%s1783 + $0x54] sm:$0xf]
  %v1836 = vsel %vm1785, %v1268, %v1835
  %1837 = vst [vmem:[%s1783 + $0x54] sm:$0xf] %v1836
  %1838 = vst.msk [vmem:[%s1783 + $0x58] sm:$0xf] %vm745, %v1277
  %v1839 = vld [vmem:[%s1783 + $0x5c] sm:$0x1]
  %v1840 = vsel %vm762, %v1278, %v1839
  %1841 = vst [vmem:[%s1783 + $0x5c] sm:$0x1] %v1840
  %v1842 = vld [vmem:[%s1783 + $0x60] sm:$0xf]
  %v1843 = vsel %vm1785, %v1285, %v1842
  %1844 = vst [vmem:[%s1783 + $0x60] sm:$0xf] %v1843
  %1845 = vst.msk [vmem:[%s1783 + $0x64] sm:$0xf] %vm745, %v1294
  %v1846 = vld [vmem:[%s1783 + $0x68] sm:$0x1]
  %v1847 = vsel %vm762, %v1295, %v1846
  %1848 = vst [vmem:[%s1783 + $0x68] sm:$0x1] %v1847
  %v1849 = vld [vmem:[%s1783 + $0x6c] sm:$0xf]
  %v1850 = vsel %vm1785, %v1302, %v1849
  %1851 = vst [vmem:[%s1783 + $0x6c] sm:$0xf] %v1850
  %1852 = vst.msk [vmem:[%s1783 + $0x70] sm:$0xf] %vm745, %v1311
  %v1853 = vld [vmem:[%s1783 + $0x74] sm:$0x1]
  %v1854 = vsel %vm762, %v1312, %v1853
  %1855 = vst [vmem:[%s1783 + $0x74] sm:$0x1] %v1854
  %v1856 = vld [vmem:[%s1783 + $0x78] sm:$0xf]
  %v1857 = vsel %vm1785, %v1319, %v1856
  %1858 = vst [vmem:[%s1783 + $0x78] sm:$0xf] %v1857
  %1859 = vst.msk [vmem:[%s1783 + $0x7c] sm:$0xf] %vm745, %v1328
  %v1860 = vld [vmem:[%s1783 + $0x80] sm:$0x1]
  %v1861 = vsel %vm762, %v1329, %v1860
  %1862 = vst [vmem:[%s1783 + $0x80] sm:$0x1] %v1861
  %v1863 = vld [vmem:[%s1783 + $0x84] sm:$0xf]
  %v1864 = vsel %vm1785, %v1336, %v1863
  %1865 = vst [vmem:[%s1783 + $0x84] sm:$0xf] %v1864
  %1866 = vst.msk [vmem:[%s1783 + $0x88] sm:$0xf] %vm745, %v1345
  %v1867 = vld [vmem:[%s1783 + $0x8c] sm:$0x1]
  %v1868 = vsel %vm762, %v1346, %v1867
  %1869 = vst [vmem:[%s1783 + $0x8c] sm:$0x1] %v1868
  %v1870 = vld [vmem:[%s1783 + $0x90] sm:$0xf]
  %v1871 = vsel %vm1785, %v1353, %v1870
  %1872 = vst [vmem:[%s1783 + $0x90] sm:$0xf] %v1871
  %1873 = vst.msk [vmem:[%s1783 + $0x94] sm:$0xf] %vm745, %v1362
  %v1874 = vld [vmem:[%s1783 + $0x98] sm:$0x1]
  %v1875 = vsel %vm762, %v1363, %v1874
  %1876 = vst [vmem:[%s1783 + $0x98] sm:$0x1] %v1875
  %v1877 = vld [vmem:[%s1783 + $0x9c] sm:$0xf]
  %v1878 = vsel %vm1785, %v1370, %v1877
  %1879 = vst [vmem:[%s1783 + $0x9c] sm:$0xf] %v1878
  %1880 = vst.msk [vmem:[%s1783 + $0xa0] sm:$0xf] %vm745, %v1379
  %v1881 = vld [vmem:[%s1783 + $0xa4] sm:$0x1]
  %v1882 = vsel %vm762, %v1380, %v1881
  %1883 = vst [vmem:[%s1783 + $0xa4] sm:$0x1] %v1882
  %v1884 = vld [vmem:[%s1783 + $0xa8] sm:$0xf]
  %v1885 = vsel %vm1785, %v1387, %v1884
  %1886 = vst [vmem:[%s1783 + $0xa8] sm:$0xf] %v1885
  %1887 = vst.msk [vmem:[%s1783 + $0xac] sm:$0xf] %vm745, %v1396
  %v1888 = vld [vmem:[%s1783 + $0xb0] sm:$0x1]
  %v1889 = vsel %vm762, %v1397, %v1888
  %1890 = vst [vmem:[%s1783 + $0xb0] sm:$0x1] %v1889
  %v1891 = vld [vmem:[%s1783 + $0xb4] sm:$0xf]
  %v1892 = vsel %vm1785, %v1404, %v1891
  %1893 = vst [vmem:[%s1783 + $0xb4] sm:$0xf] %v1892
  %1894 = vst.msk [vmem:[%s1783 + $0xb8] sm:$0xf] %vm745, %v1413
  %v1895 = vld [vmem:[%s1783 + $0xbc] sm:$0x1]
  %v1896 = vsel %vm762, %v1414, %v1895
  %1897 = vst [vmem:[%s1783 + $0xbc] sm:$0x1] %v1896
  %v1898 = vld [vmem:[%s1783 + $0xd8] sm:$0xf]
  %v1899 = vsel %vm1785, %v1421, %v1898
  %1900 = vst [vmem:[%s1783 + $0xd8] sm:$0xf] %v1899
  %1901 = vst.msk [vmem:[%s1783 + $0xdc] sm:$0xf] %vm745, %v1430
  %v1902 = vld [vmem:[%s1783 + $0xe0] sm:$0x1]
  %v1903 = vsel %vm762, %v1431, %v1902
  %1904 = vst [vmem:[%s1783 + $0xe0] sm:$0x1] %v1903
  %v1905 = vld [vmem:[%s1783 + $0xe4] sm:$0xf]
  %v1906 = vsel %vm1785, %v1438, %v1905
  %1907 = vst [vmem:[%s1783 + $0xe4] sm:$0xf] %v1906
  %1908 = vst.msk [vmem:[%s1783 + $0xe8] sm:$0xf] %vm745, %v1447
  %v1909 = vld [vmem:[%s1783 + $0xec] sm:$0x1]
  %v1910 = vsel %vm762, %v1448, %v1909
  %1911 = vst [vmem:[%s1783 + $0xec] sm:$0x1] %v1910
  %v1912 = vld [vmem:[%s1783 + $0xf0] sm:$0xf]
  %v1913 = vsel %vm1785, %v1455, %v1912
  %1914 = vst [vmem:[%s1783 + $0xf0] sm:$0xf] %v1913
  %1915 = vst.msk [vmem:[%s1783 + $0xf4] sm:$0xf] %vm745, %v1464
  %v1916 = vld [vmem:[%s1783 + $0xf8] sm:$0x1]
  %v1917 = vsel %vm762, %v1465, %v1916
  %1918 = vst [vmem:[%s1783 + $0xf8] sm:$0x1] %v1917
  %v1919 = vld [vmem:[%s1783 + $0xfc] sm:$0xf]
  %v1920 = vsel %vm1785, %v1472, %v1919
  %1921 = vst [vmem:[%s1783 + $0xfc] sm:$0xf] %v1920
  %1922 = vst.msk [vmem:[%s1783 + $0x100] sm:$0xf] %vm745, %v1481
  %v1923 = vld [vmem:[%s1783 + $0x104] sm:$0x1]
  %v1924 = vsel %vm762, %v1482, %v1923
  %1925 = vst [vmem:[%s1783 + $0x104] sm:$0x1] %v1924
  %v1926 = vld [vmem:[%s1783 + $0x108] sm:$0xf]
  %v1927 = vsel %vm1785, %v1489, %v1926
  %1928 = vst [vmem:[%s1783 + $0x108] sm:$0xf] %v1927
  %1929 = vst.msk [vmem:[%s1783 + $0x10c] sm:$0xf] %vm745, %v1498
  %v1930 = vld [vmem:[%s1783 + $0x110] sm:$0x1]
  %v1931 = vsel %vm762, %v1499, %v1930
  %1932 = vst [vmem:[%s1783 + $0x110] sm:$0x1] %v1931
  %v1933 = vld [vmem:[%s1783 + $0x114] sm:$0xf]
  %v1934 = vsel %vm1785, %v1506, %v1933
  %1935 = vst [vmem:[%s1783 + $0x114] sm:$0xf] %v1934
  %1936 = vst.msk [vmem:[%s1783 + $0x118] sm:$0xf] %vm745, %v1515
  %v1937 = vld [vmem:[%s1783 + $0x11c] sm:$0x1]
  %v1938 = vsel %vm762, %v1516, %v1937
  %1939 = vst [vmem:[%s1783 + $0x11c] sm:$0x1] %v1938
  %v1940 = vld [vmem:[%s1783 + $0x120] sm:$0xf]
  %v1941 = vsel %vm1785, %v1523, %v1940
  %1942 = vst [vmem:[%s1783 + $0x120] sm:$0xf] %v1941
  %1943 = vst.msk [vmem:[%s1783 + $0x124] sm:$0xf] %vm745, %v1532
  %v1944 = vld [vmem:[%s1783 + $0x128] sm:$0x1]
  %v1945 = vsel %vm762, %v1533, %v1944
  %1946 = vst [vmem:[%s1783 + $0x128] sm:$0x1] %v1945
  %v1947 = vld [vmem:[%s1783 + $0x12c] sm:$0xf]
  %v1948 = vsel %vm1785, %v1540, %v1947
  %1949 = vst [vmem:[%s1783 + $0x12c] sm:$0xf] %v1948
  %1950 = vst.msk [vmem:[%s1783 + $0x130] sm:$0xf] %vm745, %v1549
  %v1951 = vld [vmem:[%s1783 + $0x134] sm:$0x1]
  %v1952 = vsel %vm762, %v1550, %v1951
  %1953 = vst [vmem:[%s1783 + $0x134] sm:$0x1] %v1952
  %v1954 = vld [vmem:[%s1783 + $0x138] sm:$0xf]
  %v1955 = vsel %vm1785, %v1557, %v1954
  %1956 = vst [vmem:[%s1783 + $0x138] sm:$0xf] %v1955
  %1957 = vst.msk [vmem:[%s1783 + $0x13c] sm:$0xf] %vm745, %v1566
  %v1958 = vld [vmem:[%s1783 + $0x140] sm:$0x1]
  %v1959 = vsel %vm762, %v1567, %v1958
  %1960 = vst [vmem:[%s1783 + $0x140] sm:$0x1] %v1959
  %v1961 = vld [vmem:[%s1783 + $0x144] sm:$0xf]
  %v1962 = vsel %vm1785, %v1574, %v1961
  %1963 = vst [vmem:[%s1783 + $0x144] sm:$0xf] %v1962
  %1964 = vst.msk [vmem:[%s1783 + $0x148] sm:$0xf] %vm745, %v1583
  %v1965 = vld [vmem:[%s1783 + $0x14c] sm:$0x1]
  %v1966 = vsel %vm762, %v1584, %v1965
  %1967 = vst [vmem:[%s1783 + $0x14c] sm:$0x1] %v1966
  %v1968 = vld [vmem:[%s1783 + $0x150] sm:$0xf]
  %v1969 = vsel %vm1785, %v1591, %v1968
  %1970 = vst [vmem:[%s1783 + $0x150] sm:$0xf] %v1969
  %1971 = vst.msk [vmem:[%s1783 + $0x154] sm:$0xf] %vm745, %v1600
  %v1972 = vld [vmem:[%s1783 + $0x158] sm:$0x1]
  %v1973 = vsel %vm762, %v1601, %v1972
  %1974 = vst [vmem:[%s1783 + $0x158] sm:$0x1] %v1973
  %v1975 = vld [vmem:[%s1783 + $0x15c] sm:$0xf]
  %v1976 = vsel %vm1785, %v1608, %v1975
  %1977 = vst [vmem:[%s1783 + $0x15c] sm:$0xf] %v1976
  %1978 = vst.msk [vmem:[%s1783 + $0x160] sm:$0xf] %vm745, %v1617
  %v1979 = vld [vmem:[%s1783 + $0x164] sm:$0x1]
  %v1980 = vsel %vm762, %v1618, %v1979
  %1981 = vst [vmem:[%s1783 + $0x164] sm:$0x1] %v1980
  %v1982 = vld [vmem:[%s1783 + $0x168] sm:$0xf]
  %v1983 = vsel %vm1785, %v1625, %v1982
  %1984 = vst [vmem:[%s1783 + $0x168] sm:$0xf] %v1983
  %1985 = vst.msk [vmem:[%s1783 + $0x16c] sm:$0xf] %vm745, %v1634
  %v1986 = vld [vmem:[%s1783 + $0x170] sm:$0x1]
  %v1987 = vsel %vm762, %v1635, %v1986
  %1988 = vst [vmem:[%s1783 + $0x170] sm:$0x1] %v1987
  %v1989 = vld [vmem:[%s1783 + $0x174] sm:$0xf]
  %v1990 = vsel %vm1785, %v1642, %v1989
  %1991 = vst [vmem:[%s1783 + $0x174] sm:$0xf] %v1990
  %1992 = vst.msk [vmem:[%s1783 + $0x178] sm:$0xf] %vm745, %v1651
  %v1993 = vld [vmem:[%s1783 + $0x17c] sm:$0x1]
  %v1994 = vsel %vm762, %v1652, %v1993
  %1995 = vst [vmem:[%s1783 + $0x17c] sm:$0x1] %v1994
  %v1996 = vld [vmem:[%s1783 + $0x180] sm:$0xf]
  %v1997 = vsel %vm1785, %v1659, %v1996
  %1998 = vst [vmem:[%s1783 + $0x180] sm:$0xf] %v1997
  %1999 = vst.msk [vmem:[%s1783 + $0x184] sm:$0xf] %vm745, %v1668
  %v2000 = vld [vmem:[%s1783 + $0x188] sm:$0x1]
  %v2001 = vsel %vm762, %v1669, %v2000
  %2002 = vst [vmem:[%s1783 + $0x188] sm:$0x1] %v2001
  %v2003 = vld [vmem:[%s1783 + $0x18c] sm:$0xf]
  %v2004 = vsel %vm1785, %v1676, %v2003
  %2005 = vst [vmem:[%s1783 + $0x18c] sm:$0xf] %v2004
  %2006 = vst.msk [vmem:[%s1783 + $0x190] sm:$0xf] %vm745, %v1685
  %v2007 = vld [vmem:[%s1783 + $0x194] sm:$0x1]
  %v2008 = vsel %vm762, %v1686, %v2007
  %2009 = vst [vmem:[%s1783 + $0x194] sm:$0x1] %v2008
  %v2010 = vld [vmem:[#allocation2] sm:$0xf]
  %v2011 = vld [vmem:[#allocation2 + $0x4] sm:$0xf]
  %v2012 = vld [vmem:[#allocation2 + $0xc] sm:$0xf]
  %v2013 = vld [vmem:[#allocation2 + $0x10] sm:$0xf]
  %v2014 = vld [vmem:[#allocation2 + $0x18] sm:$0xf]
  %v2015 = vld [vmem:[#allocation2 + $0x1c] sm:$0xf]
  %v2016 = vld [vmem:[#allocation2 + $0x24] sm:$0xf]
  %v2017 = vld [vmem:[#allocation2 + $0x28] sm:$0xf]
  %v2018 = vld [vmem:[#allocation2 + $0x30] sm:$0xf]
  %v2019 = vld [vmem:[#allocation2 + $0x34] sm:$0xf]
  %v2020 = vld [vmem:[#allocation2 + $0x3c] sm:$0xf]
  %v2021 = vld [vmem:[#allocation2 + $0x40] sm:$0xf]
  %v2022 = vld [vmem:[#allocation2 + $0x48] sm:$0xf]
  %v2023 = vld [vmem:[#allocation2 + $0x4c] sm:$0xf]
  %v2024 = vld [vmem:[#allocation2 + $0x54] sm:$0xf]
  %v2025 = vld [vmem:[#allocation2 + $0x58] sm:$0xf]
  %v2026 = vld [vmem:[#allocation2 + $0x60] sm:$0xf]
  %v2027 = vld [vmem:[#allocation2 + $0x64] sm:$0xf]
  %v2028 = vld [vmem:[#allocation2 + $0x6c] sm:$0xf]
  %v2029 = vld [vmem:[#allocation2 + $0x70] sm:$0xf]
  %v2030 = vld [vmem:[#allocation2 + $0x78] sm:$0xf]
  %v2031 = vld [vmem:[#allocation2 + $0x7c] sm:$0xf]
  %v2032 = vld [vmem:[#allocation2 + $0x84] sm:$0xf]
  %v2033 = vld [vmem:[#allocation2 + $0x88] sm:$0xf]
  %v2034 = vld [vmem:[#allocation2 + $0x90] sm:$0xf]
  %v2035 = vld [vmem:[#allocation2 + $0x94] sm:$0xf]
  %v2036 = vld [vmem:[#allocation2 + $0x9c] sm:$0xf]
  %v2037 = vld [vmem:[#allocation2 + $0xa0] sm:$0xf]
  %v2038 = vld [vmem:[#allocation2 + $0xa8] sm:$0xf]
  %v2039 = vld [vmem:[#allocation2 + $0xac] sm:$0xf]
  %v2040 = vld [vmem:[#allocation2 + $0xb4] sm:$0xf]
  %v2041 = vld [vmem:[#allocation2 + $0xb8] sm:$0xf]
  %v2042 = vld [vmem:[#allocation2 + $0xd8] sm:$0xf]
  %v2043 = vld [vmem:[#allocation2 + $0xdc] sm:$0xf]
  %v2044 = vld [vmem:[#allocation2 + $0xe4] sm:$0xf]
  %v2045 = vld [vmem:[#allocation2 + $0xe8] sm:$0xf]
  %v2046 = vld [vmem:[#allocation2 + $0xf0] sm:$0xf]
  %v2047 = vld [vmem:[#allocation2 + $0xf4] sm:$0xf]
  %v2048 = vld [vmem:[#allocation2 + $0xfc] sm:$0xf]
  %v2049 = vld [vmem:[#allocation2 + $0x100] sm:$0xf]
  %v2050 = vld [vmem:[#allocation2 + $0x108] sm:$0xf]
  %v2051 = vld [vmem:[#allocation2 + $0x10c] sm:$0xf]
  %v2052 = vld [vmem:[#allocation2 + $0x114] sm:$0xf]
  %v2053 = vld [vmem:[#allocation2 + $0x118] sm:$0xf]
  %v2054 = vld [vmem:[#allocation2 + $0x120] sm:$0xf]
  %v2055 = vld [vmem:[#allocation2 + $0x124] sm:$0xf]
  %v2056 = vld [vmem:[#allocation2 + $0x12c] sm:$0xf]
  %v2057 = vld [vmem:[#allocation2 + $0x130] sm:$0xf]
  %v2058 = vld [vmem:[#allocation2 + $0x138] sm:$0xf]
  %v2059 = vld [vmem:[#allocation2 + $0x13c] sm:$0xf]
  %v2060 = vld [vmem:[#allocation2 + $0x144] sm:$0xf]
  %v2061 = vld [vmem:[#allocation2 + $0x148] sm:$0xf]
  %v2062 = vld [vmem:[#allocation2 + $0x150] sm:$0xf]
  %v2063 = vld [vmem:[#allocation2 + $0x154] sm:$0xf]
  %v2064 = vld [vmem:[#allocation2 + $0x15c] sm:$0xf]
  %v2065 = vld [vmem:[#allocation2 + $0x160] sm:$0xf]
  %v2066 = vld [vmem:[#allocation2 + $0x168] sm:$0xf]
  %v2067 = vld [vmem:[#allocation2 + $0x16c] sm:$0xf]
  %v2068 = vld [vmem:[#allocation2 + $0x174] sm:$0xf]
  %v2069 = vld [vmem:[#allocation2 + $0x178] sm:$0xf]
  %v2070 = vld [vmem:[#allocation2 + $0x180] sm:$0xf]
  %v2071 = vld [vmem:[#allocation2 + $0x184] sm:$0xf]
  %v2072 = vld [vmem:[#allocation2 + $0x18c] sm:$0xf]
  %v2073 = vld [vmem:[#allocation2 + $0x190] sm:$0xf]
  %v2074 = vld [vmem:[%s2] sm:$0xf]
  %v2075 = vld [vmem:[%s2 + $0x4] sm:$0xf]
  %v2076 = vld [vmem:[%s2 + $0x8] sm:$0xf]
  %v2077 = vld [vmem:[%s2 + $0xc] sm:$0xf]
  %v2078 = vld [vmem:[#allocation2 + $0x8] sm:$0x1]
  %v2079 = vld [vmem:[#allocation2 + $0x14] sm:$0x1]
  %v2080 = vld [vmem:[#allocation2 + $0x20] sm:$0x1]
  %v2081 = vld [vmem:[#allocation2 + $0x2c] sm:$0x1]
  %v2082 = vld [vmem:[#allocation2 + $0x38] sm:$0x1]
  %v2083 = vld [vmem:[#allocation2 + $0x44] sm:$0x1]
  %v2084 = vld [vmem:[#allocation2 + $0x50] sm:$0x1]
  %v2085 = vld [vmem:[#allocation2 + $0x5c] sm:$0x1]
  %v2086 = vld [vmem:[#allocation2 + $0x68] sm:$0x1]
  %v2087 = vld [vmem:[#allocation2 + $0x74] sm:$0x1]
  %v2088 = vld [vmem:[#allocation2 + $0x80] sm:$0x1]
  %v2089 = vld [vmem:[#allocation2 + $0x8c] sm:$0x1]
  %v2090 = vld [vmem:[#allocation2 + $0x98] sm:$0x1]
  %v2091 = vld [vmem:[#allocation2 + $0xa4] sm:$0x1]
  %v2092 = vld [vmem:[#allocation2 + $0xb0] sm:$0x1]
  %v2093 = vld [vmem:[#allocation2 + $0xbc] sm:$0x1]
  %v2094 = vld [vmem:[#allocation2 + $0xe0] sm:$0x1]
  %v2095 = vld [vmem:[#allocation2 + $0xec] sm:$0x1]
  %v2096 = vld [vmem:[#allocation2 + $0xf8] sm:$0x1]
  %v2097 = vld [vmem:[#allocation2 + $0x104] sm:$0x1]
  %v2098 = vld [vmem:[#allocation2 + $0x110] sm:$0x1]
  %v2099 = vld [vmem:[#allocation2 + $0x11c] sm:$0x1]
  %v2100 = vld [vmem:[#allocation2 + $0x128] sm:$0x1]
  %v2101 = vld [vmem:[#allocation2 + $0x134] sm:$0x1]
  %v2102 = vld [vmem:[#allocation2 + $0x140] sm:$0x1]
  %v2103 = vld [vmem:[#allocation2 + $0x14c] sm:$0x1]
  %v2104 = vld [vmem:[#allocation2 + $0x158] sm:$0x1]
  %v2105 = vld [vmem:[#allocation2 + $0x164] sm:$0x1]
  %v2106 = vld [vmem:[#allocation2 + $0x170] sm:$0x1]
  %v2107 = vld [vmem:[#allocation2 + $0x17c] sm:$0x1]
  %v2108 = vld [vmem:[#allocation2 + $0x188] sm:$0x1]
  %v2109 = vld [vmem:[#allocation2 + $0x194] sm:$0x1]
  %vm2110 = vsmask.f32 3328
  %vm2111 = vsmask.f32 7440
  %vm2112 = vmor %vm2110, %vm2111
  %v2114 = vshrl.u32 %v2010, 16
  %v2116 = vrot.slane %v2114, 4
  %v2117 = vshll.u32 %v2010, 16
  %v2119 = vrot.slane %v2117, 5
  %v2120 = vor.u32 %v2116, %v2119
  %v2121 = vrot.slane %v2120, 4
  %v2123 = vshll.u32 %v2011, 16
  %v2125 = vrot.slane %v2123, 5
  %v2126 = vsel %vm2112, %v2121, %v2125
  %v2127 = vshrl.u32 %v2011, 16
  %v2129 = vrot.slane %v2127, 4
  %v2130 = vor.u32 %v2129, %v2125
  %v2131 = vrot.slane %v2130, 4
  %v2133 = vshll.u32 %v2078, 16
  %v2135 = vrot.slane %v2133, 5
  %v2136 = vsel %vm2112, %v2131, %v2135
  %v2138 = vshrl.u32 %v2012, 16
  %v2140 = vrot.slane %v2138, 4
  %v2141 = vshll.u32 %v2012, 16
  %v2143 = vrot.slane %v2141, 5
  %v2144 = vor.u32 %v2140, %v2143
  %v2145 = vrot.slane %v2144, 4
  %v2147 = vshll.u32 %v2013, 16
  %v2149 = vrot.slane %v2147, 5
  %v2150 = vsel %vm2112, %v2145, %v2149
  %v2151 = vshrl.u32 %v2013, 16
  %v2153 = vrot.slane %v2151, 4
  %v2154 = vor.u32 %v2153, %v2149
  %v2155 = vrot.slane %v2154, 4
  %v2157 = vshll.u32 %v2079, 16
  %v2159 = vrot.slane %v2157, 5
  %v2160 = vsel %vm2112, %v2155, %v2159
  %v2162 = vshrl.u32 %v2014, 16
  %v2164 = vrot.slane %v2162, 4
  %v2165 = vshll.u32 %v2014, 16
  %v2167 = vrot.slane %v2165, 5
  %v2168 = vor.u32 %v2164, %v2167
  %v2169 = vrot.slane %v2168, 4
  %v2171 = vshll.u32 %v2015, 16
  %v2173 = vrot.slane %v2171, 5
  %v2174 = vsel %vm2112, %v2169, %v2173
  %v2175 = vshrl.u32 %v2015, 16
  %v2177 = vrot.slane %v2175, 4
  %v2178 = vor.u32 %v2177, %v2173
  %v2179 = vrot.slane %v2178, 4
  %v2181 = vshll.u32 %v2080, 16
  %v2183 = vrot.slane %v2181, 5
  %v2184 = vsel %vm2112, %v2179, %v2183
  %v2186 = vshrl.u32 %v2016, 16
  %v2188 = vrot.slane %v2186, 4
  %v2189 = vshll.u32 %v2016, 16
  %v2191 = vrot.slane %v2189, 5
  %v2192 = vor.u32 %v2188, %v2191
  %v2193 = vrot.slane %v2192, 4
  %v2195 = vshll.u32 %v2017, 16
  %v2197 = vrot.slane %v2195, 5
  %v2198 = vsel %vm2112, %v2193, %v2197
  %v2199 = vshrl.u32 %v2017, 16
  %v2201 = vrot.slane %v2199, 4
  %v2202 = vor.u32 %v2201, %v2197
  %v2203 = vrot.slane %v2202, 4
  %v2205 = vshll.u32 %v2081, 16
  %v2207 = vrot.slane %v2205, 5
  %v2208 = vsel %vm2112, %v2203, %v2207
  %v2210 = vshrl.u32 %v2018, 16
  %v2212 = vrot.slane %v2210, 4
  %v2213 = vshll.u32 %v2018, 16
  %v2215 = vrot.slane %v2213, 5
  %v2216 = vor.u32 %v2212, %v2215
  %v2217 = vrot.slane %v2216, 4
  %v2219 = vshll.u32 %v2019, 16
  %v2221 = vrot.slane %v2219, 5
  %v2222 = vsel %vm2112, %v2217, %v2221
  %v2223 = vshrl.u32 %v2019, 16
  %v2225 = vrot.slane %v2223, 4
  %v2226 = vor.u32 %v2225, %v2221
  %v2227 = vrot.slane %v2226, 4
  %v2229 = vshll.u32 %v2082, 16
  %v2231 = vrot.slane %v2229, 5
  %v2232 = vsel %vm2112, %v2227, %v2231
  %v2234 = vshrl.u32 %v2020, 16
  %v2236 = vrot.slane %v2234, 4
  %v2237 = vshll.u32 %v2020, 16
  %v2239 = vrot.slane %v2237, 5
  %v2240 = vor.u32 %v2236, %v2239
  %v2241 = vrot.slane %v2240, 4
  %v2243 = vshll.u32 %v2021, 16
  %v2245 = vrot.slane %v2243, 5
  %v2246 = vsel %vm2112, %v2241, %v2245
  %v2247 = vshrl.u32 %v2021, 16
  %v2249 = vrot.slane %v2247, 4
  %v2250 = vor.u32 %v2249, %v2245
  %v2251 = vrot.slane %v2250, 4
  %v2253 = vshll.u32 %v2083, 16
  %v2255 = vrot.slane %v2253, 5
  %v2256 = vsel %vm2112, %v2251, %v2255
  %v2258 = vshrl.u32 %v2022, 16
  %v2260 = vrot.slane %v2258, 4
  %v2261 = vshll.u32 %v2022, 16
  %v2263 = vrot.slane %v2261, 5
  %v2264 = vor.u32 %v2260, %v2263
  %v2265 = vrot.slane %v2264, 4
  %v2267 = vshll.u32 %v2023, 16
  %v2269 = vrot.slane %v2267, 5
  %v2270 = vsel %vm2112, %v2265, %v2269
  %v2271 = vshrl.u32 %v2023, 16
  %v2273 = vrot.slane %v2271, 4
  %v2274 = vor.u32 %v2273, %v2269
  %v2275 = vrot.slane %v2274, 4
  %v2277 = vshll.u32 %v2084, 16
  %v2279 = vrot.slane %v2277, 5
  %v2280 = vsel %vm2112, %v2275, %v2279
  %v2282 = vshrl.u32 %v2024, 16
  %v2284 = vrot.slane %v2282, 4
  %v2285 = vshll.u32 %v2024, 16
  %v2287 = vrot.slane %v2285, 5
  %v2288 = vor.u32 %v2284, %v2287
  %v2289 = vrot.slane %v2288, 4
  %v2291 = vshll.u32 %v2025, 16
  %v2293 = vrot.slane %v2291, 5
  %v2294 = vsel %vm2112, %v2289, %v2293
  %v2295 = vshrl.u32 %v2025, 16
  %v2297 = vrot.slane %v2295, 4
  %v2298 = vor.u32 %v2297, %v2293
  %v2299 = vrot.slane %v2298, 4
  %v2301 = vshll.u32 %v2085, 16
  %v2303 = vrot.slane %v2301, 5
  %v2304 = vsel %vm2112, %v2299, %v2303
  %v2306 = vshrl.u32 %v2026, 16
  %v2308 = vrot.slane %v2306, 4
  %v2309 = vshll.u32 %v2026, 16
  %v2311 = vrot.slane %v2309, 5
  %v2312 = vor.u32 %v2308, %v2311
  %v2313 = vrot.slane %v2312, 4
  %v2315 = vshll.u32 %v2027, 16
  %v2317 = vrot.slane %v2315, 5
  %v2318 = vsel %vm2112, %v2313, %v2317
  %v2319 = vshrl.u32 %v2027, 16
  %v2321 = vrot.slane %v2319, 4
  %v2322 = vor.u32 %v2321, %v2317
  %v2323 = vrot.slane %v2322, 4
  %v2325 = vshll.u32 %v2086, 16
  %v2327 = vrot.slane %v2325, 5
  %v2328 = vsel %vm2112, %v2323, %v2327
  %v2330 = vshrl.u32 %v2028, 16
  %v2332 = vrot.slane %v2330, 4
  %v2333 = vshll.u32 %v2028, 16
  %v2335 = vrot.slane %v2333, 5
  %v2336 = vor.u32 %v2332, %v2335
  %v2337 = vrot.slane %v2336, 4
  %v2339 = vshll.u32 %v2029, 16
  %v2341 = vrot.slane %v2339, 5
  %v2342 = vsel %vm2112, %v2337, %v2341
  %v2343 = vshrl.u32 %v2029, 16
  %v2345 = vrot.slane %v2343, 4
  %v2346 = vor.u32 %v2345, %v2341
  %v2347 = vrot.slane %v2346, 4
  %v2349 = vshll.u32 %v2087, 16
  %v2351 = vrot.slane %v2349, 5
  %v2352 = vsel %vm2112, %v2347, %v2351
  %v2354 = vshrl.u32 %v2030, 16
  %v2356 = vrot.slane %v2354, 4
  %v2357 = vshll.u32 %v2030, 16
  %v2359 = vrot.slane %v2357, 5
  %v2360 = vor.u32 %v2356, %v2359
  %v2361 = vrot.slane %v2360, 4
  %v2363 = vshll.u32 %v2031, 16
  %v2365 = vrot.slane %v2363, 5
  %v2366 = vsel %vm2112, %v2361, %v2365
  %v2367 = vshrl.u32 %v2031, 16
  %v2369 = vrot.slane %v2367, 4
  %v2370 = vor.u32 %v2369, %v2365
  %v2371 = vrot.slane %v2370, 4
  %v2373 = vshll.u32 %v2088, 16
  %v2375 = vrot.slane %v2373, 5
  %v2376 = vsel %vm2112, %v2371, %v2375
  %v2378 = vshrl.u32 %v2032, 16
  %v2380 = vrot.slane %v2378, 4
  %v2381 = vshll.u32 %v2032, 16
  %v2383 = vrot.slane %v2381, 5
  %v2384 = vor.u32 %v2380, %v2383
  %v2385 = vrot.slane %v2384, 4
  %v2387 = vshll.u32 %v2033, 16
  %v2389 = vrot.slane %v2387, 5
  %v2390 = vsel %vm2112, %v2385, %v2389
  %v2391 = vshrl.u32 %v2033, 16
  %v2393 = vrot.slane %v2391, 4
  %v2394 = vor.u32 %v2393, %v2389
  %v2395 = vrot.slane %v2394, 4
  %v2397 = vshll.u32 %v2089, 16
  %v2399 = vrot.slane %v2397, 5
  %v2400 = vsel %vm2112, %v2395, %v2399
  %v2402 = vshrl.u32 %v2034, 16
  %v2404 = vrot.slane %v2402, 4
  %v2405 = vshll.u32 %v2034, 16
  %v2407 = vrot.slane %v2405, 5
  %v2408 = vor.u32 %v2404, %v2407
  %v2409 = vrot.slane %v2408, 4
  %v2411 = vshll.u32 %v2035, 16
  %v2413 = vrot.slane %v2411, 5
  %v2414 = vsel %vm2112, %v2409, %v2413
  %v2415 = vshrl.u32 %v2035, 16
  %v2417 = vrot.slane %v2415, 4
  %v2418 = vor.u32 %v2417, %v2413
  %v2419 = vrot.slane %v2418, 4
  %v2421 = vshll.u32 %v2090, 16
  %v2423 = vrot.slane %v2421, 5
  %v2424 = vsel %vm2112, %v2419, %v2423
  %v2426 = vshrl.u32 %v2036, 16
  %v2428 = vrot.slane %v2426, 4
  %v2429 = vshll.u32 %v2036, 16
  %v2431 = vrot.slane %v2429, 5
  %v2432 = vor.u32 %v2428, %v2431
  %v2433 = vrot.slane %v2432, 4
  %v2435 = vshll.u32 %v2037, 16
  %v2437 = vrot.slane %v2435, 5
  %v2438 = vsel %vm2112, %v2433, %v2437
  %v2439 = vshrl.u32 %v2037, 16
  %v2441 = vrot.slane %v2439, 4
  %v2442 = vor.u32 %v2441, %v2437
  %v2443 = vrot.slane %v2442, 4
  %v2445 = vshll.u32 %v2091, 16
  %v2447 = vrot.slane %v2445, 5
  %v2448 = vsel %vm2112, %v2443, %v2447
  %v2450 = vshrl.u32 %v2038, 16
  %v2452 = vrot.slane %v2450, 4
  %v2453 = vshll.u32 %v2038, 16
  %v2455 = vrot.slane %v2453, 5
  %v2456 = vor.u32 %v2452, %v2455
  %v2457 = vrot.slane %v2456, 4
  %v2459 = vshll.u32 %v2039, 16
  %v2461 = vrot.slane %v2459, 5
  %v2462 = vsel %vm2112, %v2457, %v2461
  %v2463 = vshrl.u32 %v2039, 16
  %v2465 = vrot.slane %v2463, 4
  %v2466 = vor.u32 %v2465, %v2461
  %v2467 = vrot.slane %v2466, 4
  %v2469 = vshll.u32 %v2092, 16
  %v2471 = vrot.slane %v2469, 5
  %v2472 = vsel %vm2112, %v2467, %v2471
  %v2474 = vshrl.u32 %v2040, 16
  %v2476 = vrot.slane %v2474, 4
  %v2477 = vshll.u32 %v2040, 16
  %v2479 = vrot.slane %v2477, 5
  %v2480 = vor.u32 %v2476, %v2479
  %v2481 = vrot.slane %v2480, 4
  %v2483 = vshll.u32 %v2041, 16
  %v2485 = vrot.slane %v2483, 5
  %v2486 = vsel %vm2112, %v2481, %v2485
  %v2487 = vshrl.u32 %v2041, 16
  %v2489 = vrot.slane %v2487, 4
  %v2490 = vor.u32 %v2489, %v2485
  %v2491 = vrot.slane %v2490, 4
  %v2493 = vshll.u32 %v2093, 16
  %v2495 = vrot.slane %v2493, 5
  %v2496 = vsel %vm2112, %v2491, %v2495
  %v2498 = vshrl.u32 %v2042, 16
  %v2500 = vrot.slane %v2498, 4
  %v2501 = vshll.u32 %v2042, 16
  %v2503 = vrot.slane %v2501, 5
  %v2504 = vor.u32 %v2500, %v2503
  %v2505 = vrot.slane %v2504, 4
  %v2507 = vshll.u32 %v2043, 16
  %v2509 = vrot.slane %v2507, 5
  %v2510 = vsel %vm2112, %v2505, %v2509
  %v2511 = vshrl.u32 %v2043, 16
  %v2513 = vrot.slane %v2511, 4
  %v2514 = vor.u32 %v2513, %v2509
  %v2515 = vrot.slane %v2514, 4
  %v2517 = vshll.u32 %v2094, 16
  %v2519 = vrot.slane %v2517, 5
  %v2520 = vsel %vm2112, %v2515, %v2519
  %v2522 = vshrl.u32 %v2044, 16
  %v2524 = vrot.slane %v2522, 4
  %v2525 = vshll.u32 %v2044, 16
  %v2527 = vrot.slane %v2525, 5
  %v2528 = vor.u32 %v2524, %v2527
  %v2529 = vrot.slane %v2528, 4
  %v2531 = vshll.u32 %v2045, 16
  %v2533 = vrot.slane %v2531, 5
  %v2534 = vsel %vm2112, %v2529, %v2533
  %v2535 = vshrl.u32 %v2045, 16
  %v2537 = vrot.slane %v2535, 4
  %v2538 = vor.u32 %v2537, %v2533
  %v2539 = vrot.slane %v2538, 4
  %v2541 = vshll.u32 %v2095, 16
  %v2543 = vrot.slane %v2541, 5
  %v2544 = vsel %vm2112, %v2539, %v2543
  %v2546 = vshrl.u32 %v2046, 16
  %v2548 = vrot.slane %v2546, 4
  %v2549 = vshll.u32 %v2046, 16
  %v2551 = vrot.slane %v2549, 5
  %v2552 = vor.u32 %v2548, %v2551
  %v2553 = vrot.slane %v2552, 4
  %v2555 = vshll.u32 %v2047, 16
  %v2557 = vrot.slane %v2555, 5
  %v2558 = vsel %vm2112, %v2553, %v2557
  %v2559 = vshrl.u32 %v2047, 16
  %v2561 = vrot.slane %v2559, 4
  %v2562 = vor.u32 %v2561, %v2557
  %v2563 = vrot.slane %v2562, 4
  %v2565 = vshll.u32 %v2096, 16
  %v2567 = vrot.slane %v2565, 5
  %v2568 = vsel %vm2112, %v2563, %v2567
  %v2570 = vshrl.u32 %v2048, 16
  %v2572 = vrot.slane %v2570, 4
  %v2573 = vshll.u32 %v2048, 16
  %v2575 = vrot.slane %v2573, 5
  %v2576 = vor.u32 %v2572, %v2575
  %v2577 = vrot.slane %v2576, 4
  %v2579 = vshll.u32 %v2049, 16
  %v2581 = vrot.slane %v2579, 5
  %v2582 = vsel %vm2112, %v2577, %v2581
  %v2583 = vshrl.u32 %v2049, 16
  %v2585 = vrot.slane %v2583, 4
  %v2586 = vor.u32 %v2585, %v2581
  %v2587 = vrot.slane %v2586, 4
  %v2589 = vshll.u32 %v2097, 16
  %v2591 = vrot.slane %v2589, 5
  %v2592 = vsel %vm2112, %v2587, %v2591
  %v2594 = vshrl.u32 %v2050, 16
  %v2596 = vrot.slane %v2594, 4
  %v2597 = vshll.u32 %v2050, 16
  %v2599 = vrot.slane %v2597, 5
  %v2600 = vor.u32 %v2596, %v2599
  %v2601 = vrot.slane %v2600, 4
  %v2603 = vshll.u32 %v2051, 16
  %v2605 = vrot.slane %v2603, 5
  %v2606 = vsel %vm2112, %v2601, %v2605
  %v2607 = vshrl.u32 %v2051, 16
  %v2609 = vrot.slane %v2607, 4
  %v2610 = vor.u32 %v2609, %v2605
  %v2611 = vrot.slane %v2610, 4
  %v2613 = vshll.u32 %v2098, 16
  %v2615 = vrot.slane %v2613, 5
  %v2616 = vsel %vm2112, %v2611, %v2615
  %v2618 = vshrl.u32 %v2052, 16
  %v2620 = vrot.slane %v2618, 4
  %v2621 = vshll.u32 %v2052, 16
  %v2623 = vrot.slane %v2621, 5
  %v2624 = vor.u32 %v2620, %v2623
  %v2625 = vrot.slane %v2624, 4
  %v2627 = vshll.u32 %v2053, 16
  %v2629 = vrot.slane %v2627, 5
  %v2630 = vsel %vm2112, %v2625, %v2629
  %v2631 = vshrl.u32 %v2053, 16
  %v2633 = vrot.slane %v2631, 4
  %v2634 = vor.u32 %v2633, %v2629
  %v2635 = vrot.slane %v2634, 4
  %v2637 = vshll.u32 %v2099, 16
  %v2639 = vrot.slane %v2637, 5
  %v2640 = vsel %vm2112, %v2635, %v2639
  %v2642 = vshrl.u32 %v2054, 16
  %v2644 = vrot.slane %v2642, 4
  %v2645 = vshll.u32 %v2054, 16
  %v2647 = vrot.slane %v2645, 5
  %v2648 = vor.u32 %v2644, %v2647
  %v2649 = vrot.slane %v2648, 4
  %v2651 = vshll.u32 %v2055, 16
  %v2653 = vrot.slane %v2651, 5
  %v2654 = vsel %vm2112, %v2649, %v2653
  %v2655 = vshrl.u32 %v2055, 16
  %v2657 = vrot.slane %v2655, 4
  %v2658 = vor.u32 %v2657, %v2653
  %v2659 = vrot.slane %v2658, 4
  %v2661 = vshll.u32 %v2100, 16
  %v2663 = vrot.slane %v2661, 5
  %v2664 = vsel %vm2112, %v2659, %v2663
  %v2666 = vshrl.u32 %v2056, 16
  %v2668 = vrot.slane %v2666, 4
  %v2669 = vshll.u32 %v2056, 16
  %v2671 = vrot.slane %v2669, 5
  %v2672 = vor.u32 %v2668, %v2671
  %v2673 = vrot.slane %v2672, 4
  %v2675 = vshll.u32 %v2057, 16
  %v2677 = vrot.slane %v2675, 5
  %v2678 = vsel %vm2112, %v2673, %v2677
  %v2679 = vshrl.u32 %v2057, 16
  %v2681 = vrot.slane %v2679, 4
  %v2682 = vor.u32 %v2681, %v2677
  %v2683 = vrot.slane %v2682, 4
  %v2685 = vshll.u32 %v2101, 16
  %v2687 = vrot.slane %v2685, 5
  %v2688 = vsel %vm2112, %v2683, %v2687
  %v2690 = vshrl.u32 %v2058, 16
  %v2692 = vrot.slane %v2690, 4
  %v2693 = vshll.u32 %v2058, 16
  %v2695 = vrot.slane %v2693, 5
  %v2696 = vor.u32 %v2692, %v2695
  %v2697 = vrot.slane %v2696, 4
  %v2699 = vshll.u32 %v2059, 16
  %v2701 = vrot.slane %v2699, 5
  %v2702 = vsel %vm2112, %v2697, %v2701
  %v2703 = vshrl.u32 %v2059, 16
  %v2705 = vrot.slane %v2703, 4
  %v2706 = vor.u32 %v2705, %v2701
  %v2707 = vrot.slane %v2706, 4
  %v2709 = vshll.u32 %v2102, 16
  %v2711 = vrot.slane %v2709, 5
  %v2712 = vsel %vm2112, %v2707, %v2711
  %v2714 = vshrl.u32 %v2060, 16
  %v2716 = vrot.slane %v2714, 4
  %v2717 = vshll.u32 %v2060, 16
  %v2719 = vrot.slane %v2717, 5
  %v2720 = vor.u32 %v2716, %v2719
  %v2721 = vrot.slane %v2720, 4
  %v2723 = vshll.u32 %v2061, 16
  %v2725 = vrot.slane %v2723, 5
  %v2726 = vsel %vm2112, %v2721, %v2725
  %v2727 = vshrl.u32 %v2061, 16
  %v2729 = vrot.slane %v2727, 4
  %v2730 = vor.u32 %v2729, %v2725
  %v2731 = vrot.slane %v2730, 4
  %v2733 = vshll.u32 %v2103, 16
  %v2735 = vrot.slane %v2733, 5
  %v2736 = vsel %vm2112, %v2731, %v2735
  %v2738 = vshrl.u32 %v2062, 16
  %v2740 = vrot.slane %v2738, 4
  %v2741 = vshll.u32 %v2062, 16
  %v2743 = vrot.slane %v2741, 5
  %v2744 = vor.u32 %v2740, %v2743
  %v2745 = vrot.slane %v2744, 4
  %v2747 = vshll.u32 %v2063, 16
  %v2749 = vrot.slane %v2747, 5
  %v2750 = vsel %vm2112, %v2745, %v2749
  %v2751 = vshrl.u32 %v2063, 16
  %v2753 = vrot.slane %v2751, 4
  %v2754 = vor.u32 %v2753, %v2749
  %v2755 = vrot.slane %v2754, 4
  %v2757 = vshll.u32 %v2104, 16
  %v2759 = vrot.slane %v2757, 5
  %v2760 = vsel %vm2112, %v2755, %v2759
  %v2762 = vshrl.u32 %v2064, 16
  %v2764 = vrot.slane %v2762, 4
  %v2765 = vshll.u32 %v2064, 16
  %v2767 = vrot.slane %v2765, 5
  %v2768 = vor.u32 %v2764, %v2767
  %v2769 = vrot.slane %v2768, 4
  %v2771 = vshll.u32 %v2065, 16
  %v2773 = vrot.slane %v2771, 5
  %v2774 = vsel %vm2112, %v2769, %v2773
  %v2775 = vshrl.u32 %v2065, 16
  %v2777 = vrot.slane %v2775, 4
  %v2778 = vor.u32 %v2777, %v2773
  %v2779 = vrot.slane %v2778, 4
  %v2781 = vshll.u32 %v2105, 16
  %v2783 = vrot.slane %v2781, 5
  %v2784 = vsel %vm2112, %v2779, %v2783
  %v2786 = vshrl.u32 %v2066, 16
  %v2788 = vrot.slane %v2786, 4
  %v2789 = vshll.u32 %v2066, 16
  %v2791 = vrot.slane %v2789, 5
  %v2792 = vor.u32 %v2788, %v2791
  %v2793 = vrot.slane %v2792, 4
  %v2795 = vshll.u32 %v2067, 16
  %v2797 = vrot.slane %v2795, 5
  %v2798 = vsel %vm2112, %v2793, %v2797
  %v2799 = vshrl.u32 %v2067, 16
  %v2801 = vrot.slane %v2799, 4
  %v2802 = vor.u32 %v2801, %v2797
  %v2803 = vrot.slane %v2802, 4
  %v2805 = vshll.u32 %v2106, 16
  %v2807 = vrot.slane %v2805, 5
  %v2808 = vsel %vm2112, %v2803, %v2807
  %v2810 = vshrl.u32 %v2068, 16
  %v2812 = vrot.slane %v2810, 4
  %v2813 = vshll.u32 %v2068, 16
  %v2815 = vrot.slane %v2813, 5
  %v2816 = vor.u32 %v2812, %v2815
  %v2817 = vrot.slane %v2816, 4
  %v2819 = vshll.u32 %v2069, 16
  %v2821 = vrot.slane %v2819, 5
  %v2822 = vsel %vm2112, %v2817, %v2821
  %v2823 = vshrl.u32 %v2069, 16
  %v2825 = vrot.slane %v2823, 4
  %v2826 = vor.u32 %v2825, %v2821
  %v2827 = vrot.slane %v2826, 4
  %v2829 = vshll.u32 %v2107, 16
  %v2831 = vrot.slane %v2829, 5
  %v2832 = vsel %vm2112, %v2827, %v2831
  %v2834 = vshrl.u32 %v2070, 16
  %v2836 = vrot.slane %v2834, 4
  %v2837 = vshll.u32 %v2070, 16
  %v2839 = vrot.slane %v2837, 5
  %v2840 = vor.u32 %v2836, %v2839
  %v2841 = vrot.slane %v2840, 4
  %v2843 = vshll.u32 %v2071, 16
  %v2845 = vrot.slane %v2843, 5
  %v2846 = vsel %vm2112, %v2841, %v2845
  %v2847 = vshrl.u32 %v2071, 16
  %v2849 = vrot.slane %v2847, 4
  %v2850 = vor.u32 %v2849, %v2845
  %v2851 = vrot.slane %v2850, 4
  %v2853 = vshll.u32 %v2108, 16
  %v2855 = vrot.slane %v2853, 5
  %v2856 = vsel %vm2112, %v2851, %v2855
  %v2858 = vshrl.u32 %v2072, 16
  %v2860 = vrot.slane %v2858, 4
  %v2861 = vshll.u32 %v2072, 16
  %v2863 = vrot.slane %v2861, 5
  %v2864 = vor.u32 %v2860, %v2863
  %v2865 = vrot.slane %v2864, 4
  %v2867 = vshll.u32 %v2073, 16
  %v2869 = vrot.slane %v2867, 5
  %v2870 = vsel %vm2112, %v2865, %v2869
  %v2871 = vshrl.u32 %v2073, 16
  %v2873 = vrot.slane %v2871, 4
  %v2874 = vor.u32 %v2873, %v2869
  %v2875 = vrot.slane %v2874, 4
  %v2877 = vshll.u32 %v2109, 16
  %v2879 = vrot.slane %v2877, 5
  %v2880 = vsel %vm2112, %v2875, %v2879
  %v2881 = vld [vmem:[%s2 + $0x10] sm:$0xf]
  %v2882 = vld [vmem:[%s2 + $0x14] sm:$0xf]
  %v2883 = vld [vmem:[%s2 + $0x18] sm:$0xf]
  %v2884 = vld [vmem:[%s2 + $0x1c] sm:$0xf]
  %v2885 = vunpack.c.l.b16 %v2126
  %v2886 = vunpack.c.l.b16 %v2136
  %v2887 = vunpack.c.l.b16 %v2150
  %v2888 = vunpack.c.l.b16 %v2160
  %v2889 = vunpack.c.l.b16 %v2174
  %v2890 = vunpack.c.l.b16 %v2184
  %v2891 = vunpack.c.l.b16 %v2198
  %v2892 = vunpack.c.l.b16 %v2208
  %v2893 = vunpack.c.l.b16 %v2222
  %v2894 = vunpack.c.l.b16 %v2232
  %v2895 = vunpack.c.l.b16 %v2246
  %v2896 = vunpack.c.l.b16 %v2256
  %v2897 = vunpack.c.l.b16 %v2270
  %v2898 = vunpack.c.l.b16 %v2280
  %v2899 = vunpack.c.l.b16 %v2294
  %v2900 = vunpack.c.l.b16 %v2304
  %v2901 = vunpack.c.l.b16 %v2318
  %v2902 = vunpack.c.l.b16 %v2328
  %v2903 = vunpack.c.l.b16 %v2342
  %v2904 = vunpack.c.l.b16 %v2352
  %v2905 = vunpack.c.l.b16 %v2366
  %v2906 = vunpack.c.l.b16 %v2376
  %v2907 = vunpack.c.l.b16 %v2390
  %v2908 = vunpack.c.l.b16 %v2400
  %v2909 = vunpack.c.l.b16 %v2414
  %v2910 = vunpack.c.l.b16 %v2424
  %v2911 = vunpack.c.l.b16 %v2438
  %v2912 = vunpack.c.l.b16 %v2448
  %v2913 = vunpack.c.l.b16 %v2462
  %v2914 = vunpack.c.l.b16 %v2472
  %v2915 = vunpack.c.l.b16 %v2486
  %v2916 = vunpack.c.l.b16 %v2496
  %v2917 = vunpack.c.l.b16 %v2510
  %v2918 = vunpack.c.l.b16 %v2520
  %v2919 = vunpack.c.l.b16 %v2534
  %v2920 = vunpack.c.l.b16 %v2544
  %v2921 = vunpack.c.l.b16 %v2558
  %v2922 = vunpack.c.l.b16 %v2568
  %v2923 = vunpack.c.l.b16 %v2582
  %v2924 = vunpack.c.l.b16 %v2592
  %v2925 = vunpack.c.l.b16 %v2606
  %v2926 = vunpack.c.l.b16 %v2616
  %v2927 = vunpack.c.l.b16 %v2630
  %v2928 = vunpack.c.l.b16 %v2640
  %v2929 = vunpack.c.l.b16 %v2654
  %v2930 = vunpack.c.l.b16 %v2664
  %v2931 = vunpack.c.l.b16 %v2678
  %v2932 = vunpack.c.l.b16 %v2688
  %v2933 = vunpack.c.l.b16 %v2702
  %v2934 = vunpack.c.l.b16 %v2712
  %v2935 = vunpack.c.l.b16 %v2726
  %v2936 = vunpack.c.l.b16 %v2736
  %v2937 = vunpack.c.l.b16 %v2750
  %v2938 = vunpack.c.l.b16 %v2760
  %v2939 = vunpack.c.l.b16 %v2774
  %v2940 = vunpack.c.l.b16 %v2784
  %v2941 = vunpack.c.l.b16 %v2798
  %v2942 = vunpack.c.l.b16 %v2808
  %v2943 = vunpack.c.l.b16 %v2822
  %v2944 = vunpack.c.l.b16 %v2832
  %v2945 = vunpack.c.l.b16 %v2846
  %v2946 = vunpack.c.l.b16 %v2856
  %v2947 = vunpack.c.l.b16 %v2870
  %v2948 = vunpack.c.l.b16 %v2880
  %v2949 = vpack.c.b16 %v2886, %v2885
  %v2950 = vpack.c.b16 %v2888, %v2887
  %v2951 = vpack.c.b16 %v2890, %v2889
  %v2952 = vpack.c.b16 %v2892, %v2891
  %v2953 = vpack.c.b16 %v2894, %v2893
  %v2954 = vpack.c.b16 %v2896, %v2895
  %v2955 = vpack.c.b16 %v2898, %v2897
  %v2956 = vpack.c.b16 %v2900, %v2899
  %v2957 = vpack.c.b16 %v2902, %v2901
  %v2958 = vpack.c.b16 %v2904, %v2903
  %v2959 = vpack.c.b16 %v2906, %v2905
  %v2960 = vpack.c.b16 %v2908, %v2907
  %v2961 = vpack.c.b16 %v2910, %v2909
  %v2962 = vpack.c.b16 %v2912, %v2911
  %v2963 = vpack.c.b16 %v2914, %v2913
  %v2964 = vpack.c.b16 %v2916, %v2915
  %v2965 = vpack.c.b16 %v2918, %v2917
  %v2966 = vpack.c.b16 %v2920, %v2919
  %v2967 = vpack.c.b16 %v2922, %v2921
  %v2968 = vpack.c.b16 %v2924, %v2923
  %v2969 = vpack.c.b16 %v2926, %v2925
  %v2970 = vpack.c.b16 %v2928, %v2927
  %v2971 = vpack.c.b16 %v2930, %v2929
  %v2972 = vpack.c.b16 %v2932, %v2931
  %v2973 = vpack.c.b16 %v2934, %v2933
  %v2974 = vpack.c.b16 %v2936, %v2935
  %v2975 = vpack.c.b16 %v2938, %v2937
  %v2976 = vpack.c.b16 %v2940, %v2939
  %v2977 = vpack.c.b16 %v2942, %v2941
  %v2978 = vpack.c.b16 %v2944, %v2943
  %v2979 = vpack.c.b16 %v2946, %v2945
  %v2980 = vpack.c.b16 %v2948, %v2947
  %v2985 = vunpack.c.l.b16 %v2881
  %v2986 = vunpack.c.l.b16 %v2882
  %v2987 = vunpack.c.l.b16 %v2883
  %v2988 = vunpack.c.l.b16 %v2884
  %v2989 = vpack.c.b16 %v2986, %v2985
  %v2990 = vpack.c.b16 %v2988, %v2987
  %vm2993 = vcmask 261120
  %v2995 = vsel %vm2993, %v2949, 0
  %v2998 = vsel %vm2993, %v2950, 0
  %v3001 = vsel %vm2993, %v2951, 0
  %v3004 = vsel %vm2993, %v2952, 0
  %v3007 = vsel %vm2993, %v2953, 0
  %v3010 = vsel %vm2993, %v2954, 0
  %v3013 = vsel %vm2993, %v2955, 0
  %v3016 = vsel %vm2993, %v2956, 0
  %v3019 = vsel %vm2993, %v2957, 0
  %v3022 = vsel %vm2993, %v2958, 0
  %v3025 = vsel %vm2993, %v2959, 0
  %v3028 = vsel %vm2993, %v2960, 0
  %v3031 = vsel %vm2993, %v2961, 0
  %v3034 = vsel %vm2993, %v2962, 0
  %v3037 = vsel %vm2993, %v2963, 0
  %v3040 = vsel %vm2993, %v2964, 0
  %v3043 = vsel %vm2993, %v2965, 0
  %v3046 = vsel %vm2993, %v2966, 0
  %v3049 = vsel %vm2993, %v2967, 0
  %v3052 = vsel %vm2993, %v2968, 0
  %v3055 = vsel %vm2993, %v2969, 0
  %v3058 = vsel %vm2993, %v2970, 0
  %v3061 = vsel %vm2993, %v2971, 0
  %v3064 = vsel %vm2993, %v2972, 0
  %v3067 = vsel %vm2993, %v2973, 0
  %v3070 = vsel %vm2993, %v2974, 0
  %v3073 = vsel %vm2993, %v2975, 0
  %v3076 = vsel %vm2993, %v2976, 0
  %v3079 = vsel %vm2993, %v2977, 0
  %v3082 = vsel %vm2993, %v2978, 0
  %v3085 = vsel %vm2993, %v2979, 0
  %v3088 = vsel %vm2993, %v2980, 0
  %3090 = vmatprep.subr.bf16.mxu0 0
  %3091 = vmatpush1.bf16.msra.mxu0 %v2989
  %3092 = vmatprep.subr.bf16.mxu0 0
  %3093 = vmatpush1.bf16.msra.mxu0 %v2990
  %3094 = vmatprep.subr.bf16.mxu0 0
  %3095 = vmatpush1.bf16.msra.mxu0 0
  %3096 = vmatprep.subr.bf16.mxu0 0
  %3097 = vmatpush1.bf16.msra.mxu0 0
  %3098 = vmatprep.subr.bf16.mxu0 0
  %3099 = vmatpush1.bf16.msra.mxu0 0
  %3100 = vmatprep.subr.bf16.mxu0 0
  %3101 = vmatpush1.bf16.msra.mxu0 0
  %3102 = vmatprep.subr.bf16.mxu0 0
  %3103 = vmatpush1.bf16.msra.mxu0 0
  %3104 = vmatprep.subr.bf16.mxu0 0
  %3105 = vmatpush1.bf16.msra.mxu0 0
  %3106 = vmatprep.subr.bf16.mxu0 0
  %3107 = vmatpush1.bf16.msra.mxu0 0
  %3108 = vmatprep.subr.bf16.mxu0 0
  %3109 = vmatpush1.bf16.msra.mxu0 0
  %3110 = vmatprep.subr.bf16.mxu0 0
  %3111 = vmatpush1.bf16.msra.mxu0 0
  %3112 = vmatprep.subr.bf16.mxu0 0
  %3113 = vmatpush1.bf16.msra.mxu0 0
  %3114 = vmatprep.subr.bf16.mxu0 0
  %3115 = vmatpush1.bf16.msra.mxu0 0
  %3116 = vmatprep.subr.bf16.mxu0 0
  %3117 = vmatpush1.bf16.msra.mxu0 0
  %3118 = vmatprep.subr.bf16.mxu0 0
  %3119 = vmatpush1.bf16.msra.mxu0 0
  %3120 = vmatprep.subr.bf16.mxu0 0
  %3121 = vmatpush1.bf16.msra.mxu0 0
  %3122 = vmatprep.mubr.bf16.mxu0 0
  %3123 = vmatmul.mubr.bf16.gmra.mrb[0].mxu0 %v2995
  %v3124 = vpop.f32.mrb[0].mxu0
  %v3125 = vadd.f32 0.0, %v3124
  %v3126 = vpop.f32.mrb[0].mxu0
  %v3127 = vpop.f32.mrb[0].mxu0
  %v3128 = vadd.f32 0.0, %v3127
  %v3129 = vpop.f32.mrb[0].mxu0
  %3130 = vmatprep.mubr.bf16.mxu0 0
  %3131 = vmatmul.mubr.bf16.gmra.mrb[0].mxu0 %v2998
  %v3132 = vpop.f32.mrb[0].mxu0
  %v3133 = vadd.f32 0.0, %v3132
  %v3134 = vpop.f32.mrb[0].mxu0
  %v3135 = vpop.f32.mrb[0].mxu0
  %v3136 = vadd.f32 0.0, %v3135
  %v3137 = vpop.f32.mrb[0].mxu0
  %3138 = vmatprep.mubr.bf16.mxu0 0
  %3139 = vmatmul.mubr.bf16.gmra.mrb[0].mxu0 %v3001
  %v3140 = vpop.f32.mrb[0].mxu0
  %v3141 = vadd.f32 0.0, %v3140
  %v3142 = vpop.f32.mrb[0].mxu0
  %v3143 = vpop.f32.mrb[0].mxu0
  %v3144 = vadd.f32 0.0, %v3143
  %v3145 = vpop.f32.mrb[0].mxu0
  %3146 = vmatprep.mubr.bf16.mxu0 0
  %3147 = vmatmul.mubr.bf16.gmra.mrb[0].mxu0 %v3004
  %v3148 = vpop.f32.mrb[0].mxu0
  %v3149 = vadd.f32 0.0, %v3148
  %v3150 = vpop.f32.mrb[0].mxu0
  %v3151 = vpop.f32.mrb[0].mxu0
  %v3152 = vadd.f32 0.0, %v3151
  %v3153 = vpop.f32.mrb[0].mxu0
  %3154 = vmatprep.mubr.bf16.mxu0 0
  %3155 = vmatmul.mubr.bf16.gmra.mrb[0].mxu0 %v3007
  %v3156 = vpop.f32.mrb[0].mxu0
  %v3157 = vadd.f32 0.0, %v3156
  %v3158 = vpop.f32.mrb[0].mxu0
  %v3159 = vpop.f32.mrb[0].mxu0
  %v3160 = vadd.f32 0.0, %v3159
  %v3161 = vpop.f32.mrb[0].mxu0
  %3162 = vmatprep.mubr.bf16.mxu0 0
  %3163 = vmatmul.mubr.bf16.gmra.mrb[0].mxu0 %v3010
  %v3164 = vpop.f32.mrb[0].mxu0
  %v3165 = vadd.f32 0.0, %v3164
  %v3166 = vpop.f32.mrb[0].mxu0
  %v3167 = vpop.f32.mrb[0].mxu0
  %v3168 = vadd.f32 0.0, %v3167
  %v3169 = vpop.f32.mrb[0].mxu0
  %3170 = vmatprep.mubr.bf16.mxu0 0
  %3171 = vmatmul.mubr.bf16.gmra.mrb[0].mxu0 %v3013
  %v3172 = vpop.f32.mrb[0].mxu0
  %v3173 = vadd.f32 0.0, %v3172
  %v3174 = vpop.f32.mrb[0].mxu0
  %v3175 = vpop.f32.mrb[0].mxu0
  %v3176 = vadd.f32 0.0, %v3175
  %v3177 = vpop.f32.mrb[0].mxu0
  %3178 = vmatprep.mubr.bf16.mxu0 0
  %3179 = vmatmul.mubr.bf16.gmra.mrb[0].mxu0 %v3016
  %v3180 = vpop.f32.mrb[0].mxu0
  %v3181 = vadd.f32 0.0, %v3180
  %v3182 = vpop.f32.mrb[0].mxu0
  %v3183 = vpop.f32.mrb[0].mxu0
  %v3184 = vadd.f32 0.0, %v3183
  %v3185 = vpop.f32.mrb[0].mxu0
  %3186 = vmatprep.mubr.bf16.mxu0 0
  %3187 = vmatmul.mubr.bf16.gmra.mrb[0].mxu0 %v3019
  %v3188 = vpop.f32.mrb[0].mxu0
  %v3189 = vadd.f32 0.0, %v3188
  %v3190 = vpop.f32.mrb[0].mxu0
  %v3191 = vpop.f32.mrb[0].mxu0
  %v3192 = vadd.f32 0.0, %v3191
  %v3193 = vpop.f32.mrb[0].mxu0
  %3194 = vmatprep.mubr.bf16.mxu0 0
  %3195 = vmatmul.mubr.bf16.gmra.mrb[0].mxu0 %v3022
  %v3196 = vpop.f32.mrb[0].mxu0
  %v3197 = vadd.f32 0.0, %v3196
  %v3198 = vpop.f32.mrb[0].mxu0
  %v3199 = vpop.f32.mrb[0].mxu0
  %v3200 = vadd.f32 0.0, %v3199
  %v3201 = vpop.f32.mrb[0].mxu0
  %3202 = vmatprep.mubr.bf16.mxu0 0
  %3203 = vmatmul.mubr.bf16.gmra.mrb[0].mxu0 %v3025
  %v3204 = vpop.f32.mrb[0].mxu0
  %v3205 = vadd.f32 0.0, %v3204
  %v3206 = vpop.f32.mrb[0].mxu0
  %v3207 = vpop.f32.mrb[0].mxu0
  %v3208 = vadd.f32 0.0, %v3207
  %v3209 = vpop.f32.mrb[0].mxu0
  %3210 = vmatprep.mubr.bf16.mxu0 0
  %3211 = vmatmul.mubr.bf16.gmra.mrb[0].mxu0 %v3028
  %v3212 = vpop.f32.mrb[0].mxu0
  %v3213 = vadd.f32 0.0, %v3212
  %v3214 = vpop.f32.mrb[0].mxu0
  %v3215 = vpop.f32.mrb[0].mxu0
  %v3216 = vadd.f32 0.0, %v3215
  %v3217 = vpop.f32.mrb[0].mxu0
  %3218 = vmatprep.mubr.bf16.mxu0 0
  %3219 = vmatmul.mubr.bf16.gmra.mrb[0].mxu0 %v3031
  %v3220 = vpop.f32.mrb[0].mxu0
  %v3221 = vadd.f32 0.0, %v3220
  %v3222 = vpop.f32.mrb[0].mxu0
  %v3223 = vpop.f32.mrb[0].mxu0
  %v3224 = vadd.f32 0.0, %v3223
  %v3225 = vpop.f32.mrb[0].mxu0
  %3226 = vmatprep.mubr.bf16.mxu0 0
  %3227 = vmatmul.mubr.bf16.gmra.mrb[0].mxu0 %v3034
  %v3228 = vpop.f32.mrb[0].mxu0
  %v3229 = vadd.f32 0.0, %v3228
  %v3230 = vpop.f32.mrb[0].mxu0
  %v3231 = vpop.f32.mrb[0].mxu0
  %v3232 = vadd.f32 0.0, %v3231
  %v3233 = vpop.f32.mrb[0].mxu0
  %3234 = vmatprep.mubr.bf16.mxu0 0
  %3235 = vmatmul.mubr.bf16.gmra.mrb[0].mxu0 %v3037
  %v3236 = vpop.f32.mrb[0].mxu0
  %v3237 = vadd.f32 0.0, %v3236
  %v3238 = vpop.f32.mrb[0].mxu0
  %v3239 = vpop.f32.mrb[0].mxu0
  %v3240 = vadd.f32 0.0, %v3239
  %v3241 = vpop.f32.mrb[0].mxu0
  %3242 = vmatprep.mubr.bf16.mxu0 0
  %3243 = vmatmul.mubr.bf16.gmra.mrb[0].mxu0 %v3040
  %v3244 = vpop.f32.mrb[0].mxu0
  %v3245 = vadd.f32 0.0, %v3244
  %v3246 = vpop.f32.mrb[0].mxu0
  %v3247 = vpop.f32.mrb[0].mxu0
  %v3248 = vadd.f32 0.0, %v3247
  %v3249 = vpop.f32.mrb[0].mxu0
  %3250 = vmatprep.mubr.bf16.mxu0 0
  %3251 = vmatmul.mubr.bf16.gmra.mrb[0].mxu0 %v3043
  %v3252 = vpop.f32.mrb[0].mxu0
  %v3253 = vadd.f32 0.0, %v3252
  %v3254 = vpop.f32.mrb[0].mxu0
  %v3255 = vpop.f32.mrb[0].mxu0
  %v3256 = vadd.f32 0.0, %v3255
  %v3257 = vpop.f32.mrb[0].mxu0
  %3258 = vmatprep.mubr.bf16.mxu0 0
  %3259 = vmatmul.mubr.bf16.gmra.mrb[0].mxu0 %v3046
  %v3260 = vpop.f32.mrb[0].mxu0
  %v3261 = vadd.f32 0.0, %v3260
  %v3262 = vpop.f32.mrb[0].mxu0
  %v3263 = vpop.f32.mrb[0].mxu0
  %v3264 = vadd.f32 0.0, %v3263
  %v3265 = vpop.f32.mrb[0].mxu0
  %3266 = vmatprep.mubr.bf16.mxu0 0
  %3267 = vmatmul.mubr.bf16.gmra.mrb[0].mxu0 %v3049
  %v3268 = vpop.f32.mrb[0].mxu0
  %v3269 = vadd.f32 0.0, %v3268
  %v3270 = vpop.f32.mrb[0].mxu0
  %v3271 = vpop.f32.mrb[0].mxu0
  %v3272 = vadd.f32 0.0, %v3271
  %v3273 = vpop.f32.mrb[0].mxu0
  %3274 = vmatprep.mubr.bf16.mxu0 0
  %3275 = vmatmul.mubr.bf16.gmra.mrb[0].mxu0 %v3052
  %v3276 = vpop.f32.mrb[0].mxu0
  %v3277 = vadd.f32 0.0, %v3276
  %v3278 = vpop.f32.mrb[0].mxu0
  %v3279 = vpop.f32.mrb[0].mxu0
  %v3280 = vadd.f32 0.0, %v3279
  %v3281 = vpop.f32.mrb[0].mxu0
  %3282 = vmatprep.mubr.bf16.mxu0 0
  %3283 = vmatmul.mubr.bf16.gmra.mrb[0].mxu0 %v3055
  %v3284 = vpop.f32.mrb[0].mxu0
  %v3285 = vadd.f32 0.0, %v3284
  %v3286 = vpop.f32.mrb[0].mxu0
  %v3287 = vpop.f32.mrb[0].mxu0
  %v3288 = vadd.f32 0.0, %v3287
  %v3289 = vpop.f32.mrb[0].mxu0
  %3290 = vmatprep.mubr.bf16.mxu0 0
  %3291 = vmatmul.mubr.bf16.gmra.mrb[0].mxu0 %v3058
  %v3292 = vpop.f32.mrb[0].mxu0
  %v3293 = vadd.f32 0.0, %v3292
  %v3294 = vpop.f32.mrb[0].mxu0
  %v3295 = vpop.f32.mrb[0].mxu0
  %v3296 = vadd.f32 0.0, %v3295
  %v3297 = vpop.f32.mrb[0].mxu0
  %3298 = vmatprep.mubr.bf16.mxu0 0
  %3299 = vmatmul.mubr.bf16.gmra.mrb[0].mxu0 %v3061
  %v3300 = vpop.f32.mrb[0].mxu0
  %v3301 = vadd.f32 0.0, %v3300
  %v3302 = vpop.f32.mrb[0].mxu0
  %v3303 = vpop.f32.mrb[0].mxu0
  %v3304 = vadd.f32 0.0, %v3303
  %v3305 = vpop.f32.mrb[0].mxu0
  %3306 = vmatprep.mubr.bf16.mxu0 0
  %3307 = vmatmul.mubr.bf16.gmra.mrb[0].mxu0 %v3064
  %v3308 = vpop.f32.mrb[0].mxu0
  %v3309 = vadd.f32 0.0, %v3308
  %v3310 = vpop.f32.mrb[0].mxu0
  %v3311 = vpop.f32.mrb[0].mxu0
  %v3312 = vadd.f32 0.0, %v3311
  %v3313 = vpop.f32.mrb[0].mxu0
  %3314 = vmatprep.mubr.bf16.mxu0 0
  %3315 = vmatmul.mubr.bf16.gmra.mrb[0].mxu0 %v3067
  %v3316 = vpop.f32.mrb[0].mxu0
  %v3317 = vadd.f32 0.0, %v3316
  %v3318 = vpop.f32.mrb[0].mxu0
  %v3319 = vpop.f32.mrb[0].mxu0
  %v3320 = vadd.f32 0.0, %v3319
  %v3321 = vpop.f32.mrb[0].mxu0
  %3322 = vmatprep.mubr.bf16.mxu0 0
  %3323 = vmatmul.mubr.bf16.gmra.mrb[0].mxu0 %v3070
  %v3324 = vpop.f32.mrb[0].mxu0
  %v3325 = vadd.f32 0.0, %v3324
  %v3326 = vpop.f32.mrb[0].mxu0
  %v3327 = vpop.f32.mrb[0].mxu0
  %v3328 = vadd.f32 0.0, %v3327
  %v3329 = vpop.f32.mrb[0].mxu0
  %3330 = vmatprep.mubr.bf16.mxu0 0
  %3331 = vmatmul.mubr.bf16.gmra.mrb[0].mxu0 %v3073
  %v3332 = vpop.f32.mrb[0].mxu0
  %v3333 = vadd.f32 0.0, %v3332
  %v3334 = vpop.f32.mrb[0].mxu0
  %v3335 = vpop.f32.mrb[0].mxu0
  %v3336 = vadd.f32 0.0, %v3335
  %v3337 = vpop.f32.mrb[0].mxu0
  %3338 = vmatprep.mubr.bf16.mxu0 0
  %3339 = vmatmul.mubr.bf16.gmra.mrb[0].mxu0 %v3076
  %v3340 = vpop.f32.mrb[0].mxu0
  %v3341 = vadd.f32 0.0, %v3340
  %v3342 = vpop.f32.mrb[0].mxu0
  %v3343 = vpop.f32.mrb[0].mxu0
  %v3344 = vadd.f32 0.0, %v3343
  %v3345 = vpop.f32.mrb[0].mxu0
  %3346 = vmatprep.mubr.bf16.mxu0 0
  %3347 = vmatmul.mubr.bf16.gmra.mrb[0].mxu0 %v3079
  %v3348 = vpop.f32.mrb[0].mxu0
  %v3349 = vadd.f32 0.0, %v3348
  %v3350 = vpop.f32.mrb[0].mxu0
  %v3351 = vpop.f32.mrb[0].mxu0
  %v3352 = vadd.f32 0.0, %v3351
  %v3353 = vpop.f32.mrb[0].mxu0
  %3354 = vmatprep.mubr.bf16.mxu0 0
  %3355 = vmatmul.mubr.bf16.gmra.mrb[0].mxu0 %v3082
  %v3356 = vpop.f32.mrb[0].mxu0
  %v3357 = vadd.f32 0.0, %v3356
  %v3358 = vpop.f32.mrb[0].mxu0
  %v3359 = vpop.f32.mrb[0].mxu0
  %v3360 = vadd.f32 0.0, %v3359
  %v3361 = vpop.f32.mrb[0].mxu0
  %3362 = vmatprep.mubr.bf16.mxu0 0
  %3363 = vmatmul.mubr.bf16.gmra.mrb[0].mxu0 %v3085
  %v3364 = vpop.f32.mrb[0].mxu0
  %v3365 = vadd.f32 0.0, %v3364
  %v3366 = vpop.f32.mrb[0].mxu0
  %v3367 = vpop.f32.mrb[0].mxu0
  %v3368 = vadd.f32 0.0, %v3367
  %v3369 = vpop.f32.mrb[0].mxu0
  %3370 = vmatprep.mubr.bf16.mxu0 0
  %3371 = vmatmul.mubr.bf16.gmra.mrb[0].mxu0 %v3088
  %v3372 = vpop.f32.mrb[0].mxu0
  %v3373 = vadd.f32 0.0, %v3372
  %v3374 = vpop.f32.mrb[0].mxu0
  %v3375 = vpop.f32.mrb[0].mxu0
  %v3376 = vadd.f32 0.0, %v3375
  %v3377 = vpop.f32.mrb[0].mxu0
  %3378 = vdwg.mxu0
  %v3443 = vunpack.c.l.b16 %v2010
  %v3444 = vunpack.c.l.b16 %v2011
  %v3445 = vunpack.c.l.b16 %v2012
  %v3446 = vunpack.c.l.b16 %v2013
  %v3447 = vunpack.c.l.b16 %v2014
  %v3448 = vunpack.c.l.b16 %v2015
  %v3449 = vunpack.c.l.b16 %v2016
  %v3450 = vunpack.c.l.b16 %v2017
  %v3451 = vunpack.c.l.b16 %v2018
  %v3452 = vunpack.c.l.b16 %v2019
  %v3453 = vunpack.c.l.b16 %v2020
  %v3454 = vunpack.c.l.b16 %v2021
  %v3455 = vunpack.c.l.b16 %v2022
  %v3456 = vunpack.c.l.b16 %v2023
  %v3457 = vunpack.c.l.b16 %v2024
  %v3458 = vunpack.c.l.b16 %v2025
  %v3459 = vunpack.c.l.b16 %v2026
  %v3460 = vunpack.c.l.b16 %v2027
  %v3461 = vunpack.c.l.b16 %v2028
  %v3462 = vunpack.c.l.b16 %v2029
  %v3463 = vunpack.c.l.b16 %v2030
  %v3464 = vunpack.c.l.b16 %v2031
  %v3465 = vunpack.c.l.b16 %v2032
  %v3466 = vunpack.c.l.b16 %v2033
  %v3467 = vunpack.c.l.b16 %v2034
  %v3468 = vunpack.c.l.b16 %v2035
  %v3469 = vunpack.c.l.b16 %v2036
  %v3470 = vunpack.c.l.b16 %v2037
  %v3471 = vunpack.c.l.b16 %v2038
  %v3472 = vunpack.c.l.b16 %v2039
  %v3473 = vunpack.c.l.b16 %v2040
  %v3474 = vunpack.c.l.b16 %v2041
  %v3475 = vunpack.c.l.b16 %v2042
  %v3476 = vunpack.c.l.b16 %v2043
  %v3477 = vunpack.c.l.b16 %v2044
  %v3478 = vunpack.c.l.b16 %v2045
  %v3479 = vunpack.c.l.b16 %v2046
  %v3480 = vunpack.c.l.b16 %v2047
  %v3481 = vunpack.c.l.b16 %v2048
  %v3482 = vunpack.c.l.b16 %v2049
  %v3483 = vunpack.c.l.b16 %v2050
  %v3484 = vunpack.c.l.b16 %v2051
  %v3485 = vunpack.c.l.b16 %v2052
  %v3486 = vunpack.c.l.b16 %v2053
  %v3487 = vunpack.c.l.b16 %v2054
  %v3488 = vunpack.c.l.b16 %v2055
  %v3489 = vunpack.c.l.b16 %v2056
  %v3490 = vunpack.c.l.b16 %v2057
  %v3491 = vunpack.c.l.b16 %v2058
  %v3492 = vunpack.c.l.b16 %v2059
  %v3493 = vunpack.c.l.b16 %v2060
  %v3494 = vunpack.c.l.b16 %v2061
  %v3495 = vunpack.c.l.b16 %v2062
  %v3496 = vunpack.c.l.b16 %v2063
  %v3497 = vunpack.c.l.b16 %v2064
  %v3498 = vunpack.c.l.b16 %v2065
  %v3499 = vunpack.c.l.b16 %v2066
  %v3500 = vunpack.c.l.b16 %v2067
  %v3501 = vunpack.c.l.b16 %v2068
  %v3502 = vunpack.c.l.b16 %v2069
  %v3503 = vunpack.c.l.b16 %v2070
  %v3504 = vunpack.c.l.b16 %v2071
  %v3505 = vunpack.c.l.b16 %v2072
  %v3506 = vunpack.c.l.b16 %v2073
  %v3507 = vpack.c.b16 %v3444, %v3443
  %v3508 = vpack.c.b16 %v3446, %v3445
  %v3509 = vpack.c.b16 %v3448, %v3447
  %v3510 = vpack.c.b16 %v3450, %v3449
  %v3511 = vpack.c.b16 %v3452, %v3451
  %v3512 = vpack.c.b16 %v3454, %v3453
  %v3513 = vpack.c.b16 %v3456, %v3455
  %v3514 = vpack.c.b16 %v3458, %v3457
  %v3515 = vpack.c.b16 %v3460, %v3459
  %v3516 = vpack.c.b16 %v3462, %v3461
  %v3517 = vpack.c.b16 %v3464, %v3463
  %v3518 = vpack.c.b16 %v3466, %v3465
  %v3519 = vpack.c.b16 %v3468, %v3467
  %v3520 = vpack.c.b16 %v3470, %v3469
  %v3521 = vpack.c.b16 %v3472, %v3471
  %v3522 = vpack.c.b16 %v3474, %v3473
  %v3523 = vpack.c.b16 %v3476, %v3475
  %v3524 = vpack.c.b16 %v3478, %v3477
  %v3525 = vpack.c.b16 %v3480, %v3479
  %v3526 = vpack.c.b16 %v3482, %v3481
  %v3527 = vpack.c.b16 %v3484, %v3483
  %v3528 = vpack.c.b16 %v3486, %v3485
  %v3529 = vpack.c.b16 %v3488, %v3487
  %v3530 = vpack.c.b16 %v3490, %v3489
  %v3531 = vpack.c.b16 %v3492, %v3491
  %v3532 = vpack.c.b16 %v3494, %v3493
  %v3533 = vpack.c.b16 %v3496, %v3495
  %v3534 = vpack.c.b16 %v3498, %v3497
  %v3535 = vpack.c.b16 %v3500, %v3499
  %v3536 = vpack.c.b16 %v3502, %v3501
  %v3537 = vpack.c.b16 %v3504, %v3503
  %v3538 = vpack.c.b16 %v3506, %v3505
  %v3543 = vunpack.c.l.b16 %v2074
  %v3544 = vunpack.c.l.b16 %v2075
  %v3545 = vunpack.c.l.b16 %v2076
  %v3546 = vunpack.c.l.b16 %v2077
  %v3547 = vpack.c.b16 %v3544, %v3543
  %v3548 = vpack.c.b16 %v3546, %v3545
  %v3552 = vsel %vm2993, %v3507, 0
  %v3555 = vsel %vm2993, %v3508, 0
  %v3558 = vsel %vm2993, %v3509, 0
  %v3561 = vsel %vm2993, %v3510, 0
  %v3564 = vsel %vm2993, %v3511, 0
  %v3567 = vsel %vm2993, %v3512, 0
  %v3570 = vsel %vm2993, %v3513, 0
  %v3573 = vsel %vm2993, %v3514, 0
  %v3576 = vsel %vm2993, %v3515, 0
  %v3579 = vsel %vm2993, %v3516, 0
  %v3582 = vsel %vm2993, %v3517, 0
  %v3585 = vsel %vm2993, %v3518, 0
  %v3588 = vsel %vm2993, %v3519, 0
  %v3591 = vsel %vm2993, %v3520, 0
  %v3594 = vsel %vm2993, %v3521, 0
  %v3597 = vsel %vm2993, %v3522, 0
  %v3600 = vsel %vm2993, %v3523, 0
  %v3603 = vsel %vm2993, %v3524, 0
  %v3606 = vsel %vm2993, %v3525, 0
  %v3609 = vsel %vm2993, %v3526, 0
  %v3612 = vsel %vm2993, %v3527, 0
  %v3615 = vsel %vm2993, %v3528, 0
  %v3618 = vsel %vm2993, %v3529, 0
  %v3621 = vsel %vm2993, %v3530, 0
  %v3624 = vsel %vm2993, %v3531, 0
  %v3627 = vsel %vm2993, %v3532, 0
  %v3630 = vsel %vm2993, %v3533, 0
  %v3633 = vsel %vm2993, %v3534, 0
  %v3636 = vsel %vm2993, %v3535, 0
  %v3639 = vsel %vm2993, %v3536, 0
  %v3642 = vsel %vm2993, %v3537, 0
  %v3645 = vsel %vm2993, %v3538, 0
  %3647 = vmatprep.subr.bf16.mxu0 0
  %3648 = vmatpush1.bf16.msra.mxu0 %v3547
  %3649 = vmatprep.subr.bf16.mxu0 0
  %3650 = vmatpush1.bf16.msra.mxu0 %v3548
  %3651 = vmatprep.subr.bf16.mxu0 0
  %3652 = vmatpush1.bf16.msra.mxu0 0
  %3653 = vmatprep.subr.bf16.mxu0 0
  %3654 = vmatpush1.bf16.msra.mxu0 0
  %3655 = vmatprep.subr.bf16.mxu0 0
  %3656 = vmatpush1.bf16.msra.mxu0 0
  %3657 = vmatprep.subr.bf16.mxu0 0
  %3658 = vmatpush1.bf16.msra.mxu0 0
  %3659 = vmatprep.subr.bf16.mxu0 0
  %3660 = vmatpush1.bf16.msra.mxu0 0
  %3661 = vmatprep.subr.bf16.mxu0 0
  %3662 = vmatpush1.bf16.msra.mxu0 0
  %3663 = vmatprep.subr.bf16.mxu0 0
  %3664 = vmatpush1.bf16.msra.mxu0 0
  %3665 = vmatprep.subr.bf16.mxu0 0
  %3666 = vmatpush1.bf16.msra.mxu0 0
  %3667 = vmatprep.subr.bf16.mxu0 0
  %3668 = vmatpush1.bf16.msra.mxu0 0
  %3669 = vmatprep.subr.bf16.mxu0 0
  %3670 = vmatpush1.bf16.msra.mxu0 0
  %3671 = vmatprep.subr.bf16.mxu0 0
  %3672 = vmatpush1.bf16.msra.mxu0 0
  %3673 = vmatprep.subr.bf16.mxu0 0
  %3674 = vmatpush1.bf16.msra.mxu0 0
  %3675 = vmatprep.subr.bf16.mxu0 0
  %3676 = vmatpush1.bf16.msra.mxu0 0
  %3677 = vmatprep.subr.bf16.mxu0 0
  %3678 = vmatpush1.bf16.msra.mxu0 0
  %3679 = vmatprep.mubr.bf16.mxu0 0
  %3680 = vmatmul.mubr.bf16.gmra.mrb[0].mxu0 %v3552
  %v3681 = vpop.f32.mrb[0].mxu0
  %v3682 = vadd.f32 %v3125, %v3681
  %v3683 = vpop.f32.mrb[0].mxu0
  %v3684 = vpop.f32.mrb[0].mxu0
  %v3685 = vadd.f32 %v3128, %v3684
  %v3686 = vpop.f32.mrb[0].mxu0
  %3687 = vmatprep.mubr.bf16.mxu0 0
  %3688 = vmatmul.mubr.bf16.gmra.mrb[0].mxu0 %v3555
  %v3689 = vpop.f32.mrb[0].mxu0
  %v3690 = vadd.f32 %v3133, %v3689
  %v3691 = vpop.f32.mrb[0].mxu0
  %v3692 = vpop.f32.mrb[0].mxu0
  %v3693 = vadd.f32 %v3136, %v3692
  %v3694 = vpop.f32.mrb[0].mxu0
  %3695 = vmatprep.mubr.bf16.mxu0 0
  %3696 = vmatmul.mubr.bf16.gmra.mrb[0].mxu0 %v3558
  %v3697 = vpop.f32.mrb[0].mxu0
  %v3698 = vadd.f32 %v3141, %v3697
  %v3699 = vpop.f32.mrb[0].mxu0
  %v3700 = vpop.f32.mrb[0].mxu0
  %v3701 = vadd.f32 %v3144, %v3700
  %v3702 = vpop.f32.mrb[0].mxu0
  %3703 = vmatprep.mubr.bf16.mxu0 0
  %3704 = vmatmul.mubr.bf16.gmra.mrb[0].mxu0 %v3561
  %v3705 = vpop.f32.mrb[0].mxu0
  %v3706 = vadd.f32 %v3149, %v3705
  %v3707 = vpop.f32.mrb[0].mxu0
  %v3708 = vpop.f32.mrb[0].mxu0
  %v3709 = vadd.f32 %v3152, %v3708
  %v3710 = vpop.f32.mrb[0].mxu0
  %3711 = vmatprep.mubr.bf16.mxu0 0
  %3712 = vmatmul.mubr.bf16.gmra.mrb[0].mxu0 %v3564
  %v3713 = vpop.f32.mrb[0].mxu0
  %v3714 = vadd.f32 %v3157, %v3713
  %v3715 = vpop.f32.mrb[0].mxu0
  %v3716 = vpop.f32.mrb[0].mxu0
  %v3717 = vadd.f32 %v3160, %v3716
  %v3718 = vpop.f32.mrb[0].mxu0
  %3719 = vmatprep.mubr.bf16.mxu0 0
  %3720 = vmatmul.mubr.bf16.gmra.mrb[0].mxu0 %v3567
  %v3721 = vpop.f32.mrb[0].mxu0
  %v3722 = vadd.f32 %v3165, %v3721
  %v3723 = vpop.f32.mrb[0].mxu0
  %v3724 = vpop.f32.mrb[0].mxu0
  %v3725 = vadd.f32 %v3168, %v3724
  %v3726 = vpop.f32.mrb[0].mxu0
  %3727 = vmatprep.mubr.bf16.mxu0 0
  %3728 = vmatmul.mubr.bf16.gmra.mrb[0].mxu0 %v3570
  %v3729 = vpop.f32.mrb[0].mxu0
  %v3730 = vadd.f32 %v3173, %v3729
  %v3731 = vpop.f32.mrb[0].mxu0
  %v3732 = vpop.f32.mrb[0].mxu0
  %v3733 = vadd.f32 %v3176, %v3732
  %v3734 = vpop.f32.mrb[0].mxu0
  %3735 = vmatprep.mubr.bf16.mxu0 0
  %3736 = vmatmul.mubr.bf16.gmra.mrb[0].mxu0 %v3573
  %v3737 = vpop.f32.mrb[0].mxu0
  %v3738 = vadd.f32 %v3181, %v3737
  %v3739 = vpop.f32.mrb[0].mxu0
  %v3740 = vpop.f32.mrb[0].mxu0
  %v3741 = vadd.f32 %v3184, %v3740
  %v3742 = vpop.f32.mrb[0].mxu0
  %3743 = vmatprep.mubr.bf16.mxu0 0
  %3744 = vmatmul.mubr.bf16.gmra.mrb[0].mxu0 %v3576
  %v3745 = vpop.f32.mrb[0].mxu0
  %v3746 = vadd.f32 %v3189, %v3745
  %v3747 = vpop.f32.mrb[0].mxu0
  %v3748 = vpop.f32.mrb[0].mxu0
  %v3749 = vadd.f32 %v3192, %v3748
  %v3750 = vpop.f32.mrb[0].mxu0
  %3751 = vmatprep.mubr.bf16.mxu0 0
  %3752 = vmatmul.mubr.bf16.gmra.mrb[0].mxu0 %v3579
  %v3753 = vpop.f32.mrb[0].mxu0
  %v3754 = vadd.f32 %v3197, %v3753
  %v3755 = vpop.f32.mrb[0].mxu0
  %v3756 = vpop.f32.mrb[0].mxu0
  %v3757 = vadd.f32 %v3200, %v3756
  %v3758 = vpop.f32.mrb[0].mxu0
  %3759 = vmatprep.mubr.bf16.mxu0 0
  %3760 = vmatmul.mubr.bf16.gmra.mrb[0].mxu0 %v3582
  %v3761 = vpop.f32.mrb[0].mxu0
  %v3762 = vadd.f32 %v3205, %v3761
  %v3763 = vpop.f32.mrb[0].mxu0
  %v3764 = vpop.f32.mrb[0].mxu0
  %v3765 = vadd.f32 %v3208, %v3764
  %v3766 = vpop.f32.mrb[0].mxu0
  %3767 = vmatprep.mubr.bf16.mxu0 0
  %3768 = vmatmul.mubr.bf16.gmra.mrb[0].mxu0 %v3585
  %v3769 = vpop.f32.mrb[0].mxu0
  %v3770 = vadd.f32 %v3213, %v3769
  %v3771 = vpop.f32.mrb[0].mxu0
  %v3772 = vpop.f32.mrb[0].mxu0
  %v3773 = vadd.f32 %v3216, %v3772
  %v3774 = vpop.f32.mrb[0].mxu0
  %3775 = vmatprep.mubr.bf16.mxu0 0
  %3776 = vmatmul.mubr.bf16.gmra.mrb[0].mxu0 %v3588
  %v3777 = vpop.f32.mrb[0].mxu0
  %v3778 = vadd.f32 %v3221, %v3777
  %v3779 = vpop.f32.mrb[0].mxu0
  %v3780 = vpop.f32.mrb[0].mxu0
  %v3781 = vadd.f32 %v3224, %v3780
  %v3782 = vpop.f32.mrb[0].mxu0
  %3783 = vmatprep.mubr.bf16.mxu0 0
  %3784 = vmatmul.mubr.bf16.gmra.mrb[0].mxu0 %v3591
  %v3785 = vpop.f32.mrb[0].mxu0
  %v3786 = vadd.f32 %v3229, %v3785
  %v3787 = vpop.f32.mrb[0].mxu0
  %v3788 = vpop.f32.mrb[0].mxu0
  %v3789 = vadd.f32 %v3232, %v3788
  %v3790 = vpop.f32.mrb[0].mxu0
  %3791 = vmatprep.mubr.bf16.mxu0 0
  %3792 = vmatmul.mubr.bf16.gmra.mrb[0].mxu0 %v3594
  %v3793 = vpop.f32.mrb[0].mxu0
  %v3794 = vadd.f32 %v3237, %v3793
  %v3795 = vpop.f32.mrb[0].mxu0
  %v3796 = vpop.f32.mrb[0].mxu0
  %v3797 = vadd.f32 %v3240, %v3796
  %v3798 = vpop.f32.mrb[0].mxu0
  %3799 = vmatprep.mubr.bf16.mxu0 0
  %3800 = vmatmul.mubr.bf16.gmra.mrb[0].mxu0 %v3597
  %v3801 = vpop.f32.mrb[0].mxu0
  %v3802 = vadd.f32 %v3245, %v3801
  %v3803 = vpop.f32.mrb[0].mxu0
  %v3804 = vpop.f32.mrb[0].mxu0
  %v3805 = vadd.f32 %v3248, %v3804
  %v3806 = vpop.f32.mrb[0].mxu0
  %3807 = vmatprep.mubr.bf16.mxu0 0
  %3808 = vmatmul.mubr.bf16.gmra.mrb[0].mxu0 %v3600
  %v3809 = vpop.f32.mrb[0].mxu0
  %v3810 = vadd.f32 %v3253, %v3809
  %v3811 = vpop.f32.mrb[0].mxu0
  %v3812 = vpop.f32.mrb[0].mxu0
  %v3813 = vadd.f32 %v3256, %v3812
  %v3814 = vpop.f32.mrb[0].mxu0
  %3815 = vmatprep.mubr.bf16.mxu0 0
  %3816 = vmatmul.mubr.bf16.gmra.mrb[0].mxu0 %v3603
  %v3817 = vpop.f32.mrb[0].mxu0
  %v3818 = vadd.f32 %v3261, %v3817
  %v3819 = vpop.f32.mrb[0].mxu0
  %v3820 = vpop.f32.mrb[0].mxu0
  %v3821 = vadd.f32 %v3264, %v3820
  %v3822 = vpop.f32.mrb[0].mxu0
  %3823 = vmatprep.mubr.bf16.mxu0 0
  %3824 = vmatmul.mubr.bf16.gmra.mrb[0].mxu0 %v3606
  %v3825 = vpop.f32.mrb[0].mxu0
  %v3826 = vadd.f32 %v3269, %v3825
  %v3827 = vpop.f32.mrb[0].mxu0
  %v3828 = vpop.f32.mrb[0].mxu0
  %v3829 = vadd.f32 %v3272, %v3828
  %v3830 = vpop.f32.mrb[0].mxu0
  %3831 = vmatprep.mubr.bf16.mxu0 0
  %3832 = vmatmul.mubr.bf16.gmra.mrb[0].mxu0 %v3609
  %v3833 = vpop.f32.mrb[0].mxu0
  %v3834 = vadd.f32 %v3277, %v3833
  %v3835 = vpop.f32.mrb[0].mxu0
  %v3836 = vpop.f32.mrb[0].mxu0
  %v3837 = vadd.f32 %v3280, %v3836
  %v3838 = vpop.f32.mrb[0].mxu0
  %3839 = vmatprep.mubr.bf16.mxu0 0
  %3840 = vmatmul.mubr.bf16.gmra.mrb[0].mxu0 %v3612
  %v3841 = vpop.f32.mrb[0].mxu0
  %v3842 = vadd.f32 %v3285, %v3841
  %v3843 = vpop.f32.mrb[0].mxu0
  %v3844 = vpop.f32.mrb[0].mxu0
  %v3845 = vadd.f32 %v3288, %v3844
  %v3846 = vpop.f32.mrb[0].mxu0
  %3847 = vmatprep.mubr.bf16.mxu0 0
  %3848 = vmatmul.mubr.bf16.gmra.mrb[0].mxu0 %v3615
  %v3849 = vpop.f32.mrb[0].mxu0
  %v3850 = vadd.f32 %v3293, %v3849
  %v3851 = vpop.f32.mrb[0].mxu0
  %v3852 = vpop.f32.mrb[0].mxu0
  %v3853 = vadd.f32 %v3296, %v3852
  %v3854 = vpop.f32.mrb[0].mxu0
  %3855 = vmatprep.mubr.bf16.mxu0 0
  %3856 = vmatmul.mubr.bf16.gmra.mrb[0].mxu0 %v3618
  %v3857 = vpop.f32.mrb[0].mxu0
  %v3858 = vadd.f32 %v3301, %v3857
  %v3859 = vpop.f32.mrb[0].mxu0
  %v3860 = vpop.f32.mrb[0].mxu0
  %v3861 = vadd.f32 %v3304, %v3860
  %v3862 = vpop.f32.mrb[0].mxu0
  %3863 = vmatprep.mubr.bf16.mxu0 0
  %3864 = vmatmul.mubr.bf16.gmra.mrb[0].mxu0 %v3621
  %v3865 = vpop.f32.mrb[0].mxu0
  %v3866 = vadd.f32 %v3309, %v3865
  %v3867 = vpop.f32.mrb[0].mxu0
  %v3868 = vpop.f32.mrb[0].mxu0
  %v3869 = vadd.f32 %v3312, %v3868
  %v3870 = vpop.f32.mrb[0].mxu0
  %3871 = vmatprep.mubr.bf16.mxu0 0
  %3872 = vmatmul.mubr.bf16.gmra.mrb[0].mxu0 %v3624
  %v3873 = vpop.f32.mrb[0].mxu0
  %v3874 = vadd.f32 %v3317, %v3873
  %v3875 = vpop.f32.mrb[0].mxu0
  %v3876 = vpop.f32.mrb[0].mxu0
  %v3877 = vadd.f32 %v3320, %v3876
  %v3878 = vpop.f32.mrb[0].mxu0
  %3879 = vmatprep.mubr.bf16.mxu0 0
  %3880 = vmatmul.mubr.bf16.gmra.mrb[0].mxu0 %v3627
  %v3881 = vpop.f32.mrb[0].mxu0
  %v3882 = vadd.f32 %v3325, %v3881
  %v3883 = vpop.f32.mrb[0].mxu0
  %v3884 = vpop.f32.mrb[0].mxu0
  %v3885 = vadd.f32 %v3328, %v3884
  %v3886 = vpop.f32.mrb[0].mxu0
  %3887 = vmatprep.mubr.bf16.mxu0 0
  %3888 = vmatmul.mubr.bf16.gmra.mrb[0].mxu0 %v3630
  %v3889 = vpop.f32.mrb[0].mxu0
  %v3890 = vadd.f32 %v3333, %v3889
  %v3891 = vpop.f32.mrb[0].mxu0
  %v3892 = vpop.f32.mrb[0].mxu0
  %v3893 = vadd.f32 %v3336, %v3892
  %v3894 = vpop.f32.mrb[0].mxu0
  %3895 = vmatprep.mubr.bf16.mxu0 0
  %3896 = vmatmul.mubr.bf16.gmra.mrb[0].mxu0 %v3633
  %v3897 = vpop.f32.mrb[0].mxu0
  %v3898 = vadd.f32 %v3341, %v3897
  %v3899 = vpop.f32.mrb[0].mxu0
  %v3900 = vpop.f32.mrb[0].mxu0
  %v3901 = vadd.f32 %v3344, %v3900
  %v3902 = vpop.f32.mrb[0].mxu0
  %3903 = vmatprep.mubr.bf16.mxu0 0
  %3904 = vmatmul.mubr.bf16.gmra.mrb[0].mxu0 %v3636
  %v3905 = vpop.f32.mrb[0].mxu0
  %v3906 = vadd.f32 %v3349, %v3905
  %v3907 = vpop.f32.mrb[0].mxu0
  %v3908 = vpop.f32.mrb[0].mxu0
  %v3909 = vadd.f32 %v3352, %v3908
  %v3910 = vpop.f32.mrb[0].mxu0
  %3911 = vmatprep.mubr.bf16.mxu0 0
  %3912 = vmatmul.mubr.bf16.gmra.mrb[0].mxu0 %v3639
  %v3913 = vpop.f32.mrb[0].mxu0
  %v3914 = vadd.f32 %v3357, %v3913
  %v3915 = vpop.f32.mrb[0].mxu0
  %v3916 = vpop.f32.mrb[0].mxu0
  %v3917 = vadd.f32 %v3360, %v3916
  %v3918 = vpop.f32.mrb[0].mxu0
  %3919 = vmatprep.mubr.bf16.mxu0 0
  %3920 = vmatmul.mubr.bf16.gmra.mrb[0].mxu0 %v3642
  %v3921 = vpop.f32.mrb[0].mxu0
  %v3922 = vadd.f32 %v3365, %v3921
  %v3923 = vpop.f32.mrb[0].mxu0
  %v3924 = vpop.f32.mrb[0].mxu0
  %v3925 = vadd.f32 %v3368, %v3924
  %v3926 = vpop.f32.mrb[0].mxu0
  %3927 = vmatprep.mubr.bf16.mxu0 0
  %3928 = vmatmul.mubr.bf16.gmra.mrb[0].mxu0 %v3645
  %v3929 = vpop.f32.mrb[0].mxu0
  %v3930 = vadd.f32 %v3373, %v3929
  %v3931 = vpop.f32.mrb[0].mxu0
  %v3932 = vpop.f32.mrb[0].mxu0
  %v3933 = vadd.f32 %v3376, %v3932
  %v3934 = vpop.f32.mrb[0].mxu0
  %3935 = vdwg.mxu0
  %v3936 = vld [vmem:[#allocation2] sm:$0xe]
  %v3937 = vld [vmem:[#allocation2 + $0xc] sm:$0xe]
  %v3938 = vld [vmem:[#allocation2 + $0x18] sm:$0xe]
  %v3939 = vld [vmem:[#allocation2 + $0x24] sm:$0xe]
  %v3940 = vld [vmem:[#allocation2 + $0x30] sm:$0xe]
  %v3941 = vld [vmem:[#allocation2 + $0x3c] sm:$0xe]
  %v3942 = vld [vmem:[#allocation2 + $0x48] sm:$0xe]
  %v3943 = vld [vmem:[#allocation2 + $0x54] sm:$0xe]
  %v3944 = vld [vmem:[#allocation2 + $0x60] sm:$0xe]
  %v3945 = vld [vmem:[#allocation2 + $0x6c] sm:$0xe]
  %v3946 = vld [vmem:[#allocation2 + $0x78] sm:$0xe]
  %v3947 = vld [vmem:[#allocation2 + $0x84] sm:$0xe]
  %v3948 = vld [vmem:[#allocation2 + $0x90] sm:$0xe]
  %v3949 = vld [vmem:[#allocation2 + $0x9c] sm:$0xe]
  %v3950 = vld [vmem:[#allocation2 + $0xa8] sm:$0xe]
  %v3951 = vld [vmem:[#allocation2 + $0xb4] sm:$0xe]
  %v3952 = vld [vmem:[#allocation2 + $0xd8] sm:$0xe]
  %v3953 = vld [vmem:[#allocation2 + $0xe4] sm:$0xe]
  %v3954 = vld [vmem:[#allocation2 + $0xf0] sm:$0xe]
  %v3955 = vld [vmem:[#allocation2 + $0xfc] sm:$0xe]
  %v3956 = vld [vmem:[#allocation2 + $0x108] sm:$0xe]
  %v3957 = vld [vmem:[#allocation2 + $0x114] sm:$0xe]
  %v3958 = vld [vmem:[#allocation2 + $0x120] sm:$0xe]
  %v3959 = vld [vmem:[#allocation2 + $0x12c] sm:$0xe]
  %v3960 = vld [vmem:[#allocation2 + $0x138] sm:$0xe]
  %v3961 = vld [vmem:[#allocation2 + $0x144] sm:$0xe]
  %v3962 = vld [vmem:[#allocation2 + $0x150] sm:$0xe]
  %v3963 = vld [vmem:[#allocation2 + $0x15c] sm:$0xe]
  %v3964 = vld [vmem:[#allocation2 + $0x168] sm:$0xe]
  %v3965 = vld [vmem:[#allocation2 + $0x174] sm:$0xe]
  %v3966 = vld [vmem:[#allocation2 + $0x180] sm:$0xe]
  %v3967 = vld [vmem:[#allocation2 + $0x18c] sm:$0xe]
  %vm4032 = vcmask 1042432
  %vm4033 = vcmask 1046532
  %vm4034 = vmor %vm4032, %vm4033
  %v4035 = vrot.slane %v3936, 5
  %v4036 = vrot.slane %v4035, 4
  %v4037 = vrot.slane %v2011, 5
  %v4038 = vsel %vm4034, %v4036, %v4037
  %v4039 = vrot.slane %v4037, 4
  %v4040 = vrot.slane %v2078, 5
  %v4041 = vsel %vm4034, %v4039, %v4040
  %v4042 = vrot.slane %v3937, 5
  %v4043 = vrot.slane %v4042, 4
  %v4044 = vrot.slane %v2013, 5
  %v4045 = vsel %vm4034, %v4043, %v4044
  %v4046 = vrot.slane %v4044, 4
  %v4047 = vrot.slane %v2079, 5
  %v4048 = vsel %vm4034, %v4046, %v4047
  %v4049 = vrot.slane %v3938, 5
  %v4050 = vrot.slane %v4049, 4
  %v4051 = vrot.slane %v2015, 5
  %v4052 = vsel %vm4034, %v4050, %v4051
  %v4053 = vrot.slane %v4051, 4
  %v4054 = vrot.slane %v2080, 5
  %v4055 = vsel %vm4034, %v4053, %v4054
  %v4056 = vrot.slane %v3939, 5
  %v4057 = vrot.slane %v4056, 4
  %v4058 = vrot.slane %v2017, 5
  %v4059 = vsel %vm4034, %v4057, %v4058
  %v4060 = vrot.slane %v4058, 4
  %v4061 = vrot.slane %v2081, 5
  %v4062 = vsel %vm4034, %v4060, %v4061
  %v4063 = vrot.slane %v3940, 5
  %v4064 = vrot.slane %v4063, 4
  %v4065 = vrot.slane %v2019, 5
  %v4066 = vsel %vm4034, %v4064, %v4065
  %v4067 = vrot.slane %v4065, 4
  %v4068 = vrot.slane %v2082, 5
  %v4069 = vsel %vm4034, %v4067, %v4068
  %v4070 = vrot.slane %v3941, 5
  %v4071 = vrot.slane %v4070, 4
  %v4072 = vrot.slane %v2021, 5
  %v4073 = vsel %vm4034, %v4071, %v4072
  %v4074 = vrot.slane %v4072, 4
  %v4075 = vrot.slane %v2083, 5
  %v4076 = vsel %vm4034, %v4074, %v4075
  %v4077 = vrot.slane %v3942, 5
  %v4078 = vrot.slane %v4077, 4
  %v4079 = vrot.slane %v2023, 5
  %v4080 = vsel %vm4034, %v4078, %v4079
  %v4081 = vrot.slane %v4079, 4
  %v4082 = vrot.slane %v2084, 5
  %v4083 = vsel %vm4034, %v4081, %v4082
  %v4084 = vrot.slane %v3943, 5
  %v4085 = vrot.slane %v4084, 4
  %v4086 = vrot.slane %v2025, 5
  %v4087 = vsel %vm4034, %v4085, %v4086
  %v4088 = vrot.slane %v4086, 4
  %v4089 = vrot.slane %v2085, 5
  %v4090 = vsel %vm4034, %v4088, %v4089
  %v4091 = vrot.slane %v3944, 5
  %v4092 = vrot.slane %v4091, 4
  %v4093 = vrot.slane %v2027, 5
  %v4094 = vsel %vm4034, %v4092, %v4093
  %v4095 = vrot.slane %v4093, 4
  %v4096 = vrot.slane %v2086, 5
  %v4097 = vsel %vm4034, %v4095, %v4096
  %v4098 = vrot.slane %v3945, 5
  %v4099 = vrot.slane %v4098, 4
  %v4100 = vrot.slane %v2029, 5
  %v4101 = vsel %vm4034, %v4099, %v4100
  %v4102 = vrot.slane %v4100, 4
  %v4103 = vrot.slane %v2087, 5
  %v4104 = vsel %vm4034, %v4102, %v4103
  %v4105 = vrot.slane %v3946, 5
  %v4106 = vrot.slane %v4105, 4
  %v4107 = vrot.slane %v2031, 5
  %v4108 = vsel %vm4034, %v4106, %v4107
  %v4109 = vrot.slane %v4107, 4
  %v4110 = vrot.slane %v2088, 5
  %v4111 = vsel %vm4034, %v4109, %v4110
  %v4112 = vrot.slane %v3947, 5
  %v4113 = vrot.slane %v4112, 4
  %v4114 = vrot.slane %v2033, 5
  %v4115 = vsel %vm4034, %v4113, %v4114
  %v4116 = vrot.slane %v4114, 4
  %v4117 = vrot.slane %v2089, 5
  %v4118 = vsel %vm4034, %v4116, %v4117
  %v4119 = vrot.slane %v3948, 5
  %v4120 = vrot.slane %v4119, 4
  %v4121 = vrot.slane %v2035, 5
  %v4122 = vsel %vm4034, %v4120, %v4121
  %v4123 = vrot.slane %v4121, 4
  %v4124 = vrot.slane %v2090, 5
  %v4125 = vsel %vm4034, %v4123, %v4124
  %v4126 = vrot.slane %v3949, 5
  %v4127 = vrot.slane %v4126, 4
  %v4128 = vrot.slane %v2037, 5
  %v4129 = vsel %vm4034, %v4127, %v4128
  %v4130 = vrot.slane %v4128, 4
  %v4131 = vrot.slane %v2091, 5
  %v4132 = vsel %vm4034, %v4130, %v4131
  %v4133 = vrot.slane %v3950, 5
  %v4134 = vrot.slane %v4133, 4
  %v4135 = vrot.slane %v2039, 5
  %v4136 = vsel %vm4034, %v4134, %v4135
  %v4137 = vrot.slane %v4135, 4
  %v4138 = vrot.slane %v2092, 5
  %v4139 = vsel %vm4034, %v4137, %v4138
  %v4140 = vrot.slane %v3951, 5
  %v4141 = vrot.slane %v4140, 4
  %v4142 = vrot.slane %v2041, 5
  %v4143 = vsel %vm4034, %v4141, %v4142
  %v4144 = vrot.slane %v4142, 4
  %v4145 = vrot.slane %v2093, 5
  %v4146 = vsel %vm4034, %v4144, %v4145
  %v4147 = vrot.slane %v3952, 5
  %v4148 = vrot.slane %v4147, 4
  %v4149 = vrot.slane %v2043, 5
  %v4150 = vsel %vm4034, %v4148, %v4149
  %v4151 = vrot.slane %v4149, 4
  %v4152 = vrot.slane %v2094, 5
  %v4153 = vsel %vm4034, %v4151, %v4152
  %v4154 = vrot.slane %v3953, 5
  %v4155 = vrot.slane %v4154, 4
  %v4156 = vrot.slane %v2045, 5
  %v4157 = vsel %vm4034, %v4155, %v4156
  %v4158 = vrot.slane %v4156, 4
  %v4159 = vrot.slane %v2095, 5
  %v4160 = vsel %vm4034, %v4158, %v4159
  %v4161 = vrot.slane %v3954, 5
  %v4162 = vrot.slane %v4161, 4
  %v4163 = vrot.slane %v2047, 5
  %v4164 = vsel %vm4034, %v4162, %v4163
  %v4165 = vrot.slane %v4163, 4
  %v4166 = vrot.slane %v2096, 5
  %v4167 = vsel %vm4034, %v4165, %v4166
  %v4168 = vrot.slane %v3955, 5
  %v4169 = vrot.slane %v4168, 4
  %v4170 = vrot.slane %v2049, 5
  %v4171 = vsel %vm4034, %v4169, %v4170
  %v4172 = vrot.slane %v4170, 4
  %v4173 = vrot.slane %v2097, 5
  %v4174 = vsel %vm4034, %v4172, %v4173
  %v4175 = vrot.slane %v3956, 5
  %v4176 = vrot.slane %v4175, 4
  %v4177 = vrot.slane %v2051, 5
  %v4178 = vsel %vm4034, %v4176, %v4177
  %v4179 = vrot.slane %v4177, 4
  %v4180 = vrot.slane %v2098, 5
  %v4181 = vsel %vm4034, %v4179, %v4180
  %v4182 = vrot.slane %v3957, 5
  %v4183 = vrot.slane %v4182, 4
  %v4184 = vrot.slane %v2053, 5
  %v4185 = vsel %vm4034, %v4183, %v4184
  %v4186 = vrot.slane %v4184, 4
  %v4187 = vrot.slane %v2099, 5
  %v4188 = vsel %vm4034, %v4186, %v4187
  %v4189 = vrot.slane %v3958, 5
  %v4190 = vrot.slane %v4189, 4
  %v4191 = vrot.slane %v2055, 5
  %v4192 = vsel %vm4034, %v4190, %v4191
  %v4193 = vrot.slane %v4191, 4
  %v4194 = vrot.slane %v2100, 5
  %v4195 = vsel %vm4034, %v4193, %v4194
  %v4196 = vrot.slane %v3959, 5
  %v4197 = vrot.slane %v4196, 4
  %v4198 = vrot.slane %v2057, 5
  %v4199 = vsel %vm4034, %v4197, %v4198
  %v4200 = vrot.slane %v4198, 4
  %v4201 = vrot.slane %v2101, 5
  %v4202 = vsel %vm4034, %v4200, %v4201
  %v4203 = vrot.slane %v3960, 5
  %v4204 = vrot.slane %v4203, 4
  %v4205 = vrot.slane %v2059, 5
  %v4206 = vsel %vm4034, %v4204, %v4205
  %v4207 = vrot.slane %v4205, 4
  %v4208 = vrot.slane %v2102, 5
  %v4209 = vsel %vm4034, %v4207, %v4208
  %v4210 = vrot.slane %v3961, 5
  %v4211 = vrot.slane %v4210, 4
  %v4212 = vrot.slane %v2061, 5
  %v4213 = vsel %vm4034, %v4211, %v4212
  %v4214 = vrot.slane %v4212, 4
  %v4215 = vrot.slane %v2103, 5
  %v4216 = vsel %vm4034, %v4214, %v4215
  %v4217 = vrot.slane %v3962, 5
  %v4218 = vrot.slane %v4217, 4
  %v4219 = vrot.slane %v2063, 5
  %v4220 = vsel %vm4034, %v4218, %v4219
  %v4221 = vrot.slane %v4219, 4
  %v4222 = vrot.slane %v2104, 5
  %v4223 = vsel %vm4034, %v4221, %v4222
  %v4224 = vrot.slane %v3963, 5
  %v4225 = vrot.slane %v4224, 4
  %v4226 = vrot.slane %v2065, 5
  %v4227 = vsel %vm4034, %v4225, %v4226
  %v4228 = vrot.slane %v4226, 4
  %v4229 = vrot.slane %v2105, 5
  %v4230 = vsel %vm4034, %v4228, %v4229
  %v4231 = vrot.slane %v3964, 5
  %v4232 = vrot.slane %v4231, 4
  %v4233 = vrot.slane %v2067, 5
  %v4234 = vsel %vm4034, %v4232, %v4233
  %v4235 = vrot.slane %v4233, 4
  %v4236 = vrot.slane %v2106, 5
  %v4237 = vsel %vm4034, %v4235, %v4236
  %v4238 = vrot.slane %v3965, 5
  %v4239 = vrot.slane %v4238, 4
  %v4240 = vrot.slane %v2069, 5
  %v4241 = vsel %vm4034, %v4239, %v4240
  %v4242 = vrot.slane %v4240, 4
  %v4243 = vrot.slane %v2107, 5
  %v4244 = vsel %vm4034, %v4242, %v4243
  %v4245 = vrot.slane %v3966, 5
  %v4246 = vrot.slane %v4245, 4
  %v4247 = vrot.slane %v2071, 5
  %v4248 = vsel %vm4034, %v4246, %v4247
  %v4249 = vrot.slane %v4247, 4
  %v4250 = vrot.slane %v2108, 5
  %v4251 = vsel %vm4034, %v4249, %v4250
  %v4252 = vrot.slane %v3967, 5
  %v4253 = vrot.slane %v4252, 4
  %v4254 = vrot.slane %v2073, 5
  %v4255 = vsel %vm4034, %v4253, %v4254
  %v4256 = vrot.slane %v4254, 4
  %v4257 = vrot.slane %v2109, 5
  %v4258 = vsel %vm4034, %v4256, %v4257
  %v4259 = vld [vmem:[%s2 + $0x20] sm:$0xf]
  %v4260 = vld [vmem:[%s2 + $0x24] sm:$0xf]
  %v4261 = vld [vmem:[%s2 + $0x28] sm:$0xf]
  %v4262 = vld [vmem:[%s2 + $0x2c] sm:$0xf]
  %v4263 = vunpack.c.l.b16 %v4038
  %v4264 = vunpack.c.l.b16 %v4041
  %v4265 = vunpack.c.l.b16 %v4045
  %v4266 = vunpack.c.l.b16 %v4048
  %v4267 = vunpack.c.l.b16 %v4052
  %v4268 = vunpack.c.l.b16 %v4055
  %v4269 = vunpack.c.l.b16 %v4059
  %v4270 = vunpack.c.l.b16 %v4062
  %v4271 = vunpack.c.l.b16 %v4066
  %v4272 = vunpack.c.l.b16 %v4069
  %v4273 = vunpack.c.l.b16 %v4073
  %v4274 = vunpack.c.l.b16 %v4076
  %v4275 = vunpack.c.l.b16 %v4080
  %v4276 = vunpack.c.l.b16 %v4083
  %v4277 = vunpack.c.l.b16 %v4087
  %v4278 = vunpack.c.l.b16 %v4090
  %v4279 = vunpack.c.l.b16 %v4094
  %v4280 = vunpack.c.l.b16 %v4097
  %v4281 = vunpack.c.l.b16 %v4101
  %v4282 = vunpack.c.l.b16 %v4104
  %v4283 = vunpack.c.l.b16 %v4108
  %v4284 = vunpack.c.l.b16 %v4111
  %v4285 = vunpack.c.l.b16 %v4115
  %v4286 = vunpack.c.l.b16 %v4118
  %v4287 = vunpack.c.l.b16 %v4122
  %v4288 = vunpack.c.l.b16 %v4125
  %v4289 = vunpack.c.l.b16 %v4129
  %v4290 = vunpack.c.l.b16 %v4132
  %v4291 = vunpack.c.l.b16 %v4136
  %v4292 = vunpack.c.l.b16 %v4139
  %v4293 = vunpack.c.l.b16 %v4143
  %v4294 = vunpack.c.l.b16 %v4146
  %v4295 = vunpack.c.l.b16 %v4150
  %v4296 = vunpack.c.l.b16 %v4153
  %v4297 = vunpack.c.l.b16 %v4157
  %v4298 = vunpack.c.l.b16 %v4160
  %v4299 = vunpack.c.l.b16 %v4164
  %v4300 = vunpack.c.l.b16 %v4167
  %v4301 = vunpack.c.l.b16 %v4171
  %v4302 = vunpack.c.l.b16 %v4174
  %v4303 = vunpack.c.l.b16 %v4178
  %v4304 = vunpack.c.l.b16 %v4181
  %v4305 = vunpack.c.l.b16 %v4185
  %v4306 = vunpack.c.l.b16 %v4188
  %v4307 = vunpack.c.l.b16 %v4192
  %v4308 = vunpack.c.l.b16 %v4195
  %v4309 = vunpack.c.l.b16 %v4199
  %v4310 = vunpack.c.l.b16 %v4202
  %v4311 = vunpack.c.l.b16 %v4206
  %v4312 = vunpack.c.l.b16 %v4209
  %v4313 = vunpack.c.l.b16 %v4213
  %v4314 = vunpack.c.l.b16 %v4216
  %v4315 = vunpack.c.l.b16 %v4220
  %v4316 = vunpack.c.l.b16 %v4223
  %v4317 = vunpack.c.l.b16 %v4227
  %v4318 = vunpack.c.l.b16 %v4230
  %v4319 = vunpack.c.l.b16 %v4234
  %v4320 = vunpack.c.l.b16 %v4237
  %v4321 = vunpack.c.l.b16 %v4241
  %v4322 = vunpack.c.l.b16 %v4244
  %v4323 = vunpack.c.l.b16 %v4248
  %v4324 = vunpack.c.l.b16 %v4251
  %v4325 = vunpack.c.l.b16 %v4255
  %v4326 = vunpack.c.l.b16 %v4258
  %v4327 = vpack.c.b16 %v4264, %v4263
  %v4328 = vpack.c.b16 %v4266, %v4265
  %v4329 = vpack.c.b16 %v4268, %v4267
  %v4330 = vpack.c.b16 %v4270, %v4269
  %v4331 = vpack.c.b16 %v4272, %v4271
  %v4332 = vpack.c.b16 %v4274, %v4273
  %v4333 = vpack.c.b16 %v4276, %v4275
  %v4334 = vpack.c.b16 %v4278, %v4277
  %v4335 = vpack.c.b16 %v4280, %v4279
  %v4336 = vpack.c.b16 %v4282, %v4281
  %v4337 = vpack.c.b16 %v4284, %v4283
  %v4338 = vpack.c.b16 %v4286, %v4285
  %v4339 = vpack.c.b16 %v4288, %v4287
  %v4340 = vpack.c.b16 %v4290, %v4289
  %v4341 = vpack.c.b16 %v4292, %v4291
  %v4342 = vpack.c.b16 %v4294, %v4293
  %v4343 = vpack.c.b16 %v4296, %v4295
  %v4344 = vpack.c.b16 %v4298, %v4297
  %v4345 = vpack.c.b16 %v4300, %v4299
  %v4346 = vpack.c.b16 %v4302, %v4301
  %v4347 = vpack.c.b16 %v4304, %v4303
  %v4348 = vpack.c.b16 %v4306, %v4305
  %v4349 = vpack.c.b16 %v4308, %v4307
  %v4350 = vpack.c.b16 %v4310, %v4309
  %v4351 = vpack.c.b16 %v4312, %v4311
  %v4352 = vpack.c.b16 %v4314, %v4313
  %v4353 = vpack.c.b16 %v4316, %v4315
  %v4354 = vpack.c.b16 %v4318, %v4317
  %v4355 = vpack.c.b16 %v4320, %v4319
  %v4356 = vpack.c.b16 %v4322, %v4321
  %v4357 = vpack.c.b16 %v4324, %v4323
  %v4358 = vpack.c.b16 %v4326, %v4325
  %v4363 = vunpack.c.l.b16 %v4259
  %v4364 = vunpack.c.l.b16 %v4260
  %v4365 = vunpack.c.l.b16 %v4261
  %v4366 = vunpack.c.l.b16 %v4262
  %v4367 = vpack.c.b16 %v4364, %v4363
  %v4368 = vpack.c.b16 %v4366, %v4365
  %v4372 = vsel %vm2993, %v4327, 0
  %v4375 = vsel %vm2993, %v4328, 0
  %v4378 = vsel %vm2993, %v4329, 0
  %v4381 = vsel %vm2993, %v4330, 0
  %v4384 = vsel %vm2993, %v4331, 0
  %v4387 = vsel %vm2993, %v4332, 0
  %v4390 = vsel %vm2993, %v4333, 0
  %v4393 = vsel %vm2993, %v4334, 0
  %v4396 = vsel %vm2993, %v4335, 0
  %v4399 = vsel %vm2993, %v4336, 0
  %v4402 = vsel %vm2993, %v4337, 0
  %v4405 = vsel %vm2993, %v4338, 0
  %v4408 = vsel %vm2993, %v4339, 0
  %v4411 = vsel %vm2993, %v4340, 0
  %v4414 = vsel %vm2993, %v4341, 0
  %v4417 = vsel %vm2993, %v4342, 0
  %v4420 = vsel %vm2993, %v4343, 0
  %v4423 = vsel %vm2993, %v4344, 0
  %v4426 = vsel %vm2993, %v4345, 0
  %v4429 = vsel %vm2993, %v4346, 0
  %v4432 = vsel %vm2993, %v4347, 0
  %v4435 = vsel %vm2993, %v4348, 0
  %v4438 = vsel %vm2993, %v4349, 0
  %v4441 = vsel %vm2993, %v4350, 0
  %v4444 = vsel %vm2993, %v4351, 0
  %v4447 = vsel %vm2993, %v4352, 0
  %v4450 = vsel %vm2993, %v4353, 0
  %v4453 = vsel %vm2993, %v4354, 0
  %v4456 = vsel %vm2993, %v4355, 0
  %v4459 = vsel %vm2993, %v4356, 0
  %v4462 = vsel %vm2993, %v4357, 0
  %v4465 = vsel %vm2993, %v4358, 0
  %4467 = vmatprep.subr.bf16.mxu0 0
  %4468 = vmatpush1.bf16.msra.mxu0 %v4367
  %4469 = vmatprep.subr.bf16.mxu0 0
  %4470 = vmatpush1.bf16.msra.mxu0 %v4368
  %4471 = vmatprep.subr.bf16.mxu0 0
  %4472 = vmatpush1.bf16.msra.mxu0 0
  %4473 = vmatprep.subr.bf16.mxu0 0
  %4474 = vmatpush1.bf16.msra.mxu0 0
  %4475 = vmatprep.subr.bf16.mxu0 0
  %4476 = vmatpush1.bf16.msra.mxu0 0
  %4477 = vmatprep.subr.bf16.mxu0 0
  %4478 = vmatpush1.bf16.msra.mxu0 0
  %4479 = vmatprep.subr.bf16.mxu0 0
  %4480 = vmatpush1.bf16.msra.mxu0 0
  %4481 = vmatprep.subr.bf16.mxu0 0
  %4482 = vmatpush1.bf16.msra.mxu0 0
  %4483 = vmatprep.subr.bf16.mxu0 0
  %4484 = vmatpush1.bf16.msra.mxu0 0
  %4485 = vmatprep.subr.bf16.mxu0 0
  %4486 = vmatpush1.bf16.msra.mxu0 0
  %4487 = vmatprep.subr.bf16.mxu0 0
  %4488 = vmatpush1.bf16.msra.mxu0 0
  %4489 = vmatprep.subr.bf16.mxu0 0
  %4490 = vmatpush1.bf16.msra.mxu0 0
  %4491 = vmatprep.subr.bf16.mxu0 0
  %4492 = vmatpush1.bf16.msra.mxu0 0
  %4493 = vmatprep.subr.bf16.mxu0 0
  %4494 = vmatpush1.bf16.msra.mxu0 0
  %4495 = vmatprep.subr.bf16.mxu0 0
  %4496 = vmatpush1.bf16.msra.mxu0 0
  %4497 = vmatprep.subr.bf16.mxu0 0
  %4498 = vmatpush1.bf16.msra.mxu0 0
  %4499 = vmatprep.mubr.bf16.mxu0 0
  %4500 = vmatmul.mubr.bf16.gmra.mrb[0].mxu0 %v4372
  %v4501 = vpop.f32.mrb[0].mxu0
  %v4502 = vadd.f32 0.0, %v4501
  %v4503 = vpop.f32.mrb[0].mxu0
  %v4504 = vpop.f32.mrb[0].mxu0
  %v4505 = vadd.f32 0.0, %v4504
  %v4506 = vpop.f32.mrb[0].mxu0
  %4507 = vmatprep.mubr.bf16.mxu0 0
  %4508 = vmatmul.mubr.bf16.gmra.mrb[0].mxu0 %v4375
  %v4509 = vpop.f32.mrb[0].mxu0
  %v4510 = vadd.f32 0.0, %v4509
  %v4511 = vpop.f32.mrb[0].mxu0
  %v4512 = vpop.f32.mrb[0].mxu0
  %v4513 = vadd.f32 0.0, %v4512
  %v4514 = vpop.f32.mrb[0].mxu0
  %4515 = vmatprep.mubr.bf16.mxu0 0
  %4516 = vmatmul.mubr.bf16.gmra.mrb[0].mxu0 %v4378
  %v4517 = vpop.f32.mrb[0].mxu0
  %v4518 = vadd.f32 0.0, %v4517
  %v4519 = vpop.f32.mrb[0].mxu0
  %v4520 = vpop.f32.mrb[0].mxu0
  %v4521 = vadd.f32 0.0, %v4520
  %v4522 = vpop.f32.mrb[0].mxu0
  %4523 = vmatprep.mubr.bf16.mxu0 0
  %4524 = vmatmul.mubr.bf16.gmra.mrb[0].mxu0 %v4381
  %v4525 = vpop.f32.mrb[0].mxu0
  %v4526 = vadd.f32 0.0, %v4525
  %v4527 = vpop.f32.mrb[0].mxu0
  %v4528 = vpop.f32.mrb[0].mxu0
  %v4529 = vadd.f32 0.0, %v4528
  %v4530 = vpop.f32.mrb[0].mxu0
  %4531 = vmatprep.mubr.bf16.mxu0 0
  %4532 = vmatmul.mubr.bf16.gmra.mrb[0].mxu0 %v4384
  %v4533 = vpop.f32.mrb[0].mxu0
  %v4534 = vadd.f32 0.0, %v4533
  %v4535 = vpop.f32.mrb[0].mxu0
  %v4536 = vpop.f32.mrb[0].mxu0
  %v4537 = vadd.f32 0.0, %v4536
  %v4538 = vpop.f32.mrb[0].mxu0
  %4539 = vmatprep.mubr.bf16.mxu0 0
  %4540 = vmatmul.mubr.bf16.gmra.mrb[0].mxu0 %v4387
  %v4541 = vpop.f32.mrb[0].mxu0
  %v4542 = vadd.f32 0.0, %v4541
  %v4543 = vpop.f32.mrb[0].mxu0
  %v4544 = vpop.f32.mrb[0].mxu0
  %v4545 = vadd.f32 0.0, %v4544
  %v4546 = vpop.f32.mrb[0].mxu0
  %4547 = vmatprep.mubr.bf16.mxu0 0
  %4548 = vmatmul.mubr.bf16.gmra.mrb[0].mxu0 %v4390
  %v4549 = vpop.f32.mrb[0].mxu0
  %v4550 = vadd.f32 0.0, %v4549
  %v4551 = vpop.f32.mrb[0].mxu0
  %v4552 = vpop.f32.mrb[0].mxu0
  %v4553 = vadd.f32 0.0, %v4552
  %v4554 = vpop.f32.mrb[0].mxu0
  %4555 = vmatprep.mubr.bf16.mxu0 0
  %4556 = vmatmul.mubr.bf16.gmra.mrb[0].mxu0 %v4393
  %v4557 = vpop.f32.mrb[0].mxu0
  %v4558 = vadd.f32 0.0, %v4557
  %v4559 = vpop.f32.mrb[0].mxu0
  %v4560 = vpop.f32.mrb[0].mxu0
  %v4561 = vadd.f32 0.0, %v4560
  %v4562 = vpop.f32.mrb[0].mxu0
  %4563 = vmatprep.mubr.bf16.mxu0 0
  %4564 = vmatmul.mubr.bf16.gmra.mrb[0].mxu0 %v4396
  %v4565 = vpop.f32.mrb[0].mxu0
  %v4566 = vadd.f32 0.0, %v4565
  %v4567 = vpop.f32.mrb[0].mxu0
  %v4568 = vpop.f32.mrb[0].mxu0
  %v4569 = vadd.f32 0.0, %v4568
  %v4570 = vpop.f32.mrb[0].mxu0
  %4571 = vmatprep.mubr.bf16.mxu0 0
  %4572 = vmatmul.mubr.bf16.gmra.mrb[0].mxu0 %v4399
  %v4573 = vpop.f32.mrb[0].mxu0
  %v4574 = vadd.f32 0.0, %v4573
  %v4575 = vpop.f32.mrb[0].mxu0
  %v4576 = vpop.f32.mrb[0].mxu0
  %v4577 = vadd.f32 0.0, %v4576
  %v4578 = vpop.f32.mrb[0].mxu0
  %4579 = vmatprep.mubr.bf16.mxu0 0
  %4580 = vmatmul.mubr.bf16.gmra.mrb[0].mxu0 %v4402
  %v4581 = vpop.f32.mrb[0].mxu0
  %v4582 = vadd.f32 0.0, %v4581
  %v4583 = vpop.f32.mrb[0].mxu0
  %v4584 = vpop.f32.mrb[0].mxu0
  %v4585 = vadd.f32 0.0, %v4584
  %v4586 = vpop.f32.mrb[0].mxu0
  %4587 = vmatprep.mubr.bf16.mxu0 0
  %4588 = vmatmul.mubr.bf16.gmra.mrb[0].mxu0 %v4405
  %v4589 = vpop.f32.mrb[0].mxu0
  %v4590 = vadd.f32 0.0, %v4589
  %v4591 = vpop.f32.mrb[0].mxu0
  %v4592 = vpop.f32.mrb[0].mxu0
  %v4593 = vadd.f32 0.0, %v4592
  %v4594 = vpop.f32.mrb[0].mxu0
  %4595 = vmatprep.mubr.bf16.mxu0 0
  %4596 = vmatmul.mubr.bf16.gmra.mrb[0].mxu0 %v4408
  %v4597 = vpop.f32.mrb[0].mxu0
  %v4598 = vadd.f32 0.0, %v4597
  %v4599 = vpop.f32.mrb[0].mxu0
  %v4600 = vpop.f32.mrb[0].mxu0
  %v4601 = vadd.f32 0.0, %v4600
  %v4602 = vpop.f32.mrb[0].mxu0
  %4603 = vmatprep.mubr.bf16.mxu0 0
  %4604 = vmatmul.mubr.bf16.gmra.mrb[0].mxu0 %v4411
  %v4605 = vpop.f32.mrb[0].mxu0
  %v4606 = vadd.f32 0.0, %v4605
  %v4607 = vpop.f32.mrb[0].mxu0
  %v4608 = vpop.f32.mrb[0].mxu0
  %v4609 = vadd.f32 0.0, %v4608
  %v4610 = vpop.f32.mrb[0].mxu0
  %4611 = vmatprep.mubr.bf16.mxu0 0
  %4612 = vmatmul.mubr.bf16.gmra.mrb[0].mxu0 %v4414
  %v4613 = vpop.f32.mrb[0].mxu0
  %v4614 = vadd.f32 0.0, %v4613
  %v4615 = vpop.f32.mrb[0].mxu0
  %v4616 = vpop.f32.mrb[0].mxu0
  %v4617 = vadd.f32 0.0, %v4616
  %v4618 = vpop.f32.mrb[0].mxu0
  %4619 = vmatprep.mubr.bf16.mxu0 0
  %4620 = vmatmul.mubr.bf16.gmra.mrb[0].mxu0 %v4417
  %v4621 = vpop.f32.mrb[0].mxu0
  %v4622 = vadd.f32 0.0, %v4621
  %v4623 = vpop.f32.mrb[0].mxu0
  %v4624 = vpop.f32.mrb[0].mxu0
  %v4625 = vadd.f32 0.0, %v4624
  %v4626 = vpop.f32.mrb[0].mxu0
  %4627 = vmatprep.mubr.bf16.mxu0 0
  %4628 = vmatmul.mubr.bf16.gmra.mrb[0].mxu0 %v4420
  %v4629 = vpop.f32.mrb[0].mxu0
  %v4630 = vadd.f32 0.0, %v4629
  %v4631 = vpop.f32.mrb[0].mxu0
  %v4632 = vpop.f32.mrb[0].mxu0
  %v4633 = vadd.f32 0.0, %v4632
  %v4634 = vpop.f32.mrb[0].mxu0
  %4635 = vmatprep.mubr.bf16.mxu0 0
  %4636 = vmatmul.mubr.bf16.gmra.mrb[0].mxu0 %v4423
  %v4637 = vpop.f32.mrb[0].mxu0
  %v4638 = vadd.f32 0.0, %v4637
  %v4639 = vpop.f32.mrb[0].mxu0
  %v4640 = vpop.f32.mrb[0].mxu0
  %v4641 = vadd.f32 0.0, %v4640
  %v4642 = vpop.f32.mrb[0].mxu0
  %4643 = vmatprep.mubr.bf16.mxu0 0
  %4644 = vmatmul.mubr.bf16.gmra.mrb[0].mxu0 %v4426
  %v4645 = vpop.f32.mrb[0].mxu0
  %v4646 = vadd.f32 0.0, %v4645
  %v4647 = vpop.f32.mrb[0].mxu0
  %v4648 = vpop.f32.mrb[0].mxu0
  %v4649 = vadd.f32 0.0, %v4648
  %v4650 = vpop.f32.mrb[0].mxu0
  %4651 = vmatprep.mubr.bf16.mxu0 0
  %4652 = vmatmul.mubr.bf16.gmra.mrb[0].mxu0 %v4429
  %v4653 = vpop.f32.mrb[0].mxu0
  %v4654 = vadd.f32 0.0, %v4653
  %v4655 = vpop.f32.mrb[0].mxu0
  %v4656 = vpop.f32.mrb[0].mxu0
  %v4657 = vadd.f32 0.0, %v4656
  %v4658 = vpop.f32.mrb[0].mxu0
  %4659 = vmatprep.mubr.bf16.mxu0 0
  %4660 = vmatmul.mubr.bf16.gmra.mrb[0].mxu0 %v4432
  %v4661 = vpop.f32.mrb[0].mxu0
  %v4662 = vadd.f32 0.0, %v4661
  %v4663 = vpop.f32.mrb[0].mxu0
  %v4664 = vpop.f32.mrb[0].mxu0
  %v4665 = vadd.f32 0.0, %v4664
  %v4666 = vpop.f32.mrb[0].mxu0
  %4667 = vmatprep.mubr.bf16.mxu0 0
  %4668 = vmatmul.mubr.bf16.gmra.mrb[0].mxu0 %v4435
  %v4669 = vpop.f32.mrb[0].mxu0
  %v4670 = vadd.f32 0.0, %v4669
  %v4671 = vpop.f32.mrb[0].mxu0
  %v4672 = vpop.f32.mrb[0].mxu0
  %v4673 = vadd.f32 0.0, %v4672
  %v4674 = vpop.f32.mrb[0].mxu0
  %4675 = vmatprep.mubr.bf16.mxu0 0
  %4676 = vmatmul.mubr.bf16.gmra.mrb[0].mxu0 %v4438
  %v4677 = vpop.f32.mrb[0].mxu0
  %v4678 = vadd.f32 0.0, %v4677
  %v4679 = vpop.f32.mrb[0].mxu0
  %v4680 = vpop.f32.mrb[0].mxu0
  %v4681 = vadd.f32 0.0, %v4680
  %v4682 = vpop.f32.mrb[0].mxu0
  %4683 = vmatprep.mubr.bf16.mxu0 0
  %4684 = vmatmul.mubr.bf16.gmra.mrb[0].mxu0 %v4441
  %v4685 = vpop.f32.mrb[0].mxu0
  %v4686 = vadd.f32 0.0, %v4685
  %v4687 = vpop.f32.mrb[0].mxu0
  %v4688 = vpop.f32.mrb[0].mxu0
  %v4689 = vadd.f32 0.0, %v4688
  %v4690 = vpop.f32.mrb[0].mxu0
  %4691 = vmatprep.mubr.bf16.mxu0 0
  %4692 = vmatmul.mubr.bf16.gmra.mrb[0].mxu0 %v4444
  %v4693 = vpop.f32.mrb[0].mxu0
  %v4694 = vadd.f32 0.0, %v4693
  %v4695 = vpop.f32.mrb[0].mxu0
  %v4696 = vpop.f32.mrb[0].mxu0
  %v4697 = vadd.f32 0.0, %v4696
  %v4698 = vpop.f32.mrb[0].mxu0
  %4699 = vmatprep.mubr.bf16.mxu0 0
  %4700 = vmatmul.mubr.bf16.gmra.mrb[0].mxu0 %v4447
  %v4701 = vpop.f32.mrb[0].mxu0
  %v4702 = vadd.f32 0.0, %v4701
  %v4703 = vpop.f32.mrb[0].mxu0
  %v4704 = vpop.f32.mrb[0].mxu0
  %v4705 = vadd.f32 0.0, %v4704
  %v4706 = vpop.f32.mrb[0].mxu0
  %4707 = vmatprep.mubr.bf16.mxu0 0
  %4708 = vmatmul.mubr.bf16.gmra.mrb[0].mxu0 %v4450
  %v4709 = vpop.f32.mrb[0].mxu0
  %v4710 = vadd.f32 0.0, %v4709
  %v4711 = vpop.f32.mrb[0].mxu0
  %v4712 = vpop.f32.mrb[0].mxu0
  %v4713 = vadd.f32 0.0, %v4712
  %v4714 = vpop.f32.mrb[0].mxu0
  %4715 = vmatprep.mubr.bf16.mxu0 0
  %4716 = vmatmul.mubr.bf16.gmra.mrb[0].mxu0 %v4453
  %v4717 = vpop.f32.mrb[0].mxu0
  %v4718 = vadd.f32 0.0, %v4717
  %v4719 = vpop.f32.mrb[0].mxu0
  %v4720 = vpop.f32.mrb[0].mxu0
  %v4721 = vadd.f32 0.0, %v4720
  %v4722 = vpop.f32.mrb[0].mxu0
  %4723 = vmatprep.mubr.bf16.mxu0 0
  %4724 = vmatmul.mubr.bf16.gmra.mrb[0].mxu0 %v4456
  %v4725 = vpop.f32.mrb[0].mxu0
  %v4726 = vadd.f32 0.0, %v4725
  %v4727 = vpop.f32.mrb[0].mxu0
  %v4728 = vpop.f32.mrb[0].mxu0
  %v4729 = vadd.f32 0.0, %v4728
  %v4730 = vpop.f32.mrb[0].mxu0
  %4731 = vmatprep.mubr.bf16.mxu0 0
  %4732 = vmatmul.mubr.bf16.gmra.mrb[0].mxu0 %v4459
  %v4733 = vpop.f32.mrb[0].mxu0
  %v4734 = vadd.f32 0.0, %v4733
  %v4735 = vpop.f32.mrb[0].mxu0
  %v4736 = vpop.f32.mrb[0].mxu0
  %v4737 = vadd.f32 0.0, %v4736
  %v4738 = vpop.f32.mrb[0].mxu0
  %4739 = vmatprep.mubr.bf16.mxu0 0
  %4740 = vmatmul.mubr.bf16.gmra.mrb[0].mxu0 %v4462
  %v4741 = vpop.f32.mrb[0].mxu0
  %v4742 = vadd.f32 0.0, %v4741
  %v4743 = vpop.f32.mrb[0].mxu0
  %v4744 = vpop.f32.mrb[0].mxu0
  %v4745 = vadd.f32 0.0, %v4744
  %v4746 = vpop.f32.mrb[0].mxu0
  %4747 = vmatprep.mubr.bf16.mxu0 0
  %4748 = vmatmul.mubr.bf16.gmra.mrb[0].mxu0 %v4465
  %v4749 = vpop.f32.mrb[0].mxu0
  %v4750 = vadd.f32 0.0, %v4749
  %v4751 = vpop.f32.mrb[0].mxu0
  %v4752 = vpop.f32.mrb[0].mxu0
  %v4753 = vadd.f32 0.0, %v4752
  %v4754 = vpop.f32.mrb[0].mxu0
  %4755 = vdwg.mxu0
  %v4756 = vadd.f32 %v3682, %v4502
  %v4757 = vadd.f32 %v3685, %v4505
  %v4758 = vadd.f32 %v3690, %v4510
  %v4759 = vadd.f32 %v3693, %v4513
  %v4760 = vadd.f32 %v3698, %v4518
  %v4761 = vadd.f32 %v3701, %v4521
  %v4762 = vadd.f32 %v3706, %v4526
  %v4763 = vadd.f32 %v3709, %v4529
  %v4764 = vadd.f32 %v3714, %v4534
  %v4765 = vadd.f32 %v3717, %v4537
  %v4766 = vadd.f32 %v3722, %v4542
  %v4767 = vadd.f32 %v3725, %v4545
  %v4768 = vadd.f32 %v3730, %v4550
  %v4769 = vadd.f32 %v3733, %v4553
  %v4770 = vadd.f32 %v3738, %v4558
  %v4771 = vadd.f32 %v3741, %v4561
  %v4772 = vadd.f32 %v3746, %v4566
  %v4773 = vadd.f32 %v3749, %v4569
  %v4774 = vadd.f32 %v3754, %v4574
  %v4775 = vadd.f32 %v3757, %v4577
  %v4776 = vadd.f32 %v3762, %v4582
  %v4777 = vadd.f32 %v3765, %v4585
  %v4778 = vadd.f32 %v3770, %v4590
  %v4779 = vadd.f32 %v3773, %v4593
  %v4780 = vadd.f32 %v3778, %v4598
  %v4781 = vadd.f32 %v3781, %v4601
  %v4782 = vadd.f32 %v3786, %v4606
  %v4783 = vadd.f32 %v3789, %v4609
  %v4784 = vadd.f32 %v3794, %v4614
  %v4785 = vadd.f32 %v3797, %v4617
  %v4786 = vadd.f32 %v3802, %v4622
  %v4787 = vadd.f32 %v3805, %v4625
  %v4788 = vadd.f32 %v3810, %v4630
  %v4789 = vadd.f32 %v3813, %v4633
  %v4790 = vadd.f32 %v3818, %v4638
  %v4791 = vadd.f32 %v3821, %v4641
  %v4792 = vadd.f32 %v3826, %v4646
  %v4793 = vadd.f32 %v3829, %v4649
  %v4794 = vadd.f32 %v3834, %v4654
  %v4795 = vadd.f32 %v3837, %v4657
  %v4796 = vadd.f32 %v3842, %v4662
  %v4797 = vadd.f32 %v3845, %v4665
  %v4798 = vadd.f32 %v3850, %v4670
  %v4799 = vadd.f32 %v3853, %v4673
  %v4800 = vadd.f32 %v3858, %v4678
  %v4801 = vadd.f32 %v3861, %v4681
  %v4802 = vadd.f32 %v3866, %v4686
  %v4803 = vadd.f32 %v3869, %v4689
  %v4804 = vadd.f32 %v3874, %v4694
  %v4805 = vadd.f32 %v3877, %v4697
  %v4806 = vadd.f32 %v3882, %v4702
  %v4807 = vadd.f32 %v3885, %v4705
  %v4808 = vadd.f32 %v3890, %v4710
  %v4809 = vadd.f32 %v3893, %v4713
  %v4810 = vadd.f32 %v3898, %v4718
  %v4811 = vadd.f32 %v3901, %v4721
  %v4812 = vadd.f32 %v3906, %v4726
  %v4813 = vadd.f32 %v3909, %v4729
  %v4814 = vadd.f32 %v3914, %v4734
  %v4815 = vadd.f32 %v3917, %v4737
  %v4816 = vadd.f32 %v3922, %v4742
  %v4817 = vadd.f32 %v3925, %v4745
  %v4818 = vadd.f32 %v3930, %v4750
  %v4819 = vadd.f32 %v3933, %v4753
  %v4820 = vld [vmem:[%s1783] sm:$0xf]
  %v4821 = vld [vmem:[%s1783 + $0x4] sm:$0xf]
  %v4822 = vld [vmem:[%s1783 + $0xc] sm:$0xf]
  %v4823 = vld [vmem:[%s1783 + $0x10] sm:$0xf]
  %v4824 = vld [vmem:[%s1783 + $0x18] sm:$0xf]
  %v4825 = vld [vmem:[%s1783 + $0x1c] sm:$0xf]
  %v4826 = vld [vmem:[%s1783 + $0x24] sm:$0xf]
  %v4827 = vld [vmem:[%s1783 + $0x28] sm:$0xf]
  %v4828 = vld [vmem:[%s1783 + $0x30] sm:$0xf]
  %v4829 = vld [vmem:[%s1783 + $0x34] sm:$0xf]
  %v4830 = vld [vmem:[%s1783 + $0x3c] sm:$0xf]
  %v4831 = vld [vmem:[%s1783 + $0x40] sm:$0xf]
  %v4832 = vld [vmem:[%s1783 + $0x48] sm:$0xf]
  %v4833 = vld [vmem:[%s1783 + $0x4c] sm:$0xf]
  %v4834 = vld [vmem:[%s1783 + $0x54] sm:$0xf]
  %v4835 = vld [vmem:[%s1783 + $0x58] sm:$0xf]
  %v4836 = vld [vmem:[%s1783 + $0x60] sm:$0xf]
  %v4837 = vld [vmem:[%s1783 + $0x64] sm:$0xf]
  %v4838 = vld [vmem:[%s1783 + $0x6c] sm:$0xf]
  %v4839 = vld [vmem:[%s1783 + $0x70] sm:$0xf]
  %v4840 = vld [vmem:[%s1783 + $0x78] sm:$0xf]
  %v4841 = vld [vmem:[%s1783 + $0x7c] sm:$0xf]
  %v4842 = vld [vmem:[%s1783 + $0x84] sm:$0xf]
  %v4843 = vld [vmem:[%s1783 + $0x88] sm:$0xf]
  %v4844 = vld [vmem:[%s1783 + $0x90] sm:$0xf]
  %v4845 = vld [vmem:[%s1783 + $0x94] sm:$0xf]
  %v4846 = vld [vmem:[%s1783 + $0x9c] sm:$0xf]
  %v4847 = vld [vmem:[%s1783 + $0xa0] sm:$0xf]
  %v4848 = vld [vmem:[%s1783 + $0xa8] sm:$0xf]
  %v4849 = vld [vmem:[%s1783 + $0xac] sm:$0xf]
  %v4850 = vld [vmem:[%s1783 + $0xb4] sm:$0xf]
  %v4851 = vld [vmem:[%s1783 + $0xb8] sm:$0xf]
  %v4852 = vld [vmem:[%s1783 + $0xd8] sm:$0xf]
  %v4853 = vld [vmem:[%s1783 + $0xdc] sm:$0xf]
  %v4854 = vld [vmem:[%s1783 + $0xe4] sm:$0xf]
  %v4855 = vld [vmem:[%s1783 + $0xe8] sm:$0xf]
  %v4856 = vld [vmem:[%s1783 + $0xf0] sm:$0xf]
  %v4857 = vld [vmem:[%s1783 + $0xf4] sm:$0xf]
  %v4858 = vld [vmem:[%s1783 + $0xfc] sm:$0xf]
  %v4859 = vld [vmem:[%s1783 + $0x100] sm:$0xf]
  %v4860 = vld [vmem:[%s1783 + $0x108] sm:$0xf]
  %v4861 = vld [vmem:[%s1783 + $0x10c] sm:$0xf]
  %v4862 = vld [vmem:[%s1783 + $0x114] sm:$0xf]
  %v4863 = vld [vmem:[%s1783 + $0x118] sm:$0xf]
  %v4864 = vld [vmem:[%s1783 + $0x120] sm:$0xf]
  %v4865 = vld [vmem:[%s1783 + $0x124] sm:$0xf]
  %v4866 = vld [vmem:[%s1783 + $0x12c] sm:$0xf]
  %v4867 = vld [vmem:[%s1783 + $0x130] sm:$0xf]
  %v4868 = vld [vmem:[%s1783 + $0x138] sm:$0xf]
  %v4869 = vld [vmem:[%s1783 + $0x13c] sm:$0xf]
  %v4870 = vld [vmem:[%s1783 + $0x144] sm:$0xf]
  %v4871 = vld [vmem:[%s1783 + $0x148] sm:$0xf]
  %v4872 = vld [vmem:[%s1783 + $0x150] sm:$0xf]
  %v4873 = vld [vmem:[%s1783 + $0x154] sm:$0xf]
  %v4874 = vld [vmem:[%s1783 + $0x15c] sm:$0xf]
  %v4875 = vld [vmem:[%s1783 + $0x160] sm:$0xf]
  %v4876 = vld [vmem:[%s1783 + $0x168] sm:$0xf]
  %v4877 = vld [vmem:[%s1783 + $0x16c] sm:$0xf]
  %v4878 = vld [vmem:[%s1783 + $0x174] sm:$0xf]
  %v4879 = vld [vmem:[%s1783 + $0x178] sm:$0xf]
  %v4880 = vld [vmem:[%s1783 + $0x180] sm:$0xf]
  %v4881 = vld [vmem:[%s1783 + $0x184] sm:$0xf]
  %v4882 = vld [vmem:[%s1783 + $0x18c] sm:$0xf]
  %v4883 = vld [vmem:[%s1783 + $0x190] sm:$0xf]
  %v4884 = vld [vmem:[%s2 + $0x30] sm:$0xf]
  %v4885 = vld [vmem:[%s2 + $0x34] sm:$0xf]
  %v4886 = vld [vmem:[%s2 + $0x38] sm:$0xf]
  %v4887 = vld [vmem:[%s2 + $0x3c] sm:$0xf]
  %v4952 = vunpack.c.l.b16 %v4820
  %v4953 = vunpack.c.l.b16 %v4821
  %v4954 = vunpack.c.l.b16 %v4822
  %v4955 = vunpack.c.l.b16 %v4823
  %v4956 = vunpack.c.l.b16 %v4824
  %v4957 = vunpack.c.l.b16 %v4825
  %v4958 = vunpack.c.l.b16 %v4826
  %v4959 = vunpack.c.l.b16 %v4827
  %v4960 = vunpack.c.l.b16 %v4828
  %v4961 = vunpack.c.l.b16 %v4829
  %v4962 = vunpack.c.l.b16 %v4830
  %v4963 = vunpack.c.l.b16 %v4831
  %v4964 = vunpack.c.l.b16 %v4832
  %v4965 = vunpack.c.l.b16 %v4833
  %v4966 = vunpack.c.l.b16 %v4834
  %v4967 = vunpack.c.l.b16 %v4835
  %v4968 = vunpack.c.l.b16 %v4836
  %v4969 = vunpack.c.l.b16 %v4837
  %v4970 = vunpack.c.l.b16 %v4838
  %v4971 = vunpack.c.l.b16 %v4839
  %v4972 = vunpack.c.l.b16 %v4840
  %v4973 = vunpack.c.l.b16 %v4841
  %v4974 = vunpack.c.l.b16 %v4842
  %v4975 = vunpack.c.l.b16 %v4843
  %v4976 = vunpack.c.l.b16 %v4844
  %v4977 = vunpack.c.l.b16 %v4845
  %v4978 = vunpack.c.l.b16 %v4846
  %v4979 = vunpack.c.l.b16 %v4847
  %v4980 = vunpack.c.l.b16 %v4848
  %v4981 = vunpack.c.l.b16 %v4849
  %v4982 = vunpack.c.l.b16 %v4850
  %v4983 = vunpack.c.l.b16 %v4851
  %v4984 = vunpack.c.l.b16 %v4852
  %v4985 = vunpack.c.l.b16 %v4853
  %v4986 = vunpack.c.l.b16 %v4854
  %v4987 = vunpack.c.l.b16 %v4855
  %v4988 = vunpack.c.l.b16 %v4856
  %v4989 = vunpack.c.l.b16 %v4857
  %v4990 = vunpack.c.l.b16 %v4858
  %v4991 = vunpack.c.l.b16 %v4859
  %v4992 = vunpack.c.l.b16 %v4860
  %v4993 = vunpack.c.l.b16 %v4861
  %v4994 = vunpack.c.l.b16 %v4862
  %v4995 = vunpack.c.l.b16 %v4863
  %v4996 = vunpack.c.l.b16 %v4864
  %v4997 = vunpack.c.l.b16 %v4865
  %v4998 = vunpack.c.l.b16 %v4866
  %v4999 = vunpack.c.l.b16 %v4867
  %v5000 = vunpack.c.l.b16 %v4868
  %v5001 = vunpack.c.l.b16 %v4869
  %v5002 = vunpack.c.l.b16 %v4870
  %v5003 = vunpack.c.l.b16 %v4871
  %v5004 = vunpack.c.l.b16 %v4872
  %v5005 = vunpack.c.l.b16 %v4873
  %v5006 = vunpack.c.l.b16 %v4874
  %v5007 = vunpack.c.l.b16 %v4875
  %v5008 = vunpack.c.l.b16 %v4876
  %v5009 = vunpack.c.l.b16 %v4877
  %v5010 = vunpack.c.l.b16 %v4878
  %v5011 = vunpack.c.l.b16 %v4879
  %v5012 = vunpack.c.l.b16 %v4880
  %v5013 = vunpack.c.l.b16 %v4881
  %v5014 = vunpack.c.l.b16 %v4882
  %v5015 = vunpack.c.l.b16 %v4883
  %v5016 = vpack.c.b16 %v4953, %v4952
  %v5017 = vpack.c.b16 %v4955, %v4954
  %v5018 = vpack.c.b16 %v4957, %v4956
  %v5019 = vpack.c.b16 %v4959, %v4958
  %v5020 = vpack.c.b16 %v4961, %v4960
  %v5021 = vpack.c.b16 %v4963, %v4962
  %v5022 = vpack.c.b16 %v4965, %v4964
  %v5023 = vpack.c.b16 %v4967, %v4966
  %v5024 = vpack.c.b16 %v4969, %v4968
  %v5025 = vpack.c.b16 %v4971, %v4970
  %v5026 = vpack.c.b16 %v4973, %v4972
  %v5027 = vpack.c.b16 %v4975, %v4974
  %v5028 = vpack.c.b16 %v4977, %v4976
  %v5029 = vpack.c.b16 %v4979, %v4978
  %v5030 = vpack.c.b16 %v4981, %v4980
  %v5031 = vpack.c.b16 %v4983, %v4982
  %v5032 = vpack.c.b16 %v4985, %v4984
  %v5033 = vpack.c.b16 %v4987, %v4986
  %v5034 = vpack.c.b16 %v4989, %v4988
  %v5035 = vpack.c.b16 %v4991, %v4990
  %v5036 = vpack.c.b16 %v4993, %v4992
  %v5037 = vpack.c.b16 %v4995, %v4994
  %v5038 = vpack.c.b16 %v4997, %v4996
  %v5039 = vpack.c.b16 %v4999, %v4998
  %v5040 = vpack.c.b16 %v5001, %v5000
  %v5041 = vpack.c.b16 %v5003, %v5002
  %v5042 = vpack.c.b16 %v5005, %v5004
  %v5043 = vpack.c.b16 %v5007, %v5006
  %v5044 = vpack.c.b16 %v5009, %v5008
  %v5045 = vpack.c.b16 %v5011, %v5010
  %v5046 = vpack.c.b16 %v5013, %v5012
  %v5047 = vpack.c.b16 %v5015, %v5014
  %v5052 = vunpack.c.l.b16 %v4884
  %v5053 = vunpack.c.l.b16 %v4885
  %v5054 = vunpack.c.l.b16 %v4886
  %v5055 = vunpack.c.l.b16 %v4887
  %v5056 = vpack.c.b16 %v5053, %v5052
  %v5057 = vpack.c.b16 %v5055, %v5054
  %v5061 = vsel %vm2993, %v5016, 0
  %v5064 = vsel %vm2993, %v5017, 0
  %v5067 = vsel %vm2993, %v5018, 0
  %v5070 = vsel %vm2993, %v5019, 0
  %v5073 = vsel %vm2993, %v5020, 0
  %v5076 = vsel %vm2993, %v5021, 0
  %v5079 = vsel %vm2993, %v5022, 0
  %v5082 = vsel %vm2993, %v5023, 0
  %v5085 = vsel %vm2993, %v5024, 0
  %v5088 = vsel %vm2993, %v5025, 0
  %v5091 = vsel %vm2993, %v5026, 0
  %v5094 = vsel %vm2993, %v5027, 0
  %v5097 = vsel %vm2993, %v5028, 0
  %v5100 = vsel %vm2993, %v5029, 0
  %v5103 = vsel %vm2993, %v5030, 0
  %v5106 = vsel %vm2993, %v5031, 0
  %v5109 = vsel %vm2993, %v5032, 0
  %v5112 = vsel %vm2993, %v5033, 0
  %v5115 = vsel %vm2993, %v5034, 0
  %v5118 = vsel %vm2993, %v5035, 0
  %v5121 = vsel %vm2993, %v5036, 0
  %v5124 = vsel %vm2993, %v5037, 0
  %v5127 = vsel %vm2993, %v5038, 0
  %v5130 = vsel %vm2993, %v5039, 0
  %v5133 = vsel %vm2993, %v5040, 0
  %v5136 = vsel %vm2993, %v5041, 0
  %v5139 = vsel %vm2993, %v5042, 0
  %v5142 = vsel %vm2993, %v5043, 0
  %v5145 = vsel %vm2993, %v5044, 0
  %v5148 = vsel %vm2993, %v5045, 0
  %v5151 = vsel %vm2993, %v5046, 0
  %v5154 = vsel %vm2993, %v5047, 0
  %5156 = vmatprep.subr.bf16.mxu0 0
  %5157 = vmatpush1.bf16.msra.mxu0 %v5056
  %5158 = vmatprep.subr.bf16.mxu0 0
  %5159 = vmatpush1.bf16.msra.mxu0 %v5057
  %5160 = vmatprep.subr.bf16.mxu0 0
  %5161 = vmatpush1.bf16.msra.mxu0 0
  %5162 = vmatprep.subr.bf16.mxu0 0
  %5163 = vmatpush1.bf16.msra.mxu0 0
  %5164 = vmatprep.subr.bf16.mxu0 0
  %5165 = vmatpush1.bf16.msra.mxu0 0
  %5166 = vmatprep.subr.bf16.mxu0 0
  %5167 = vmatpush1.bf16.msra.mxu0 0
  %5168 = vmatprep.subr.bf16.mxu0 0
  %5169 = vmatpush1.bf16.msra.mxu0 0
  %5170 = vmatprep.subr.bf16.mxu0 0
  %5171 = vmatpush1.bf16.msra.mxu0 0
  %5172 = vmatprep.subr.bf16.mxu0 0
  %5173 = vmatpush1.bf16.msra.mxu0 0
  %5174 = vmatprep.subr.bf16.mxu0 0
  %5175 = vmatpush1.bf16.msra.mxu0 0
  %5176 = vmatprep.subr.bf16.mxu0 0
  %5177 = vmatpush1.bf16.msra.mxu0 0
  %5178 = vmatprep.subr.bf16.mxu0 0
  %5179 = vmatpush1.bf16.msra.mxu0 0
  %5180 = vmatprep.subr.bf16.mxu0 0
  %5181 = vmatpush1.bf16.msra.mxu0 0
  %5182 = vmatprep.subr.bf16.mxu0 0
  %5183 = vmatpush1.bf16.msra.mxu0 0
  %5184 = vmatprep.subr.bf16.mxu0 0
  %5185 = vmatpush1.bf16.msra.mxu0 0
  %5186 = vmatprep.subr.bf16.mxu0 0
  %5187 = vmatpush1.bf16.msra.mxu0 0
  %5188 = vmatprep.mubr.bf16.mxu0 0
  %5189 = vmatmul.mubr.bf16.gmra.mrb[0].mxu0 %v5061
  %v5190 = vpop.f32.mrb[0].mxu0
  %v5191 = vadd.f32 0.0, %v5190
  %v5192 = vpop.f32.mrb[0].mxu0
  %v5193 = vpop.f32.mrb[0].mxu0
  %v5194 = vadd.f32 0.0, %v5193
  %v5195 = vpop.f32.mrb[0].mxu0
  %5196 = vmatprep.mubr.bf16.mxu0 0
  %5197 = vmatmul.mubr.bf16.gmra.mrb[0].mxu0 %v5064
  %v5198 = vpop.f32.mrb[0].mxu0
  %v5199 = vadd.f32 0.0, %v5198
  %v5200 = vpop.f32.mrb[0].mxu0
  %v5201 = vpop.f32.mrb[0].mxu0
  %v5202 = vadd.f32 0.0, %v5201
  %v5203 = vpop.f32.mrb[0].mxu0
  %5204 = vmatprep.mubr.bf16.mxu0 0
  %5205 = vmatmul.mubr.bf16.gmra.mrb[0].mxu0 %v5067
  %v5206 = vpop.f32.mrb[0].mxu0
  %v5207 = vadd.f32 0.0, %v5206
  %v5208 = vpop.f32.mrb[0].mxu0
  %v5209 = vpop.f32.mrb[0].mxu0
  %v5210 = vadd.f32 0.0, %v5209
  %v5211 = vpop.f32.mrb[0].mxu0
  %5212 = vmatprep.mubr.bf16.mxu0 0
  %5213 = vmatmul.mubr.bf16.gmra.mrb[0].mxu0 %v5070
  %v5214 = vpop.f32.mrb[0].mxu0
  %v5215 = vadd.f32 0.0, %v5214
  %v5216 = vpop.f32.mrb[0].mxu0
  %v5217 = vpop.f32.mrb[0].mxu0
  %v5218 = vadd.f32 0.0, %v5217
  %v5219 = vpop.f32.mrb[0].mxu0
  %5220 = vmatprep.mubr.bf16.mxu0 0
  %5221 = vmatmul.mubr.bf16.gmra.mrb[0].mxu0 %v5073
  %v5222 = vpop.f32.mrb[0].mxu0
  %v5223 = vadd.f32 0.0, %v5222
  %v5224 = vpop.f32.mrb[0].mxu0
  %v5225 = vpop.f32.mrb[0].mxu0
  %v5226 = vadd.f32 0.0, %v5225
  %v5227 = vpop.f32.mrb[0].mxu0
  %5228 = vmatprep.mubr.bf16.mxu0 0
  %5229 = vmatmul.mubr.bf16.gmra.mrb[0].mxu0 %v5076
  %v5230 = vpop.f32.mrb[0].mxu0
  %v5231 = vadd.f32 0.0, %v5230
  %v5232 = vpop.f32.mrb[0].mxu0
  %v5233 = vpop.f32.mrb[0].mxu0
  %v5234 = vadd.f32 0.0, %v5233
  %v5235 = vpop.f32.mrb[0].mxu0
  %5236 = vmatprep.mubr.bf16.mxu0 0
  %5237 = vmatmul.mubr.bf16.gmra.mrb[0].mxu0 %v5079
  %v5238 = vpop.f32.mrb[0].mxu0
  %v5239 = vadd.f32 0.0, %v5238
  %v5240 = vpop.f32.mrb[0].mxu0
  %v5241 = vpop.f32.mrb[0].mxu0
  %v5242 = vadd.f32 0.0, %v5241
  %v5243 = vpop.f32.mrb[0].mxu0
  %5244 = vmatprep.mubr.bf16.mxu0 0
  %5245 = vmatmul.mubr.bf16.gmra.mrb[0].mxu0 %v5082
  %v5246 = vpop.f32.mrb[0].mxu0
  %v5247 = vadd.f32 0.0, %v5246
  %v5248 = vpop.f32.mrb[0].mxu0
  %v5249 = vpop.f32.mrb[0].mxu0
  %v5250 = vadd.f32 0.0, %v5249
  %v5251 = vpop.f32.mrb[0].mxu0
  %5252 = vmatprep.mubr.bf16.mxu0 0
  %5253 = vmatmul.mubr.bf16.gmra.mrb[0].mxu0 %v5085
  %v5254 = vpop.f32.mrb[0].mxu0
  %v5255 = vadd.f32 0.0, %v5254
  %v5256 = vpop.f32.mrb[0].mxu0
  %v5257 = vpop.f32.mrb[0].mxu0
  %v5258 = vadd.f32 0.0, %v5257
  %v5259 = vpop.f32.mrb[0].mxu0
  %5260 = vmatprep.mubr.bf16.mxu0 0
  %5261 = vmatmul.mubr.bf16.gmra.mrb[0].mxu0 %v5088
  %v5262 = vpop.f32.mrb[0].mxu0
  %v5263 = vadd.f32 0.0, %v5262
  %v5264 = vpop.f32.mrb[0].mxu0
  %v5265 = vpop.f32.mrb[0].mxu0
  %v5266 = vadd.f32 0.0, %v5265
  %v5267 = vpop.f32.mrb[0].mxu0
  %5268 = vmatprep.mubr.bf16.mxu0 0
  %5269 = vmatmul.mubr.bf16.gmra.mrb[0].mxu0 %v5091
  %v5270 = vpop.f32.mrb[0].mxu0
  %v5271 = vadd.f32 0.0, %v5270
  %v5272 = vpop.f32.mrb[0].mxu0
  %v5273 = vpop.f32.mrb[0].mxu0
  %v5274 = vadd.f32 0.0, %v5273
  %v5275 = vpop.f32.mrb[0].mxu0
  %5276 = vmatprep.mubr.bf16.mxu0 0
  %5277 = vmatmul.mubr.bf16.gmra.mrb[0].mxu0 %v5094
  %v5278 = vpop.f32.mrb[0].mxu0
  %v5279 = vadd.f32 0.0, %v5278
  %v5280 = vpop.f32.mrb[0].mxu0
  %v5281 = vpop.f32.mrb[0].mxu0
  %v5282 = vadd.f32 0.0, %v5281
  %v5283 = vpop.f32.mrb[0].mxu0
  %5284 = vmatprep.mubr.bf16.mxu0 0
  %5285 = vmatmul.mubr.bf16.gmra.mrb[0].mxu0 %v5097
  %v5286 = vpop.f32.mrb[0].mxu0
  %v5287 = vadd.f32 0.0, %v5286
  %v5288 = vpop.f32.mrb[0].mxu0
  %v5289 = vpop.f32.mrb[0].mxu0
  %v5290 = vadd.f32 0.0, %v5289
  %v5291 = vpop.f32.mrb[0].mxu0
  %5292 = vmatprep.mubr.bf16.mxu0 0
  %5293 = vmatmul.mubr.bf16.gmra.mrb[0].mxu0 %v5100
  %v5294 = vpop.f32.mrb[0].mxu0
  %v5295 = vadd.f32 0.0, %v5294
  %v5296 = vpop.f32.mrb[0].mxu0
  %v5297 = vpop.f32.mrb[0].mxu0
  %v5298 = vadd.f32 0.0, %v5297
  %v5299 = vpop.f32.mrb[0].mxu0
  %5300 = vmatprep.mubr.bf16.mxu0 0
  %5301 = vmatmul.mubr.bf16.gmra.mrb[0].mxu0 %v5103
  %v5302 = vpop.f32.mrb[0].mxu0
  %v5303 = vadd.f32 0.0, %v5302
  %v5304 = vpop.f32.mrb[0].mxu0
  %v5305 = vpop.f32.mrb[0].mxu0
  %v5306 = vadd.f32 0.0, %v5305
  %v5307 = vpop.f32.mrb[0].mxu0
  %5308 = vmatprep.mubr.bf16.mxu0 0
  %5309 = vmatmul.mubr.bf16.gmra.mrb[0].mxu0 %v5106
  %v5310 = vpop.f32.mrb[0].mxu0
  %v5311 = vadd.f32 0.0, %v5310
  %v5312 = vpop.f32.mrb[0].mxu0
  %v5313 = vpop.f32.mrb[0].mxu0
  %v5314 = vadd.f32 0.0, %v5313
  %v5315 = vpop.f32.mrb[0].mxu0
  %5316 = vmatprep.mubr.bf16.mxu0 0
  %5317 = vmatmul.mubr.bf16.gmra.mrb[0].mxu0 %v5109
  %v5318 = vpop.f32.mrb[0].mxu0
  %v5319 = vadd.f32 0.0, %v5318
  %v5320 = vpop.f32.mrb[0].mxu0
  %v5321 = vpop.f32.mrb[0].mxu0
  %v5322 = vadd.f32 0.0, %v5321
  %v5323 = vpop.f32.mrb[0].mxu0
  %5324 = vmatprep.mubr.bf16.mxu0 0
  %5325 = vmatmul.mubr.bf16.gmra.mrb[0].mxu0 %v5112
  %v5326 = vpop.f32.mrb[0].mxu0
  %v5327 = vadd.f32 0.0, %v5326
  %v5328 = vpop.f32.mrb[0].mxu0
  %v5329 = vpop.f32.mrb[0].mxu0
  %v5330 = vadd.f32 0.0, %v5329
  %v5331 = vpop.f32.mrb[0].mxu0
  %5332 = vmatprep.mubr.bf16.mxu0 0
  %5333 = vmatmul.mubr.bf16.gmra.mrb[0].mxu0 %v5115
  %v5334 = vpop.f32.mrb[0].mxu0
  %v5335 = vadd.f32 0.0, %v5334
  %v5336 = vpop.f32.mrb[0].mxu0
  %v5337 = vpop.f32.mrb[0].mxu0
  %v5338 = vadd.f32 0.0, %v5337
  %v5339 = vpop.f32.mrb[0].mxu0
  %5340 = vmatprep.mubr.bf16.mxu0 0
  %5341 = vmatmul.mubr.bf16.gmra.mrb[0].mxu0 %v5118
  %v5342 = vpop.f32.mrb[0].mxu0
  %v5343 = vadd.f32 0.0, %v5342
  %v5344 = vpop.f32.mrb[0].mxu0
  %v5345 = vpop.f32.mrb[0].mxu0
  %v5346 = vadd.f32 0.0, %v5345
  %v5347 = vpop.f32.mrb[0].mxu0
  %5348 = vmatprep.mubr.bf16.mxu0 0
  %5349 = vmatmul.mubr.bf16.gmra.mrb[0].mxu0 %v5121
  %v5350 = vpop.f32.mrb[0].mxu0
  %v5351 = vadd.f32 0.0, %v5350
  %v5352 = vpop.f32.mrb[0].mxu0
  %v5353 = vpop.f32.mrb[0].mxu0
  %v5354 = vadd.f32 0.0, %v5353
  %v5355 = vpop.f32.mrb[0].mxu0
  %5356 = vmatprep.mubr.bf16.mxu0 0
  %5357 = vmatmul.mubr.bf16.gmra.mrb[0].mxu0 %v5124
  %v5358 = vpop.f32.mrb[0].mxu0
  %v5359 = vadd.f32 0.0, %v5358
  %v5360 = vpop.f32.mrb[0].mxu0
  %v5361 = vpop.f32.mrb[0].mxu0
  %v5362 = vadd.f32 0.0, %v5361
  %v5363 = vpop.f32.mrb[0].mxu0
  %5364 = vmatprep.mubr.bf16.mxu0 0
  %5365 = vmatmul.mubr.bf16.gmra.mrb[0].mxu0 %v5127
  %v5366 = vpop.f32.mrb[0].mxu0
  %v5367 = vadd.f32 0.0, %v5366
  %v5368 = vpop.f32.mrb[0].mxu0
  %v5369 = vpop.f32.mrb[0].mxu0
  %v5370 = vadd.f32 0.0, %v5369
  %v5371 = vpop.f32.mrb[0].mxu0
  %5372 = vmatprep.mubr.bf16.mxu0 0
  %5373 = vmatmul.mubr.bf16.gmra.mrb[0].mxu0 %v5130
  %v5374 = vpop.f32.mrb[0].mxu0
  %v5375 = vadd.f32 0.0, %v5374
  %v5376 = vpop.f32.mrb[0].mxu0
  %v5377 = vpop.f32.mrb[0].mxu0
  %v5378 = vadd.f32 0.0, %v5377
  %v5379 = vpop.f32.mrb[0].mxu0
  %5380 = vmatprep.mubr.bf16.mxu0 0
  %5381 = vmatmul.mubr.bf16.gmra.mrb[0].mxu0 %v5133
  %v5382 = vpop.f32.mrb[0].mxu0
  %v5383 = vadd.f32 0.0, %v5382
  %v5384 = vpop.f32.mrb[0].mxu0
  %v5385 = vpop.f32.mrb[0].mxu0
  %v5386 = vadd.f32 0.0, %v5385
  %v5387 = vpop.f32.mrb[0].mxu0
  %5388 = vmatprep.mubr.bf16.mxu0 0
  %5389 = vmatmul.mubr.bf16.gmra.mrb[0].mxu0 %v5136
  %v5390 = vpop.f32.mrb[0].mxu0
  %v5391 = vadd.f32 0.0, %v5390
  %v5392 = vpop.f32.mrb[0].mxu0
  %v5393 = vpop.f32.mrb[0].mxu0
  %v5394 = vadd.f32 0.0, %v5393
  %v5395 = vpop.f32.mrb[0].mxu0
  %5396 = vmatprep.mubr.bf16.mxu0 0
  %5397 = vmatmul.mubr.bf16.gmra.mrb[0].mxu0 %v5139
  %v5398 = vpop.f32.mrb[0].mxu0
  %v5399 = vadd.f32 0.0, %v5398
  %v5400 = vpop.f32.mrb[0].mxu0
  %v5401 = vpop.f32.mrb[0].mxu0
  %v5402 = vadd.f32 0.0, %v5401
  %v5403 = vpop.f32.mrb[0].mxu0
  %5404 = vmatprep.mubr.bf16.mxu0 0
  %5405 = vmatmul.mubr.bf16.gmra.mrb[0].mxu0 %v5142
  %v5406 = vpop.f32.mrb[0].mxu0
  %v5407 = vadd.f32 0.0, %v5406
  %v5408 = vpop.f32.mrb[0].mxu0
  %v5409 = vpop.f32.mrb[0].mxu0
  %v5410 = vadd.f32 0.0, %v5409
  %v5411 = vpop.f32.mrb[0].mxu0
  %5412 = vmatprep.mubr.bf16.mxu0 0
  %5413 = vmatmul.mubr.bf16.gmra.mrb[0].mxu0 %v5145
  %v5414 = vpop.f32.mrb[0].mxu0
  %v5415 = vadd.f32 0.0, %v5414
  %v5416 = vpop.f32.mrb[0].mxu0
  %v5417 = vpop.f32.mrb[0].mxu0
  %v5418 = vadd.f32 0.0, %v5417
  %v5419 = vpop.f32.mrb[0].mxu0
  %5420 = vmatprep.mubr.bf16.mxu0 0
  %5421 = vmatmul.mubr.bf16.gmra.mrb[0].mxu0 %v5148
  %v5422 = vpop.f32.mrb[0].mxu0
  %v5423 = vadd.f32 0.0, %v5422
  %v5424 = vpop.f32.mrb[0].mxu0
  %v5425 = vpop.f32.mrb[0].mxu0
  %v5426 = vadd.f32 0.0, %v5425
  %v5427 = vpop.f32.mrb[0].mxu0
  %5428 = vmatprep.mubr.bf16.mxu0 0
  %5429 = vmatmul.mubr.bf16.gmra.mrb[0].mxu0 %v5151
  %v5430 = vpop.f32.mrb[0].mxu0
  %v5431 = vadd.f32 0.0, %v5430
  %v5432 = vpop.f32.mrb[0].mxu0
  %v5433 = vpop.f32.mrb[0].mxu0
  %v5434 = vadd.f32 0.0, %v5433
  %v5435 = vpop.f32.mrb[0].mxu0
  %5436 = vmatprep.mubr.bf16.mxu0 0
  %5437 = vmatmul.mubr.bf16.gmra.mrb[0].mxu0 %v5154
  %v5438 = vpop.f32.mrb[0].mxu0
  %v5439 = vadd.f32 0.0, %v5438
  %v5440 = vpop.f32.mrb[0].mxu0
  %v5441 = vpop.f32.mrb[0].mxu0
  %v5442 = vadd.f32 0.0, %v5441
  %v5443 = vpop.f32.mrb[0].mxu0
  %5444 = vdwg.mxu0
  %v5445 = vadd.f32 %v4756, %v5191
  %v5446 = vadd.f32 %v4757, %v5194
  %v5447 = vadd.f32 %v4758, %v5199
  %v5448 = vadd.f32 %v4759, %v5202
  %v5449 = vadd.f32 %v4760, %v5207
  %v5450 = vadd.f32 %v4761, %v5210
  %v5451 = vadd.f32 %v4762, %v5215
  %v5452 = vadd.f32 %v4763, %v5218
  %v5453 = vadd.f32 %v4764, %v5223
  %v5454 = vadd.f32 %v4765, %v5226
  %v5455 = vadd.f32 %v4766, %v5231
  %v5456 = vadd.f32 %v4767, %v5234
  %v5457 = vadd.f32 %v4768, %v5239
  %v5458 = vadd.f32 %v4769, %v5242
  %v5459 = vadd.f32 %v4770, %v5247
  %v5460 = vadd.f32 %v4771, %v5250
  %v5461 = vadd.f32 %v4772, %v5255
  %v5462 = vadd.f32 %v4773, %v5258
  %v5463 = vadd.f32 %v4774, %v5263
  %v5464 = vadd.f32 %v4775, %v5266
  %v5465 = vadd.f32 %v4776, %v5271
  %v5466 = vadd.f32 %v4777, %v5274
  %v5467 = vadd.f32 %v4778, %v5279
  %v5468 = vadd.f32 %v4779, %v5282
  %v5469 = vadd.f32 %v4780, %v5287
  %v5470 = vadd.f32 %v4781, %v5290
  %v5471 = vadd.f32 %v4782, %v5295
  %v5472 = vadd.f32 %v4783, %v5298
  %v5473 = vadd.f32 %v4784, %v5303
  %v5474 = vadd.f32 %v4785, %v5306
  %v5475 = vadd.f32 %v4786, %v5311
  %v5476 = vadd.f32 %v4787, %v5314
  %v5477 = vadd.f32 %v4788, %v5319
  %v5478 = vadd.f32 %v4789, %v5322
  %v5479 = vadd.f32 %v4790, %v5327
  %v5480 = vadd.f32 %v4791, %v5330
  %v5481 = vadd.f32 %v4792, %v5335
  %v5482 = vadd.f32 %v4793, %v5338
  %v5483 = vadd.f32 %v4794, %v5343
  %v5484 = vadd.f32 %v4795, %v5346
  %v5485 = vadd.f32 %v4796, %v5351
  %v5486 = vadd.f32 %v4797, %v5354
  %v5487 = vadd.f32 %v4798, %v5359
  %v5488 = vadd.f32 %v4799, %v5362
  %v5489 = vadd.f32 %v4800, %v5367
  %v5490 = vadd.f32 %v4801, %v5370
  %v5491 = vadd.f32 %v4802, %v5375
  %v5492 = vadd.f32 %v4803, %v5378
  %v5493 = vadd.f32 %v4804, %v5383
  %v5494 = vadd.f32 %v4805, %v5386
  %v5495 = vadd.f32 %v4806, %v5391
  %v5496 = vadd.f32 %v4807, %v5394
  %v5497 = vadd.f32 %v4808, %v5399
  %v5498 = vadd.f32 %v4809, %v5402
  %v5499 = vadd.f32 %v4810, %v5407
  %v5500 = vadd.f32 %v4811, %v5410
  %v5501 = vadd.f32 %v4812, %v5415
  %v5502 = vadd.f32 %v4813, %v5418
  %v5503 = vadd.f32 %v4814, %v5423
  %v5504 = vadd.f32 %v4815, %v5426
  %v5505 = vadd.f32 %v4816, %v5431
  %v5506 = vadd.f32 %v4817, %v5434
  %v5507 = vadd.f32 %v4818, %v5439
  %v5508 = vadd.f32 %v4819, %v5442
  %v5509 = vld [vmem:[%s1783] sm:$0xf]
  %v5510 = vld [vmem:[%s1783 + $0x4] sm:$0xf]
  %v5511 = vld [vmem:[%s1783 + $0x8] sm:$0x1]
  %v5512 = vld [vmem:[%s1783 + $0xc] sm:$0xf]
  %v5513 = vld [vmem:[%s1783 + $0x10] sm:$0xf]
  %v5514 = vld [vmem:[%s1783 + $0x14] sm:$0x1]
  %v5515 = vld [vmem:[%s1783 + $0x18] sm:$0xf]
  %v5516 = vld [vmem:[%s1783 + $0x1c] sm:$0xf]
  %v5517 = vld [vmem:[%s1783 + $0x20] sm:$0x1]
  %v5518 = vld [vmem:[%s1783 + $0x24] sm:$0xf]
  %v5519 = vld [vmem:[%s1783 + $0x28] sm:$0xf]
  %v5520 = vld [vmem:[%s1783 + $0x2c] sm:$0x1]
  %v5521 = vld [vmem:[%s1783 + $0x30] sm:$0xf]
  %v5522 = vld [vmem:[%s1783 + $0x34] sm:$0xf]
  %v5523 = vld [vmem:[%s1783 + $0x38] sm:$0x1]
  %v5524 = vld [vmem:[%s1783 + $0x3c] sm:$0xf]
  %v5525 = vld [vmem:[%s1783 + $0x40] sm:$0xf]
  %v5526 = vld [vmem:[%s1783 + $0x44] sm:$0x1]
  %v5527 = vld [vmem:[%s1783 + $0x48] sm:$0xf]
  %v5528 = vld [vmem:[%s1783 + $0x4c] sm:$0xf]
  %v5529 = vld [vmem:[%s1783 + $0x50] sm:$0x1]
  %v5530 = vld [vmem:[%s1783 + $0x54] sm:$0xf]
  %v5531 = vld [vmem:[%s1783 + $0x58] sm:$0xf]
  %v5532 = vld [vmem:[%s1783 + $0x5c] sm:$0x1]
  %v5533 = vld [vmem:[%s1783 + $0x60] sm:$0xf]
  %v5534 = vld [vmem:[%s1783 + $0x64] sm:$0xf]
  %v5535 = vld [vmem:[%s1783 + $0x68] sm:$0x1]
  %v5536 = vld [vmem:[%s1783 + $0x6c] sm:$0xf]
  %v5537 = vld [vmem:[%s1783 + $0x70] sm:$0xf]
  %v5538 = vld [vmem:[%s1783 + $0x74] sm:$0x1]
  %v5539 = vld [vmem:[%s1783 + $0x78] sm:$0xf]
  %v5540 = vld [vmem:[%s1783 + $0x7c] sm:$0xf]
  %v5541 = vld [vmem:[%s1783 + $0x80] sm:$0x1]
  %v5542 = vld [vmem:[%s1783 + $0x84] sm:$0xf]
  %v5543 = vld [vmem:[%s1783 + $0x88] sm:$0xf]
  %v5544 = vld [vmem:[%s1783 + $0x8c] sm:$0x1]
  %v5545 = vld [vmem:[%s1783 + $0x90] sm:$0xf]
  %v5546 = vld [vmem:[%s1783 + $0x94] sm:$0xf]
  %v5547 = vld [vmem:[%s1783 + $0x98] sm:$0x1]
  %v5548 = vld [vmem:[%s1783 + $0x9c] sm:$0xf]
  %v5549 = vld [vmem:[%s1783 + $0xa0] sm:$0xf]
  %v5550 = vld [vmem:[%s1783 + $0xa4] sm:$0x1]
  %v5551 = vld [vmem:[%s1783 + $0xa8] sm:$0xf]
  %v5552 = vld [vmem:[%s1783 + $0xac] sm:$0xf]
  %v5553 = vld [vmem:[%s1783 + $0xb0] sm:$0x1]
  %v5554 = vld [vmem:[%s1783 + $0xb4] sm:$0xf]
  %v5555 = vld [vmem:[%s1783 + $0xb8] sm:$0xf]
  %v5556 = vld [vmem:[%s1783 + $0xbc] sm:$0x1]
  %v5557 = vld [vmem:[%s1783 + $0xd8] sm:$0xf]
  %v5558 = vld [vmem:[%s1783 + $0xdc] sm:$0xf]
  %v5559 = vld [vmem:[%s1783 + $0xe0] sm:$0x1]
  %v5560 = vld [vmem:[%s1783 + $0xe4] sm:$0xf]
  %v5561 = vld [vmem:[%s1783 + $0xe8] sm:$0xf]
  %v5562 = vld [vmem:[%s1783 + $0xec] sm:$0x1]
  %v5563 = vld [vmem:[%s1783 + $0xf0] sm:$0xf]
  %v5564 = vld [vmem:[%s1783 + $0xf4] sm:$0xf]
  %v5565 = vld [vmem:[%s1783 + $0xf8] sm:$0x1]
  %v5566 = vld [vmem:[%s1783 + $0xfc] sm:$0xf]
  %v5567 = vld [vmem:[%s1783 + $0x100] sm:$0xf]
  %v5568 = vld [vmem:[%s1783 + $0x104] sm:$0x1]
  %v5569 = vld [vmem:[%s1783 + $0x108] sm:$0xf]
  %v5570 = vld [vmem:[%s1783 + $0x10c] sm:$0xf]
  %v5571 = vld [vmem:[%s1783 + $0x110] sm:$0x1]
  %v5572 = vld [vmem:[%s1783 + $0x114] sm:$0xf]
  %v5573 = vld [vmem:[%s1783 + $0x118] sm:$0xf]
  %v5574 = vld [vmem:[%s1783 + $0x11c] sm:$0x1]
  %v5575 = vld [vmem:[%s1783 + $0x120] sm:$0xf]
  %v5576 = vld [vmem:[%s1783 + $0x124] sm:$0xf]
  %v5577 = vld [vmem:[%s1783 + $0x128] sm:$0x1]
  %v5578 = vld [vmem:[%s1783 + $0x12c] sm:$0xf]
  %v5579 = vld [vmem:[%s1783 + $0x130] sm:$0xf]
  %v5580 = vld [vmem:[%s1783 + $0x134] sm:$0x1]
  %v5581 = vld [vmem:[%s1783 + $0x138] sm:$0xf]
  %v5582 = vld [vmem:[%s1783 + $0x13c] sm:$0xf]
  %v5583 = vld [vmem:[%s1783 + $0x140] sm:$0x1]
  %v5584 = vld [vmem:[%s1783 + $0x144] sm:$0xf]
  %v5585 = vld [vmem:[%s1783 + $0x148] sm:$0xf]
  %v5586 = vld [vmem:[%s1783 + $0x14c] sm:$0x1]
  %v5587 = vld [vmem:[%s1783 + $0x150] sm:$0xf]
  %v5588 = vld [vmem:[%s1783 + $0x154] sm:$0xf]
  %v5589 = vld [vmem:[%s1783 + $0x158] sm:$0x1]
  %v5590 = vld [vmem:[%s1783 + $0x15c] sm:$0xf]
  %v5591 = vld [vmem:[%s1783 + $0x160] sm:$0xf]
  %v5592 = vld [vmem:[%s1783 + $0x164] sm:$0x1]
  %v5593 = vld [vmem:[%s1783 + $0x168] sm:$0xf]
  %v5594 = vld [vmem:[%s1783 + $0x16c] sm:$0xf]
  %v5595 = vld [vmem:[%s1783 + $0x170] sm:$0x1]
  %v5596 = vld [vmem:[%s1783 + $0x174] sm:$0xf]
  %v5597 = vld [vmem:[%s1783 + $0x178] sm:$0xf]
  %v5598 = vld [vmem:[%s1783 + $0x17c] sm:$0x1]
  %v5599 = vld [vmem:[%s1783 + $0x180] sm:$0xf]
  %v5600 = vld [vmem:[%s1783 + $0x184] sm:$0xf]
  %v5601 = vld [vmem:[%s1783 + $0x188] sm:$0x1]
  %v5602 = vld [vmem:[%s1783 + $0x18c] sm:$0xf]
  %v5603 = vld [vmem:[%s1783 + $0x190] sm:$0xf]
  %v5604 = vld [vmem:[%s1783 + $0x194] sm:$0x1]
  %v5606 = vshrl.u32 %v5509, 16
  %v5608 = vrot.slane %v5606, 4
  %v5609 = vshll.u32 %v5509, 16
  %v5611 = vrot.slane %v5609, 5
  %v5612 = vor.u32 %v5608, %v5611
  %v5613 = vrot.slane %v5612, 4
  %v5615 = vshll.u32 %v5510, 16
  %v5617 = vrot.slane %v5615, 5
  %v5618 = vsel %vm2112, %v5613, %v5617
  %v5619 = vshrl.u32 %v5510, 16
  %v5621 = vrot.slane %v5619, 4
  %v5622 = vor.u32 %v5621, %v5617
  %v5623 = vrot.slane %v5622, 4
  %v5625 = vshll.u32 %v5511, 16
  %v5627 = vrot.slane %v5625, 5
  %v5628 = vsel %vm2112, %v5623, %v5627
  %v5630 = vshrl.u32 %v5512, 16
  %v5632 = vrot.slane %v5630, 4
  %v5633 = vshll.u32 %v5512, 16
  %v5635 = vrot.slane %v5633, 5
  %v5636 = vor.u32 %v5632, %v5635
  %v5637 = vrot.slane %v5636, 4
  %v5639 = vshll.u32 %v5513, 16
  %v5641 = vrot.slane %v5639, 5
  %v5642 = vsel %vm2112, %v5637, %v5641
  %v5643 = vshrl.u32 %v5513, 16
  %v5645 = vrot.slane %v5643, 4
  %v5646 = vor.u32 %v5645, %v5641
  %v5647 = vrot.slane %v5646, 4
  %v5649 = vshll.u32 %v5514, 16
  %v5651 = vrot.slane %v5649, 5
  %v5652 = vsel %vm2112, %v5647, %v5651
  %v5654 = vshrl.u32 %v5515, 16
  %v5656 = vrot.slane %v5654, 4
  %v5657 = vshll.u32 %v5515, 16
  %v5659 = vrot.slane %v5657, 5
  %v5660 = vor.u32 %v5656, %v5659
  %v5661 = vrot.slane %v5660, 4
  %v5663 = vshll.u32 %v5516, 16
  %v5665 = vrot.slane %v5663, 5
  %v5666 = vsel %vm2112, %v5661, %v5665
  %v5667 = vshrl.u32 %v5516, 16
  %v5669 = vrot.slane %v5667, 4
  %v5670 = vor.u32 %v5669, %v5665
  %v5671 = vrot.slane %v5670, 4
  %v5673 = vshll.u32 %v5517, 16
  %v5675 = vrot.slane %v5673, 5
  %v5676 = vsel %vm2112, %v5671, %v5675
  %v5678 = vshrl.u32 %v5518, 16
  %v5680 = vrot.slane %v5678, 4
  %v5681 = vshll.u32 %v5518, 16
  %v5683 = vrot.slane %v5681, 5
  %v5684 = vor.u32 %v5680, %v5683
  %v5685 = vrot.slane %v5684, 4
  %v5687 = vshll.u32 %v5519, 16
  %v5689 = vrot.slane %v5687, 5
  %v5690 = vsel %vm2112, %v5685, %v5689
  %v5691 = vshrl.u32 %v5519, 16
  %v5693 = vrot.slane %v5691, 4
  %v5694 = vor.u32 %v5693, %v5689
  %v5695 = vrot.slane %v5694, 4
  %v5697 = vshll.u32 %v5520, 16
  %v5699 = vrot.slane %v5697, 5
  %v5700 = vsel %vm2112, %v5695, %v5699
  %v5702 = vshrl.u32 %v5521, 16
  %v5704 = vrot.slane %v5702, 4
  %v5705 = vshll.u32 %v5521, 16
  %v5707 = vrot.slane %v5705, 5
  %v5708 = vor.u32 %v5704, %v5707
  %v5709 = vrot.slane %v5708, 4
  %v5711 = vshll.u32 %v5522, 16
  %v5713 = vrot.slane %v5711, 5
  %v5714 = vsel %vm2112, %v5709, %v5713
  %v5715 = vshrl.u32 %v5522, 16
  %v5717 = vrot.slane %v5715, 4
  %v5718 = vor.u32 %v5717, %v5713
  %v5719 = vrot.slane %v5718, 4
  %v5721 = vshll.u32 %v5523, 16
  %v5723 = vrot.slane %v5721, 5
  %v5724 = vsel %vm2112, %v5719, %v5723
  %v5726 = vshrl.u32 %v5524, 16
  %v5728 = vrot.slane %v5726, 4
  %v5729 = vshll.u32 %v5524, 16
  %v5731 = vrot.slane %v5729, 5
  %v5732 = vor.u32 %v5728, %v5731
  %v5733 = vrot.slane %v5732, 4
  %v5735 = vshll.u32 %v5525, 16
  %v5737 = vrot.slane %v5735, 5
  %v5738 = vsel %vm2112, %v5733, %v5737
  %v5739 = vshrl.u32 %v5525, 16
  %v5741 = vrot.slane %v5739, 4
  %v5742 = vor.u32 %v5741, %v5737
  %v5743 = vrot.slane %v5742, 4
  %v5745 = vshll.u32 %v5526, 16
  %v5747 = vrot.slane %v5745, 5
  %v5748 = vsel %vm2112, %v5743, %v5747
  %v5750 = vshrl.u32 %v5527, 16
  %v5752 = vrot.slane %v5750, 4
  %v5753 = vshll.u32 %v5527, 16
  %v5755 = vrot.slane %v5753, 5
  %v5756 = vor.u32 %v5752, %v5755
  %v5757 = vrot.slane %v5756, 4
  %v5759 = vshll.u32 %v5528, 16
  %v5761 = vrot.slane %v5759, 5
  %v5762 = vsel %vm2112, %v5757, %v5761
  %v5763 = vshrl.u32 %v5528, 16
  %v5765 = vrot.slane %v5763, 4
  %v5766 = vor.u32 %v5765, %v5761
  %v5767 = vrot.slane %v5766, 4
  %v5769 = vshll.u32 %v5529, 16
  %v5771 = vrot.slane %v5769, 5
  %v5772 = vsel %vm2112, %v5767, %v5771
  %v5774 = vshrl.u32 %v5530, 16
  %v5776 = vrot.slane %v5774, 4
  %v5777 = vshll.u32 %v5530, 16
  %v5779 = vrot.slane %v5777, 5
  %v5780 = vor.u32 %v5776, %v5779
  %v5781 = vrot.slane %v5780, 4
  %v5783 = vshll.u32 %v5531, 16
  %v5785 = vrot.slane %v5783, 5
  %v5786 = vsel %vm2112, %v5781, %v5785
  %v5787 = vshrl.u32 %v5531, 16
  %v5789 = vrot.slane %v5787, 4
  %v5790 = vor.u32 %v5789, %v5785
  %v5791 = vrot.slane %v5790, 4
  %v5793 = vshll.u32 %v5532, 16
  %v5795 = vrot.slane %v5793, 5
  %v5796 = vsel %vm2112, %v5791, %v5795
  %v5798 = vshrl.u32 %v5533, 16
  %v5800 = vrot.slane %v5798, 4
  %v5801 = vshll.u32 %v5533, 16
  %v5803 = vrot.slane %v5801, 5
  %v5804 = vor.u32 %v5800, %v5803
  %v5805 = vrot.slane %v5804, 4
  %v5807 = vshll.u32 %v5534, 16
  %v5809 = vrot.slane %v5807, 5
  %v5810 = vsel %vm2112, %v5805, %v5809
  %v5811 = vshrl.u32 %v5534, 16
  %v5813 = vrot.slane %v5811, 4
  %v5814 = vor.u32 %v5813, %v5809
  %v5815 = vrot.slane %v5814, 4
  %v5817 = vshll.u32 %v5535, 16
  %v5819 = vrot.slane %v5817, 5
  %v5820 = vsel %vm2112, %v5815, %v5819
  %v5822 = vshrl.u32 %v5536, 16
  %v5824 = vrot.slane %v5822, 4
  %v5825 = vshll.u32 %v5536, 16
  %v5827 = vrot.slane %v5825, 5
  %v5828 = vor.u32 %v5824, %v5827
  %v5829 = vrot.slane %v5828, 4
  %v5831 = vshll.u32 %v5537, 16
  %v5833 = vrot.slane %v5831, 5
  %v5834 = vsel %vm2112, %v5829, %v5833
  %v5835 = vshrl.u32 %v5537, 16
  %v5837 = vrot.slane %v5835, 4
  %v5838 = vor.u32 %v5837, %v5833
  %v5839 = vrot.slane %v5838, 4
  %v5841 = vshll.u32 %v5538, 16
  %v5843 = vrot.slane %v5841, 5
  %v5844 = vsel %vm2112, %v5839, %v5843
  %v5846 = vshrl.u32 %v5539, 16
  %v5848 = vrot.slane %v5846, 4
  %v5849 = vshll.u32 %v5539, 16
  %v5851 = vrot.slane %v5849, 5
  %v5852 = vor.u32 %v5848, %v5851
  %v5853 = vrot.slane %v5852, 4
  %v5855 = vshll.u32 %v5540, 16
  %v5857 = vrot.slane %v5855, 5
  %v5858 = vsel %vm2112, %v5853, %v5857
  %v5859 = vshrl.u32 %v5540, 16
  %v5861 = vrot.slane %v5859, 4
  %v5862 = vor.u32 %v5861, %v5857
  %v5863 = vrot.slane %v5862, 4
  %v5865 = vshll.u32 %v5541, 16
  %v5867 = vrot.slane %v5865, 5
  %v5868 = vsel %vm2112, %v5863, %v5867
  %v5870 = vshrl.u32 %v5542, 16
  %v5872 = vrot.slane %v5870, 4
  %v5873 = vshll.u32 %v5542, 16
  %v5875 = vrot.slane %v5873, 5
  %v5876 = vor.u32 %v5872, %v5875
  %v5877 = vrot.slane %v5876, 4
  %v5879 = vshll.u32 %v5543, 16
  %v5881 = vrot.slane %v5879, 5
  %v5882 = vsel %vm2112, %v5877, %v5881
  %v5883 = vshrl.u32 %v5543, 16
  %v5885 = vrot.slane %v5883, 4
  %v5886 = vor.u32 %v5885, %v5881
  %v5887 = vrot.slane %v5886, 4
  %v5889 = vshll.u32 %v5544, 16
  %v5891 = vrot.slane %v5889, 5
  %v5892 = vsel %vm2112, %v5887, %v5891
  %v5894 = vshrl.u32 %v5545, 16
  %v5896 = vrot.slane %v5894, 4
  %v5897 = vshll.u32 %v5545, 16
  %v5899 = vrot.slane %v5897, 5
  %v5900 = vor.u32 %v5896, %v5899
  %v5901 = vrot.slane %v5900, 4
  %v5903 = vshll.u32 %v5546, 16
  %v5905 = vrot.slane %v5903, 5
  %v5906 = vsel %vm2112, %v5901, %v5905
  %v5907 = vshrl.u32 %v5546, 16
  %v5909 = vrot.slane %v5907, 4
  %v5910 = vor.u32 %v5909, %v5905
  %v5911 = vrot.slane %v5910, 4
  %v5913 = vshll.u32 %v5547, 16
  %v5915 = vrot.slane %v5913, 5
  %v5916 = vsel %vm2112, %v5911, %v5915
  %v5918 = vshrl.u32 %v5548, 16
  %v5920 = vrot.slane %v5918, 4
  %v5921 = vshll.u32 %v5548, 16
  %v5923 = vrot.slane %v5921, 5
  %v5924 = vor.u32 %v5920, %v5923
  %v5925 = vrot.slane %v5924, 4
  %v5927 = vshll.u32 %v5549, 16
  %v5929 = vrot.slane %v5927, 5
  %v5930 = vsel %vm2112, %v5925, %v5929
  %v5931 = vshrl.u32 %v5549, 16
  %v5933 = vrot.slane %v5931, 4
  %v5934 = vor.u32 %v5933, %v5929
  %v5935 = vrot.slane %v5934, 4
  %v5937 = vshll.u32 %v5550, 16
  %v5939 = vrot.slane %v5937, 5
  %v5940 = vsel %vm2112, %v5935, %v5939
  %v5942 = vshrl.u32 %v5551, 16
  %v5944 = vrot.slane %v5942, 4
  %v5945 = vshll.u32 %v5551, 16
  %v5947 = vrot.slane %v5945, 5
  %v5948 = vor.u32 %v5944, %v5947
  %v5949 = vrot.slane %v5948, 4
  %v5951 = vshll.u32 %v5552, 16
  %v5953 = vrot.slane %v5951, 5
  %v5954 = vsel %vm2112, %v5949, %v5953
  %v5955 = vshrl.u32 %v5552, 16
  %v5957 = vrot.slane %v5955, 4
  %v5958 = vor.u32 %v5957, %v5953
  %v5959 = vrot.slane %v5958, 4
  %v5961 = vshll.u32 %v5553, 16
  %v5963 = vrot.slane %v5961, 5
  %v5964 = vsel %vm2112, %v5959, %v5963
  %v5966 = vshrl.u32 %v5554, 16
  %v5968 = vrot.slane %v5966, 4
  %v5969 = vshll.u32 %v5554, 16
  %v5971 = vrot.slane %v5969, 5
  %v5972 = vor.u32 %v5968, %v5971
  %v5973 = vrot.slane %v5972, 4
  %v5975 = vshll.u32 %v5555, 16
  %v5977 = vrot.slane %v5975, 5
  %v5978 = vsel %vm2112, %v5973, %v5977
  %v5979 = vshrl.u32 %v5555, 16
  %v5981 = vrot.slane %v5979, 4
  %v5982 = vor.u32 %v5981, %v5977
  %v5983 = vrot.slane %v5982, 4
  %v5985 = vshll.u32 %v5556, 16
  %v5987 = vrot.slane %v5985, 5
  %v5988 = vsel %vm2112, %v5983, %v5987
  %v5990 = vshrl.u32 %v5557, 16
  %v5992 = vrot.slane %v5990, 4
  %v5993 = vshll.u32 %v5557, 16
  %v5995 = vrot.slane %v5993, 5
  %v5996 = vor.u32 %v5992, %v5995
  %v5997 = vrot.slane %v5996, 4
  %v5999 = vshll.u32 %v5558, 16
  %v6001 = vrot.slane %v5999, 5
  %v6002 = vsel %vm2112, %v5997, %v6001
  %v6003 = vshrl.u32 %v5558, 16
  %v6005 = vrot.slane %v6003, 4
  %v6006 = vor.u32 %v6005, %v6001
  %v6007 = vrot.slane %v6006, 4
  %v6009 = vshll.u32 %v5559, 16
  %v6011 = vrot.slane %v6009, 5
  %v6012 = vsel %vm2112, %v6007, %v6011
  %v6014 = vshrl.u32 %v5560, 16
  %v6016 = vrot.slane %v6014, 4
  %v6017 = vshll.u32 %v5560, 16
  %v6019 = vrot.slane %v6017, 5
  %v6020 = vor.u32 %v6016, %v6019
  %v6021 = vrot.slane %v6020, 4
  %v6023 = vshll.u32 %v5561, 16
  %v6025 = vrot.slane %v6023, 5
  %v6026 = vsel %vm2112, %v6021, %v6025
  %v6027 = vshrl.u32 %v5561, 16
  %v6029 = vrot.slane %v6027, 4
  %v6030 = vor.u32 %v6029, %v6025
  %v6031 = vrot.slane %v6030, 4
  %v6033 = vshll.u32 %v5562, 16
  %v6035 = vrot.slane %v6033, 5
  %v6036 = vsel %vm2112, %v6031, %v6035
  %v6038 = vshrl.u32 %v5563, 16
  %v6040 = vrot.slane %v6038, 4
  %v6041 = vshll.u32 %v5563, 16
  %v6043 = vrot.slane %v6041, 5
  %v6044 = vor.u32 %v6040, %v6043
  %v6045 = vrot.slane %v6044, 4
  %v6047 = vshll.u32 %v5564, 16
  %v6049 = vrot.slane %v6047, 5
  %v6050 = vsel %vm2112, %v6045, %v6049
  %v6051 = vshrl.u32 %v5564, 16
  %v6053 = vrot.slane %v6051, 4
  %v6054 = vor.u32 %v6053, %v6049
  %v6055 = vrot.slane %v6054, 4
  %v6057 = vshll.u32 %v5565, 16
  %v6059 = vrot.slane %v6057, 5
  %v6060 = vsel %vm2112, %v6055, %v6059
  %v6062 = vshrl.u32 %v5566, 16
  %v6064 = vrot.slane %v6062, 4
  %v6065 = vshll.u32 %v5566, 16
  %v6067 = vrot.slane %v6065, 5
  %v6068 = vor.u32 %v6064, %v6067
  %v6069 = vrot.slane %v6068, 4
  %v6071 = vshll.u32 %v5567, 16
  %v6073 = vrot.slane %v6071, 5
  %v6074 = vsel %vm2112, %v6069, %v6073
  %v6075 = vshrl.u32 %v5567, 16
  %v6077 = vrot.slane %v6075, 4
  %v6078 = vor.u32 %v6077, %v6073
  %v6079 = vrot.slane %v6078, 4
  %v6081 = vshll.u32 %v5568, 16
  %v6083 = vrot.slane %v6081, 5
  %v6084 = vsel %vm2112, %v6079, %v6083
  %v6086 = vshrl.u32 %v5569, 16
  %v6088 = vrot.slane %v6086, 4
  %v6089 = vshll.u32 %v5569, 16
  %v6091 = vrot.slane %v6089, 5
  %v6092 = vor.u32 %v6088, %v6091
  %v6093 = vrot.slane %v6092, 4
  %v6095 = vshll.u32 %v5570, 16
  %v6097 = vrot.slane %v6095, 5
  %v6098 = vsel %vm2112, %v6093, %v6097
  %v6099 = vshrl.u32 %v5570, 16
  %v6101 = vrot.slane %v6099, 4
  %v6102 = vor.u32 %v6101, %v6097
  %v6103 = vrot.slane %v6102, 4
  %v6105 = vshll.u32 %v5571, 16
  %v6107 = vrot.slane %v6105, 5
  %v6108 = vsel %vm2112, %v6103, %v6107
  %v6110 = vshrl.u32 %v5572, 16
  %v6112 = vrot.slane %v6110, 4
  %v6113 = vshll.u32 %v5572, 16
  %v6115 = vrot.slane %v6113, 5
  %v6116 = vor.u32 %v6112, %v6115
  %v6117 = vrot.slane %v6116, 4
  %v6119 = vshll.u32 %v5573, 16
  %v6121 = vrot.slane %v6119, 5
  %v6122 = vsel %vm2112, %v6117, %v6121
  %v6123 = vshrl.u32 %v5573, 16
  %v6125 = vrot.slane %v6123, 4
  %v6126 = vor.u32 %v6125, %v6121
  %v6127 = vrot.slane %v6126, 4
  %v6129 = vshll.u32 %v5574, 16
  %v6131 = vrot.slane %v6129, 5
  %v6132 = vsel %vm2112, %v6127, %v6131
  %v6134 = vshrl.u32 %v5575, 16
  %v6136 = vrot.slane %v6134, 4
  %v6137 = vshll.u32 %v5575, 16
  %v6139 = vrot.slane %v6137, 5
  %v6140 = vor.u32 %v6136, %v6139
  %v6141 = vrot.slane %v6140, 4
  %v6143 = vshll.u32 %v5576, 16
  %v6145 = vrot.slane %v6143, 5
  %v6146 = vsel %vm2112, %v6141, %v6145
  %v6147 = vshrl.u32 %v5576, 16
  %v6149 = vrot.slane %v6147, 4
  %v6150 = vor.u32 %v6149, %v6145
  %v6151 = vrot.slane %v6150, 4
  %v6153 = vshll.u32 %v5577, 16
  %v6155 = vrot.slane %v6153, 5
  %v6156 = vsel %vm2112, %v6151, %v6155
  %v6158 = vshrl.u32 %v5578, 16
  %v6160 = vrot.slane %v6158, 4
  %v6161 = vshll.u32 %v5578, 16
  %v6163 = vrot.slane %v6161, 5
  %v6164 = vor.u32 %v6160, %v6163
  %v6165 = vrot.slane %v6164, 4
  %v6167 = vshll.u32 %v5579, 16
  %v6169 = vrot.slane %v6167, 5
  %v6170 = vsel %vm2112, %v6165, %v6169
  %v6171 = vshrl.u32 %v5579, 16
  %v6173 = vrot.slane %v6171, 4
  %v6174 = vor.u32 %v6173, %v6169
  %v6175 = vrot.slane %v6174, 4
  %v6177 = vshll.u32 %v5580, 16
  %v6179 = vrot.slane %v6177, 5
  %v6180 = vsel %vm2112, %v6175, %v6179
  %v6182 = vshrl.u32 %v5581, 16
  %v6184 = vrot.slane %v6182, 4
  %v6185 = vshll.u32 %v5581, 16
  %v6187 = vrot.slane %v6185, 5
  %v6188 = vor.u32 %v6184, %v6187
  %v6189 = vrot.slane %v6188, 4
  %v6191 = vshll.u32 %v5582, 16
  %v6193 = vrot.slane %v6191, 5
  %v6194 = vsel %vm2112, %v6189, %v6193
  %v6195 = vshrl.u32 %v5582, 16
  %v6197 = vrot.slane %v6195, 4
  %v6198 = vor.u32 %v6197, %v6193
  %v6199 = vrot.slane %v6198, 4
  %v6201 = vshll.u32 %v5583, 16
  %v6203 = vrot.slane %v6201, 5
  %v6204 = vsel %vm2112, %v6199, %v6203
  %v6206 = vshrl.u32 %v5584, 16
  %v6208 = vrot.slane %v6206, 4
  %v6209 = vshll.u32 %v5584, 16
  %v6211 = vrot.slane %v6209, 5
  %v6212 = vor.u32 %v6208, %v6211
  %v6213 = vrot.slane %v6212, 4
  %v6215 = vshll.u32 %v5585, 16
  %v6217 = vrot.slane %v6215, 5
  %v6218 = vsel %vm2112, %v6213, %v6217
  %v6219 = vshrl.u32 %v5585, 16
  %v6221 = vrot.slane %v6219, 4
  %v6222 = vor.u32 %v6221, %v6217
  %v6223 = vrot.slane %v6222, 4
  %v6225 = vshll.u32 %v5586, 16
  %v6227 = vrot.slane %v6225, 5
  %v6228 = vsel %vm2112, %v6223, %v6227
  %v6230 = vshrl.u32 %v5587, 16
  %v6232 = vrot.slane %v6230, 4
  %v6233 = vshll.u32 %v5587, 16
  %v6235 = vrot.slane %v6233, 5
  %v6236 = vor.u32 %v6232, %v6235
  %v6237 = vrot.slane %v6236, 4
  %v6239 = vshll.u32 %v5588, 16
  %v6241 = vrot.slane %v6239, 5
  %v6242 = vsel %vm2112, %v6237, %v6241
  %v6243 = vshrl.u32 %v5588, 16
  %v6245 = vrot.slane %v6243, 4
  %v6246 = vor.u32 %v6245, %v6241
  %v6247 = vrot.slane %v6246, 4
  %v6249 = vshll.u32 %v5589, 16
  %v6251 = vrot.slane %v6249, 5
  %v6252 = vsel %vm2112, %v6247, %v6251
  %v6254 = vshrl.u32 %v5590, 16
  %v6256 = vrot.slane %v6254, 4
  %v6257 = vshll.u32 %v5590, 16
  %v6259 = vrot.slane %v6257, 5
  %v6260 = vor.u32 %v6256, %v6259
  %v6261 = vrot.slane %v6260, 4
  %v6263 = vshll.u32 %v5591, 16
  %v6265 = vrot.slane %v6263, 5
  %v6266 = vsel %vm2112, %v6261, %v6265
  %v6267 = vshrl.u32 %v5591, 16
  %v6269 = vrot.slane %v6267, 4
  %v6270 = vor.u32 %v6269, %v6265
  %v6271 = vrot.slane %v6270, 4
  %v6273 = vshll.u32 %v5592, 16
  %v6275 = vrot.slane %v6273, 5
  %v6276 = vsel %vm2112, %v6271, %v6275
  %v6278 = vshrl.u32 %v5593, 16
  %v6280 = vrot.slane %v6278, 4
  %v6281 = vshll.u32 %v5593, 16
  %v6283 = vrot.slane %v6281, 5
  %v6284 = vor.u32 %v6280, %v6283
  %v6285 = vrot.slane %v6284, 4
  %v6287 = vshll.u32 %v5594, 16
  %v6289 = vrot.slane %v6287, 5
  %v6290 = vsel %vm2112, %v6285, %v6289
  %v6291 = vshrl.u32 %v5594, 16
  %v6293 = vrot.slane %v6291, 4
  %v6294 = vor.u32 %v6293, %v6289
  %v6295 = vrot.slane %v6294, 4
  %v6297 = vshll.u32 %v5595, 16
  %v6299 = vrot.slane %v6297, 5
  %v6300 = vsel %vm2112, %v6295, %v6299
  %v6302 = vshrl.u32 %v5596, 16
  %v6304 = vrot.slane %v6302, 4
  %v6305 = vshll.u32 %v5596, 16
  %v6307 = vrot.slane %v6305, 5
  %v6308 = vor.u32 %v6304, %v6307
  %v6309 = vrot.slane %v6308, 4
  %v6311 = vshll.u32 %v5597, 16
  %v6313 = vrot.slane %v6311, 5
  %v6314 = vsel %vm2112, %v6309, %v6313
  %v6315 = vshrl.u32 %v5597, 16
  %v6317 = vrot.slane %v6315, 4
  %v6318 = vor.u32 %v6317, %v6313
  %v6319 = vrot.slane %v6318, 4
  %v6321 = vshll.u32 %v5598, 16
  %v6323 = vrot.slane %v6321, 5
  %v6324 = vsel %vm2112, %v6319, %v6323
  %v6326 = vshrl.u32 %v5599, 16
  %v6328 = vrot.slane %v6326, 4
  %v6329 = vshll.u32 %v5599, 16
  %v6331 = vrot.slane %v6329, 5
  %v6332 = vor.u32 %v6328, %v6331
  %v6333 = vrot.slane %v6332, 4
  %v6335 = vshll.u32 %v5600, 16
  %v6337 = vrot.slane %v6335, 5
  %v6338 = vsel %vm2112, %v6333, %v6337
  %v6339 = vshrl.u32 %v5600, 16
  %v6341 = vrot.slane %v6339, 4
  %v6342 = vor.u32 %v6341, %v6337
  %v6343 = vrot.slane %v6342, 4
  %v6345 = vshll.u32 %v5601, 16
  %v6347 = vrot.slane %v6345, 5
  %v6348 = vsel %vm2112, %v6343, %v6347
  %v6350 = vshrl.u32 %v5602, 16
  %v6352 = vrot.slane %v6350, 4
  %v6353 = vshll.u32 %v5602, 16
  %v6355 = vrot.slane %v6353, 5
  %v6356 = vor.u32 %v6352, %v6355
  %v6357 = vrot.slane %v6356, 4
  %v6359 = vshll.u32 %v5603, 16
  %v6361 = vrot.slane %v6359, 5
  %v6362 = vsel %vm2112, %v6357, %v6361
  %v6363 = vshrl.u32 %v5603, 16
  %v6365 = vrot.slane %v6363, 4
  %v6366 = vor.u32 %v6365, %v6361
  %v6367 = vrot.slane %v6366, 4
  %v6369 = vshll.u32 %v5604, 16
  %v6371 = vrot.slane %v6369, 5
  %v6372 = vsel %vm2112, %v6367, %v6371
  %v6373 = vld [vmem:[%s2 + $0x40] sm:$0xf]
  %v6374 = vld [vmem:[%s2 + $0x44] sm:$0xf]
  %v6375 = vld [vmem:[%s2 + $0x48] sm:$0xf]
  %v6376 = vld [vmem:[%s2 + $0x4c] sm:$0xf]
  %v6377 = vunpack.c.l.b16 %v5618
  %v6378 = vunpack.c.l.b16 %v5628
  %v6379 = vunpack.c.l.b16 %v5642
  %v6380 = vunpack.c.l.b16 %v5652
  %v6381 = vunpack.c.l.b16 %v5666
  %v6382 = vunpack.c.l.b16 %v5676
  %v6383 = vunpack.c.l.b16 %v5690
  %v6384 = vunpack.c.l.b16 %v5700
  %v6385 = vunpack.c.l.b16 %v5714
  %v6386 = vunpack.c.l.b16 %v5724
  %v6387 = vunpack.c.l.b16 %v5738
  %v6388 = vunpack.c.l.b16 %v5748
  %v6389 = vunpack.c.l.b16 %v5762
  %v6390 = vunpack.c.l.b16 %v5772
  %v6391 = vunpack.c.l.b16 %v5786
  %v6392 = vunpack.c.l.b16 %v5796
  %v6393 = vunpack.c.l.b16 %v5810
  %v6394 = vunpack.c.l.b16 %v5820
  %v6395 = vunpack.c.l.b16 %v5834
  %v6396 = vunpack.c.l.b16 %v5844
  %v6397 = vunpack.c.l.b16 %v5858
  %v6398 = vunpack.c.l.b16 %v5868
  %v6399 = vunpack.c.l.b16 %v5882
  %v6400 = vunpack.c.l.b16 %v5892
  %v6401 = vunpack.c.l.b16 %v5906
  %v6402 = vunpack.c.l.b16 %v5916
  %v6403 = vunpack.c.l.b16 %v5930
  %v6404 = vunpack.c.l.b16 %v5940
  %v6405 = vunpack.c.l.b16 %v5954
  %v6406 = vunpack.c.l.b16 %v5964
  %v6407 = vunpack.c.l.b16 %v5978
  %v6408 = vunpack.c.l.b16 %v5988
  %v6409 = vunpack.c.l.b16 %v6002
  %v6410 = vunpack.c.l.b16 %v6012
  %v6411 = vunpack.c.l.b16 %v6026
  %v6412 = vunpack.c.l.b16 %v6036
  %v6413 = vunpack.c.l.b16 %v6050
  %v6414 = vunpack.c.l.b16 %v6060
  %v6415 = vunpack.c.l.b16 %v6074
  %v6416 = vunpack.c.l.b16 %v6084
  %v6417 = vunpack.c.l.b16 %v6098
  %v6418 = vunpack.c.l.b16 %v6108
  %v6419 = vunpack.c.l.b16 %v6122
  %v6420 = vunpack.c.l.b16 %v6132
  %v6421 = vunpack.c.l.b16 %v6146
  %v6422 = vunpack.c.l.b16 %v6156
  %v6423 = vunpack.c.l.b16 %v6170
  %v6424 = vunpack.c.l.b16 %v6180
  %v6425 = vunpack.c.l.b16 %v6194
  %v6426 = vunpack.c.l.b16 %v6204
  %v6427 = vunpack.c.l.b16 %v6218
  %v6428 = vunpack.c.l.b16 %v6228
  %v6429 = vunpack.c.l.b16 %v6242
  %v6430 = vunpack.c.l.b16 %v6252
  %v6431 = vunpack.c.l.b16 %v6266
  %v6432 = vunpack.c.l.b16 %v6276
  %v6433 = vunpack.c.l.b16 %v6290
  %v6434 = vunpack.c.l.b16 %v6300
  %v6435 = vunpack.c.l.b16 %v6314
  %v6436 = vunpack.c.l.b16 %v6324
  %v6437 = vunpack.c.l.b16 %v6338
  %v6438 = vunpack.c.l.b16 %v6348
  %v6439 = vunpack.c.l.b16 %v6362
  %v6440 = vunpack.c.l.b16 %v6372
  %v6441 = vpack.c.b16 %v6378, %v6377
  %v6442 = vpack.c.b16 %v6380, %v6379
  %v6443 = vpack.c.b16 %v6382, %v6381
  %v6444 = vpack.c.b16 %v6384, %v6383
  %v6445 = vpack.c.b16 %v6386, %v6385
  %v6446 = vpack.c.b16 %v6388, %v6387
  %v6447 = vpack.c.b16 %v6390, %v6389
  %v6448 = vpack.c.b16 %v6392, %v6391
  %v6449 = vpack.c.b16 %v6394, %v6393
  %v6450 = vpack.c.b16 %v6396, %v6395
  %v6451 = vpack.c.b16 %v6398, %v6397
  %v6452 = vpack.c.b16 %v6400, %v6399
  %v6453 = vpack.c.b16 %v6402, %v6401
  %v6454 = vpack.c.b16 %v6404, %v6403
  %v6455 = vpack.c.b16 %v6406, %v6405
  %v6456 = vpack.c.b16 %v6408, %v6407
  %v6457 = vpack.c.b16 %v6410, %v6409
  %v6458 = vpack.c.b16 %v6412, %v6411
  %v6459 = vpack.c.b16 %v6414, %v6413
  %v6460 = vpack.c.b16 %v6416, %v6415
  %v6461 = vpack.c.b16 %v6418, %v6417
  %v6462 = vpack.c.b16 %v6420, %v6419
  %v6463 = vpack.c.b16 %v6422, %v6421
  %v6464 = vpack.c.b16 %v6424, %v6423
  %v6465 = vpack.c.b16 %v6426, %v6425
  %v6466 = vpack.c.b16 %v6428, %v6427
  %v6467 = vpack.c.b16 %v6430, %v6429
  %v6468 = vpack.c.b16 %v6432, %v6431
  %v6469 = vpack.c.b16 %v6434, %v6433
  %v6470 = vpack.c.b16 %v6436, %v6435
  %v6471 = vpack.c.b16 %v6438, %v6437
  %v6472 = vpack.c.b16 %v6440, %v6439
  %v6477 = vunpack.c.l.b16 %v6373
  %v6478 = vunpack.c.l.b16 %v6374
  %v6479 = vunpack.c.l.b16 %v6375
  %v6480 = vunpack.c.l.b16 %v6376
  %v6481 = vpack.c.b16 %v6478, %v6477
  %v6482 = vpack.c.b16 %v6480, %v6479
  %v6486 = vsel %vm2993, %v6441, 0
  %v6489 = vsel %vm2993, %v6442, 0
  %v6492 = vsel %vm2993, %v6443, 0
  %v6495 = vsel %vm2993, %v6444, 0
  %v6498 = vsel %vm2993, %v6445, 0
  %v6501 = vsel %vm2993, %v6446, 0
  %v6504 = vsel %vm2993, %v6447, 0
  %v6507 = vsel %vm2993, %v6448, 0
  %v6510 = vsel %vm2993, %v6449, 0
  %v6513 = vsel %vm2993, %v6450, 0
  %v6516 = vsel %vm2993, %v6451, 0
  %v6519 = vsel %vm2993, %v6452, 0
  %v6522 = vsel %vm2993, %v6453, 0
  %v6525 = vsel %vm2993, %v6454, 0
  %v6528 = vsel %vm2993, %v6455, 0
  %v6531 = vsel %vm2993, %v6456, 0
  %v6534 = vsel %vm2993, %v6457, 0
  %v6537 = vsel %vm2993, %v6458, 0
  %v6540 = vsel %vm2993, %v6459, 0
  %v6543 = vsel %vm2993, %v6460, 0
  %v6546 = vsel %vm2993, %v6461, 0
  %v6549 = vsel %vm2993, %v6462, 0
  %v6552 = vsel %vm2993, %v6463, 0
  %v6555 = vsel %vm2993, %v6464, 0
  %v6558 = vsel %vm2993, %v6465, 0
  %v6561 = vsel %vm2993, %v6466, 0
  %v6564 = vsel %vm2993, %v6467, 0
  %v6567 = vsel %vm2993, %v6468, 0
  %v6570 = vsel %vm2993, %v6469, 0
  %v6573 = vsel %vm2993, %v6470, 0
  %v6576 = vsel %vm2993, %v6471, 0
  %v6579 = vsel %vm2993, %v6472, 0
  %6581 = vmatprep.subr.bf16.mxu0 0
  %6582 = vmatpush1.bf16.msra.mxu0 %v6481
  %6583 = vmatprep.subr.bf16.mxu0 0
  %6584 = vmatpush1.bf16.msra.mxu0 %v6482
  %6585 = vmatprep.subr.bf16.mxu0 0
  %6586 = vmatpush1.bf16.msra.mxu0 0
  %6587 = vmatprep.subr.bf16.mxu0 0
  %6588 = vmatpush1.bf16.msra.mxu0 0
  %6589 = vmatprep.subr.bf16.mxu0 0
  %6590 = vmatpush1.bf16.msra.mxu0 0
  %6591 = vmatprep.subr.bf16.mxu0 0
  %6592 = vmatpush1.bf16.msra.mxu0 0
  %6593 = vmatprep.subr.bf16.mxu0 0
  %6594 = vmatpush1.bf16.msra.mxu0 0
  %6595 = vmatprep.subr.bf16.mxu0 0
  %6596 = vmatpush1.bf16.msra.mxu0 0
  %6597 = vmatprep.subr.bf16.mxu0 0
  %6598 = vmatpush1.bf16.msra.mxu0 0
  %6599 = vmatprep.subr.bf16.mxu0 0
  %6600 = vmatpush1.bf16.msra.mxu0 0
  %6601 = vmatprep.subr.bf16.mxu0 0
  %6602 = vmatpush1.bf16.msra.mxu0 0
  %6603 = vmatprep.subr.bf16.mxu0 0
  %6604 = vmatpush1.bf16.msra.mxu0 0
  %6605 = vmatprep.subr.bf16.mxu0 0
  %6606 = vmatpush1.bf16.msra.mxu0 0
  %6607 = vmatprep.subr.bf16.mxu0 0
  %6608 = vmatpush1.bf16.msra.mxu0 0
  %6609 = vmatprep.subr.bf16.mxu0 0
  %6610 = vmatpush1.bf16.msra.mxu0 0
  %6611 = vmatprep.subr.bf16.mxu0 0
  %6612 = vmatpush1.bf16.msra.mxu0 0
  %6613 = vmatprep.mubr.bf16.mxu0 0
  %6614 = vmatmul.mubr.bf16.gmra.mrb[0].mxu0 %v6486
  %v6615 = vpop.f32.mrb[0].mxu0
  %v6616 = vadd.f32 0.0, %v6615
  %v6617 = vpop.f32.mrb[0].mxu0
  %v6618 = vpop.f32.mrb[0].mxu0
  %v6619 = vadd.f32 0.0, %v6618
  %v6620 = vpop.f32.mrb[0].mxu0
  %6621 = vmatprep.mubr.bf16.mxu0 0
  %6622 = vmatmul.mubr.bf16.gmra.mrb[0].mxu0 %v6489
  %v6623 = vpop.f32.mrb[0].mxu0
  %v6624 = vadd.f32 0.0, %v6623
  %v6625 = vpop.f32.mrb[0].mxu0
  %v6626 = vpop.f32.mrb[0].mxu0
  %v6627 = vadd.f32 0.0, %v6626
  %v6628 = vpop.f32.mrb[0].mxu0
  %6629 = vmatprep.mubr.bf16.mxu0 0
  %6630 = vmatmul.mubr.bf16.gmra.mrb[0].mxu0 %v6492
  %v6631 = vpop.f32.mrb[0].mxu0
  %v6632 = vadd.f32 0.0, %v6631
  %v6633 = vpop.f32.mrb[0].mxu0
  %v6634 = vpop.f32.mrb[0].mxu0
  %v6635 = vadd.f32 0.0, %v6634
  %v6636 = vpop.f32.mrb[0].mxu0
  %6637 = vmatprep.mubr.bf16.mxu0 0
  %6638 = vmatmul.mubr.bf16.gmra.mrb[0].mxu0 %v6495
  %v6639 = vpop.f32.mrb[0].mxu0
  %v6640 = vadd.f32 0.0, %v6639
  %v6641 = vpop.f32.mrb[0].mxu0
  %v6642 = vpop.f32.mrb[0].mxu0
  %v6643 = vadd.f32 0.0, %v6642
  %v6644 = vpop.f32.mrb[0].mxu0
  %6645 = vmatprep.mubr.bf16.mxu0 0
  %6646 = vmatmul.mubr.bf16.gmra.mrb[0].mxu0 %v6498
  %v6647 = vpop.f32.mrb[0].mxu0
  %v6648 = vadd.f32 0.0, %v6647
  %v6649 = vpop.f32.mrb[0].mxu0
  %v6650 = vpop.f32.mrb[0].mxu0
  %v6651 = vadd.f32 0.0, %v6650
  %v6652 = vpop.f32.mrb[0].mxu0
  %6653 = vmatprep.mubr.bf16.mxu0 0
  %6654 = vmatmul.mubr.bf16.gmra.mrb[0].mxu0 %v6501
  %v6655 = vpop.f32.mrb[0].mxu0
  %v6656 = vadd.f32 0.0, %v6655
  %v6657 = vpop.f32.mrb[0].mxu0
  %v6658 = vpop.f32.mrb[0].mxu0
  %v6659 = vadd.f32 0.0, %v6658
  %v6660 = vpop.f32.mrb[0].mxu0
  %6661 = vmatprep.mubr.bf16.mxu0 0
  %6662 = vmatmul.mubr.bf16.gmra.mrb[0].mxu0 %v6504
  %v6663 = vpop.f32.mrb[0].mxu0
  %v6664 = vadd.f32 0.0, %v6663
  %v6665 = vpop.f32.mrb[0].mxu0
  %v6666 = vpop.f32.mrb[0].mxu0
  %v6667 = vadd.f32 0.0, %v6666
  %v6668 = vpop.f32.mrb[0].mxu0
  %6669 = vmatprep.mubr.bf16.mxu0 0
  %6670 = vmatmul.mubr.bf16.gmra.mrb[0].mxu0 %v6507
  %v6671 = vpop.f32.mrb[0].mxu0
  %v6672 = vadd.f32 0.0, %v6671
  %v6673 = vpop.f32.mrb[0].mxu0
  %v6674 = vpop.f32.mrb[0].mxu0
  %v6675 = vadd.f32 0.0, %v6674
  %v6676 = vpop.f32.mrb[0].mxu0
  %6677 = vmatprep.mubr.bf16.mxu0 0
  %6678 = vmatmul.mubr.bf16.gmra.mrb[0].mxu0 %v6510
  %v6679 = vpop.f32.mrb[0].mxu0
  %v6680 = vadd.f32 0.0, %v6679
  %v6681 = vpop.f32.mrb[0].mxu0
  %v6682 = vpop.f32.mrb[0].mxu0
  %v6683 = vadd.f32 0.0, %v6682
  %v6684 = vpop.f32.mrb[0].mxu0
  %6685 = vmatprep.mubr.bf16.mxu0 0
  %6686 = vmatmul.mubr.bf16.gmra.mrb[0].mxu0 %v6513
  %v6687 = vpop.f32.mrb[0].mxu0
  %v6688 = vadd.f32 0.0, %v6687
  %v6689 = vpop.f32.mrb[0].mxu0
  %v6690 = vpop.f32.mrb[0].mxu0
  %v6691 = vadd.f32 0.0, %v6690
  %v6692 = vpop.f32.mrb[0].mxu0
  %6693 = vmatprep.mubr.bf16.mxu0 0
  %6694 = vmatmul.mubr.bf16.gmra.mrb[0].mxu0 %v6516
  %v6695 = vpop.f32.mrb[0].mxu0
  %v6696 = vadd.f32 0.0, %v6695
  %v6697 = vpop.f32.mrb[0].mxu0
  %v6698 = vpop.f32.mrb[0].mxu0
  %v6699 = vadd.f32 0.0, %v6698
  %v6700 = vpop.f32.mrb[0].mxu0
  %6701 = vmatprep.mubr.bf16.mxu0 0
  %6702 = vmatmul.mubr.bf16.gmra.mrb[0].mxu0 %v6519
  %v6703 = vpop.f32.mrb[0].mxu0
  %v6704 = vadd.f32 0.0, %v6703
  %v6705 = vpop.f32.mrb[0].mxu0
  %v6706 = vpop.f32.mrb[0].mxu0
  %v6707 = vadd.f32 0.0, %v6706
  %v6708 = vpop.f32.mrb[0].mxu0
  %6709 = vmatprep.mubr.bf16.mxu0 0
  %6710 = vmatmul.mubr.bf16.gmra.mrb[0].mxu0 %v6522
  %v6711 = vpop.f32.mrb[0].mxu0
  %v6712 = vadd.f32 0.0, %v6711
  %v6713 = vpop.f32.mrb[0].mxu0
  %v6714 = vpop.f32.mrb[0].mxu0
  %v6715 = vadd.f32 0.0, %v6714
  %v6716 = vpop.f32.mrb[0].mxu0
  %6717 = vmatprep.mubr.bf16.mxu0 0
  %6718 = vmatmul.mubr.bf16.gmra.mrb[0].mxu0 %v6525
  %v6719 = vpop.f32.mrb[0].mxu0
  %v6720 = vadd.f32 0.0, %v6719
  %v6721 = vpop.f32.mrb[0].mxu0
  %v6722 = vpop.f32.mrb[0].mxu0
  %v6723 = vadd.f32 0.0, %v6722
  %v6724 = vpop.f32.mrb[0].mxu0
  %6725 = vmatprep.mubr.bf16.mxu0 0
  %6726 = vmatmul.mubr.bf16.gmra.mrb[0].mxu0 %v6528
  %v6727 = vpop.f32.mrb[0].mxu0
  %v6728 = vadd.f32 0.0, %v6727
  %v6729 = vpop.f32.mrb[0].mxu0
  %v6730 = vpop.f32.mrb[0].mxu0
  %v6731 = vadd.f32 0.0, %v6730
  %v6732 = vpop.f32.mrb[0].mxu0
  %6733 = vmatprep.mubr.bf16.mxu0 0
  %6734 = vmatmul.mubr.bf16.gmra.mrb[0].mxu0 %v6531
  %v6735 = vpop.f32.mrb[0].mxu0
  %v6736 = vadd.f32 0.0, %v6735
  %v6737 = vpop.f32.mrb[0].mxu0
  %v6738 = vpop.f32.mrb[0].mxu0
  %v6739 = vadd.f32 0.0, %v6738
  %v6740 = vpop.f32.mrb[0].mxu0
  %6741 = vmatprep.mubr.bf16.mxu0 0
  %6742 = vmatmul.mubr.bf16.gmra.mrb[0].mxu0 %v6534
  %v6743 = vpop.f32.mrb[0].mxu0
  %v6744 = vadd.f32 0.0, %v6743
  %v6745 = vpop.f32.mrb[0].mxu0
  %v6746 = vpop.f32.mrb[0].mxu0
  %v6747 = vadd.f32 0.0, %v6746
  %v6748 = vpop.f32.mrb[0].mxu0
  %6749 = vmatprep.mubr.bf16.mxu0 0
  %6750 = vmatmul.mubr.bf16.gmra.mrb[0].mxu0 %v6537
  %v6751 = vpop.f32.mrb[0].mxu0
  %v6752 = vadd.f32 0.0, %v6751
  %v6753 = vpop.f32.mrb[0].mxu0
  %v6754 = vpop.f32.mrb[0].mxu0
  %v6755 = vadd.f32 0.0, %v6754
  %v6756 = vpop.f32.mrb[0].mxu0
  %6757 = vmatprep.mubr.bf16.mxu0 0
  %6758 = vmatmul.mubr.bf16.gmra.mrb[0].mxu0 %v6540
  %v6759 = vpop.f32.mrb[0].mxu0
  %v6760 = vadd.f32 0.0, %v6759
  %v6761 = vpop.f32.mrb[0].mxu0
  %v6762 = vpop.f32.mrb[0].mxu0
  %v6763 = vadd.f32 0.0, %v6762
  %v6764 = vpop.f32.mrb[0].mxu0
  %6765 = vmatprep.mubr.bf16.mxu0 0
  %6766 = vmatmul.mubr.bf16.gmra.mrb[0].mxu0 %v6543
  %v6767 = vpop.f32.mrb[0].mxu0
  %v6768 = vadd.f32 0.0, %v6767
  %v6769 = vpop.f32.mrb[0].mxu0
  %v6770 = vpop.f32.mrb[0].mxu0
  %v6771 = vadd.f32 0.0, %v6770
  %v6772 = vpop.f32.mrb[0].mxu0
  %6773 = vmatprep.mubr.bf16.mxu0 0
  %6774 = vmatmul.mubr.bf16.gmra.mrb[0].mxu0 %v6546
  %v6775 = vpop.f32.mrb[0].mxu0
  %v6776 = vadd.f32 0.0, %v6775
  %v6777 = vpop.f32.mrb[0].mxu0
  %v6778 = vpop.f32.mrb[0].mxu0
  %v6779 = vadd.f32 0.0, %v6778
  %v6780 = vpop.f32.mrb[0].mxu0
  %6781 = vmatprep.mubr.bf16.mxu0 0
  %6782 = vmatmul.mubr.bf16.gmra.mrb[0].mxu0 %v6549
  %v6783 = vpop.f32.mrb[0].mxu0
  %v6784 = vadd.f32 0.0, %v6783
  %v6785 = vpop.f32.mrb[0].mxu0
  %v6786 = vpop.f32.mrb[0].mxu0
  %v6787 = vadd.f32 0.0, %v6786
  %v6788 = vpop.f32.mrb[0].mxu0
  %6789 = vmatprep.mubr.bf16.mxu0 0
  %6790 = vmatmul.mubr.bf16.gmra.mrb[0].mxu0 %v6552
  %v6791 = vpop.f32.mrb[0].mxu0
  %v6792 = vadd.f32 0.0, %v6791
  %v6793 = vpop.f32.mrb[0].mxu0
  %v6794 = vpop.f32.mrb[0].mxu0
  %v6795 = vadd.f32 0.0, %v6794
  %v6796 = vpop.f32.mrb[0].mxu0
  %6797 = vmatprep.mubr.bf16.mxu0 0
  %6798 = vmatmul.mubr.bf16.gmra.mrb[0].mxu0 %v6555
  %v6799 = vpop.f32.mrb[0].mxu0
  %v6800 = vadd.f32 0.0, %v6799
  %v6801 = vpop.f32.mrb[0].mxu0
  %v6802 = vpop.f32.mrb[0].mxu0
  %v6803 = vadd.f32 0.0, %v6802
  %v6804 = vpop.f32.mrb[0].mxu0
  %6805 = vmatprep.mubr.bf16.mxu0 0
  %6806 = vmatmul.mubr.bf16.gmra.mrb[0].mxu0 %v6558
  %v6807 = vpop.f32.mrb[0].mxu0
  %v6808 = vadd.f32 0.0, %v6807
  %v6809 = vpop.f32.mrb[0].mxu0
  %v6810 = vpop.f32.mrb[0].mxu0
  %v6811 = vadd.f32 0.0, %v6810
  %v6812 = vpop.f32.mrb[0].mxu0
  %6813 = vmatprep.mubr.bf16.mxu0 0
  %6814 = vmatmul.mubr.bf16.gmra.mrb[0].mxu0 %v6561
  %v6815 = vpop.f32.mrb[0].mxu0
  %v6816 = vadd.f32 0.0, %v6815
  %v6817 = vpop.f32.mrb[0].mxu0
  %v6818 = vpop.f32.mrb[0].mxu0
  %v6819 = vadd.f32 0.0, %v6818
  %v6820 = vpop.f32.mrb[0].mxu0
  %6821 = vmatprep.mubr.bf16.mxu0 0
  %6822 = vmatmul.mubr.bf16.gmra.mrb[0].mxu0 %v6564
  %v6823 = vpop.f32.mrb[0].mxu0
  %v6824 = vadd.f32 0.0, %v6823
  %v6825 = vpop.f32.mrb[0].mxu0
  %v6826 = vpop.f32.mrb[0].mxu0
  %v6827 = vadd.f32 0.0, %v6826
  %v6828 = vpop.f32.mrb[0].mxu0
  %6829 = vmatprep.mubr.bf16.mxu0 0
  %6830 = vmatmul.mubr.bf16.gmra.mrb[0].mxu0 %v6567
  %v6831 = vpop.f32.mrb[0].mxu0
  %v6832 = vadd.f32 0.0, %v6831
  %v6833 = vpop.f32.mrb[0].mxu0
  %v6834 = vpop.f32.mrb[0].mxu0
  %v6835 = vadd.f32 0.0, %v6834
  %v6836 = vpop.f32.mrb[0].mxu0
  %6837 = vmatprep.mubr.bf16.mxu0 0
  %6838 = vmatmul.mubr.bf16.gmra.mrb[0].mxu0 %v6570
  %v6839 = vpop.f32.mrb[0].mxu0
  %v6840 = vadd.f32 0.0, %v6839
  %v6841 = vpop.f32.mrb[0].mxu0
  %v6842 = vpop.f32.mrb[0].mxu0
  %v6843 = vadd.f32 0.0, %v6842
  %v6844 = vpop.f32.mrb[0].mxu0
  %6845 = vmatprep.mubr.bf16.mxu0 0
  %6846 = vmatmul.mubr.bf16.gmra.mrb[0].mxu0 %v6573
  %v6847 = vpop.f32.mrb[0].mxu0
  %v6848 = vadd.f32 0.0, %v6847
  %v6849 = vpop.f32.mrb[0].mxu0
  %v6850 = vpop.f32.mrb[0].mxu0
  %v6851 = vadd.f32 0.0, %v6850
  %v6852 = vpop.f32.mrb[0].mxu0
  %6853 = vmatprep.mubr.bf16.mxu0 0
  %6854 = vmatmul.mubr.bf16.gmra.mrb[0].mxu0 %v6576
  %v6855 = vpop.f32.mrb[0].mxu0
  %v6856 = vadd.f32 0.0, %v6855
  %v6857 = vpop.f32.mrb[0].mxu0
  %v6858 = vpop.f32.mrb[0].mxu0
  %v6859 = vadd.f32 0.0, %v6858
  %v6860 = vpop.f32.mrb[0].mxu0
  %6861 = vmatprep.mubr.bf16.mxu0 0
  %6862 = vmatmul.mubr.bf16.gmra.mrb[0].mxu0 %v6579
  %v6863 = vpop.f32.mrb[0].mxu0
  %v6864 = vadd.f32 0.0, %v6863
  %v6865 = vpop.f32.mrb[0].mxu0
  %v6866 = vpop.f32.mrb[0].mxu0
  %v6867 = vadd.f32 0.0, %v6866
  %v6868 = vpop.f32.mrb[0].mxu0
  %6869 = vdwg.mxu0
  %v6870 = vadd.f32 %v5445, %v6616
  %v6871 = vadd.f32 %v5446, %v6619
  %v6872 = vadd.f32 %v5447, %v6624
  %v6873 = vadd.f32 %v5448, %v6627
  %v6874 = vadd.f32 %v5449, %v6632
  %v6875 = vadd.f32 %v5450, %v6635
  %v6876 = vadd.f32 %v5451, %v6640
  %v6877 = vadd.f32 %v5452, %v6643
  %v6878 = vadd.f32 %v5453, %v6648
  %v6879 = vadd.f32 %v5454, %v6651
  %v6880 = vadd.f32 %v5455, %v6656
  %v6881 = vadd.f32 %v5456, %v6659
  %v6882 = vadd.f32 %v5457, %v6664
  %v6883 = vadd.f32 %v5458, %v6667
  %v6884 = vadd.f32 %v5459, %v6672
  %v6885 = vadd.f32 %v5460, %v6675
  %v6886 = vadd.f32 %v5461, %v6680
  %v6887 = vadd.f32 %v5462, %v6683
  %v6888 = vadd.f32 %v5463, %v6688
  %v6889 = vadd.f32 %v5464, %v6691
  %v6890 = vadd.f32 %v5465, %v6696
  %v6891 = vadd.f32 %v5466, %v6699
  %v6892 = vadd.f32 %v5467, %v6704
  %v6893 = vadd.f32 %v5468, %v6707
  %v6894 = vadd.f32 %v5469, %v6712
  %v6895 = vadd.f32 %v5470, %v6715
  %v6896 = vadd.f32 %v5471, %v6720
  %v6897 = vadd.f32 %v5472, %v6723
  %v6898 = vadd.f32 %v5473, %v6728
  %v6899 = vadd.f32 %v5474, %v6731
  %v6900 = vadd.f32 %v5475, %v6736
  %v6901 = vadd.f32 %v5476, %v6739
  %v6902 = vadd.f32 %v5477, %v6744
  %v6903 = vadd.f32 %v5478, %v6747
  %v6904 = vadd.f32 %v5479, %v6752
  %v6905 = vadd.f32 %v5480, %v6755
  %v6906 = vadd.f32 %v5481, %v6760
  %v6907 = vadd.f32 %v5482, %v6763
  %v6908 = vadd.f32 %v5483, %v6768
  %v6909 = vadd.f32 %v5484, %v6771
  %v6910 = vadd.f32 %v5485, %v6776
  %v6911 = vadd.f32 %v5486, %v6779
  %v6912 = vadd.f32 %v5487, %v6784
  %v6913 = vadd.f32 %v5488, %v6787
  %v6914 = vadd.f32 %v5489, %v6792
  %v6915 = vadd.f32 %v5490, %v6795
  %v6916 = vadd.f32 %v5491, %v6800
  %v6917 = vadd.f32 %v5492, %v6803
  %v6918 = vadd.f32 %v5493, %v6808
  %v6919 = vadd.f32 %v5494, %v6811
  %v6920 = vadd.f32 %v5495, %v6816
  %v6921 = vadd.f32 %v5496, %v6819
  %v6922 = vadd.f32 %v5497, %v6824
  %v6923 = vadd.f32 %v5498, %v6827
  %v6924 = vadd.f32 %v5499, %v6832
  %v6925 = vadd.f32 %v5500, %v6835
  %v6926 = vadd.f32 %v5501, %v6840
  %v6927 = vadd.f32 %v5502, %v6843
  %v6928 = vadd.f32 %v5503, %v6848
  %v6929 = vadd.f32 %v5504, %v6851
  %v6930 = vadd.f32 %v5505, %v6856
  %v6931 = vadd.f32 %v5506, %v6859
  %v6932 = vadd.f32 %v5507, %v6864
  %v6933 = vadd.f32 %v5508, %v6867
  %v6934 = vld [vmem:[%s1783] sm:$0xe]
  %v6935 = vld [vmem:[%s1783 + $0xc] sm:$0xe]
  %v6936 = vld [vmem:[%s1783 + $0x18] sm:$0xe]
  %v6937 = vld [vmem:[%s1783 + $0x24] sm:$0xe]
  %v6938 = vld [vmem:[%s1783 + $0x30] sm:$0xe]
  %v6939 = vld [vmem:[%s1783 + $0x3c] sm:$0xe]
  %v6940 = vld [vmem:[%s1783 + $0x48] sm:$0xe]
  %v6941 = vld [vmem:[%s1783 + $0x54] sm:$0xe]
  %v6942 = vld [vmem:[%s1783 + $0x60] sm:$0xe]
  %v6943 = vld [vmem:[%s1783 + $0x6c] sm:$0xe]
  %v6944 = vld [vmem:[%s1783 + $0x78] sm:$0xe]
  %v6945 = vld [vmem:[%s1783 + $0x84] sm:$0xe]
  %v6946 = vld [vmem:[%s1783 + $0x90] sm:$0xe]
  %v6947 = vld [vmem:[%s1783 + $0x9c] sm:$0xe]
  %v6948 = vld [vmem:[%s1783 + $0xa8] sm:$0xe]
  %v6949 = vld [vmem:[%s1783 + $0xb4] sm:$0xe]
  %v6950 = vld [vmem:[%s1783 + $0xd8] sm:$0xe]
  %v6951 = vld [vmem:[%s1783 + $0xe4] sm:$0xe]
  %v6952 = vld [vmem:[%s1783 + $0xf0] sm:$0xe]
  %v6953 = vld [vmem:[%s1783 + $0xfc] sm:$0xe]
  %v6954 = vld [vmem:[%s1783 + $0x108] sm:$0xe]
  %v6955 = vld [vmem:[%s1783 + $0x114] sm:$0xe]
  %v6956 = vld [vmem:[%s1783 + $0x120] sm:$0xe]
  %v6957 = vld [vmem:[%s1783 + $0x12c] sm:$0xe]
  %v6958 = vld [vmem:[%s1783 + $0x138] sm:$0xe]
  %v6959 = vld [vmem:[%s1783 + $0x144] sm:$0xe]
  %v6960 = vld [vmem:[%s1783 + $0x150] sm:$0xe]
  %v6961 = vld [vmem:[%s1783 + $0x15c] sm:$0xe]
  %v6962 = vld [vmem:[%s1783 + $0x168] sm:$0xe]
  %v6963 = vld [vmem:[%s1783 + $0x174] sm:$0xe]
  %v6964 = vld [vmem:[%s1783 + $0x180] sm:$0xe]
  %v6965 = vld [vmem:[%s1783 + $0x18c] sm:$0xe]
  %v7062 = vrot.slane %v6934, 5
  %v7063 = vrot.slane %v7062, 4
  %v7064 = vrot.slane %v5510, 5
  %v7065 = vsel %vm4034, %v7063, %v7064
  %v7066 = vrot.slane %v7064, 4
  %v7067 = vrot.slane %v5511, 5
  %v7068 = vsel %vm4034, %v7066, %v7067
  %v7069 = vrot.slane %v6935, 5
  %v7070 = vrot.slane %v7069, 4
  %v7071 = vrot.slane %v5513, 5
  %v7072 = vsel %vm4034, %v7070, %v7071
  %v7073 = vrot.slane %v7071, 4
  %v7074 = vrot.slane %v5514, 5
  %v7075 = vsel %vm4034, %v7073, %v7074
  %v7076 = vrot.slane %v6936, 5
  %v7077 = vrot.slane %v7076, 4
  %v7078 = vrot.slane %v5516, 5
  %v7079 = vsel %vm4034, %v7077, %v7078
  %v7080 = vrot.slane %v7078, 4
  %v7081 = vrot.slane %v5517, 5
  %v7082 = vsel %vm4034, %v7080, %v7081
  %v7083 = vrot.slane %v6937, 5
  %v7084 = vrot.slane %v7083, 4
  %v7085 = vrot.slane %v5519, 5
  %v7086 = vsel %vm4034, %v7084, %v7085
  %v7087 = vrot.slane %v7085, 4
  %v7088 = vrot.slane %v5520, 5
  %v7089 = vsel %vm4034, %v7087, %v7088
  %v7090 = vrot.slane %v6938, 5
  %v7091 = vrot.slane %v7090, 4
  %v7092 = vrot.slane %v5522, 5
  %v7093 = vsel %vm4034, %v7091, %v7092
  %v7094 = vrot.slane %v7092, 4
  %v7095 = vrot.slane %v5523, 5
  %v7096 = vsel %vm4034, %v7094, %v7095
  %v7097 = vrot.slane %v6939, 5
  %v7098 = vrot.slane %v7097, 4
  %v7099 = vrot.slane %v5525, 5
  %v7100 = vsel %vm4034, %v7098, %v7099
  %v7101 = vrot.slane %v7099, 4
  %v7102 = vrot.slane %v5526, 5
  %v7103 = vsel %vm4034, %v7101, %v7102
  %v7104 = vrot.slane %v6940, 5
  %v7105 = vrot.slane %v7104, 4
  %v7106 = vrot.slane %v5528, 5
  %v7107 = vsel %vm4034, %v7105, %v7106
  %v7108 = vrot.slane %v7106, 4
  %v7109 = vrot.slane %v5529, 5
  %v7110 = vsel %vm4034, %v7108, %v7109
  %v7111 = vrot.slane %v6941, 5
  %v7112 = vrot.slane %v7111, 4
  %v7113 = vrot.slane %v5531, 5
  %v7114 = vsel %vm4034, %v7112, %v7113
  %v7115 = vrot.slane %v7113, 4
  %v7116 = vrot.slane %v5532, 5
  %v7117 = vsel %vm4034, %v7115, %v7116
  %v7118 = vrot.slane %v6942, 5
  %v7119 = vrot.slane %v7118, 4
  %v7120 = vrot.slane %v5534, 5
  %v7121 = vsel %vm4034, %v7119, %v7120
  %v7122 = vrot.slane %v7120, 4
  %v7123 = vrot.slane %v5535, 5
  %v7124 = vsel %vm4034, %v7122, %v7123
  %v7125 = vrot.slane %v6943, 5
  %v7126 = vrot.slane %v7125, 4
  %v7127 = vrot.slane %v5537, 5
  %v7128 = vsel %vm4034, %v7126, %v7127
  %v7129 = vrot.slane %v7127, 4
  %v7130 = vrot.slane %v5538, 5
  %v7131 = vsel %vm4034, %v7129, %v7130
  %v7132 = vrot.slane %v6944, 5
  %v7133 = vrot.slane %v7132, 4
  %v7134 = vrot.slane %v5540, 5
  %v7135 = vsel %vm4034, %v7133, %v7134
  %v7136 = vrot.slane %v7134, 4
  %v7137 = vrot.slane %v5541, 5
  %v7138 = vsel %vm4034, %v7136, %v7137
  %v7139 = vrot.slane %v6945, 5
  %v7140 = vrot.slane %v7139, 4
  %v7141 = vrot.slane %v5543, 5
  %v7142 = vsel %vm4034, %v7140, %v7141
  %v7143 = vrot.slane %v7141, 4
  %v7144 = vrot.slane %v5544, 5
  %v7145 = vsel %vm4034, %v7143, %v7144
  %v7146 = vrot.slane %v6946, 5
  %v7147 = vrot.slane %v7146, 4
  %v7148 = vrot.slane %v5546, 5
  %v7149 = vsel %vm4034, %v7147, %v7148
  %v7150 = vrot.slane %v7148, 4
  %v7151 = vrot.slane %v5547, 5
  %v7152 = vsel %vm4034, %v7150, %v7151
  %v7153 = vrot.slane %v6947, 5
  %v7154 = vrot.slane %v7153, 4
  %v7155 = vrot.slane %v5549, 5
  %v7156 = vsel %vm4034, %v7154, %v7155
  %v7157 = vrot.slane %v7155, 4
  %v7158 = vrot.slane %v5550, 5
  %v7159 = vsel %vm4034, %v7157, %v7158
  %v7160 = vrot.slane %v6948, 5
  %v7161 = vrot.slane %v7160, 4
  %v7162 = vrot.slane %v5552, 5
  %v7163 = vsel %vm4034, %v7161, %v7162
  %v7164 = vrot.slane %v7162, 4
  %v7165 = vrot.slane %v5553, 5
  %v7166 = vsel %vm4034, %v7164, %v7165
  %v7167 = vrot.slane %v6949, 5
  %v7168 = vrot.slane %v7167, 4
  %v7169 = vrot.slane %v5555, 5
  %v7170 = vsel %vm4034, %v7168, %v7169
  %v7171 = vrot.slane %v7169, 4
  %v7172 = vrot.slane %v5556, 5
  %v7173 = vsel %vm4034, %v7171, %v7172
  %v7174 = vrot.slane %v6950, 5
  %v7175 = vrot.slane %v7174, 4
  %v7176 = vrot.slane %v5558, 5
  %v7177 = vsel %vm4034, %v7175, %v7176
  %v7178 = vrot.slane %v7176, 4
  %v7179 = vrot.slane %v5559, 5
  %v7180 = vsel %vm4034, %v7178, %v7179
  %v7181 = vrot.slane %v6951, 5
  %v7182 = vrot.slane %v7181, 4
  %v7183 = vrot.slane %v5561, 5
  %v7184 = vsel %vm4034, %v7182, %v7183
  %v7185 = vrot.slane %v7183, 4
  %v7186 = vrot.slane %v5562, 5
  %v7187 = vsel %vm4034, %v7185, %v7186
  %v7188 = vrot.slane %v6952, 5
  %v7189 = vrot.slane %v7188, 4
  %v7190 = vrot.slane %v5564, 5
  %v7191 = vsel %vm4034, %v7189, %v7190
  %v7192 = vrot.slane %v7190, 4
  %v7193 = vrot.slane %v5565, 5
  %v7194 = vsel %vm4034, %v7192, %v7193
  %v7195 = vrot.slane %v6953, 5
  %v7196 = vrot.slane %v7195, 4
  %v7197 = vrot.slane %v5567, 5
  %v7198 = vsel %vm4034, %v7196, %v7197
  %v7199 = vrot.slane %v7197, 4
  %v7200 = vrot.slane %v5568, 5
  %v7201 = vsel %vm4034, %v7199, %v7200
  %v7202 = vrot.slane %v6954, 5
  %v7203 = vrot.slane %v7202, 4
  %v7204 = vrot.slane %v5570, 5
  %v7205 = vsel %vm4034, %v7203, %v7204
  %v7206 = vrot.slane %v7204, 4
  %v7207 = vrot.slane %v5571, 5
  %v7208 = vsel %vm4034, %v7206, %v7207
  %v7209 = vrot.slane %v6955, 5
  %v7210 = vrot.slane %v7209, 4
  %v7211 = vrot.slane %v5573, 5
  %v7212 = vsel %vm4034, %v7210, %v7211
  %v7213 = vrot.slane %v7211, 4
  %v7214 = vrot.slane %v5574, 5
  %v7215 = vsel %vm4034, %v7213, %v7214
  %v7216 = vrot.slane %v6956, 5
  %v7217 = vrot.slane %v7216, 4
  %v7218 = vrot.slane %v5576, 5
  %v7219 = vsel %vm4034, %v7217, %v7218
  %v7220 = vrot.slane %v7218, 4
  %v7221 = vrot.slane %v5577, 5
  %v7222 = vsel %vm4034, %v7220, %v7221
  %v7223 = vrot.slane %v6957, 5
  %v7224 = vrot.slane %v7223, 4
  %v7225 = vrot.slane %v5579, 5
  %v7226 = vsel %vm4034, %v7224, %v7225
  %v7227 = vrot.slane %v7225, 4
  %v7228 = vrot.slane %v5580, 5
  %v7229 = vsel %vm4034, %v7227, %v7228
  %v7230 = vrot.slane %v6958, 5
  %v7231 = vrot.slane %v7230, 4
  %v7232 = vrot.slane %v5582, 5
  %v7233 = vsel %vm4034, %v7231, %v7232
  %v7234 = vrot.slane %v7232, 4
  %v7235 = vrot.slane %v5583, 5
  %v7236 = vsel %vm4034, %v7234, %v7235
  %v7237 = vrot.slane %v6959, 5
  %v7238 = vrot.slane %v7237, 4
  %v7239 = vrot.slane %v5585, 5
  %v7240 = vsel %vm4034, %v7238, %v7239
  %v7241 = vrot.slane %v7239, 4
  %v7242 = vrot.slane %v5586, 5
  %v7243 = vsel %vm4034, %v7241, %v7242
  %v7244 = vrot.slane %v6960, 5
  %v7245 = vrot.slane %v7244, 4
  %v7246 = vrot.slane %v5588, 5
  %v7247 = vsel %vm4034, %v7245, %v7246
  %v7248 = vrot.slane %v7246, 4
  %v7249 = vrot.slane %v5589, 5
  %v7250 = vsel %vm4034, %v7248, %v7249
  %v7251 = vrot.slane %v6961, 5
  %v7252 = vrot.slane %v7251, 4
  %v7253 = vrot.slane %v5591, 5
  %v7254 = vsel %vm4034, %v7252, %v7253
  %v7255 = vrot.slane %v7253, 4
  %v7256 = vrot.slane %v5592, 5
  %v7257 = vsel %vm4034, %v7255, %v7256
  %v7258 = vrot.slane %v6962, 5
  %v7259 = vrot.slane %v7258, 4
  %v7260 = vrot.slane %v5594, 5
  %v7261 = vsel %vm4034, %v7259, %v7260
  %v7262 = vrot.slane %v7260, 4
  %v7263 = vrot.slane %v5595, 5
  %v7264 = vsel %vm4034, %v7262, %v7263
  %v7265 = vrot.slane %v6963, 5
  %v7266 = vrot.slane %v7265, 4
  %v7267 = vrot.slane %v5597, 5
  %v7268 = vsel %vm4034, %v7266, %v7267
  %v7269 = vrot.slane %v7267, 4
  %v7270 = vrot.slane %v5598, 5
  %v7271 = vsel %vm4034, %v7269, %v7270
  %v7272 = vrot.slane %v6964, 5
  %v7273 = vrot.slane %v7272, 4
  %v7274 = vrot.slane %v5600, 5
  %v7275 = vsel %vm4034, %v7273, %v7274
  %v7276 = vrot.slane %v7274, 4
  %v7277 = vrot.slane %v5601, 5
  %v7278 = vsel %vm4034, %v7276, %v7277
  %v7279 = vrot.slane %v6965, 5
  %v7280 = vrot.slane %v7279, 4
  %v7281 = vrot.slane %v5603, 5
  %v7282 = vsel %vm4034, %v7280, %v7281
  %v7283 = vrot.slane %v7281, 4
  %v7284 = vrot.slane %v5604, 5
  %v7285 = vsel %vm4034, %v7283, %v7284
  %v7286 = vld [vmem:[%s2 + $0x50] sm:$0xf]
  %v7287 = vld [vmem:[%s2 + $0x54] sm:$0xf]
  %v7288 = vld [vmem:[%s2 + $0x58] sm:$0xf]
  %v7289 = vld [vmem:[%s2 + $0x5c] sm:$0xf]
  %v7290 = vunpack.c.l.b16 %v7065
  %v7291 = vunpack.c.l.b16 %v7068
  %v7292 = vunpack.c.l.b16 %v7072
  %v7293 = vunpack.c.l.b16 %v7075
  %v7294 = vunpack.c.l.b16 %v7079
  %v7295 = vunpack.c.l.b16 %v7082
  %v7296 = vunpack.c.l.b16 %v7086
  %v7297 = vunpack.c.l.b16 %v7089
  %v7298 = vunpack.c.l.b16 %v7093
  %v7299 = vunpack.c.l.b16 %v7096
  %v7300 = vunpack.c.l.b16 %v7100
  %v7301 = vunpack.c.l.b16 %v7103
  %v7302 = vunpack.c.l.b16 %v7107
  %v7303 = vunpack.c.l.b16 %v7110
  %v7304 = vunpack.c.l.b16 %v7114
  %v7305 = vunpack.c.l.b16 %v7117
  %v7306 = vunpack.c.l.b16 %v7121
  %v7307 = vunpack.c.l.b16 %v7124
  %v7308 = vunpack.c.l.b16 %v7128
  %v7309 = vunpack.c.l.b16 %v7131
  %v7310 = vunpack.c.l.b16 %v7135
  %v7311 = vunpack.c.l.b16 %v7138
  %v7312 = vunpack.c.l.b16 %v7142
  %v7313 = vunpack.c.l.b16 %v7145
  %v7314 = vunpack.c.l.b16 %v7149
  %v7315 = vunpack.c.l.b16 %v7152
  %v7316 = vunpack.c.l.b16 %v7156
  %v7317 = vunpack.c.l.b16 %v7159
  %v7318 = vunpack.c.l.b16 %v7163
  %v7319 = vunpack.c.l.b16 %v7166
  %v7320 = vunpack.c.l.b16 %v7170
  %v7321 = vunpack.c.l.b16 %v7173
  %v7322 = vunpack.c.l.b16 %v7177
  %v7323 = vunpack.c.l.b16 %v7180
  %v7324 = vunpack.c.l.b16 %v7184
  %v7325 = vunpack.c.l.b16 %v7187
  %v7326 = vunpack.c.l.b16 %v7191
  %v7327 = vunpack.c.l.b16 %v7194
  %v7328 = vunpack.c.l.b16 %v7198
  %v7329 = vunpack.c.l.b16 %v7201
  %v7330 = vunpack.c.l.b16 %v7205
  %v7331 = vunpack.c.l.b16 %v7208
  %v7332 = vunpack.c.l.b16 %v7212
  %v7333 = vunpack.c.l.b16 %v7215
  %v7334 = vunpack.c.l.b16 %v7219
  %v7335 = vunpack.c.l.b16 %v7222
  %v7336 = vunpack.c.l.b16 %v7226
  %v7337 = vunpack.c.l.b16 %v7229
  %v7338 = vunpack.c.l.b16 %v7233
  %v7339 = vunpack.c.l.b16 %v7236
  %v7340 = vunpack.c.l.b16 %v7240
  %v7341 = vunpack.c.l.b16 %v7243
  %v7342 = vunpack.c.l.b16 %v7247
  %v7343 = vunpack.c.l.b16 %v7250
  %v7344 = vunpack.c.l.b16 %v7254
  %v7345 = vunpack.c.l.b16 %v7257
  %v7346 = vunpack.c.l.b16 %v7261
  %v7347 = vunpack.c.l.b16 %v7264
  %v7348 = vunpack.c.l.b16 %v7268
  %v7349 = vunpack.c.l.b16 %v7271
  %v7350 = vunpack.c.l.b16 %v7275
  %v7351 = vunpack.c.l.b16 %v7278
  %v7352 = vunpack.c.l.b16 %v7282
  %v7353 = vunpack.c.l.b16 %v7285
  %v7354 = vpack.c.b16 %v7291, %v7290
  %v7355 = vpack.c.b16 %v7293, %v7292
  %v7356 = vpack.c.b16 %v7295, %v7294
  %v7357 = vpack.c.b16 %v7297, %v7296
  %v7358 = vpack.c.b16 %v7299, %v7298
  %v7359 = vpack.c.b16 %v7301, %v7300
  %v7360 = vpack.c.b16 %v7303, %v7302
  %v7361 = vpack.c.b16 %v7305, %v7304
  %v7362 = vpack.c.b16 %v7307, %v7306
  %v7363 = vpack.c.b16 %v7309, %v7308
  %v7364 = vpack.c.b16 %v7311, %v7310
  %v7365 = vpack.c.b16 %v7313, %v7312
  %v7366 = vpack.c.b16 %v7315, %v7314
  %v7367 = vpack.c.b16 %v7317, %v7316
  %v7368 = vpack.c.b16 %v7319, %v7318
  %v7369 = vpack.c.b16 %v7321, %v7320
  %v7370 = vpack.c.b16 %v7323, %v7322
  %v7371 = vpack.c.b16 %v7325, %v7324
  %v7372 = vpack.c.b16 %v7327, %v7326
  %v7373 = vpack.c.b16 %v7329, %v7328
  %v7374 = vpack.c.b16 %v7331, %v7330
  %v7375 = vpack.c.b16 %v7333, %v7332
  %v7376 = vpack.c.b16 %v7335, %v7334
  %v7377 = vpack.c.b16 %v7337, %v7336
  %v7378 = vpack.c.b16 %v7339, %v7338
  %v7379 = vpack.c.b16 %v7341, %v7340
  %v7380 = vpack.c.b16 %v7343, %v7342
  %v7381 = vpack.c.b16 %v7345, %v7344
  %v7382 = vpack.c.b16 %v7347, %v7346
  %v7383 = vpack.c.b16 %v7349, %v7348
  %v7384 = vpack.c.b16 %v7351, %v7350
  %v7385 = vpack.c.b16 %v7353, %v7352
  %v7390 = vunpack.c.l.b16 %v7286
  %v7391 = vunpack.c.l.b16 %v7287
  %v7392 = vunpack.c.l.b16 %v7288
  %v7393 = vunpack.c.l.b16 %v7289
  %v7394 = vpack.c.b16 %v7391, %v7390
  %v7395 = vpack.c.b16 %v7393, %v7392
  %v7399 = vsel %vm2993, %v7354, 0
  %v7402 = vsel %vm2993, %v7355, 0
  %v7405 = vsel %vm2993, %v7356, 0
  %v7408 = vsel %vm2993, %v7357, 0
  %v7411 = vsel %vm2993, %v7358, 0
  %v7414 = vsel %vm2993, %v7359, 0
  %v7417 = vsel %vm2993, %v7360, 0
  %v7420 = vsel %vm2993, %v7361, 0
  %v7423 = vsel %vm2993, %v7362, 0
  %v7426 = vsel %vm2993, %v7363, 0
  %v7429 = vsel %vm2993, %v7364, 0
  %v7432 = vsel %vm2993, %v7365, 0
  %v7435 = vsel %vm2993, %v7366, 0
  %v7438 = vsel %vm2993, %v7367, 0
  %v7441 = vsel %vm2993, %v7368, 0
  %v7444 = vsel %vm2993, %v7369, 0
  %v7447 = vsel %vm2993, %v7370, 0
  %v7450 = vsel %vm2993, %v7371, 0
  %v7453 = vsel %vm2993, %v7372, 0
  %v7456 = vsel %vm2993, %v7373, 0
  %v7459 = vsel %vm2993, %v7374, 0
  %v7462 = vsel %vm2993, %v7375, 0
  %v7465 = vsel %vm2993, %v7376, 0
  %v7468 = vsel %vm2993, %v7377, 0
  %v7471 = vsel %vm2993, %v7378, 0
  %v7474 = vsel %vm2993, %v7379, 0
  %v7477 = vsel %vm2993, %v7380, 0
  %v7480 = vsel %vm2993, %v7381, 0
  %v7483 = vsel %vm2993, %v7382, 0
  %v7486 = vsel %vm2993, %v7383, 0
  %v7489 = vsel %vm2993, %v7384, 0
  %v7492 = vsel %vm2993, %v7385, 0
  %7494 = vmatprep.subr.bf16.mxu0 0
  %7495 = vmatpush1.bf16.msra.mxu0 %v7394
  %7496 = vmatprep.subr.bf16.mxu0 0
  %7497 = vmatpush1.bf16.msra.mxu0 %v7395
  %7498 = vmatprep.subr.bf16.mxu0 0
  %7499 = vmatpush1.bf16.msra.mxu0 0
  %7500 = vmatprep.subr.bf16.mxu0 0
  %7501 = vmatpush1.bf16.msra.mxu0 0
  %7502 = vmatprep.subr.bf16.mxu0 0
  %7503 = vmatpush1.bf16.msra.mxu0 0
  %7504 = vmatprep.subr.bf16.mxu0 0
  %7505 = vmatpush1.bf16.msra.mxu0 0
  %7506 = vmatprep.subr.bf16.mxu0 0
  %7507 = vmatpush1.bf16.msra.mxu0 0
  %7508 = vmatprep.subr.bf16.mxu0 0
  %7509 = vmatpush1.bf16.msra.mxu0 0
  %7510 = vmatprep.subr.bf16.mxu0 0
  %7511 = vmatpush1.bf16.msra.mxu0 0
  %7512 = vmatprep.subr.bf16.mxu0 0
  %7513 = vmatpush1.bf16.msra.mxu0 0
  %7514 = vmatprep.subr.bf16.mxu0 0
  %7515 = vmatpush1.bf16.msra.mxu0 0
  %7516 = vmatprep.subr.bf16.mxu0 0
  %7517 = vmatpush1.bf16.msra.mxu0 0
  %7518 = vmatprep.subr.bf16.mxu0 0
  %7519 = vmatpush1.bf16.msra.mxu0 0
  %7520 = vmatprep.subr.bf16.mxu0 0
  %7521 = vmatpush1.bf16.msra.mxu0 0
  %7522 = vmatprep.subr.bf16.mxu0 0
  %7523 = vmatpush1.bf16.msra.mxu0 0
  %7524 = vmatprep.subr.bf16.mxu0 0
  %7525 = vmatpush1.bf16.msra.mxu0 0
  %7526 = vmatprep.mubr.bf16.mxu0 0
  %7527 = vmatmul.mubr.bf16.gmra.mrb[0].mxu0 %v7399
  %v7528 = vpop.f32.mrb[0].mxu0
  %v7529 = vadd.f32 0.0, %v7528
  %v7530 = vpop.f32.mrb[0].mxu0
  %v7531 = vpop.f32.mrb[0].mxu0
  %v7532 = vadd.f32 0.0, %v7531
  %v7533 = vpop.f32.mrb[0].mxu0
  %7534 = vmatprep.mubr.bf16.mxu0 0
  %7535 = vmatmul.mubr.bf16.gmra.mrb[0].mxu0 %v7402
  %v7536 = vpop.f32.mrb[0].mxu0
  %v7537 = vadd.f32 0.0, %v7536
  %v7538 = vpop.f32.mrb[0].mxu0
  %v7539 = vpop.f32.mrb[0].mxu0
  %v7540 = vadd.f32 0.0, %v7539
  %v7541 = vpop.f32.mrb[0].mxu0
  %7542 = vmatprep.mubr.bf16.mxu0 0
  %7543 = vmatmul.mubr.bf16.gmra.mrb[0].mxu0 %v7405
  %v7544 = vpop.f32.mrb[0].mxu0
  %v7545 = vadd.f32 0.0, %v7544
  %v7546 = vpop.f32.mrb[0].mxu0
  %v7547 = vpop.f32.mrb[0].mxu0
  %v7548 = vadd.f32 0.0, %v7547
  %v7549 = vpop.f32.mrb[0].mxu0
  %7550 = vmatprep.mubr.bf16.mxu0 0
  %7551 = vmatmul.mubr.bf16.gmra.mrb[0].mxu0 %v7408
  %v7552 = vpop.f32.mrb[0].mxu0
  %v7553 = vadd.f32 0.0, %v7552
  %v7554 = vpop.f32.mrb[0].mxu0
  %v7555 = vpop.f32.mrb[0].mxu0
  %v7556 = vadd.f32 0.0, %v7555
  %v7557 = vpop.f32.mrb[0].mxu0
  %7558 = vmatprep.mubr.bf16.mxu0 0
  %7559 = vmatmul.mubr.bf16.gmra.mrb[0].mxu0 %v7411
  %v7560 = vpop.f32.mrb[0].mxu0
  %v7561 = vadd.f32 0.0, %v7560
  %v7562 = vpop.f32.mrb[0].mxu0
  %v7563 = vpop.f32.mrb[0].mxu0
  %v7564 = vadd.f32 0.0, %v7563
  %v7565 = vpop.f32.mrb[0].mxu0
  %7566 = vmatprep.mubr.bf16.mxu0 0
  %7567 = vmatmul.mubr.bf16.gmra.mrb[0].mxu0 %v7414
  %v7568 = vpop.f32.mrb[0].mxu0
  %v7569 = vadd.f32 0.0, %v7568
  %v7570 = vpop.f32.mrb[0].mxu0
  %v7571 = vpop.f32.mrb[0].mxu0
  %v7572 = vadd.f32 0.0, %v7571
  %v7573 = vpop.f32.mrb[0].mxu0
  %7574 = vmatprep.mubr.bf16.mxu0 0
  %7575 = vmatmul.mubr.bf16.gmra.mrb[0].mxu0 %v7417
  %v7576 = vpop.f32.mrb[0].mxu0
  %v7577 = vadd.f32 0.0, %v7576
  %v7578 = vpop.f32.mrb[0].mxu0
  %v7579 = vpop.f32.mrb[0].mxu0
  %v7580 = vadd.f32 0.0, %v7579
  %v7581 = vpop.f32.mrb[0].mxu0
  %7582 = vmatprep.mubr.bf16.mxu0 0
  %7583 = vmatmul.mubr.bf16.gmra.mrb[0].mxu0 %v7420
  %v7584 = vpop.f32.mrb[0].mxu0
  %v7585 = vadd.f32 0.0, %v7584
  %v7586 = vpop.f32.mrb[0].mxu0
  %v7587 = vpop.f32.mrb[0].mxu0
  %v7588 = vadd.f32 0.0, %v7587
  %v7589 = vpop.f32.mrb[0].mxu0
  %7590 = vmatprep.mubr.bf16.mxu0 0
  %7591 = vmatmul.mubr.bf16.gmra.mrb[0].mxu0 %v7423
  %v7592 = vpop.f32.mrb[0].mxu0
  %v7593 = vadd.f32 0.0, %v7592
  %v7594 = vpop.f32.mrb[0].mxu0
  %v7595 = vpop.f32.mrb[0].mxu0
  %v7596 = vadd.f32 0.0, %v7595
  %v7597 = vpop.f32.mrb[0].mxu0
  %7598 = vmatprep.mubr.bf16.mxu0 0
  %7599 = vmatmul.mubr.bf16.gmra.mrb[0].mxu0 %v7426
  %v7600 = vpop.f32.mrb[0].mxu0
  %v7601 = vadd.f32 0.0, %v7600
  %v7602 = vpop.f32.mrb[0].mxu0
  %v7603 = vpop.f32.mrb[0].mxu0
  %v7604 = vadd.f32 0.0, %v7603
  %v7605 = vpop.f32.mrb[0].mxu0
  %7606 = vmatprep.mubr.bf16.mxu0 0
  %7607 = vmatmul.mubr.bf16.gmra.mrb[0].mxu0 %v7429
  %v7608 = vpop.f32.mrb[0].mxu0
  %v7609 = vadd.f32 0.0, %v7608
  %v7610 = vpop.f32.mrb[0].mxu0
  %v7611 = vpop.f32.mrb[0].mxu0
  %v7612 = vadd.f32 0.0, %v7611
  %v7613 = vpop.f32.mrb[0].mxu0
  %7614 = vmatprep.mubr.bf16.mxu0 0
  %7615 = vmatmul.mubr.bf16.gmra.mrb[0].mxu0 %v7432
  %v7616 = vpop.f32.mrb[0].mxu0
  %v7617 = vadd.f32 0.0, %v7616
  %v7618 = vpop.f32.mrb[0].mxu0
  %v7619 = vpop.f32.mrb[0].mxu0
  %v7620 = vadd.f32 0.0, %v7619
  %v7621 = vpop.f32.mrb[0].mxu0
  %7622 = vmatprep.mubr.bf16.mxu0 0
  %7623 = vmatmul.mubr.bf16.gmra.mrb[0].mxu0 %v7435
  %v7624 = vpop.f32.mrb[0].mxu0
  %v7625 = vadd.f32 0.0, %v7624
  %v7626 = vpop.f32.mrb[0].mxu0
  %v7627 = vpop.f32.mrb[0].mxu0
  %v7628 = vadd.f32 0.0, %v7627
  %v7629 = vpop.f32.mrb[0].mxu0
  %7630 = vmatprep.mubr.bf16.mxu0 0
  %7631 = vmatmul.mubr.bf16.gmra.mrb[0].mxu0 %v7438
  %v7632 = vpop.f32.mrb[0].mxu0
  %v7633 = vadd.f32 0.0, %v7632
  %v7634 = vpop.f32.mrb[0].mxu0
  %v7635 = vpop.f32.mrb[0].mxu0
  %v7636 = vadd.f32 0.0, %v7635
  %v7637 = vpop.f32.mrb[0].mxu0
  %7638 = vmatprep.mubr.bf16.mxu0 0
  %7639 = vmatmul.mubr.bf16.gmra.mrb[0].mxu0 %v7441
  %v7640 = vpop.f32.mrb[0].mxu0
  %v7641 = vadd.f32 0.0, %v7640
  %v7642 = vpop.f32.mrb[0].mxu0
  %v7643 = vpop.f32.mrb[0].mxu0
  %v7644 = vadd.f32 0.0, %v7643
  %v7645 = vpop.f32.mrb[0].mxu0
  %7646 = vmatprep.mubr.bf16.mxu0 0
  %7647 = vmatmul.mubr.bf16.gmra.mrb[0].mxu0 %v7444
  %v7648 = vpop.f32.mrb[0].mxu0
  %v7649 = vadd.f32 0.0, %v7648
  %v7650 = vpop.f32.mrb[0].mxu0
  %v7651 = vpop.f32.mrb[0].mxu0
  %v7652 = vadd.f32 0.0, %v7651
  %v7653 = vpop.f32.mrb[0].mxu0
  %7654 = vmatprep.mubr.bf16.mxu0 0
  %7655 = vmatmul.mubr.bf16.gmra.mrb[0].mxu0 %v7447
  %v7656 = vpop.f32.mrb[0].mxu0
  %v7657 = vadd.f32 0.0, %v7656
  %v7658 = vpop.f32.mrb[0].mxu0
  %v7659 = vpop.f32.mrb[0].mxu0
  %v7660 = vadd.f32 0.0, %v7659
  %v7661 = vpop.f32.mrb[0].mxu0
  %7662 = vmatprep.mubr.bf16.mxu0 0
  %7663 = vmatmul.mubr.bf16.gmra.mrb[0].mxu0 %v7450
  %v7664 = vpop.f32.mrb[0].mxu0
  %v7665 = vadd.f32 0.0, %v7664
  %v7666 = vpop.f32.mrb[0].mxu0
  %v7667 = vpop.f32.mrb[0].mxu0
  %v7668 = vadd.f32 0.0, %v7667
  %v7669 = vpop.f32.mrb[0].mxu0
  %7670 = vmatprep.mubr.bf16.mxu0 0
  %7671 = vmatmul.mubr.bf16.gmra.mrb[0].mxu0 %v7453
  %v7672 = vpop.f32.mrb[0].mxu0
  %v7673 = vadd.f32 0.0, %v7672
  %v7674 = vpop.f32.mrb[0].mxu0
  %v7675 = vpop.f32.mrb[0].mxu0
  %v7676 = vadd.f32 0.0, %v7675
  %v7677 = vpop.f32.mrb[0].mxu0
  %7678 = vmatprep.mubr.bf16.mxu0 0
  %7679 = vmatmul.mubr.bf16.gmra.mrb[0].mxu0 %v7456
  %v7680 = vpop.f32.mrb[0].mxu0
  %v7681 = vadd.f32 0.0, %v7680
  %v7682 = vpop.f32.mrb[0].mxu0
  %v7683 = vpop.f32.mrb[0].mxu0
  %v7684 = vadd.f32 0.0, %v7683
  %v7685 = vpop.f32.mrb[0].mxu0
  %7686 = vmatprep.mubr.bf16.mxu0 0
  %7687 = vmatmul.mubr.bf16.gmra.mrb[0].mxu0 %v7459
  %v7688 = vpop.f32.mrb[0].mxu0
  %v7689 = vadd.f32 0.0, %v7688
  %v7690 = vpop.f32.mrb[0].mxu0
  %v7691 = vpop.f32.mrb[0].mxu0
  %v7692 = vadd.f32 0.0, %v7691
  %v7693 = vpop.f32.mrb[0].mxu0
  %7694 = vmatprep.mubr.bf16.mxu0 0
  %7695 = vmatmul.mubr.bf16.gmra.mrb[0].mxu0 %v7462
  %v7696 = vpop.f32.mrb[0].mxu0
  %v7697 = vadd.f32 0.0, %v7696
  %v7698 = vpop.f32.mrb[0].mxu0
  %v7699 = vpop.f32.mrb[0].mxu0
  %v7700 = vadd.f32 0.0, %v7699
  %v7701 = vpop.f32.mrb[0].mxu0
  %7702 = vmatprep.mubr.bf16.mxu0 0
  %7703 = vmatmul.mubr.bf16.gmra.mrb[0].mxu0 %v7465
  %v7704 = vpop.f32.mrb[0].mxu0
  %v7705 = vadd.f32 0.0, %v7704
  %v7706 = vpop.f32.mrb[0].mxu0
  %v7707 = vpop.f32.mrb[0].mxu0
  %v7708 = vadd.f32 0.0, %v7707
  %v7709 = vpop.f32.mrb[0].mxu0
  %7710 = vmatprep.mubr.bf16.mxu0 0
  %7711 = vmatmul.mubr.bf16.gmra.mrb[0].mxu0 %v7468
  %v7712 = vpop.f32.mrb[0].mxu0
  %v7713 = vadd.f32 0.0, %v7712
  %v7714 = vpop.f32.mrb[0].mxu0
  %v7715 = vpop.f32.mrb[0].mxu0
  %v7716 = vadd.f32 0.0, %v7715
  %v7717 = vpop.f32.mrb[0].mxu0
  %7718 = vmatprep.mubr.bf16.mxu0 0
  %7719 = vmatmul.mubr.bf16.gmra.mrb[0].mxu0 %v7471
  %v7720 = vpop.f32.mrb[0].mxu0
  %v7721 = vadd.f32 0.0, %v7720
  %v7722 = vpop.f32.mrb[0].mxu0
  %v7723 = vpop.f32.mrb[0].mxu0
  %v7724 = vadd.f32 0.0, %v7723
  %v7725 = vpop.f32.mrb[0].mxu0
  %7726 = vmatprep.mubr.bf16.mxu0 0
  %7727 = vmatmul.mubr.bf16.gmra.mrb[0].mxu0 %v7474
  %v7728 = vpop.f32.mrb[0].mxu0
  %v7729 = vadd.f32 0.0, %v7728
  %v7730 = vpop.f32.mrb[0].mxu0
  %v7731 = vpop.f32.mrb[0].mxu0
  %v7732 = vadd.f32 0.0, %v7731
  %v7733 = vpop.f32.mrb[0].mxu0
  %7734 = vmatprep.mubr.bf16.mxu0 0
  %7735 = vmatmul.mubr.bf16.gmra.mrb[0].mxu0 %v7477
  %v7736 = vpop.f32.mrb[0].mxu0
  %v7737 = vadd.f32 0.0, %v7736
  %v7738 = vpop.f32.mrb[0].mxu0
  %v7739 = vpop.f32.mrb[0].mxu0
  %v7740 = vadd.f32 0.0, %v7739
  %v7741 = vpop.f32.mrb[0].mxu0
  %7742 = vmatprep.mubr.bf16.mxu0 0
  %7743 = vmatmul.mubr.bf16.gmra.mrb[0].mxu0 %v7480
  %v7744 = vpop.f32.mrb[0].mxu0
  %v7745 = vadd.f32 0.0, %v7744
  %v7746 = vpop.f32.mrb[0].mxu0
  %v7747 = vpop.f32.mrb[0].mxu0
  %v7748 = vadd.f32 0.0, %v7747
  %v7749 = vpop.f32.mrb[0].mxu0
  %7750 = vmatprep.mubr.bf16.mxu0 0
  %7751 = vmatmul.mubr.bf16.gmra.mrb[0].mxu0 %v7483
  %v7752 = vpop.f32.mrb[0].mxu0
  %v7753 = vadd.f32 0.0, %v7752
  %v7754 = vpop.f32.mrb[0].mxu0
  %v7755 = vpop.f32.mrb[0].mxu0
  %v7756 = vadd.f32 0.0, %v7755
  %v7757 = vpop.f32.mrb[0].mxu0
  %7758 = vmatprep.mubr.bf16.mxu0 0
  %7759 = vmatmul.mubr.bf16.gmra.mrb[0].mxu0 %v7486
  %v7760 = vpop.f32.mrb[0].mxu0
  %v7761 = vadd.f32 0.0, %v7760
  %v7762 = vpop.f32.mrb[0].mxu0
  %v7763 = vpop.f32.mrb[0].mxu0
  %v7764 = vadd.f32 0.0, %v7763
  %v7765 = vpop.f32.mrb[0].mxu0
  %7766 = vmatprep.mubr.bf16.mxu0 0
  %7767 = vmatmul.mubr.bf16.gmra.mrb[0].mxu0 %v7489
  %v7768 = vpop.f32.mrb[0].mxu0
  %v7769 = vadd.f32 0.0, %v7768
  %v7770 = vpop.f32.mrb[0].mxu0
  %v7771 = vpop.f32.mrb[0].mxu0
  %v7772 = vadd.f32 0.0, %v7771
  %v7773 = vpop.f32.mrb[0].mxu0
  %7774 = vmatprep.mubr.bf16.mxu0 0
  %7775 = vmatmul.mubr.bf16.gmra.mrb[0].mxu0 %v7492
  %v7776 = vpop.f32.mrb[0].mxu0
  %v7777 = vadd.f32 0.0, %v7776
  %v7778 = vpop.f32.mrb[0].mxu0
  %v7779 = vpop.f32.mrb[0].mxu0
  %v7780 = vadd.f32 0.0, %v7779
  %v7781 = vpop.f32.mrb[0].mxu0
  %7782 = vdwg.mxu0
  %v7783 = vadd.f32 %v6870, %v7529
  %v7784 = vadd.f32 %v6871, %v7532
  %v7785 = vadd.f32 %v6872, %v7537
  %v7786 = vadd.f32 %v6873, %v7540
  %v7787 = vadd.f32 %v6874, %v7545
  %v7788 = vadd.f32 %v6875, %v7548
  %v7789 = vadd.f32 %v6876, %v7553
  %v7790 = vadd.f32 %v6877, %v7556
  %v7791 = vadd.f32 %v6878, %v7561
  %v7792 = vadd.f32 %v6879, %v7564
  %v7793 = vadd.f32 %v6880, %v7569
  %v7794 = vadd.f32 %v6881, %v7572
  %v7795 = vadd.f32 %v6882, %v7577
  %v7796 = vadd.f32 %v6883, %v7580
  %v7797 = vadd.f32 %v6884, %v7585
  %v7798 = vadd.f32 %v6885, %v7588
  %v7799 = vadd.f32 %v6886, %v7593
  %v7800 = vadd.f32 %v6887, %v7596
  %v7801 = vadd.f32 %v6888, %v7601
  %v7802 = vadd.f32 %v6889, %v7604
  %v7803 = vadd.f32 %v6890, %v7609
  %v7804 = vadd.f32 %v6891, %v7612
  %v7805 = vadd.f32 %v6892, %v7617
  %v7806 = vadd.f32 %v6893, %v7620
  %v7807 = vadd.f32 %v6894, %v7625
  %v7808 = vadd.f32 %v6895, %v7628
  %v7809 = vadd.f32 %v6896, %v7633
  %v7810 = vadd.f32 %v6897, %v7636
  %v7811 = vadd.f32 %v6898, %v7641
  %v7812 = vadd.f32 %v6899, %v7644
  %v7813 = vadd.f32 %v6900, %v7649
  %v7814 = vadd.f32 %v6901, %v7652
  %v7815 = vadd.f32 %v6902, %v7657
  %v7816 = vadd.f32 %v6903, %v7660
  %v7817 = vadd.f32 %v6904, %v7665
  %v7818 = vadd.f32 %v6905, %v7668
  %v7819 = vadd.f32 %v6906, %v7673
  %v7820 = vadd.f32 %v6907, %v7676
  %v7821 = vadd.f32 %v6908, %v7681
  %v7822 = vadd.f32 %v6909, %v7684
  %v7823 = vadd.f32 %v6910, %v7689
  %v7824 = vadd.f32 %v6911, %v7692
  %v7825 = vadd.f32 %v6912, %v7697
  %v7826 = vadd.f32 %v6913, %v7700
  %v7827 = vadd.f32 %v6914, %v7705
  %v7828 = vadd.f32 %v6915, %v7708
  %v7829 = vadd.f32 %v6916, %v7713
  %v7830 = vadd.f32 %v6917, %v7716
  %v7831 = vadd.f32 %v6918, %v7721
  %v7832 = vadd.f32 %v6919, %v7724
  %v7833 = vadd.f32 %v6920, %v7729
  %v7834 = vadd.f32 %v6921, %v7732
  %v7835 = vadd.f32 %v6922, %v7737
  %v7836 = vadd.f32 %v6923, %v7740
  %v7837 = vadd.f32 %v6924, %v7745
  %v7838 = vadd.f32 %v6925, %v7748
  %v7839 = vadd.f32 %v6926, %v7753
  %v7840 = vadd.f32 %v6927, %v7756
  %v7841 = vadd.f32 %v6928, %v7761
  %v7842 = vadd.f32 %v6929, %v7764
  %v7843 = vadd.f32 %v6930, %v7769
  %v7844 = vadd.f32 %v6931, %v7772
  %v7845 = vadd.f32 %v6932, %v7777
  %v7846 = vadd.f32 %v6933, %v7780
  %s7847 = scalar_lea.vmem [#allocation2], 24
  %v7848 = vld [vmem:[%s7847] sm:$0xf]
  %v7849 = vld [vmem:[%s7847 + $0x4] sm:$0xf]
  %v7850 = vld [vmem:[%s7847 + $0xc] sm:$0xf]
  %v7851 = vld [vmem:[%s7847 + $0x10] sm:$0xf]
  %v7852 = vld [vmem:[%s7847 + $0x18] sm:$0xf]
  %v7853 = vld [vmem:[%s7847 + $0x1c] sm:$0xf]
  %v7854 = vld [vmem:[%s7847 + $0x24] sm:$0xf]
  %v7855 = vld [vmem:[%s7847 + $0x28] sm:$0xf]
  %v7856 = vld [vmem:[%s7847 + $0x30] sm:$0xf]
  %v7857 = vld [vmem:[%s7847 + $0x34] sm:$0xf]
  %v7858 = vld [vmem:[%s7847 + $0x3c] sm:$0xf]
  %v7859 = vld [vmem:[%s7847 + $0x40] sm:$0xf]
  %v7860 = vld [vmem:[%s7847 + $0x48] sm:$0xf]
  %v7861 = vld [vmem:[%s7847 + $0x4c] sm:$0xf]
  %v7862 = vld [vmem:[%s7847 + $0x54] sm:$0xf]
  %v7863 = vld [vmem:[%s7847 + $0x58] sm:$0xf]
  %v7864 = vld [vmem:[%s7847 + $0x60] sm:$0xf]
  %v7865 = vld [vmem:[%s7847 + $0x64] sm:$0xf]
  %v7866 = vld [vmem:[%s7847 + $0x6c] sm:$0xf]
  %v7867 = vld [vmem:[%s7847 + $0x70] sm:$0xf]
  %v7868 = vld [vmem:[%s7847 + $0x78] sm:$0xf]
  %v7869 = vld [vmem:[%s7847 + $0x7c] sm:$0xf]
  %v7870 = vld [vmem:[%s7847 + $0x84] sm:$0xf]
  %v7871 = vld [vmem:[%s7847 + $0x88] sm:$0xf]
  %v7872 = vld [vmem:[%s7847 + $0x90] sm:$0xf]
  %v7873 = vld [vmem:[%s7847 + $0x94] sm:$0xf]
  %v7874 = vld [vmem:[%s7847 + $0x9c] sm:$0xf]
  %v7875 = vld [vmem:[%s7847 + $0xa0] sm:$0xf]
  %v7876 = vld [vmem:[%s7847 + $0xa8] sm:$0xf]
  %v7877 = vld [vmem:[%s7847 + $0xac] sm:$0xf]
  %v7878 = vld [vmem:[%s7847 + $0xb4] sm:$0xf]
  %v7879 = vld [vmem:[%s7847 + $0xb8] sm:$0xf]
  %v7880 = vld [vmem:[%s7847 + $0xd8] sm:$0xf]
  %v7881 = vld [vmem:[%s7847 + $0xdc] sm:$0xf]
  %v7882 = vld [vmem:[%s7847 + $0xe4] sm:$0xf]
  %v7883 = vld [vmem:[%s7847 + $0xe8] sm:$0xf]
  %v7884 = vld [vmem:[%s7847 + $0xf0] sm:$0xf]
  %v7885 = vld [vmem:[%s7847 + $0xf4] sm:$0xf]
  %v7886 = vld [vmem:[%s7847 + $0xfc] sm:$0xf]
  %v7887 = vld [vmem:[%s7847 + $0x100] sm:$0xf]
  %v7888 = vld [vmem:[%s7847 + $0x108] sm:$0xf]
  %v7889 = vld [vmem:[%s7847 + $0x10c] sm:$0xf]
  %v7890 = vld [vmem:[%s7847 + $0x114] sm:$0xf]
  %v7891 = vld [vmem:[%s7847 + $0x118] sm:$0xf]
  %v7892 = vld [vmem:[%s7847 + $0x120] sm:$0xf]
  %v7893 = vld [vmem:[%s7847 + $0x124] sm:$0xf]
  %v7894 = vld [vmem:[%s7847 + $0x12c] sm:$0xf]
  %v7895 = vld [vmem:[%s7847 + $0x130] sm:$0xf]
  %v7896 = vld [vmem:[%s7847 + $0x138] sm:$0xf]
  %v7897 = vld [vmem:[%s7847 + $0x13c] sm:$0xf]
  %v7898 = vld [vmem:[%s7847 + $0x144] sm:$0xf]
  %v7899 = vld [vmem:[%s7847 + $0x148] sm:$0xf]
  %v7900 = vld [vmem:[%s7847 + $0x150] sm:$0xf]
  %v7901 = vld [vmem:[%s7847 + $0x154] sm:$0xf]
  %v7902 = vld [vmem:[%s7847 + $0x15c] sm:$0xf]
  %v7903 = vld [vmem:[%s7847 + $0x160] sm:$0xf]
  %v7904 = vld [vmem:[%s7847 + $0x168] sm:$0xf]
  %v7905 = vld [vmem:[%s7847 + $0x16c] sm:$0xf]
  %v7906 = vld [vmem:[%s7847 + $0x174] sm:$0xf]
  %v7907 = vld [vmem:[%s7847 + $0x178] sm:$0xf]
  %v7908 = vld [vmem:[%s7847 + $0x180] sm:$0xf]
  %v7909 = vld [vmem:[%s7847 + $0x184] sm:$0xf]
  %v7910 = vld [vmem:[%s7847 + $0x18c] sm:$0xf]
  %v7911 = vld [vmem:[%s7847 + $0x190] sm:$0xf]
  %v7912 = vld [vmem:[%s2 + $0x60] sm:$0xf]
  %v7913 = vld [vmem:[%s2 + $0x64] sm:$0xf]
  %v7914 = vld [vmem:[%s2 + $0x68] sm:$0xf]
  %v7915 = vld [vmem:[%s2 + $0x6c] sm:$0xf]
  %v7980 = vunpack.c.l.b16 %v7848
  %v7981 = vunpack.c.l.b16 %v7849
  %v7982 = vunpack.c.l.b16 %v7850
  %v7983 = vunpack.c.l.b16 %v7851
  %v7984 = vunpack.c.l.b16 %v7852
  %v7985 = vunpack.c.l.b16 %v7853
  %v7986 = vunpack.c.l.b16 %v7854
  %v7987 = vunpack.c.l.b16 %v7855
  %v7988 = vunpack.c.l.b16 %v7856
  %v7989 = vunpack.c.l.b16 %v7857
  %v7990 = vunpack.c.l.b16 %v7858
  %v7991 = vunpack.c.l.b16 %v7859
  %v7992 = vunpack.c.l.b16 %v7860
  %v7993 = vunpack.c.l.b16 %v7861
  %v7994 = vunpack.c.l.b16 %v7862
  %v7995 = vunpack.c.l.b16 %v7863
  %v7996 = vunpack.c.l.b16 %v7864
  %v7997 = vunpack.c.l.b16 %v7865
  %v7998 = vunpack.c.l.b16 %v7866
  %v7999 = vunpack.c.l.b16 %v7867
  %v8000 = vunpack.c.l.b16 %v7868
  %v8001 = vunpack.c.l.b16 %v7869
  %v8002 = vunpack.c.l.b16 %v7870
  %v8003 = vunpack.c.l.b16 %v7871
  %v8004 = vunpack.c.l.b16 %v7872
  %v8005 = vunpack.c.l.b16 %v7873
  %v8006 = vunpack.c.l.b16 %v7874
  %v8007 = vunpack.c.l.b16 %v7875
  %v8008 = vunpack.c.l.b16 %v7876
  %v8009 = vunpack.c.l.b16 %v7877
  %v8010 = vunpack.c.l.b16 %v7878
  %v8011 = vunpack.c.l.b16 %v7879
  %v8012 = vunpack.c.l.b16 %v7880
  %v8013 = vunpack.c.l.b16 %v7881
  %v8014 = vunpack.c.l.b16 %v7882
  %v8015 = vunpack.c.l.b16 %v7883
  %v8016 = vunpack.c.l.b16 %v7884
  %v8017 = vunpack.c.l.b16 %v7885
  %v8018 = vunpack.c.l.b16 %v7886
  %v8019 = vunpack.c.l.b16 %v7887
  %v8020 = vunpack.c.l.b16 %v7888
  %v8021 = vunpack.c.l.b16 %v7889
  %v8022 = vunpack.c.l.b16 %v7890
  %v8023 = vunpack.c.l.b16 %v7891
  %v8024 = vunpack.c.l.b16 %v7892
  %v8025 = vunpack.c.l.b16 %v7893
  %v8026 = vunpack.c.l.b16 %v7894
  %v8027 = vunpack.c.l.b16 %v7895
  %v8028 = vunpack.c.l.b16 %v7896
  %v8029 = vunpack.c.l.b16 %v7897
  %v8030 = vunpack.c.l.b16 %v7898
  %v8031 = vunpack.c.l.b16 %v7899
  %v8032 = vunpack.c.l.b16 %v7900
  %v8033 = vunpack.c.l.b16 %v7901
  %v8034 = vunpack.c.l.b16 %v7902
  %v8035 = vunpack.c.l.b16 %v7903
  %v8036 = vunpack.c.l.b16 %v7904
  %v8037 = vunpack.c.l.b16 %v7905
  %v8038 = vunpack.c.l.b16 %v7906
  %v8039 = vunpack.c.l.b16 %v7907
  %v8040 = vunpack.c.l.b16 %v7908
  %v8041 = vunpack.c.l.b16 %v7909
  %v8042 = vunpack.c.l.b16 %v7910
  %v8043 = vunpack.c.l.b16 %v7911
  %v8044 = vpack.c.b16 %v7981, %v7980
  %v8045 = vpack.c.b16 %v7983, %v7982
  %v8046 = vpack.c.b16 %v7985, %v7984
  %v8047 = vpack.c.b16 %v7987, %v7986
  %v8048 = vpack.c.b16 %v7989, %v7988
  %v8049 = vpack.c.b16 %v7991, %v7990
  %v8050 = vpack.c.b16 %v7993, %v7992
  %v8051 = vpack.c.b16 %v7995, %v7994
  %v8052 = vpack.c.b16 %v7997, %v7996
  %v8053 = vpack.c.b16 %v7999, %v7998
  %v8054 = vpack.c.b16 %v8001, %v8000
  %v8055 = vpack.c.b16 %v8003, %v8002
  %v8056 = vpack.c.b16 %v8005, %v8004
  %v8057 = vpack.c.b16 %v8007, %v8006
  %v8058 = vpack.c.b16 %v8009, %v8008
  %v8059 = vpack.c.b16 %v8011, %v8010
  %v8060 = vpack.c.b16 %v8013, %v8012
  %v8061 = vpack.c.b16 %v8015, %v8014
  %v8062 = vpack.c.b16 %v8017, %v8016
  %v8063 = vpack.c.b16 %v8019, %v8018
  %v8064 = vpack.c.b16 %v8021, %v8020
  %v8065 = vpack.c.b16 %v8023, %v8022
  %v8066 = vpack.c.b16 %v8025, %v8024
  %v8067 = vpack.c.b16 %v8027, %v8026
  %v8068 = vpack.c.b16 %v8029, %v8028
  %v8069 = vpack.c.b16 %v8031, %v8030
  %v8070 = vpack.c.b16 %v8033, %v8032
  %v8071 = vpack.c.b16 %v8035, %v8034
  %v8072 = vpack.c.b16 %v8037, %v8036
  %v8073 = vpack.c.b16 %v8039, %v8038
  %v8074 = vpack.c.b16 %v8041, %v8040
  %v8075 = vpack.c.b16 %v8043, %v8042
  %v8080 = vunpack.c.l.b16 %v7912
  %v8081 = vunpack.c.l.b16 %v7913
  %v8082 = vunpack.c.l.b16 %v7914
  %v8083 = vunpack.c.l.b16 %v7915
  %v8084 = vpack.c.b16 %v8081, %v8080
  %v8085 = vpack.c.b16 %v8083, %v8082
  %v8089 = vsel %vm2993, %v8044, 0
  %v8092 = vsel %vm2993, %v8045, 0
  %v8095 = vsel %vm2993, %v8046, 0
  %v8098 = vsel %vm2993, %v8047, 0
  %v8101 = vsel %vm2993, %v8048, 0
  %v8104 = vsel %vm2993, %v8049, 0
  %v8107 = vsel %vm2993, %v8050, 0
  %v8110 = vsel %vm2993, %v8051, 0
  %v8113 = vsel %vm2993, %v8052, 0
  %v8116 = vsel %vm2993, %v8053, 0
  %v8119 = vsel %vm2993, %v8054, 0
  %v8122 = vsel %vm2993, %v8055, 0
  %v8125 = vsel %vm2993, %v8056, 0
  %v8128 = vsel %vm2993, %v8057, 0
  %v8131 = vsel %vm2993, %v8058, 0
  %v8134 = vsel %vm2993, %v8059, 0
  %v8137 = vsel %vm2993, %v8060, 0
  %v8140 = vsel %vm2993, %v8061, 0
  %v8143 = vsel %vm2993, %v8062, 0
  %v8146 = vsel %vm2993, %v8063, 0
  %v8149 = vsel %vm2993, %v8064, 0
  %v8152 = vsel %vm2993, %v8065, 0
  %v8155 = vsel %vm2993, %v8066, 0
  %v8158 = vsel %vm2993, %v8067, 0
  %v8161 = vsel %vm2993, %v8068, 0
  %v8164 = vsel %vm2993, %v8069, 0
  %v8167 = vsel %vm2993, %v8070, 0
  %v8170 = vsel %vm2993, %v8071, 0
  %v8173 = vsel %vm2993, %v8072, 0
  %v8176 = vsel %vm2993, %v8073, 0
  %v8179 = vsel %vm2993, %v8074, 0
  %v8182 = vsel %vm2993, %v8075, 0
  %8184 = vmatprep.subr.bf16.mxu0 0
  %8185 = vmatpush1.bf16.msra.mxu0 %v8084
  %8186 = vmatprep.subr.bf16.mxu0 0
  %8187 = vmatpush1.bf16.msra.mxu0 %v8085
  %8188 = vmatprep.subr.bf16.mxu0 0
  %8189 = vmatpush1.bf16.msra.mxu0 0
  %8190 = vmatprep.subr.bf16.mxu0 0
  %8191 = vmatpush1.bf16.msra.mxu0 0
  %8192 = vmatprep.subr.bf16.mxu0 0
  %8193 = vmatpush1.bf16.msra.mxu0 0
  %8194 = vmatprep.subr.bf16.mxu0 0
  %8195 = vmatpush1.bf16.msra.mxu0 0
  %8196 = vmatprep.subr.bf16.mxu0 0
  %8197 = vmatpush1.bf16.msra.mxu0 0
  %8198 = vmatprep.subr.bf16.mxu0 0
  %8199 = vmatpush1.bf16.msra.mxu0 0
  %8200 = vmatprep.subr.bf16.mxu0 0
  %8201 = vmatpush1.bf16.msra.mxu0 0
  %8202 = vmatprep.subr.bf16.mxu0 0
  %8203 = vmatpush1.bf16.msra.mxu0 0
  %8204 = vmatprep.subr.bf16.mxu0 0
  %8205 = vmatpush1.bf16.msra.mxu0 0
  %8206 = vmatprep.subr.bf16.mxu0 0
  %8207 = vmatpush1.bf16.msra.mxu0 0
  %8208 = vmatprep.subr.bf16.mxu0 0
  %8209 = vmatpush1.bf16.msra.mxu0 0
  %8210 = vmatprep.subr.bf16.mxu0 0
  %8211 = vmatpush1.bf16.msra.mxu0 0
  %8212 = vmatprep.subr.bf16.mxu0 0
  %8213 = vmatpush1.bf16.msra.mxu0 0
  %8214 = vmatprep.subr.bf16.mxu0 0
  %8215 = vmatpush1.bf16.msra.mxu0 0
  %8216 = vmatprep.mubr.bf16.mxu0 0
  %8217 = vmatmul.mubr.bf16.gmra.mrb[0].mxu0 %v8089
  %v8218 = vpop.f32.mrb[0].mxu0
  %v8219 = vadd.f32 0.0, %v8218
  %v8220 = vpop.f32.mrb[0].mxu0
  %v8221 = vpop.f32.mrb[0].mxu0
  %v8222 = vadd.f32 0.0, %v8221
  %v8223 = vpop.f32.mrb[0].mxu0
  %8224 = vmatprep.mubr.bf16.mxu0 0
  %8225 = vmatmul.mubr.bf16.gmra.mrb[0].mxu0 %v8092
  %v8226 = vpop.f32.mrb[0].mxu0
  %v8227 = vadd.f32 0.0, %v8226
  %v8228 = vpop.f32.mrb[0].mxu0
  %v8229 = vpop.f32.mrb[0].mxu0
  %v8230 = vadd.f32 0.0, %v8229
  %v8231 = vpop.f32.mrb[0].mxu0
  %8232 = vmatprep.mubr.bf16.mxu0 0
  %8233 = vmatmul.mubr.bf16.gmra.mrb[0].mxu0 %v8095
  %v8234 = vpop.f32.mrb[0].mxu0
  %v8235 = vadd.f32 0.0, %v8234
  %v8236 = vpop.f32.mrb[0].mxu0
  %v8237 = vpop.f32.mrb[0].mxu0
  %v8238 = vadd.f32 0.0, %v8237
  %v8239 = vpop.f32.mrb[0].mxu0
  %8240 = vmatprep.mubr.bf16.mxu0 0
  %8241 = vmatmul.mubr.bf16.gmra.mrb[0].mxu0 %v8098
  %v8242 = vpop.f32.mrb[0].mxu0
  %v8243 = vadd.f32 0.0, %v8242
  %v8244 = vpop.f32.mrb[0].mxu0
  %v8245 = vpop.f32.mrb[0].mxu0
  %v8246 = vadd.f32 0.0, %v8245
  %v8247 = vpop.f32.mrb[0].mxu0
  %8248 = vmatprep.mubr.bf16.mxu0 0
  %8249 = vmatmul.mubr.bf16.gmra.mrb[0].mxu0 %v8101
  %v8250 = vpop.f32.mrb[0].mxu0
  %v8251 = vadd.f32 0.0, %v8250
  %v8252 = vpop.f32.mrb[0].mxu0
  %v8253 = vpop.f32.mrb[0].mxu0
  %v8254 = vadd.f32 0.0, %v8253
  %v8255 = vpop.f32.mrb[0].mxu0
  %8256 = vmatprep.mubr.bf16.mxu0 0
  %8257 = vmatmul.mubr.bf16.gmra.mrb[0].mxu0 %v8104
  %v8258 = vpop.f32.mrb[0].mxu0
  %v8259 = vadd.f32 0.0, %v8258
  %v8260 = vpop.f32.mrb[0].mxu0
  %v8261 = vpop.f32.mrb[0].mxu0
  %v8262 = vadd.f32 0.0, %v8261
  %v8263 = vpop.f32.mrb[0].mxu0
  %8264 = vmatprep.mubr.bf16.mxu0 0
  %8265 = vmatmul.mubr.bf16.gmra.mrb[0].mxu0 %v8107
  %v8266 = vpop.f32.mrb[0].mxu0
  %v8267 = vadd.f32 0.0, %v8266
  %v8268 = vpop.f32.mrb[0].mxu0
  %v8269 = vpop.f32.mrb[0].mxu0
  %v8270 = vadd.f32 0.0, %v8269
  %v8271 = vpop.f32.mrb[0].mxu0
  %8272 = vmatprep.mubr.bf16.mxu0 0
  %8273 = vmatmul.mubr.bf16.gmra.mrb[0].mxu0 %v8110
  %v8274 = vpop.f32.mrb[0].mxu0
  %v8275 = vadd.f32 0.0, %v8274
  %v8276 = vpop.f32.mrb[0].mxu0
  %v8277 = vpop.f32.mrb[0].mxu0
  %v8278 = vadd.f32 0.0, %v8277
  %v8279 = vpop.f32.mrb[0].mxu0
  %8280 = vmatprep.mubr.bf16.mxu0 0
  %8281 = vmatmul.mubr.bf16.gmra.mrb[0].mxu0 %v8113
  %v8282 = vpop.f32.mrb[0].mxu0
  %v8283 = vadd.f32 0.0, %v8282
  %v8284 = vpop.f32.mrb[0].mxu0
  %v8285 = vpop.f32.mrb[0].mxu0
  %v8286 = vadd.f32 0.0, %v8285
  %v8287 = vpop.f32.mrb[0].mxu0
  %8288 = vmatprep.mubr.bf16.mxu0 0
  %8289 = vmatmul.mubr.bf16.gmra.mrb[0].mxu0 %v8116
  %v8290 = vpop.f32.mrb[0].mxu0
  %v8291 = vadd.f32 0.0, %v8290
  %v8292 = vpop.f32.mrb[0].mxu0
  %v8293 = vpop.f32.mrb[0].mxu0
  %v8294 = vadd.f32 0.0, %v8293
  %v8295 = vpop.f32.mrb[0].mxu0
  %8296 = vmatprep.mubr.bf16.mxu0 0
  %8297 = vmatmul.mubr.bf16.gmra.mrb[0].mxu0 %v8119
  %v8298 = vpop.f32.mrb[0].mxu0
  %v8299 = vadd.f32 0.0, %v8298
  %v8300 = vpop.f32.mrb[0].mxu0
  %v8301 = vpop.f32.mrb[0].mxu0
  %v8302 = vadd.f32 0.0, %v8301
  %v8303 = vpop.f32.mrb[0].mxu0
  %8304 = vmatprep.mubr.bf16.mxu0 0
  %8305 = vmatmul.mubr.bf16.gmra.mrb[0].mxu0 %v8122
  %v8306 = vpop.f32.mrb[0].mxu0
  %v8307 = vadd.f32 0.0, %v8306
  %v8308 = vpop.f32.mrb[0].mxu0
  %v8309 = vpop.f32.mrb[0].mxu0
  %v8310 = vadd.f32 0.0, %v8309
  %v8311 = vpop.f32.mrb[0].mxu0
  %8312 = vmatprep.mubr.bf16.mxu0 0
  %8313 = vmatmul.mubr.bf16.gmra.mrb[0].mxu0 %v8125
  %v8314 = vpop.f32.mrb[0].mxu0
  %v8315 = vadd.f32 0.0, %v8314
  %v8316 = vpop.f32.mrb[0].mxu0
  %v8317 = vpop.f32.mrb[0].mxu0
  %v8318 = vadd.f32 0.0, %v8317
  %v8319 = vpop.f32.mrb[0].mxu0
  %8320 = vmatprep.mubr.bf16.mxu0 0
  %8321 = vmatmul.mubr.bf16.gmra.mrb[0].mxu0 %v8128
  %v8322 = vpop.f32.mrb[0].mxu0
  %v8323 = vadd.f32 0.0, %v8322
  %v8324 = vpop.f32.mrb[0].mxu0
  %v8325 = vpop.f32.mrb[0].mxu0
  %v8326 = vadd.f32 0.0, %v8325
  %v8327 = vpop.f32.mrb[0].mxu0
  %8328 = vmatprep.mubr.bf16.mxu0 0
  %8329 = vmatmul.mubr.bf16.gmra.mrb[0].mxu0 %v8131
  %v8330 = vpop.f32.mrb[0].mxu0
  %v8331 = vadd.f32 0.0, %v8330
  %v8332 = vpop.f32.mrb[0].mxu0
  %v8333 = vpop.f32.mrb[0].mxu0
  %v8334 = vadd.f32 0.0, %v8333
  %v8335 = vpop.f32.mrb[0].mxu0
  %8336 = vmatprep.mubr.bf16.mxu0 0
  %8337 = vmatmul.mubr.bf16.gmra.mrb[0].mxu0 %v8134
  %v8338 = vpop.f32.mrb[0].mxu0
  %v8339 = vadd.f32 0.0, %v8338
  %v8340 = vpop.f32.mrb[0].mxu0
  %v8341 = vpop.f32.mrb[0].mxu0
  %v8342 = vadd.f32 0.0, %v8341
  %v8343 = vpop.f32.mrb[0].mxu0
  %8344 = vmatprep.mubr.bf16.mxu0 0
  %8345 = vmatmul.mubr.bf16.gmra.mrb[0].mxu0 %v8137
  %v8346 = vpop.f32.mrb[0].mxu0
  %v8347 = vadd.f32 0.0, %v8346
  %v8348 = vpop.f32.mrb[0].mxu0
  %v8349 = vpop.f32.mrb[0].mxu0
  %v8350 = vadd.f32 0.0, %v8349
  %v8351 = vpop.f32.mrb[0].mxu0
  %8352 = vmatprep.mubr.bf16.mxu0 0
  %8353 = vmatmul.mubr.bf16.gmra.mrb[0].mxu0 %v8140
  %v8354 = vpop.f32.mrb[0].mxu0
  %v8355 = vadd.f32 0.0, %v8354
  %v8356 = vpop.f32.mrb[0].mxu0
  %v8357 = vpop.f32.mrb[0].mxu0
  %v8358 = vadd.f32 0.0, %v8357
  %v8359 = vpop.f32.mrb[0].mxu0
  %8360 = vmatprep.mubr.bf16.mxu0 0
  %8361 = vmatmul.mubr.bf16.gmra.mrb[0].mxu0 %v8143
  %v8362 = vpop.f32.mrb[0].mxu0
  %v8363 = vadd.f32 0.0, %v8362
  %v8364 = vpop.f32.mrb[0].mxu0
  %v8365 = vpop.f32.mrb[0].mxu0
  %v8366 = vadd.f32 0.0, %v8365
  %v8367 = vpop.f32.mrb[0].mxu0
  %8368 = vmatprep.mubr.bf16.mxu0 0
  %8369 = vmatmul.mubr.bf16.gmra.mrb[0].mxu0 %v8146
  %v8370 = vpop.f32.mrb[0].mxu0
  %v8371 = vadd.f32 0.0, %v8370
  %v8372 = vpop.f32.mrb[0].mxu0
  %v8373 = vpop.f32.mrb[0].mxu0
  %v8374 = vadd.f32 0.0, %v8373
  %v8375 = vpop.f32.mrb[0].mxu0
  %8376 = vmatprep.mubr.bf16.mxu0 0
  %8377 = vmatmul.mubr.bf16.gmra.mrb[0].mxu0 %v8149
  %v8378 = vpop.f32.mrb[0].mxu0
  %v8379 = vadd.f32 0.0, %v8378
  %v8380 = vpop.f32.mrb[0].mxu0
  %v8381 = vpop.f32.mrb[0].mxu0
  %v8382 = vadd.f32 0.0, %v8381
  %v8383 = vpop.f32.mrb[0].mxu0
  %8384 = vmatprep.mubr.bf16.mxu0 0
  %8385 = vmatmul.mubr.bf16.gmra.mrb[0].mxu0 %v8152
  %v8386 = vpop.f32.mrb[0].mxu0
  %v8387 = vadd.f32 0.0, %v8386
  %v8388 = vpop.f32.mrb[0].mxu0
  %v8389 = vpop.f32.mrb[0].mxu0
  %v8390 = vadd.f32 0.0, %v8389
  %v8391 = vpop.f32.mrb[0].mxu0
  %8392 = vmatprep.mubr.bf16.mxu0 0
  %8393 = vmatmul.mubr.bf16.gmra.mrb[0].mxu0 %v8155
  %v8394 = vpop.f32.mrb[0].mxu0
  %v8395 = vadd.f32 0.0, %v8394
  %v8396 = vpop.f32.mrb[0].mxu0
  %v8397 = vpop.f32.mrb[0].mxu0
  %v8398 = vadd.f32 0.0, %v8397
  %v8399 = vpop.f32.mrb[0].mxu0
  %8400 = vmatprep.mubr.bf16.mxu0 0
  %8401 = vmatmul.mubr.bf16.gmra.mrb[0].mxu0 %v8158
  %v8402 = vpop.f32.mrb[0].mxu0
  %v8403 = vadd.f32 0.0, %v8402
  %v8404 = vpop.f32.mrb[0].mxu0
  %v8405 = vpop.f32.mrb[0].mxu0
  %v8406 = vadd.f32 0.0, %v8405
  %v8407 = vpop.f32.mrb[0].mxu0
  %8408 = vmatprep.mubr.bf16.mxu0 0
  %8409 = vmatmul.mubr.bf16.gmra.mrb[0].mxu0 %v8161
  %v8410 = vpop.f32.mrb[0].mxu0
  %v8411 = vadd.f32 0.0, %v8410
  %v8412 = vpop.f32.mrb[0].mxu0
  %v8413 = vpop.f32.mrb[0].mxu0
  %v8414 = vadd.f32 0.0, %v8413
  %v8415 = vpop.f32.mrb[0].mxu0
  %8416 = vmatprep.mubr.bf16.mxu0 0
  %8417 = vmatmul.mubr.bf16.gmra.mrb[0].mxu0 %v8164
  %v8418 = vpop.f32.mrb[0].mxu0
  %v8419 = vadd.f32 0.0, %v8418
  %v8420 = vpop.f32.mrb[0].mxu0
  %v8421 = vpop.f32.mrb[0].mxu0
  %v8422 = vadd.f32 0.0, %v8421
  %v8423 = vpop.f32.mrb[0].mxu0
  %8424 = vmatprep.mubr.bf16.mxu0 0
  %8425 = vmatmul.mubr.bf16.gmra.mrb[0].mxu0 %v8167
  %v8426 = vpop.f32.mrb[0].mxu0
  %v8427 = vadd.f32 0.0, %v8426
  %v8428 = vpop.f32.mrb[0].mxu0
  %v8429 = vpop.f32.mrb[0].mxu0
  %v8430 = vadd.f32 0.0, %v8429
  %v8431 = vpop.f32.mrb[0].mxu0
  %8432 = vmatprep.mubr.bf16.mxu0 0
  %8433 = vmatmul.mubr.bf16.gmra.mrb[0].mxu0 %v8170
  %v8434 = vpop.f32.mrb[0].mxu0
  %v8435 = vadd.f32 0.0, %v8434
  %v8436 = vpop.f32.mrb[0].mxu0
  %v8437 = vpop.f32.mrb[0].mxu0
  %v8438 = vadd.f32 0.0, %v8437
  %v8439 = vpop.f32.mrb[0].mxu0
  %8440 = vmatprep.mubr.bf16.mxu0 0
  %8441 = vmatmul.mubr.bf16.gmra.mrb[0].mxu0 %v8173
  %v8442 = vpop.f32.mrb[0].mxu0
  %v8443 = vadd.f32 0.0, %v8442
  %v8444 = vpop.f32.mrb[0].mxu0
  %v8445 = vpop.f32.mrb[0].mxu0
  %v8446 = vadd.f32 0.0, %v8445
  %v8447 = vpop.f32.mrb[0].mxu0
  %8448 = vmatprep.mubr.bf16.mxu0 0
  %8449 = vmatmul.mubr.bf16.gmra.mrb[0].mxu0 %v8176
  %v8450 = vpop.f32.mrb[0].mxu0
  %v8451 = vadd.f32 0.0, %v8450
  %v8452 = vpop.f32.mrb[0].mxu0
  %v8453 = vpop.f32.mrb[0].mxu0
  %v8454 = vadd.f32 0.0, %v8453
  %v8455 = vpop.f32.mrb[0].mxu0
  %8456 = vmatprep.mubr.bf16.mxu0 0
  %8457 = vmatmul.mubr.bf16.gmra.mrb[0].mxu0 %v8179
  %v8458 = vpop.f32.mrb[0].mxu0
  %v8459 = vadd.f32 0.0, %v8458
  %v8460 = vpop.f32.mrb[0].mxu0
  %v8461 = vpop.f32.mrb[0].mxu0
  %v8462 = vadd.f32 0.0, %v8461
  %v8463 = vpop.f32.mrb[0].mxu0
  %8464 = vmatprep.mubr.bf16.mxu0 0
  %8465 = vmatmul.mubr.bf16.gmra.mrb[0].mxu0 %v8182
  %v8466 = vpop.f32.mrb[0].mxu0
  %v8467 = vadd.f32 0.0, %v8466
  %v8468 = vpop.f32.mrb[0].mxu0
  %v8469 = vpop.f32.mrb[0].mxu0
  %v8470 = vadd.f32 0.0, %v8469
  %v8471 = vpop.f32.mrb[0].mxu0
  %8472 = vdwg.mxu0
  %v8473 = vadd.f32 %v7783, %v8219
  %v8474 = vadd.f32 %v7784, %v8222
  %v8475 = vadd.f32 %v7785, %v8227
  %v8476 = vadd.f32 %v7786, %v8230
  %v8477 = vadd.f32 %v7787, %v8235
  %v8478 = vadd.f32 %v7788, %v8238
  %v8479 = vadd.f32 %v7789, %v8243
  %v8480 = vadd.f32 %v7790, %v8246
  %v8481 = vadd.f32 %v7791, %v8251
  %v8482 = vadd.f32 %v7792, %v8254
  %v8483 = vadd.f32 %v7793, %v8259
  %v8484 = vadd.f32 %v7794, %v8262
  %v8485 = vadd.f32 %v7795, %v8267
  %v8486 = vadd.f32 %v7796, %v8270
  %v8487 = vadd.f32 %v7797, %v8275
  %v8488 = vadd.f32 %v7798, %v8278
  %v8489 = vadd.f32 %v7799, %v8283
  %v8490 = vadd.f32 %v7800, %v8286
  %v8491 = vadd.f32 %v7801, %v8291
  %v8492 = vadd.f32 %v7802, %v8294
  %v8493 = vadd.f32 %v7803, %v8299
  %v8494 = vadd.f32 %v7804, %v8302
  %v8495 = vadd.f32 %v7805, %v8307
  %v8496 = vadd.f32 %v7806, %v8310
  %v8497 = vadd.f32 %v7807, %v8315
  %v8498 = vadd.f32 %v7808, %v8318
  %v8499 = vadd.f32 %v7809, %v8323
  %v8500 = vadd.f32 %v7810, %v8326
  %v8501 = vadd.f32 %v7811, %v8331
  %v8502 = vadd.f32 %v7812, %v8334
  %v8503 = vadd.f32 %v7813, %v8339
  %v8504 = vadd.f32 %v7814, %v8342
  %v8505 = vadd.f32 %v7815, %v8347
  %v8506 = vadd.f32 %v7816, %v8350
  %v8507 = vadd.f32 %v7817, %v8355
  %v8508 = vadd.f32 %v7818, %v8358
  %v8509 = vadd.f32 %v7819, %v8363
  %v8510 = vadd.f32 %v7820, %v8366
  %v8511 = vadd.f32 %v7821, %v8371
  %v8512 = vadd.f32 %v7822, %v8374
  %v8513 = vadd.f32 %v7823, %v8379
  %v8514 = vadd.f32 %v7824, %v8382
  %v8515 = vadd.f32 %v7825, %v8387
  %v8516 = vadd.f32 %v7826, %v8390
  %v8517 = vadd.f32 %v7827, %v8395
  %v8518 = vadd.f32 %v7828, %v8398
  %v8519 = vadd.f32 %v7829, %v8403
  %v8520 = vadd.f32 %v7830, %v8406
  %v8521 = vadd.f32 %v7831, %v8411
  %v8522 = vadd.f32 %v7832, %v8414
  %v8523 = vadd.f32 %v7833, %v8419
  %v8524 = vadd.f32 %v7834, %v8422
  %v8525 = vadd.f32 %v7835, %v8427
  %v8526 = vadd.f32 %v7836, %v8430
  %v8527 = vadd.f32 %v7837, %v8435
  %v8528 = vadd.f32 %v7838, %v8438
  %v8529 = vadd.f32 %v7839, %v8443
  %v8530 = vadd.f32 %v7840, %v8446
  %v8531 = vadd.f32 %v7841, %v8451
  %v8532 = vadd.f32 %v7842, %v8454
  %v8533 = vadd.f32 %v7843, %v8459
  %v8534 = vadd.f32 %v7844, %v8462
  %v8535 = vadd.f32 %v7845, %v8467
  %v8536 = vadd.f32 %v7846, %v8470
  %v8537 = vld [vmem:[%s7847] sm:$0xf]
  %v8538 = vld [vmem:[%s7847 + $0x4] sm:$0xf]
  %v8539 = vld [vmem:[%s7847 + $0x8] sm:$0x1]
  %v8540 = vld [vmem:[%s7847 + $0xc] sm:$0xf]
  %v8541 = vld [vmem:[%s7847 + $0x10] sm:$0xf]
  %v8542 = vld [vmem:[%s7847 + $0x14] sm:$0x1]
  %v8543 = vld [vmem:[%s7847 + $0x18] sm:$0xf]
  %v8544 = vld [vmem:[%s7847 + $0x1c] sm:$0xf]
  %v8545 = vld [vmem:[%s7847 + $0x20] sm:$0x1]
  %v8546 = vld [vmem:[%s7847 + $0x24] sm:$0xf]
  %v8547 = vld [vmem:[%s7847 + $0x28] sm:$0xf]
  %v8548 = vld [vmem:[%s7847 + $0x2c] sm:$0x1]
  %v8549 = vld [vmem:[%s7847 + $0x30] sm:$0xf]
  %v8550 = vld [vmem:[%s7847 + $0x34] sm:$0xf]
  %v8551 = vld [vmem:[%s7847 + $0x38] sm:$0x1]
  %v8552 = vld [vmem:[%s7847 + $0x3c] sm:$0xf]
  %v8553 = vld [vmem:[%s7847 + $0x40] sm:$0xf]
  %v8554 = vld [vmem:[%s7847 + $0x44] sm:$0x1]
  %v8555 = vld [vmem:[%s7847 + $0x48] sm:$0xf]
  %v8556 = vld [vmem:[%s7847 + $0x4c] sm:$0xf]
  %v8557 = vld [vmem:[%s7847 + $0x50] sm:$0x1]
  %v8558 = vld [vmem:[%s7847 + $0x54] sm:$0xf]
  %v8559 = vld [vmem:[%s7847 + $0x58] sm:$0xf]
  %v8560 = vld [vmem:[%s7847 + $0x5c] sm:$0x1]
  %v8561 = vld [vmem:[%s7847 + $0x60] sm:$0xf]
  %v8562 = vld [vmem:[%s7847 + $0x64] sm:$0xf]
  %v8563 = vld [vmem:[%s7847 + $0x68] sm:$0x1]
  %v8564 = vld [vmem:[%s7847 + $0x6c] sm:$0xf]
  %v8565 = vld [vmem:[%s7847 + $0x70] sm:$0xf]
  %v8566 = vld [vmem:[%s7847 + $0x74] sm:$0x1]
  %v8567 = vld [vmem:[%s7847 + $0x78] sm:$0xf]
  %v8568 = vld [vmem:[%s7847 + $0x7c] sm:$0xf]
  %v8569 = vld [vmem:[%s7847 + $0x80] sm:$0x1]
  %v8570 = vld [vmem:[%s7847 + $0x84] sm:$0xf]
  %v8571 = vld [vmem:[%s7847 + $0x88] sm:$0xf]
  %v8572 = vld [vmem:[%s7847 + $0x8c] sm:$0x1]
  %v8573 = vld [vmem:[%s7847 + $0x90] sm:$0xf]
  %v8574 = vld [vmem:[%s7847 + $0x94] sm:$0xf]
  %v8575 = vld [vmem:[%s7847 + $0x98] sm:$0x1]
  %v8576 = vld [vmem:[%s7847 + $0x9c] sm:$0xf]
  %v8577 = vld [vmem:[%s7847 + $0xa0] sm:$0xf]
  %v8578 = vld [vmem:[%s7847 + $0xa4] sm:$0x1]
  %v8579 = vld [vmem:[%s7847 + $0xa8] sm:$0xf]
  %v8580 = vld [vmem:[%s7847 + $0xac] sm:$0xf]
  %v8581 = vld [vmem:[%s7847 + $0xb0] sm:$0x1]
  %v8582 = vld [vmem:[%s7847 + $0xb4] sm:$0xf]
  %v8583 = vld [vmem:[%s7847 + $0xb8] sm:$0xf]
  %v8584 = vld [vmem:[%s7847 + $0xbc] sm:$0x1]
  %v8585 = vld [vmem:[%s7847 + $0xd8] sm:$0xf]
  %v8586 = vld [vmem:[%s7847 + $0xdc] sm:$0xf]
  %v8587 = vld [vmem:[%s7847 + $0xe0] sm:$0x1]
  %v8588 = vld [vmem:[%s7847 + $0xe4] sm:$0xf]
  %v8589 = vld [vmem:[%s7847 + $0xe8] sm:$0xf]
  %v8590 = vld [vmem:[%s7847 + $0xec] sm:$0x1]
  %v8591 = vld [vmem:[%s7847 + $0xf0] sm:$0xf]
  %v8592 = vld [vmem:[%s7847 + $0xf4] sm:$0xf]
  %v8593 = vld [vmem:[%s7847 + $0xf8] sm:$0x1]
  %v8594 = vld [vmem:[%s7847 + $0xfc] sm:$0xf]
  %v8595 = vld [vmem:[%s7847 + $0x100] sm:$0xf]
  %v8596 = vld [vmem:[%s7847 + $0x104] sm:$0x1]
  %v8597 = vld [vmem:[%s7847 + $0x108] sm:$0xf]
  %v8598 = vld [vmem:[%s7847 + $0x10c] sm:$0xf]
  %v8599 = vld [vmem:[%s7847 + $0x110] sm:$0x1]
  %v8600 = vld [vmem:[%s7847 + $0x114] sm:$0xf]
  %v8601 = vld [vmem:[%s7847 + $0x118] sm:$0xf]
  %v8602 = vld [vmem:[%s7847 + $0x11c] sm:$0x1]
  %v8603 = vld [vmem:[%s7847 + $0x120] sm:$0xf]
  %v8604 = vld [vmem:[%s7847 + $0x124] sm:$0xf]
  %v8605 = vld [vmem:[%s7847 + $0x128] sm:$0x1]
  %v8606 = vld [vmem:[%s7847 + $0x12c] sm:$0xf]
  %v8607 = vld [vmem:[%s7847 + $0x130] sm:$0xf]
  %v8608 = vld [vmem:[%s7847 + $0x134] sm:$0x1]
  %v8609 = vld [vmem:[%s7847 + $0x138] sm:$0xf]
  %v8610 = vld [vmem:[%s7847 + $0x13c] sm:$0xf]
  %v8611 = vld [vmem:[%s7847 + $0x140] sm:$0x1]
  %v8612 = vld [vmem:[%s7847 + $0x144] sm:$0xf]
  %v8613 = vld [vmem:[%s7847 + $0x148] sm:$0xf]
  %v8614 = vld [vmem:[%s7847 + $0x14c] sm:$0x1]
  %v8615 = vld [vmem:[%s7847 + $0x150] sm:$0xf]
  %v8616 = vld [vmem:[%s7847 + $0x154] sm:$0xf]
  %v8617 = vld [vmem:[%s7847 + $0x158] sm:$0x1]
  %v8618 = vld [vmem:[%s7847 + $0x15c] sm:$0xf]
  %v8619 = vld [vmem:[%s7847 + $0x160] sm:$0xf]
  %v8620 = vld [vmem:[%s7847 + $0x164] sm:$0x1]
  %v8621 = vld [vmem:[%s7847 + $0x168] sm:$0xf]
  %v8622 = vld [vmem:[%s7847 + $0x16c] sm:$0xf]
  %v8623 = vld [vmem:[%s7847 + $0x170] sm:$0x1]
  %v8624 = vld [vmem:[%s7847 + $0x174] sm:$0xf]
  %v8625 = vld [vmem:[%s7847 + $0x178] sm:$0xf]
  %v8626 = vld [vmem:[%s7847 + $0x17c] sm:$0x1]
  %v8627 = vld [vmem:[%s7847 + $0x180] sm:$0xf]
  %v8628 = vld [vmem:[%s7847 + $0x184] sm:$0xf]
  %v8629 = vld [vmem:[%s7847 + $0x188] sm:$0x1]
  %v8630 = vld [vmem:[%s7847 + $0x18c] sm:$0xf]
  %v8631 = vld [vmem:[%s7847 + $0x190] sm:$0xf]
  %v8632 = vld [vmem:[%s7847 + $0x194] sm:$0x1]
  %v8634 = vshrl.u32 %v8537, 16
  %v8636 = vrot.slane %v8634, 4
  %v8637 = vshll.u32 %v8537, 16
  %v8639 = vrot.slane %v8637, 5
  %v8640 = vor.u32 %v8636, %v8639
  %v8641 = vrot.slane %v8640, 4
  %v8643 = vshll.u32 %v8538, 16
  %v8645 = vrot.slane %v8643, 5
  %v8646 = vsel %vm2112, %v8641, %v8645
  %v8647 = vshrl.u32 %v8538, 16
  %v8649 = vrot.slane %v8647, 4
  %v8650 = vor.u32 %v8649, %v8645
  %v8651 = vrot.slane %v8650, 4
  %v8653 = vshll.u32 %v8539, 16
  %v8655 = vrot.slane %v8653, 5
  %v8656 = vsel %vm2112, %v8651, %v8655
  %v8658 = vshrl.u32 %v8540, 16
  %v8660 = vrot.slane %v8658, 4
  %v8661 = vshll.u32 %v8540, 16
  %v8663 = vrot.slane %v8661, 5
  %v8664 = vor.u32 %v8660, %v8663
  %v8665 = vrot.slane %v8664, 4
  %v8667 = vshll.u32 %v8541, 16
  %v8669 = vrot.slane %v8667, 5
  %v8670 = vsel %vm2112, %v8665, %v8669
  %v8671 = vshrl.u32 %v8541, 16
  %v8673 = vrot.slane %v8671, 4
  %v8674 = vor.u32 %v8673, %v8669
  %v8675 = vrot.slane %v8674, 4
  %v8677 = vshll.u32 %v8542, 16
  %v8679 = vrot.slane %v8677, 5
  %v8680 = vsel %vm2112, %v8675, %v8679
  %v8682 = vshrl.u32 %v8543, 16
  %v8684 = vrot.slane %v8682, 4
  %v8685 = vshll.u32 %v8543, 16
  %v8687 = vrot.slane %v8685, 5
  %v8688 = vor.u32 %v8684, %v8687
  %v8689 = vrot.slane %v8688, 4
  %v8691 = vshll.u32 %v8544, 16
  %v8693 = vrot.slane %v8691, 5
  %v8694 = vsel %vm2112, %v8689, %v8693
  %v8695 = vshrl.u32 %v8544, 16
  %v8697 = vrot.slane %v8695, 4
  %v8698 = vor.u32 %v8697, %v8693
  %v8699 = vrot.slane %v8698, 4
  %v8701 = vshll.u32 %v8545, 16
  %v8703 = vrot.slane %v8701, 5
  %v8704 = vsel %vm2112, %v8699, %v8703
  %v8706 = vshrl.u32 %v8546, 16
  %v8708 = vrot.slane %v8706, 4
  %v8709 = vshll.u32 %v8546, 16
  %v8711 = vrot.slane %v8709, 5
  %v8712 = vor.u32 %v8708, %v8711
  %v8713 = vrot.slane %v8712, 4
  %v8715 = vshll.u32 %v8547, 16
  %v8717 = vrot.slane %v8715, 5
  %v8718 = vsel %vm2112, %v8713, %v8717
  %v8719 = vshrl.u32 %v8547, 16
  %v8721 = vrot.slane %v8719, 4
  %v8722 = vor.u32 %v8721, %v8717
  %v8723 = vrot.slane %v8722, 4
  %v8725 = vshll.u32 %v8548, 16
  %v8727 = vrot.slane %v8725, 5
  %v8728 = vsel %vm2112, %v8723, %v8727
  %v8730 = vshrl.u32 %v8549, 16
  %v8732 = vrot.slane %v8730, 4
  %v8733 = vshll.u32 %v8549, 16
  %v8735 = vrot.slane %v8733, 5
  %v8736 = vor.u32 %v8732, %v8735
  %v8737 = vrot.slane %v8736, 4
  %v8739 = vshll.u32 %v8550, 16
  %v8741 = vrot.slane %v8739, 5
  %v8742 = vsel %vm2112, %v8737, %v8741
  %v8743 = vshrl.u32 %v8550, 16
  %v8745 = vrot.slane %v8743, 4
  %v8746 = vor.u32 %v8745, %v8741
  %v8747 = vrot.slane %v8746, 4
  %v8749 = vshll.u32 %v8551, 16
  %v8751 = vrot.slane %v8749, 5
  %v8752 = vsel %vm2112, %v8747, %v8751
  %v8754 = vshrl.u32 %v8552, 16
  %v8756 = vrot.slane %v8754, 4
  %v8757 = vshll.u32 %v8552, 16
  %v8759 = vrot.slane %v8757, 5
  %v8760 = vor.u32 %v8756, %v8759
  %v8761 = vrot.slane %v8760, 4
  %v8763 = vshll.u32 %v8553, 16
  %v8765 = vrot.slane %v8763, 5
  %v8766 = vsel %vm2112, %v8761, %v8765
  %v8767 = vshrl.u32 %v8553, 16
  %v8769 = vrot.slane %v8767, 4
  %v8770 = vor.u32 %v8769, %v8765
  %v8771 = vrot.slane %v8770, 4
  %v8773 = vshll.u32 %v8554, 16
  %v8775 = vrot.slane %v8773, 5
  %v8776 = vsel %vm2112, %v8771, %v8775
  %v8778 = vshrl.u32 %v8555, 16
  %v8780 = vrot.slane %v8778, 4
  %v8781 = vshll.u32 %v8555, 16
  %v8783 = vrot.slane %v8781, 5
  %v8784 = vor.u32 %v8780, %v8783
  %v8785 = vrot.slane %v8784, 4
  %v8787 = vshll.u32 %v8556, 16
  %v8789 = vrot.slane %v8787, 5
  %v8790 = vsel %vm2112, %v8785, %v8789
  %v8791 = vshrl.u32 %v8556, 16
  %v8793 = vrot.slane %v8791, 4
  %v8794 = vor.u32 %v8793, %v8789
  %v8795 = vrot.slane %v8794, 4
  %v8797 = vshll.u32 %v8557, 16
  %v8799 = vrot.slane %v8797, 5
  %v8800 = vsel %vm2112, %v8795, %v8799
  %v8802 = vshrl.u32 %v8558, 16
  %v8804 = vrot.slane %v8802, 4
  %v8805 = vshll.u32 %v8558, 16
  %v8807 = vrot.slane %v8805, 5
  %v8808 = vor.u32 %v8804, %v8807
  %v8809 = vrot.slane %v8808, 4
  %v8811 = vshll.u32 %v8559, 16
  %v8813 = vrot.slane %v8811, 5
  %v8814 = vsel %vm2112, %v8809, %v8813
  %v8815 = vshrl.u32 %v8559, 16
  %v8817 = vrot.slane %v8815, 4
  %v8818 = vor.u32 %v8817, %v8813
  %v8819 = vrot.slane %v8818, 4
  %v8821 = vshll.u32 %v8560, 16
  %v8823 = vrot.slane %v8821, 5
  %v8824 = vsel %vm2112, %v8819, %v8823
  %v8826 = vshrl.u32 %v8561, 16
  %v8828 = vrot.slane %v8826, 4
  %v8829 = vshll.u32 %v8561, 16
  %v8831 = vrot.slane %v8829, 5
  %v8832 = vor.u32 %v8828, %v8831
  %v8833 = vrot.slane %v8832, 4
  %v8835 = vshll.u32 %v8562, 16
  %v8837 = vrot.slane %v8835, 5
  %v8838 = vsel %vm2112, %v8833, %v8837
  %v8839 = vshrl.u32 %v8562, 16
  %v8841 = vrot.slane %v8839, 4
  %v8842 = vor.u32 %v8841, %v8837
  %v8843 = vrot.slane %v8842, 4
  %v8845 = vshll.u32 %v8563, 16
  %v8847 = vrot.slane %v8845, 5
  %v8848 = vsel %vm2112, %v8843, %v8847
  %v8850 = vshrl.u32 %v8564, 16
  %v8852 = vrot.slane %v8850, 4
  %v8853 = vshll.u32 %v8564, 16
  %v8855 = vrot.slane %v8853, 5
  %v8856 = vor.u32 %v8852, %v8855
  %v8857 = vrot.slane %v8856, 4
  %v8859 = vshll.u32 %v8565, 16
  %v8861 = vrot.slane %v8859, 5
  %v8862 = vsel %vm2112, %v8857, %v8861
  %v8863 = vshrl.u32 %v8565, 16
  %v8865 = vrot.slane %v8863, 4
  %v8866 = vor.u32 %v8865, %v8861
  %v8867 = vrot.slane %v8866, 4
  %v8869 = vshll.u32 %v8566, 16
  %v8871 = vrot.slane %v8869, 5
  %v8872 = vsel %vm2112, %v8867, %v8871
  %v8874 = vshrl.u32 %v8567, 16
  %v8876 = vrot.slane %v8874, 4
  %v8877 = vshll.u32 %v8567, 16
  %v8879 = vrot.slane %v8877, 5
  %v8880 = vor.u32 %v8876, %v8879
  %v8881 = vrot.slane %v8880, 4
  %v8883 = vshll.u32 %v8568, 16
  %v8885 = vrot.slane %v8883, 5
  %v8886 = vsel %vm2112, %v8881, %v8885
  %v8887 = vshrl.u32 %v8568, 16
  %v8889 = vrot.slane %v8887, 4
  %v8890 = vor.u32 %v8889, %v8885
  %v8891 = vrot.slane %v8890, 4
  %v8893 = vshll.u32 %v8569, 16
  %v8895 = vrot.slane %v8893, 5
  %v8896 = vsel %vm2112, %v8891, %v8895
  %v8898 = vshrl.u32 %v8570, 16
  %v8900 = vrot.slane %v8898, 4
  %v8901 = vshll.u32 %v8570, 16
  %v8903 = vrot.slane %v8901, 5
  %v8904 = vor.u32 %v8900, %v8903
  %v8905 = vrot.slane %v8904, 4
  %v8907 = vshll.u32 %v8571, 16
  %v8909 = vrot.slane %v8907, 5
  %v8910 = vsel %vm2112, %v8905, %v8909
  %v8911 = vshrl.u32 %v8571, 16
  %v8913 = vrot.slane %v8911, 4
  %v8914 = vor.u32 %v8913, %v8909
  %v8915 = vrot.slane %v8914, 4
  %v8917 = vshll.u32 %v8572, 16
  %v8919 = vrot.slane %v8917, 5
  %v8920 = vsel %vm2112, %v8915, %v8919
  %v8922 = vshrl.u32 %v8573, 16
  %v8924 = vrot.slane %v8922, 4
  %v8925 = vshll.u32 %v8573, 16
  %v8927 = vrot.slane %v8925, 5
  %v8928 = vor.u32 %v8924, %v8927
  %v8929 = vrot.slane %v8928, 4
  %v8931 = vshll.u32 %v8574, 16
  %v8933 = vrot.slane %v8931, 5
  %v8934 = vsel %vm2112, %v8929, %v8933
  %v8935 = vshrl.u32 %v8574, 16
  %v8937 = vrot.slane %v8935, 4
  %v8938 = vor.u32 %v8937, %v8933
  %v8939 = vrot.slane %v8938, 4
  %v8941 = vshll.u32 %v8575, 16
  %v8943 = vrot.slane %v8941, 5
  %v8944 = vsel %vm2112, %v8939, %v8943
  %v8946 = vshrl.u32 %v8576, 16
  %v8948 = vrot.slane %v8946, 4
  %v8949 = vshll.u32 %v8576, 16
  %v8951 = vrot.slane %v8949, 5
  %v8952 = vor.u32 %v8948, %v8951
  %v8953 = vrot.slane %v8952, 4
  %v8955 = vshll.u32 %v8577, 16
  %v8957 = vrot.slane %v8955, 5
  %v8958 = vsel %vm2112, %v8953, %v8957
  %v8959 = vshrl.u32 %v8577, 16
  %v8961 = vrot.slane %v8959, 4
  %v8962 = vor.u32 %v8961, %v8957
  %v8963 = vrot.slane %v8962, 4
  %v8965 = vshll.u32 %v8578, 16
  %v8967 = vrot.slane %v8965, 5
  %v8968 = vsel %vm2112, %v8963, %v8967
  %v8970 = vshrl.u32 %v8579, 16
  %v8972 = vrot.slane %v8970, 4
  %v8973 = vshll.u32 %v8579, 16
  %v8975 = vrot.slane %v8973, 5
  %v8976 = vor.u32 %v8972, %v8975
  %v8977 = vrot.slane %v8976, 4
  %v8979 = vshll.u32 %v8580, 16
  %v8981 = vrot.slane %v8979, 5
  %v8982 = vsel %vm2112, %v8977, %v8981
  %v8983 = vshrl.u32 %v8580, 16
  %v8985 = vrot.slane %v8983, 4
  %v8986 = vor.u32 %v8985, %v8981
  %v8987 = vrot.slane %v8986, 4
  %v8989 = vshll.u32 %v8581, 16
  %v8991 = vrot.slane %v8989, 5
  %v8992 = vsel %vm2112, %v8987, %v8991
  %v8994 = vshrl.u32 %v8582, 16
  %v8996 = vrot.slane %v8994, 4
  %v8997 = vshll.u32 %v8582, 16
  %v8999 = vrot.slane %v8997, 5
  %v9000 = vor.u32 %v8996, %v8999
  %v9001 = vrot.slane %v9000, 4
  %v9003 = vshll.u32 %v8583, 16
  %v9005 = vrot.slane %v9003, 5
  %v9006 = vsel %vm2112, %v9001, %v9005
  %v9007 = vshrl.u32 %v8583, 16
  %v9009 = vrot.slane %v9007, 4
  %v9010 = vor.u32 %v9009, %v9005
  %v9011 = vrot.slane %v9010, 4
  %v9013 = vshll.u32 %v8584, 16
  %v9015 = vrot.slane %v9013, 5
  %v9016 = vsel %vm2112, %v9011, %v9015
  %v9018 = vshrl.u32 %v8585, 16
  %v9020 = vrot.slane %v9018, 4
  %v9021 = vshll.u32 %v8585, 16
  %v9023 = vrot.slane %v9021, 5
  %v9024 = vor.u32 %v9020, %v9023
  %v9025 = vrot.slane %v9024, 4
  %v9027 = vshll.u32 %v8586, 16
  %v9029 = vrot.slane %v9027, 5
  %v9030 = vsel %vm2112, %v9025, %v9029
  %v9031 = vshrl.u32 %v8586, 16
  %v9033 = vrot.slane %v9031, 4
  %v9034 = vor.u32 %v9033, %v9029
  %v9035 = vrot.slane %v9034, 4
  %v9037 = vshll.u32 %v8587, 16
  %v9039 = vrot.slane %v9037, 5
  %v9040 = vsel %vm2112, %v9035, %v9039
  %v9042 = vshrl.u32 %v8588, 16
  %v9044 = vrot.slane %v9042, 4
  %v9045 = vshll.u32 %v8588, 16
  %v9047 = vrot.slane %v9045, 5
  %v9048 = vor.u32 %v9044, %v9047
  %v9049 = vrot.slane %v9048, 4
  %v9051 = vshll.u32 %v8589, 16
  %v9053 = vrot.slane %v9051, 5
  %v9054 = vsel %vm2112, %v9049, %v9053
  %v9055 = vshrl.u32 %v8589, 16
  %v9057 = vrot.slane %v9055, 4
  %v9058 = vor.u32 %v9057, %v9053
  %v9059 = vrot.slane %v9058, 4
  %v9061 = vshll.u32 %v8590, 16
  %v9063 = vrot.slane %v9061, 5
  %v9064 = vsel %vm2112, %v9059, %v9063
  %v9066 = vshrl.u32 %v8591, 16
  %v9068 = vrot.slane %v9066, 4
  %v9069 = vshll.u32 %v8591, 16
  %v9071 = vrot.slane %v9069, 5
  %v9072 = vor.u32 %v9068, %v9071
  %v9073 = vrot.slane %v9072, 4
  %v9075 = vshll.u32 %v8592, 16
  %v9077 = vrot.slane %v9075, 5
  %v9078 = vsel %vm2112, %v9073, %v9077
  %v9079 = vshrl.u32 %v8592, 16
  %v9081 = vrot.slane %v9079, 4
  %v9082 = vor.u32 %v9081, %v9077
  %v9083 = vrot.slane %v9082, 4
  %v9085 = vshll.u32 %v8593, 16
  %v9087 = vrot.slane %v9085, 5
  %v9088 = vsel %vm2112, %v9083, %v9087
  %v9090 = vshrl.u32 %v8594, 16
  %v9092 = vrot.slane %v9090, 4
  %v9093 = vshll.u32 %v8594, 16
  %v9095 = vrot.slane %v9093, 5
  %v9096 = vor.u32 %v9092, %v9095
  %v9097 = vrot.slane %v9096, 4
  %v9099 = vshll.u32 %v8595, 16
  %v9101 = vrot.slane %v9099, 5
  %v9102 = vsel %vm2112, %v9097, %v9101
  %v9103 = vshrl.u32 %v8595, 16
  %v9105 = vrot.slane %v9103, 4
  %v9106 = vor.u32 %v9105, %v9101
  %v9107 = vrot.slane %v9106, 4
  %v9109 = vshll.u32 %v8596, 16
  %v9111 = vrot.slane %v9109, 5
  %v9112 = vsel %vm2112, %v9107, %v9111
  %v9114 = vshrl.u32 %v8597, 16
  %v9116 = vrot.slane %v9114, 4
  %v9117 = vshll.u32 %v8597, 16
  %v9119 = vrot.slane %v9117, 5
  %v9120 = vor.u32 %v9116, %v9119
  %v9121 = vrot.slane %v9120, 4
  %v9123 = vshll.u32 %v8598, 16
  %v9125 = vrot.slane %v9123, 5
  %v9126 = vsel %vm2112, %v9121, %v9125
  %v9127 = vshrl.u32 %v8598, 16
  %v9129 = vrot.slane %v9127, 4
  %v9130 = vor.u32 %v9129, %v9125
  %v9131 = vrot.slane %v9130, 4
  %v9133 = vshll.u32 %v8599, 16
  %v9135 = vrot.slane %v9133, 5
  %v9136 = vsel %vm2112, %v9131, %v9135
  %v9138 = vshrl.u32 %v8600, 16
  %v9140 = vrot.slane %v9138, 4
  %v9141 = vshll.u32 %v8600, 16
  %v9143 = vrot.slane %v9141, 5
  %v9144 = vor.u32 %v9140, %v9143
  %v9145 = vrot.slane %v9144, 4
  %v9147 = vshll.u32 %v8601, 16
  %v9149 = vrot.slane %v9147, 5
  %v9150 = vsel %vm2112, %v9145, %v9149
  %v9151 = vshrl.u32 %v8601, 16
  %v9153 = vrot.slane %v9151, 4
  %v9154 = vor.u32 %v9153, %v9149
  %v9155 = vrot.slane %v9154, 4
  %v9157 = vshll.u32 %v8602, 16
  %v9159 = vrot.slane %v9157, 5
  %v9160 = vsel %vm2112, %v9155, %v9159
  %v9162 = vshrl.u32 %v8603, 16
  %v9164 = vrot.slane %v9162, 4
  %v9165 = vshll.u32 %v8603, 16
  %v9167 = vrot.slane %v9165, 5
  %v9168 = vor.u32 %v9164, %v9167
  %v9169 = vrot.slane %v9168, 4
  %v9171 = vshll.u32 %v8604, 16
  %v9173 = vrot.slane %v9171, 5
  %v9174 = vsel %vm2112, %v9169, %v9173
  %v9175 = vshrl.u32 %v8604, 16
  %v9177 = vrot.slane %v9175, 4
  %v9178 = vor.u32 %v9177, %v9173
  %v9179 = vrot.slane %v9178, 4
  %v9181 = vshll.u32 %v8605, 16
  %v9183 = vrot.slane %v9181, 5
  %v9184 = vsel %vm2112, %v9179, %v9183
  %v9186 = vshrl.u32 %v8606, 16
  %v9188 = vrot.slane %v9186, 4
  %v9189 = vshll.u32 %v8606, 16
  %v9191 = vrot.slane %v9189, 5
  %v9192 = vor.u32 %v9188, %v9191
  %v9193 = vrot.slane %v9192, 4
  %v9195 = vshll.u32 %v8607, 16
  %v9197 = vrot.slane %v9195, 5
  %v9198 = vsel %vm2112, %v9193, %v9197
  %v9199 = vshrl.u32 %v8607, 16
  %v9201 = vrot.slane %v9199, 4
  %v9202 = vor.u32 %v9201, %v9197
  %v9203 = vrot.slane %v9202, 4
  %v9205 = vshll.u32 %v8608, 16
  %v9207 = vrot.slane %v9205, 5
  %v9208 = vsel %vm2112, %v9203, %v9207
  %v9210 = vshrl.u32 %v8609, 16
  %v9212 = vrot.slane %v9210, 4
  %v9213 = vshll.u32 %v8609, 16
  %v9215 = vrot.slane %v9213, 5
  %v9216 = vor.u32 %v9212, %v9215
  %v9217 = vrot.slane %v9216, 4
  %v9219 = vshll.u32 %v8610, 16
  %v9221 = vrot.slane %v9219, 5
  %v9222 = vsel %vm2112, %v9217, %v9221
  %v9223 = vshrl.u32 %v8610, 16
  %v9225 = vrot.slane %v9223, 4
  %v9226 = vor.u32 %v9225, %v9221
  %v9227 = vrot.slane %v9226, 4
  %v9229 = vshll.u32 %v8611, 16
  %v9231 = vrot.slane %v9229, 5
  %v9232 = vsel %vm2112, %v9227, %v9231
  %v9234 = vshrl.u32 %v8612, 16
  %v9236 = vrot.slane %v9234, 4
  %v9237 = vshll.u32 %v8612, 16
  %v9239 = vrot.slane %v9237, 5
  %v9240 = vor.u32 %v9236, %v9239
  %v9241 = vrot.slane %v9240, 4
  %v9243 = vshll.u32 %v8613, 16
  %v9245 = vrot.slane %v9243, 5
  %v9246 = vsel %vm2112, %v9241, %v9245
  %v9247 = vshrl.u32 %v8613, 16
  %v9249 = vrot.slane %v9247, 4
  %v9250 = vor.u32 %v9249, %v9245
  %v9251 = vrot.slane %v9250, 4
  %v9253 = vshll.u32 %v8614, 16
  %v9255 = vrot.slane %v9253, 5
  %v9256 = vsel %vm2112, %v9251, %v9255
  %v9258 = vshrl.u32 %v8615, 16
  %v9260 = vrot.slane %v9258, 4
  %v9261 = vshll.u32 %v8615, 16
  %v9263 = vrot.slane %v9261, 5
  %v9264 = vor.u32 %v9260, %v9263
  %v9265 = vrot.slane %v9264, 4
  %v9267 = vshll.u32 %v8616, 16
  %v9269 = vrot.slane %v9267, 5
  %v9270 = vsel %vm2112, %v9265, %v9269
  %v9271 = vshrl.u32 %v8616, 16
  %v9273 = vrot.slane %v9271, 4
  %v9274 = vor.u32 %v9273, %v9269
  %v9275 = vrot.slane %v9274, 4
  %v9277 = vshll.u32 %v8617, 16
  %v9279 = vrot.slane %v9277, 5
  %v9280 = vsel %vm2112, %v9275, %v9279
  %v9282 = vshrl.u32 %v8618, 16
  %v9284 = vrot.slane %v9282, 4
  %v9285 = vshll.u32 %v8618, 16
  %v9287 = vrot.slane %v9285, 5
  %v9288 = vor.u32 %v9284, %v9287
  %v9289 = vrot.slane %v9288, 4
  %v9291 = vshll.u32 %v8619, 16
  %v9293 = vrot.slane %v9291, 5
  %v9294 = vsel %vm2112, %v9289, %v9293
  %v9295 = vshrl.u32 %v8619, 16
  %v9297 = vrot.slane %v9295, 4
  %v9298 = vor.u32 %v9297, %v9293
  %v9299 = vrot.slane %v9298, 4
  %v9301 = vshll.u32 %v8620, 16
  %v9303 = vrot.slane %v9301, 5
  %v9304 = vsel %vm2112, %v9299, %v9303
  %v9306 = vshrl.u32 %v8621, 16
  %v9308 = vrot.slane %v9306, 4
  %v9309 = vshll.u32 %v8621, 16
  %v9311 = vrot.slane %v9309, 5
  %v9312 = vor.u32 %v9308, %v9311
  %v9313 = vrot.slane %v9312, 4
  %v9315 = vshll.u32 %v8622, 16
  %v9317 = vrot.slane %v9315, 5
  %v9318 = vsel %vm2112, %v9313, %v9317
  %v9319 = vshrl.u32 %v8622, 16
  %v9321 = vrot.slane %v9319, 4
  %v9322 = vor.u32 %v9321, %v9317
  %v9323 = vrot.slane %v9322, 4
  %v9325 = vshll.u32 %v8623, 16
  %v9327 = vrot.slane %v9325, 5
  %v9328 = vsel %vm2112, %v9323, %v9327
  %v9330 = vshrl.u32 %v8624, 16
  %v9332 = vrot.slane %v9330, 4
  %v9333 = vshll.u32 %v8624, 16
  %v9335 = vrot.slane %v9333, 5
  %v9336 = vor.u32 %v9332, %v9335
  %v9337 = vrot.slane %v9336, 4
  %v9339 = vshll.u32 %v8625, 16
  %v9341 = vrot.slane %v9339, 5
  %v9342 = vsel %vm2112, %v9337, %v9341
  %v9343 = vshrl.u32 %v8625, 16
  %v9345 = vrot.slane %v9343, 4
  %v9346 = vor.u32 %v9345, %v9341
  %v9347 = vrot.slane %v9346, 4
  %v9349 = vshll.u32 %v8626, 16
  %v9351 = vrot.slane %v9349, 5
  %v9352 = vsel %vm2112, %v9347, %v9351
  %v9354 = vshrl.u32 %v8627, 16
  %v9356 = vrot.slane %v9354, 4
  %v9357 = vshll.u32 %v8627, 16
  %v9359 = vrot.slane %v9357, 5
  %v9360 = vor.u32 %v9356, %v9359
  %v9361 = vrot.slane %v9360, 4
  %v9363 = vshll.u32 %v8628, 16
  %v9365 = vrot.slane %v9363, 5
  %v9366 = vsel %vm2112, %v9361, %v9365
  %v9367 = vshrl.u32 %v8628, 16
  %v9369 = vrot.slane %v9367, 4
  %v9370 = vor.u32 %v9369, %v9365
  %v9371 = vrot.slane %v9370, 4
  %v9373 = vshll.u32 %v8629, 16
  %v9375 = vrot.slane %v9373, 5
  %v9376 = vsel %vm2112, %v9371, %v9375
  %v9378 = vshrl.u32 %v8630, 16
  %v9380 = vrot.slane %v9378, 4
  %v9381 = vshll.u32 %v8630, 16
  %v9383 = vrot.slane %v9381, 5
  %v9384 = vor.u32 %v9380, %v9383
  %v9385 = vrot.slane %v9384, 4
  %v9387 = vshll.u32 %v8631, 16
  %v9389 = vrot.slane %v9387, 5
  %v9390 = vsel %vm2112, %v9385, %v9389
  %v9391 = vshrl.u32 %v8631, 16
  %v9393 = vrot.slane %v9391, 4
  %v9394 = vor.u32 %v9393, %v9389
  %v9395 = vrot.slane %v9394, 4
  %v9397 = vshll.u32 %v8632, 16
  %v9399 = vrot.slane %v9397, 5
  %v9400 = vsel %vm2112, %v9395, %v9399
  %v9401 = vld [vmem:[%s2 + $0x70] sm:$0xf]
  %v9402 = vld [vmem:[%s2 + $0x74] sm:$0xf]
  %v9403 = vld [vmem:[%s2 + $0x78] sm:$0xf]
  %v9404 = vld [vmem:[%s2 + $0x7c] sm:$0xf]
  %v9405 = vunpack.c.l.b16 %v8646
  %v9406 = vunpack.c.l.b16 %v8656
  %v9407 = vunpack.c.l.b16 %v8670
  %v9408 = vunpack.c.l.b16 %v8680
  %v9409 = vunpack.c.l.b16 %v8694
  %v9410 = vunpack.c.l.b16 %v8704
  %v9411 = vunpack.c.l.b16 %v8718
  %v9412 = vunpack.c.l.b16 %v8728
  %v9413 = vunpack.c.l.b16 %v8742
  %v9414 = vunpack.c.l.b16 %v8752
  %v9415 = vunpack.c.l.b16 %v8766
  %v9416 = vunpack.c.l.b16 %v8776
  %v9417 = vunpack.c.l.b16 %v8790
  %v9418 = vunpack.c.l.b16 %v8800
  %v9419 = vunpack.c.l.b16 %v8814
  %v9420 = vunpack.c.l.b16 %v8824
  %v9421 = vunpack.c.l.b16 %v8838
  %v9422 = vunpack.c.l.b16 %v8848
  %v9423 = vunpack.c.l.b16 %v8862
  %v9424 = vunpack.c.l.b16 %v8872
  %v9425 = vunpack.c.l.b16 %v8886
  %v9426 = vunpack.c.l.b16 %v8896
  %v9427 = vunpack.c.l.b16 %v8910
  %v9428 = vunpack.c.l.b16 %v8920
  %v9429 = vunpack.c.l.b16 %v8934
  %v9430 = vunpack.c.l.b16 %v8944
  %v9431 = vunpack.c.l.b16 %v8958
  %v9432 = vunpack.c.l.b16 %v8968
  %v9433 = vunpack.c.l.b16 %v8982
  %v9434 = vunpack.c.l.b16 %v8992
  %v9435 = vunpack.c.l.b16 %v9006
  %v9436 = vunpack.c.l.b16 %v9016
  %v9437 = vunpack.c.l.b16 %v9030
  %v9438 = vunpack.c.l.b16 %v9040
  %v9439 = vunpack.c.l.b16 %v9054
  %v9440 = vunpack.c.l.b16 %v9064
  %v9441 = vunpack.c.l.b16 %v9078
  %v9442 = vunpack.c.l.b16 %v9088
  %v9443 = vunpack.c.l.b16 %v9102
  %v9444 = vunpack.c.l.b16 %v9112
  %v9445 = vunpack.c.l.b16 %v9126
  %v9446 = vunpack.c.l.b16 %v9136
  %v9447 = vunpack.c.l.b16 %v9150
  %v9448 = vunpack.c.l.b16 %v9160
  %v9449 = vunpack.c.l.b16 %v9174
  %v9450 = vunpack.c.l.b16 %v9184
  %v9451 = vunpack.c.l.b16 %v9198
  %v9452 = vunpack.c.l.b16 %v9208
  %v9453 = vunpack.c.l.b16 %v9222
  %v9454 = vunpack.c.l.b16 %v9232
  %v9455 = vunpack.c.l.b16 %v9246
  %v9456 = vunpack.c.l.b16 %v9256
  %v9457 = vunpack.c.l.b16 %v9270
  %v9458 = vunpack.c.l.b16 %v9280
  %v9459 = vunpack.c.l.b16 %v9294
  %v9460 = vunpack.c.l.b16 %v9304
  %v9461 = vunpack.c.l.b16 %v9318
  %v9462 = vunpack.c.l.b16 %v9328
  %v9463 = vunpack.c.l.b16 %v9342
  %v9464 = vunpack.c.l.b16 %v9352
  %v9465 = vunpack.c.l.b16 %v9366
  %v9466 = vunpack.c.l.b16 %v9376
  %v9467 = vunpack.c.l.b16 %v9390
  %v9468 = vunpack.c.l.b16 %v9400
  %v9469 = vpack.c.b16 %v9406, %v9405
  %v9470 = vpack.c.b16 %v9408, %v9407
  %v9471 = vpack.c.b16 %v9410, %v9409
  %v9472 = vpack.c.b16 %v9412, %v9411
  %v9473 = vpack.c.b16 %v9414, %v9413
  %v9474 = vpack.c.b16 %v9416, %v9415
  %v9475 = vpack.c.b16 %v9418, %v9417
  %v9476 = vpack.c.b16 %v9420, %v9419
  %v9477 = vpack.c.b16 %v9422, %v9421
  %v9478 = vpack.c.b16 %v9424, %v9423
  %v9479 = vpack.c.b16 %v9426, %v9425
  %v9480 = vpack.c.b16 %v9428, %v9427
  %v9481 = vpack.c.b16 %v9430, %v9429
  %v9482 = vpack.c.b16 %v9432, %v9431
  %v9483 = vpack.c.b16 %v9434, %v9433
  %v9484 = vpack.c.b16 %v9436, %v9435
  %v9485 = vpack.c.b16 %v9438, %v9437
  %v9486 = vpack.c.b16 %v9440, %v9439
  %v9487 = vpack.c.b16 %v9442, %v9441
  %v9488 = vpack.c.b16 %v9444, %v9443
  %v9489 = vpack.c.b16 %v9446, %v9445
  %v9490 = vpack.c.b16 %v9448, %v9447
  %v9491 = vpack.c.b16 %v9450, %v9449
  %v9492 = vpack.c.b16 %v9452, %v9451
  %v9493 = vpack.c.b16 %v9454, %v9453
  %v9494 = vpack.c.b16 %v9456, %v9455
  %v9495 = vpack.c.b16 %v9458, %v9457
  %v9496 = vpack.c.b16 %v9460, %v9459
  %v9497 = vpack.c.b16 %v9462, %v9461
  %v9498 = vpack.c.b16 %v9464, %v9463
  %v9499 = vpack.c.b16 %v9466, %v9465
  %v9500 = vpack.c.b16 %v9468, %v9467
  %v9505 = vunpack.c.l.b16 %v9401
  %v9506 = vunpack.c.l.b16 %v9402
  %v9507 = vunpack.c.l.b16 %v9403
  %v9508 = vunpack.c.l.b16 %v9404
  %v9509 = vpack.c.b16 %v9506, %v9505
  %v9510 = vpack.c.b16 %v9508, %v9507
  %v9514 = vsel %vm2993, %v9469, 0
  %v9517 = vsel %vm2993, %v9470, 0
  %v9520 = vsel %vm2993, %v9471, 0
  %v9523 = vsel %vm2993, %v9472, 0
  %v9526 = vsel %vm2993, %v9473, 0
  %v9529 = vsel %vm2993, %v9474, 0
  %v9532 = vsel %vm2993, %v9475, 0
  %v9535 = vsel %vm2993, %v9476, 0
  %v9538 = vsel %vm2993, %v9477, 0
  %v9541 = vsel %vm2993, %v9478, 0
  %v9544 = vsel %vm2993, %v9479, 0
  %v9547 = vsel %vm2993, %v9480, 0
  %v9550 = vsel %vm2993, %v9481, 0
  %v9553 = vsel %vm2993, %v9482, 0
  %v9556 = vsel %vm2993, %v9483, 0
  %v9559 = vsel %vm2993, %v9484, 0
  %v9562 = vsel %vm2993, %v9485, 0
  %v9565 = vsel %vm2993, %v9486, 0
  %v9568 = vsel %vm2993, %v9487, 0
  %v9571 = vsel %vm2993, %v9488, 0
  %v9574 = vsel %vm2993, %v9489, 0
  %v9577 = vsel %vm2993, %v9490, 0
  %v9580 = vsel %vm2993, %v9491, 0
  %v9583 = vsel %vm2993, %v9492, 0
  %v9586 = vsel %vm2993, %v9493, 0
  %v9589 = vsel %vm2993, %v9494, 0
  %v9592 = vsel %vm2993, %v9495, 0
  %v9595 = vsel %vm2993, %v9496, 0
  %v9598 = vsel %vm2993, %v9497, 0
  %v9601 = vsel %vm2993, %v9498, 0
  %v9604 = vsel %vm2993, %v9499, 0
  %v9607 = vsel %vm2993, %v9500, 0
  %9609 = vmatprep.subr.bf16.mxu0 0
  %9610 = vmatpush1.bf16.msra.mxu0 %v9509
  %9611 = vmatprep.subr.bf16.mxu0 0
  %9612 = vmatpush1.bf16.msra.mxu0 %v9510
  %9613 = vmatprep.subr.bf16.mxu0 0
  %9614 = vmatpush1.bf16.msra.mxu0 0
  %9615 = vmatprep.subr.bf16.mxu0 0
  %9616 = vmatpush1.bf16.msra.mxu0 0
  %9617 = vmatprep.subr.bf16.mxu0 0
  %9618 = vmatpush1.bf16.msra.mxu0 0
  %9619 = vmatprep.subr.bf16.mxu0 0
  %9620 = vmatpush1.bf16.msra.mxu0 0
  %9621 = vmatprep.subr.bf16.mxu0 0
  %9622 = vmatpush1.bf16.msra.mxu0 0
  %9623 = vmatprep.subr.bf16.mxu0 0
  %9624 = vmatpush1.bf16.msra.mxu0 0
  %9625 = vmatprep.subr.bf16.mxu0 0
  %9626 = vmatpush1.bf16.msra.mxu0 0
  %9627 = vmatprep.subr.bf16.mxu0 0
  %9628 = vmatpush1.bf16.msra.mxu0 0
  %9629 = vmatprep.subr.bf16.mxu0 0
  %9630 = vmatpush1.bf16.msra.mxu0 0
  %9631 = vmatprep.subr.bf16.mxu0 0
  %9632 = vmatpush1.bf16.msra.mxu0 0
  %9633 = vmatprep.subr.bf16.mxu0 0
  %9634 = vmatpush1.bf16.msra.mxu0 0
  %9635 = vmatprep.subr.bf16.mxu0 0
  %9636 = vmatpush1.bf16.msra.mxu0 0
  %9637 = vmatprep.subr.bf16.mxu0 0
  %9638 = vmatpush1.bf16.msra.mxu0 0
  %9639 = vmatprep.subr.bf16.mxu0 0
  %9640 = vmatpush1.bf16.msra.mxu0 0
  %9641 = vmatprep.mubr.bf16.mxu0 0
  %9642 = vmatmul.mubr.bf16.gmra.mrb[0].mxu0 %v9514
  %v9643 = vpop.f32.mrb[0].mxu0
  %v9644 = vadd.f32 0.0, %v9643
  %v9645 = vpop.f32.mrb[0].mxu0
  %v9646 = vpop.f32.mrb[0].mxu0
  %v9647 = vadd.f32 0.0, %v9646
  %v9648 = vpop.f32.mrb[0].mxu0
  %9649 = vmatprep.mubr.bf16.mxu0 0
  %9650 = vmatmul.mubr.bf16.gmra.mrb[0].mxu0 %v9517
  %v9651 = vpop.f32.mrb[0].mxu0
  %v9652 = vadd.f32 0.0, %v9651
  %v9653 = vpop.f32.mrb[0].mxu0
  %v9654 = vpop.f32.mrb[0].mxu0
  %v9655 = vadd.f32 0.0, %v9654
  %v9656 = vpop.f32.mrb[0].mxu0
  %9657 = vmatprep.mubr.bf16.mxu0 0
  %9658 = vmatmul.mubr.bf16.gmra.mrb[0].mxu0 %v9520
  %v9659 = vpop.f32.mrb[0].mxu0
  %v9660 = vadd.f32 0.0, %v9659
  %v9661 = vpop.f32.mrb[0].mxu0
  %v9662 = vpop.f32.mrb[0].mxu0
  %v9663 = vadd.f32 0.0, %v9662
  %v9664 = vpop.f32.mrb[0].mxu0
  %9665 = vmatprep.mubr.bf16.mxu0 0
  %9666 = vmatmul.mubr.bf16.gmra.mrb[0].mxu0 %v9523
  %v9667 = vpop.f32.mrb[0].mxu0
  %v9668 = vadd.f32 0.0, %v9667
  %v9669 = vpop.f32.mrb[0].mxu0
  %v9670 = vpop.f32.mrb[0].mxu0
  %v9671 = vadd.f32 0.0, %v9670
  %v9672 = vpop.f32.mrb[0].mxu0
  %9673 = vmatprep.mubr.bf16.mxu0 0
  %9674 = vmatmul.mubr.bf16.gmra.mrb[0].mxu0 %v9526
  %v9675 = vpop.f32.mrb[0].mxu0
  %v9676 = vadd.f32 0.0, %v9675
  %v9677 = vpop.f32.mrb[0].mxu0
  %v9678 = vpop.f32.mrb[0].mxu0
  %v9679 = vadd.f32 0.0, %v9678
  %v9680 = vpop.f32.mrb[0].mxu0
  %9681 = vmatprep.mubr.bf16.mxu0 0
  %9682 = vmatmul.mubr.bf16.gmra.mrb[0].mxu0 %v9529
  %v9683 = vpop.f32.mrb[0].mxu0
  %v9684 = vadd.f32 0.0, %v9683
  %v9685 = vpop.f32.mrb[0].mxu0
  %v9686 = vpop.f32.mrb[0].mxu0
  %v9687 = vadd.f32 0.0, %v9686
  %v9688 = vpop.f32.mrb[0].mxu0
  %9689 = vmatprep.mubr.bf16.mxu0 0
  %9690 = vmatmul.mubr.bf16.gmra.mrb[0].mxu0 %v9532
  %v9691 = vpop.f32.mrb[0].mxu0
  %v9692 = vadd.f32 0.0, %v9691
  %v9693 = vpop.f32.mrb[0].mxu0
  %v9694 = vpop.f32.mrb[0].mxu0
  %v9695 = vadd.f32 0.0, %v9694
  %v9696 = vpop.f32.mrb[0].mxu0
  %9697 = vmatprep.mubr.bf16.mxu0 0
  %9698 = vmatmul.mubr.bf16.gmra.mrb[0].mxu0 %v9535
  %v9699 = vpop.f32.mrb[0].mxu0
  %v9700 = vadd.f32 0.0, %v9699
  %v9701 = vpop.f32.mrb[0].mxu0
  %v9702 = vpop.f32.mrb[0].mxu0
  %v9703 = vadd.f32 0.0, %v9702
  %v9704 = vpop.f32.mrb[0].mxu0
  %9705 = vmatprep.mubr.bf16.mxu0 0
  %9706 = vmatmul.mubr.bf16.gmra.mrb[0].mxu0 %v9538
  %v9707 = vpop.f32.mrb[0].mxu0
  %v9708 = vadd.f32 0.0, %v9707
  %v9709 = vpop.f32.mrb[0].mxu0
  %v9710 = vpop.f32.mrb[0].mxu0
  %v9711 = vadd.f32 0.0, %v9710
  %v9712 = vpop.f32.mrb[0].mxu0
  %9713 = vmatprep.mubr.bf16.mxu0 0
  %9714 = vmatmul.mubr.bf16.gmra.mrb[0].mxu0 %v9541
  %v9715 = vpop.f32.mrb[0].mxu0
  %v9716 = vadd.f32 0.0, %v9715
  %v9717 = vpop.f32.mrb[0].mxu0
  %v9718 = vpop.f32.mrb[0].mxu0
  %v9719 = vadd.f32 0.0, %v9718
  %v9720 = vpop.f32.mrb[0].mxu0
  %9721 = vmatprep.mubr.bf16.mxu0 0
  %9722 = vmatmul.mubr.bf16.gmra.mrb[0].mxu0 %v9544
  %v9723 = vpop.f32.mrb[0].mxu0
  %v9724 = vadd.f32 0.0, %v9723
  %v9725 = vpop.f32.mrb[0].mxu0
  %v9726 = vpop.f32.mrb[0].mxu0
  %v9727 = vadd.f32 0.0, %v9726
  %v9728 = vpop.f32.mrb[0].mxu0
  %9729 = vmatprep.mubr.bf16.mxu0 0
  %9730 = vmatmul.mubr.bf16.gmra.mrb[0].mxu0 %v9547
  %v9731 = vpop.f32.mrb[0].mxu0
  %v9732 = vadd.f32 0.0, %v9731
  %v9733 = vpop.f32.mrb[0].mxu0
  %v9734 = vpop.f32.mrb[0].mxu0
  %v9735 = vadd.f32 0.0, %v9734
  %v9736 = vpop.f32.mrb[0].mxu0
  %9737 = vmatprep.mubr.bf16.mxu0 0
  %9738 = vmatmul.mubr.bf16.gmra.mrb[0].mxu0 %v9550
  %v9739 = vpop.f32.mrb[0].mxu0
  %v9740 = vadd.f32 0.0, %v9739
  %v9741 = vpop.f32.mrb[0].mxu0
  %v9742 = vpop.f32.mrb[0].mxu0
  %v9743 = vadd.f32 0.0, %v9742
  %v9744 = vpop.f32.mrb[0].mxu0
  %9745 = vmatprep.mubr.bf16.mxu0 0
  %9746 = vmatmul.mubr.bf16.gmra.mrb[0].mxu0 %v9553
  %v9747 = vpop.f32.mrb[0].mxu0
  %v9748 = vadd.f32 0.0, %v9747
  %v9749 = vpop.f32.mrb[0].mxu0
  %v9750 = vpop.f32.mrb[0].mxu0
  %v9751 = vadd.f32 0.0, %v9750
  %v9752 = vpop.f32.mrb[0].mxu0
  %9753 = vmatprep.mubr.bf16.mxu0 0
  %9754 = vmatmul.mubr.bf16.gmra.mrb[0].mxu0 %v9556
  %v9755 = vpop.f32.mrb[0].mxu0
  %v9756 = vadd.f32 0.0, %v9755
  %v9757 = vpop.f32.mrb[0].mxu0
  %v9758 = vpop.f32.mrb[0].mxu0
  %v9759 = vadd.f32 0.0, %v9758
  %v9760 = vpop.f32.mrb[0].mxu0
  %9761 = vmatprep.mubr.bf16.mxu0 0
  %9762 = vmatmul.mubr.bf16.gmra.mrb[0].mxu0 %v9559
  %v9763 = vpop.f32.mrb[0].mxu0
  %v9764 = vadd.f32 0.0, %v9763
  %v9765 = vpop.f32.mrb[0].mxu0
  %v9766 = vpop.f32.mrb[0].mxu0
  %v9767 = vadd.f32 0.0, %v9766
  %v9768 = vpop.f32.mrb[0].mxu0
  %9769 = vmatprep.mubr.bf16.mxu0 0
  %9770 = vmatmul.mubr.bf16.gmra.mrb[0].mxu0 %v9562
  %v9771 = vpop.f32.mrb[0].mxu0
  %v9772 = vadd.f32 0.0, %v9771
  %v9773 = vpop.f32.mrb[0].mxu0
  %v9774 = vpop.f32.mrb[0].mxu0
  %v9775 = vadd.f32 0.0, %v9774
  %v9776 = vpop.f32.mrb[0].mxu0
  %9777 = vmatprep.mubr.bf16.mxu0 0
  %9778 = vmatmul.mubr.bf16.gmra.mrb[0].mxu0 %v9565
  %v9779 = vpop.f32.mrb[0].mxu0
  %v9780 = vadd.f32 0.0, %v9779
  %v9781 = vpop.f32.mrb[0].mxu0
  %v9782 = vpop.f32.mrb[0].mxu0
  %v9783 = vadd.f32 0.0, %v9782
  %v9784 = vpop.f32.mrb[0].mxu0
  %9785 = vmatprep.mubr.bf16.mxu0 0
  %9786 = vmatmul.mubr.bf16.gmra.mrb[0].mxu0 %v9568
  %v9787 = vpop.f32.mrb[0].mxu0
  %v9788 = vadd.f32 0.0, %v9787
  %v9789 = vpop.f32.mrb[0].mxu0
  %v9790 = vpop.f32.mrb[0].mxu0
  %v9791 = vadd.f32 0.0, %v9790
  %v9792 = vpop.f32.mrb[0].mxu0
  %9793 = vmatprep.mubr.bf16.mxu0 0
  %9794 = vmatmul.mubr.bf16.gmra.mrb[0].mxu0 %v9571
  %v9795 = vpop.f32.mrb[0].mxu0
  %v9796 = vadd.f32 0.0, %v9795
  %v9797 = vpop.f32.mrb[0].mxu0
  %v9798 = vpop.f32.mrb[0].mxu0
  %v9799 = vadd.f32 0.0, %v9798
  %v9800 = vpop.f32.mrb[0].mxu0
  %9801 = vmatprep.mubr.bf16.mxu0 0
  %9802 = vmatmul.mubr.bf16.gmra.mrb[0].mxu0 %v9574
  %v9803 = vpop.f32.mrb[0].mxu0
  %v9804 = vadd.f32 0.0, %v9803
  %v9805 = vpop.f32.mrb[0].mxu0
  %v9806 = vpop.f32.mrb[0].mxu0
  %v9807 = vadd.f32 0.0, %v9806
  %v9808 = vpop.f32.mrb[0].mxu0
  %9809 = vmatprep.mubr.bf16.mxu0 0
  %9810 = vmatmul.mubr.bf16.gmra.mrb[0].mxu0 %v9577
  %v9811 = vpop.f32.mrb[0].mxu0
  %v9812 = vadd.f32 0.0, %v9811
  %v9813 = vpop.f32.mrb[0].mxu0
  %v9814 = vpop.f32.mrb[0].mxu0
  %v9815 = vadd.f32 0.0, %v9814
  %v9816 = vpop.f32.mrb[0].mxu0
  %9817 = vmatprep.mubr.bf16.mxu0 0
  %9818 = vmatmul.mubr.bf16.gmra.mrb[0].mxu0 %v9580
  %v9819 = vpop.f32.mrb[0].mxu0
  %v9820 = vadd.f32 0.0, %v9819
  %v9821 = vpop.f32.mrb[0].mxu0
  %v9822 = vpop.f32.mrb[0].mxu0
  %v9823 = vadd.f32 0.0, %v9822
  %v9824 = vpop.f32.mrb[0].mxu0
  %9825 = vmatprep.mubr.bf16.mxu0 0
  %9826 = vmatmul.mubr.bf16.gmra.mrb[0].mxu0 %v9583
  %v9827 = vpop.f32.mrb[0].mxu0
  %v9828 = vadd.f32 0.0, %v9827
  %v9829 = vpop.f32.mrb[0].mxu0
  %v9830 = vpop.f32.mrb[0].mxu0
  %v9831 = vadd.f32 0.0, %v9830
  %v9832 = vpop.f32.mrb[0].mxu0
  %9833 = vmatprep.mubr.bf16.mxu0 0
  %9834 = vmatmul.mubr.bf16.gmra.mrb[0].mxu0 %v9586
  %v9835 = vpop.f32.mrb[0].mxu0
  %v9836 = vadd.f32 0.0, %v9835
  %v9837 = vpop.f32.mrb[0].mxu0
  %v9838 = vpop.f32.mrb[0].mxu0
  %v9839 = vadd.f32 0.0, %v9838
  %v9840 = vpop.f32.mrb[0].mxu0
  %9841 = vmatprep.mubr.bf16.mxu0 0
  %9842 = vmatmul.mubr.bf16.gmra.mrb[0].mxu0 %v9589
  %v9843 = vpop.f32.mrb[0].mxu0
  %v9844 = vadd.f32 0.0, %v9843
  %v9845 = vpop.f32.mrb[0].mxu0
  %v9846 = vpop.f32.mrb[0].mxu0
  %v9847 = vadd.f32 0.0, %v9846
  %v9848 = vpop.f32.mrb[0].mxu0
  %9849 = vmatprep.mubr.bf16.mxu0 0
  %9850 = vmatmul.mubr.bf16.gmra.mrb[0].mxu0 %v9592
  %v9851 = vpop.f32.mrb[0].mxu0
  %v9852 = vadd.f32 0.0, %v9851
  %v9853 = vpop.f32.mrb[0].mxu0
  %v9854 = vpop.f32.mrb[0].mxu0
  %v9855 = vadd.f32 0.0, %v9854
  %v9856 = vpop.f32.mrb[0].mxu0
  %9857 = vmatprep.mubr.bf16.mxu0 0
  %9858 = vmatmul.mubr.bf16.gmra.mrb[0].mxu0 %v9595
  %v9859 = vpop.f32.mrb[0].mxu0
  %v9860 = vadd.f32 0.0, %v9859
  %v9861 = vpop.f32.mrb[0].mxu0
  %v9862 = vpop.f32.mrb[0].mxu0
  %v9863 = vadd.f32 0.0, %v9862
  %v9864 = vpop.f32.mrb[0].mxu0
  %9865 = vmatprep.mubr.bf16.mxu0 0
  %9866 = vmatmul.mubr.bf16.gmra.mrb[0].mxu0 %v9598
  %v9867 = vpop.f32.mrb[0].mxu0
  %v9868 = vadd.f32 0.0, %v9867
  %v9869 = vpop.f32.mrb[0].mxu0
  %v9870 = vpop.f32.mrb[0].mxu0
  %v9871 = vadd.f32 0.0, %v9870
  %v9872 = vpop.f32.mrb[0].mxu0
  %9873 = vmatprep.mubr.bf16.mxu0 0
  %9874 = vmatmul.mubr.bf16.gmra.mrb[0].mxu0 %v9601
  %v9875 = vpop.f32.mrb[0].mxu0
  %v9876 = vadd.f32 0.0, %v9875
  %v9877 = vpop.f32.mrb[0].mxu0
  %v9878 = vpop.f32.mrb[0].mxu0
  %v9879 = vadd.f32 0.0, %v9878
  %v9880 = vpop.f32.mrb[0].mxu0
  %9881 = vmatprep.mubr.bf16.mxu0 0
  %9882 = vmatmul.mubr.bf16.gmra.mrb[0].mxu0 %v9604
  %v9883 = vpop.f32.mrb[0].mxu0
  %v9884 = vadd.f32 0.0, %v9883
  %v9885 = vpop.f32.mrb[0].mxu0
  %v9886 = vpop.f32.mrb[0].mxu0
  %v9887 = vadd.f32 0.0, %v9886
  %v9888 = vpop.f32.mrb[0].mxu0
  %9889 = vmatprep.mubr.bf16.mxu0 0
  %9890 = vmatmul.mubr.bf16.gmra.mrb[0].mxu0 %v9607
  %v9891 = vpop.f32.mrb[0].mxu0
  %v9892 = vadd.f32 0.0, %v9891
  %v9893 = vpop.f32.mrb[0].mxu0
  %v9894 = vpop.f32.mrb[0].mxu0
  %v9895 = vadd.f32 0.0, %v9894
  %v9896 = vpop.f32.mrb[0].mxu0
  %9897 = vdwg.mxu0
  %v9898 = vadd.f32 %v8473, %v9644
  %v9899 = vadd.f32 %v8474, %v9647
  %v9900 = vadd.f32 %v8475, %v9652
  %v9901 = vadd.f32 %v8476, %v9655
  %v9902 = vadd.f32 %v8477, %v9660
  %v9903 = vadd.f32 %v8478, %v9663
  %v9904 = vadd.f32 %v8479, %v9668
  %v9905 = vadd.f32 %v8480, %v9671
  %v9906 = vadd.f32 %v8481, %v9676
  %v9907 = vadd.f32 %v8482, %v9679
  %v9908 = vadd.f32 %v8483, %v9684
  %v9909 = vadd.f32 %v8484, %v9687
  %v9910 = vadd.f32 %v8485, %v9692
  %v9911 = vadd.f32 %v8486, %v9695
  %v9912 = vadd.f32 %v8487, %v9700
  %v9913 = vadd.f32 %v8488, %v9703
  %v9914 = vadd.f32 %v8489, %v9708
  %v9915 = vadd.f32 %v8490, %v9711
  %v9916 = vadd.f32 %v8491, %v9716
  %v9917 = vadd.f32 %v8492, %v9719
  %v9918 = vadd.f32 %v8493, %v9724
  %v9919 = vadd.f32 %v8494, %v9727
  %v9920 = vadd.f32 %v8495, %v9732
  %v9921 = vadd.f32 %v8496, %v9735
  %v9922 = vadd.f32 %v8497, %v9740
  %v9923 = vadd.f32 %v8498, %v9743
  %v9924 = vadd.f32 %v8499, %v9748
  %v9925 = vadd.f32 %v8500, %v9751
  %v9926 = vadd.f32 %v8501, %v9756
  %v9927 = vadd.f32 %v8502, %v9759
  %v9928 = vadd.f32 %v8503, %v9764
  %v9929 = vadd.f32 %v8504, %v9767
  %v9930 = vadd.f32 %v8505, %v9772
  %v9931 = vadd.f32 %v8506, %v9775
  %v9932 = vadd.f32 %v8507, %v9780
  %v9933 = vadd.f32 %v8508, %v9783
  %v9934 = vadd.f32 %v8509, %v9788
  %v9935 = vadd.f32 %v8510, %v9791
  %v9936 = vadd.f32 %v8511, %v9796
  %v9937 = vadd.f32 %v8512, %v9799
  %v9938 = vadd.f32 %v8513, %v9804
  %v9939 = vadd.f32 %v8514, %v9807
  %v9940 = vadd.f32 %v8515, %v9812
  %v9941 = vadd.f32 %v8516, %v9815
  %v9942 = vadd.f32 %v8517, %v9820
  %v9943 = vadd.f32 %v8518, %v9823
  %v9944 = vadd.f32 %v8519, %v9828
  %v9945 = vadd.f32 %v8520, %v9831
  %v9946 = vadd.f32 %v8521, %v9836
  %v9947 = vadd.f32 %v8522, %v9839
  %v9948 = vadd.f32 %v8523, %v9844
  %v9949 = vadd.f32 %v8524, %v9847
  %v9950 = vadd.f32 %v8525, %v9852
  %v9951 = vadd.f32 %v8526, %v9855
  %v9952 = vadd.f32 %v8527, %v9860
  %v9953 = vadd.f32 %v8528, %v9863
  %v9954 = vadd.f32 %v8529, %v9868
  %v9955 = vadd.f32 %v8530, %v9871
  %v9956 = vadd.f32 %v8531, %v9876
  %v9957 = vadd.f32 %v8532, %v9879
  %v9958 = vadd.f32 %v8533, %v9884
  %v9959 = vadd.f32 %v8534, %v9887
  %v9960 = vadd.f32 %v8535, %v9892
  %v9961 = vadd.f32 %v8536, %v9895
  %v9962 = vld [vmem:[%s7847] sm:$0xe]
  %v9963 = vld [vmem:[%s7847 + $0xc] sm:$0xe]
  %v9964 = vld [vmem:[%s7847 + $0x18] sm:$0xe]
  %v9965 = vld [vmem:[%s7847 + $0x24] sm:$0xe]
  %v9966 = vld [vmem:[%s7847 + $0x30] sm:$0xe]
  %v9967 = vld [vmem:[%s7847 + $0x3c] sm:$0xe]
  %v9968 = vld [vmem:[%s7847 + $0x48] sm:$0xe]
  %v9969 = vld [vmem:[%s7847 + $0x54] sm:$0xe]
  %v9970 = vld [vmem:[%s7847 + $0x60] sm:$0xe]
  %v9971 = vld [vmem:[%s7847 + $0x6c] sm:$0xe]
  %v9972 = vld [vmem:[%s7847 + $0x78] sm:$0xe]
  %v9973 = vld [vmem:[%s7847 + $0x84] sm:$0xe]
  %v9974 = vld [vmem:[%s7847 + $0x90] sm:$0xe]
  %v9975 = vld [vmem:[%s7847 + $0x9c] sm:$0xe]
  %v9976 = vld [vmem:[%s7847 + $0xa8] sm:$0xe]
  %v9977 = vld [vmem:[%s7847 + $0xb4] sm:$0xe]
  %v9978 = vld [vmem:[%s7847 + $0xd8] sm:$0xe]
  %v9979 = vld [vmem:[%s7847 + $0xe4] sm:$0xe]
  %v9980 = vld [vmem:[%s7847 + $0xf0] sm:$0xe]
  %v9981 = vld [vmem:[%s7847 + $0xfc] sm:$0xe]
  %v9982 = vld [vmem:[%s7847 + $0x108] sm:$0xe]
  %v9983 = vld [vmem:[%s7847 + $0x114] sm:$0xe]
  %v9984 = vld [vmem:[%s7847 + $0x120] sm:$0xe]
  %v9985 = vld [vmem:[%s7847 + $0x12c] sm:$0xe]
  %v9986 = vld [vmem:[%s7847 + $0x138] sm:$0xe]
  %v9987 = vld [vmem:[%s7847 + $0x144] sm:$0xe]
  %v9988 = vld [vmem:[%s7847 + $0x150] sm:$0xe]
  %v9989 = vld [vmem:[%s7847 + $0x15c] sm:$0xe]
  %v9990 = vld [vmem:[%s7847 + $0x168] sm:$0xe]
  %v9991 = vld [vmem:[%s7847 + $0x174] sm:$0xe]
  %v9992 = vld [vmem:[%s7847 + $0x180] sm:$0xe]
  %v9993 = vld [vmem:[%s7847 + $0x18c] sm:$0xe]
  %v10090 = vrot.slane %v9962, 5
  %v10091 = vrot.slane %v10090, 4
  %v10092 = vrot.slane %v8538, 5
  %v10093 = vsel %vm4034, %v10091, %v10092
  %v10094 = vrot.slane %v10092, 4
  %v10095 = vrot.slane %v8539, 5
  %v10096 = vsel %vm4034, %v10094, %v10095
  %v10097 = vrot.slane %v9963, 5
  %v10098 = vrot.slane %v10097, 4
  %v10099 = vrot.slane %v8541, 5
  %v10100 = vsel %vm4034, %v10098, %v10099
  %v10101 = vrot.slane %v10099, 4
  %v10102 = vrot.slane %v8542, 5
  %v10103 = vsel %vm4034, %v10101, %v10102
  %v10104 = vrot.slane %v9964, 5
  %v10105 = vrot.slane %v10104, 4
  %v10106 = vrot.slane %v8544, 5
  %v10107 = vsel %vm4034, %v10105, %v10106
  %v10108 = vrot.slane %v10106, 4
  %v10109 = vrot.slane %v8545, 5
  %v10110 = vsel %vm4034, %v10108, %v10109
  %v10111 = vrot.slane %v9965, 5
  %v10112 = vrot.slane %v10111, 4
  %v10113 = vrot.slane %v8547, 5
  %v10114 = vsel %vm4034, %v10112, %v10113
  %v10115 = vrot.slane %v10113, 4
  %v10116 = vrot.slane %v8548, 5
  %v10117 = vsel %vm4034, %v10115, %v10116
  %v10118 = vrot.slane %v9966, 5
  %v10119 = vrot.slane %v10118, 4
  %v10120 = vrot.slane %v8550, 5
  %v10121 = vsel %vm4034, %v10119, %v10120
  %v10122 = vrot.slane %v10120, 4
  %v10123 = vrot.slane %v8551, 5
  %v10124 = vsel %vm4034, %v10122, %v10123
  %v10125 = vrot.slane %v9967, 5
  %v10126 = vrot.slane %v10125, 4
  %v10127 = vrot.slane %v8553, 5
  %v10128 = vsel %vm4034, %v10126, %v10127
  %v10129 = vrot.slane %v10127, 4
  %v10130 = vrot.slane %v8554, 5
  %v10131 = vsel %vm4034, %v10129, %v10130
  %v10132 = vrot.slane %v9968, 5
  %v10133 = vrot.slane %v10132, 4
  %v10134 = vrot.slane %v8556, 5
  %v10135 = vsel %vm4034, %v10133, %v10134
  %v10136 = vrot.slane %v10134, 4
  %v10137 = vrot.slane %v8557, 5
  %v10138 = vsel %vm4034, %v10136, %v10137
  %v10139 = vrot.slane %v9969, 5
  %v10140 = vrot.slane %v10139, 4
  %v10141 = vrot.slane %v8559, 5
  %v10142 = vsel %vm4034, %v10140, %v10141
  %v10143 = vrot.slane %v10141, 4
  %v10144 = vrot.slane %v8560, 5
  %v10145 = vsel %vm4034, %v10143, %v10144
  %v10146 = vrot.slane %v9970, 5
  %v10147 = vrot.slane %v10146, 4
  %v10148 = vrot.slane %v8562, 5
  %v10149 = vsel %vm4034, %v10147, %v10148
  %v10150 = vrot.slane %v10148, 4
  %v10151 = vrot.slane %v8563, 5
  %v10152 = vsel %vm4034, %v10150, %v10151
  %v10153 = vrot.slane %v9971, 5
  %v10154 = vrot.slane %v10153, 4
  %v10155 = vrot.slane %v8565, 5
  %v10156 = vsel %vm4034, %v10154, %v10155
  %v10157 = vrot.slane %v10155, 4
  %v10158 = vrot.slane %v8566, 5
  %v10159 = vsel %vm4034, %v10157, %v10158
  %v10160 = vrot.slane %v9972, 5
  %v10161 = vrot.slane %v10160, 4
  %v10162 = vrot.slane %v8568, 5
  %v10163 = vsel %vm4034, %v10161, %v10162
  %v10164 = vrot.slane %v10162, 4
  %v10165 = vrot.slane %v8569, 5
  %v10166 = vsel %vm4034, %v10164, %v10165
  %v10167 = vrot.slane %v9973, 5
  %v10168 = vrot.slane %v10167, 4
  %v10169 = vrot.slane %v8571, 5
  %v10170 = vsel %vm4034, %v10168, %v10169
  %v10171 = vrot.slane %v10169, 4
  %v10172 = vrot.slane %v8572, 5
  %v10173 = vsel %vm4034, %v10171, %v10172
  %v10174 = vrot.slane %v9974, 5
  %v10175 = vrot.slane %v10174, 4
  %v10176 = vrot.slane %v8574, 5
  %v10177 = vsel %vm4034, %v10175, %v10176
  %v10178 = vrot.slane %v10176, 4
  %v10179 = vrot.slane %v8575, 5
  %v10180 = vsel %vm4034, %v10178, %v10179
  %v10181 = vrot.slane %v9975, 5
  %v10182 = vrot.slane %v10181, 4
  %v10183 = vrot.slane %v8577, 5
  %v10184 = vsel %vm4034, %v10182, %v10183
  %v10185 = vrot.slane %v10183, 4
  %v10186 = vrot.slane %v8578, 5
  %v10187 = vsel %vm4034, %v10185, %v10186
  %v10188 = vrot.slane %v9976, 5
  %v10189 = vrot.slane %v10188, 4
  %v10190 = vrot.slane %v8580, 5
  %v10191 = vsel %vm4034, %v10189, %v10190
  %v10192 = vrot.slane %v10190, 4
  %v10193 = vrot.slane %v8581, 5
  %v10194 = vsel %vm4034, %v10192, %v10193
  %v10195 = vrot.slane %v9977, 5
  %v10196 = vrot.slane %v10195, 4
  %v10197 = vrot.slane %v8583, 5
  %v10198 = vsel %vm4034, %v10196, %v10197
  %v10199 = vrot.slane %v10197, 4
  %v10200 = vrot.slane %v8584, 5
  %v10201 = vsel %vm4034, %v10199, %v10200
  %v10202 = vrot.slane %v9978, 5
  %v10203 = vrot.slane %v10202, 4
  %v10204 = vrot.slane %v8586, 5
  %v10205 = vsel %vm4034, %v10203, %v10204
  %v10206 = vrot.slane %v10204, 4
  %v10207 = vrot.slane %v8587, 5
  %v10208 = vsel %vm4034, %v10206, %v10207
  %v10209 = vrot.slane %v9979, 5
  %v10210 = vrot.slane %v10209, 4
  %v10211 = vrot.slane %v8589, 5
  %v10212 = vsel %vm4034, %v10210, %v10211
  %v10213 = vrot.slane %v10211, 4
  %v10214 = vrot.slane %v8590, 5
  %v10215 = vsel %vm4034, %v10213, %v10214
  %v10216 = vrot.slane %v9980, 5
  %v10217 = vrot.slane %v10216, 4
  %v10218 = vrot.slane %v8592, 5
  %v10219 = vsel %vm4034, %v10217, %v10218
  %v10220 = vrot.slane %v10218, 4
  %v10221 = vrot.slane %v8593, 5
  %v10222 = vsel %vm4034, %v10220, %v10221
  %v10223 = vrot.slane %v9981, 5
  %v10224 = vrot.slane %v10223, 4
  %v10225 = vrot.slane %v8595, 5
  %v10226 = vsel %vm4034, %v10224, %v10225
  %v10227 = vrot.slane %v10225, 4
  %v10228 = vrot.slane %v8596, 5
  %v10229 = vsel %vm4034, %v10227, %v10228
  %v10230 = vrot.slane %v9982, 5
  %v10231 = vrot.slane %v10230, 4
  %v10232 = vrot.slane %v8598, 5
  %v10233 = vsel %vm4034, %v10231, %v10232
  %v10234 = vrot.slane %v10232, 4
  %v10235 = vrot.slane %v8599, 5
  %v10236 = vsel %vm4034, %v10234, %v10235
  %v10237 = vrot.slane %v9983, 5
  %v10238 = vrot.slane %v10237, 4
  %v10239 = vrot.slane %v8601, 5
  %v10240 = vsel %vm4034, %v10238, %v10239
  %v10241 = vrot.slane %v10239, 4
  %v10242 = vrot.slane %v8602, 5
  %v10243 = vsel %vm4034, %v10241, %v10242
  %v10244 = vrot.slane %v9984, 5
  %v10245 = vrot.slane %v10244, 4
  %v10246 = vrot.slane %v8604, 5
  %v10247 = vsel %vm4034, %v10245, %v10246
  %v10248 = vrot.slane %v10246, 4
  %v10249 = vrot.slane %v8605, 5
  %v10250 = vsel %vm4034, %v10248, %v10249
  %v10251 = vrot.slane %v9985, 5
  %v10252 = vrot.slane %v10251, 4
  %v10253 = vrot.slane %v8607, 5
  %v10254 = vsel %vm4034, %v10252, %v10253
  %v10255 = vrot.slane %v10253, 4
  %v10256 = vrot.slane %v8608, 5
  %v10257 = vsel %vm4034, %v10255, %v10256
  %v10258 = vrot.slane %v9986, 5
  %v10259 = vrot.slane %v10258, 4
  %v10260 = vrot.slane %v8610, 5
  %v10261 = vsel %vm4034, %v10259, %v10260
  %v10262 = vrot.slane %v10260, 4
  %v10263 = vrot.slane %v8611, 5
  %v10264 = vsel %vm4034, %v10262, %v10263
  %v10265 = vrot.slane %v9987, 5
  %v10266 = vrot.slane %v10265, 4
  %v10267 = vrot.slane %v8613, 5
  %v10268 = vsel %vm4034, %v10266, %v10267
  %v10269 = vrot.slane %v10267, 4
  %v10270 = vrot.slane %v8614, 5
  %v10271 = vsel %vm4034, %v10269, %v10270
  %v10272 = vrot.slane %v9988, 5
  %v10273 = vrot.slane %v10272, 4
  %v10274 = vrot.slane %v8616, 5
  %v10275 = vsel %vm4034, %v10273, %v10274
  %v10276 = vrot.slane %v10274, 4
  %v10277 = vrot.slane %v8617, 5
  %v10278 = vsel %vm4034, %v10276, %v10277
  %v10279 = vrot.slane %v9989, 5
  %v10280 = vrot.slane %v10279, 4
  %v10281 = vrot.slane %v8619, 5
  %v10282 = vsel %vm4034, %v10280, %v10281
  %v10283 = vrot.slane %v10281, 4
  %v10284 = vrot.slane %v8620, 5
  %v10285 = vsel %vm4034, %v10283, %v10284
  %v10286 = vrot.slane %v9990, 5
  %v10287 = vrot.slane %v10286, 4
  %v10288 = vrot.slane %v8622, 5
  %v10289 = vsel %vm4034, %v10287, %v10288
  %v10290 = vrot.slane %v10288, 4
  %v10291 = vrot.slane %v8623, 5
  %v10292 = vsel %vm4034, %v10290, %v10291
  %v10293 = vrot.slane %v9991, 5
  %v10294 = vrot.slane %v10293, 4
  %v10295 = vrot.slane %v8625, 5
  %v10296 = vsel %vm4034, %v10294, %v10295
  %v10297 = vrot.slane %v10295, 4
  %v10298 = vrot.slane %v8626, 5
  %v10299 = vsel %vm4034, %v10297, %v10298
  %v10300 = vrot.slane %v9992, 5
  %v10301 = vrot.slane %v10300, 4
  %v10302 = vrot.slane %v8628, 5
  %v10303 = vsel %vm4034, %v10301, %v10302
  %v10304 = vrot.slane %v10302, 4
  %v10305 = vrot.slane %v8629, 5
  %v10306 = vsel %vm4034, %v10304, %v10305
  %v10307 = vrot.slane %v9993, 5
  %v10308 = vrot.slane %v10307, 4
  %v10309 = vrot.slane %v8631, 5
  %v10310 = vsel %vm4034, %v10308, %v10309
  %v10311 = vrot.slane %v10309, 4
  %v10312 = vrot.slane %v8632, 5
  %v10313 = vsel %vm4034, %v10311, %v10312
  %v10314 = vld [vmem:[%s2 + $0x80] sm:$0xf]
  %v10315 = vld [vmem:[%s2 + $0x84] sm:$0xf]
  %v10316 = vld [vmem:[%s2 + $0x88] sm:$0xf]
  %v10317 = vld [vmem:[%s2 + $0x8c] sm:$0xf]
  %v10318 = vunpack.c.l.b16 %v10093
  %v10319 = vunpack.c.l.b16 %v10096
  %v10320 = vunpack.c.l.b16 %v10100
  %v10321 = vunpack.c.l.b16 %v10103
  %v10322 = vunpack.c.l.b16 %v10107
  %v10323 = vunpack.c.l.b16 %v10110
  %v10324 = vunpack.c.l.b16 %v10114
  %v10325 = vunpack.c.l.b16 %v10117
  %v10326 = vunpack.c.l.b16 %v10121
  %v10327 = vunpack.c.l.b16 %v10124
  %v10328 = vunpack.c.l.b16 %v10128
  %v10329 = vunpack.c.l.b16 %v10131
  %v10330 = vunpack.c.l.b16 %v10135
  %v10331 = vunpack.c.l.b16 %v10138
  %v10332 = vunpack.c.l.b16 %v10142
  %v10333 = vunpack.c.l.b16 %v10145
  %v10334 = vunpack.c.l.b16 %v10149
  %v10335 = vunpack.c.l.b16 %v10152
  %v10336 = vunpack.c.l.b16 %v10156
  %v10337 = vunpack.c.l.b16 %v10159
  %v10338 = vunpack.c.l.b16 %v10163
  %v10339 = vunpack.c.l.b16 %v10166
  %v10340 = vunpack.c.l.b16 %v10170
  %v10341 = vunpack.c.l.b16 %v10173
  %v10342 = vunpack.c.l.b16 %v10177
  %v10343 = vunpack.c.l.b16 %v10180
  %v10344 = vunpack.c.l.b16 %v10184
  %v10345 = vunpack.c.l.b16 %v10187
  %v10346 = vunpack.c.l.b16 %v10191
  %v10347 = vunpack.c.l.b16 %v10194
  %v10348 = vunpack.c.l.b16 %v10198
  %v10349 = vunpack.c.l.b16 %v10201
  %v10350 = vunpack.c.l.b16 %v10205
  %v10351 = vunpack.c.l.b16 %v10208
  %v10352 = vunpack.c.l.b16 %v10212
  %v10353 = vunpack.c.l.b16 %v10215
  %v10354 = vunpack.c.l.b16 %v10219
  %v10355 = vunpack.c.l.b16 %v10222
  %v10356 = vunpack.c.l.b16 %v10226
  %v10357 = vunpack.c.l.b16 %v10229
  %v10358 = vunpack.c.l.b16 %v10233
  %v10359 = vunpack.c.l.b16 %v10236
  %v10360 = vunpack.c.l.b16 %v10240
  %v10361 = vunpack.c.l.b16 %v10243
  %v10362 = vunpack.c.l.b16 %v10247
  %v10363 = vunpack.c.l.b16 %v10250
  %v10364 = vunpack.c.l.b16 %v10254
  %v10365 = vunpack.c.l.b16 %v10257
  %v10366 = vunpack.c.l.b16 %v10261
  %v10367 = vunpack.c.l.b16 %v10264
  %v10368 = vunpack.c.l.b16 %v10268
  %v10369 = vunpack.c.l.b16 %v10271
  %v10370 = vunpack.c.l.b16 %v10275
  %v10371 = vunpack.c.l.b16 %v10278
  %v10372 = vunpack.c.l.b16 %v10282
  %v10373 = vunpack.c.l.b16 %v10285
  %v10374 = vunpack.c.l.b16 %v10289
  %v10375 = vunpack.c.l.b16 %v10292
  %v10376 = vunpack.c.l.b16 %v10296
  %v10377 = vunpack.c.l.b16 %v10299
  %v10378 = vunpack.c.l.b16 %v10303
  %v10379 = vunpack.c.l.b16 %v10306
  %v10380 = vunpack.c.l.b16 %v10310
  %v10381 = vunpack.c.l.b16 %v10313
  %v10382 = vpack.c.b16 %v10319, %v10318
  %v10383 = vpack.c.b16 %v10321, %v10320
  %v10384 = vpack.c.b16 %v10323, %v10322
  %v10385 = vpack.c.b16 %v10325, %v10324
  %v10386 = vpack.c.b16 %v10327, %v10326
  %v10387 = vpack.c.b16 %v10329, %v10328
  %v10388 = vpack.c.b16 %v10331, %v10330
  %v10389 = vpack.c.b16 %v10333, %v10332
  %v10390 = vpack.c.b16 %v10335, %v10334
  %v10391 = vpack.c.b16 %v10337, %v10336
  %v10392 = vpack.c.b16 %v10339, %v10338
  %v10393 = vpack.c.b16 %v10341, %v10340
  %v10394 = vpack.c.b16 %v10343, %v10342
  %v10395 = vpack.c.b16 %v10345, %v10344
  %v10396 = vpack.c.b16 %v10347, %v10346
  %v10397 = vpack.c.b16 %v10349, %v10348
  %v10398 = vpack.c.b16 %v10351, %v10350
  %v10399 = vpack.c.b16 %v10353, %v10352
  %v10400 = vpack.c.b16 %v10355, %v10354
  %v10401 = vpack.c.b16 %v10357, %v10356
  %v10402 = vpack.c.b16 %v10359, %v10358
  %v10403 = vpack.c.b16 %v10361, %v10360
  %v10404 = vpack.c.b16 %v10363, %v10362
  %v10405 = vpack.c.b16 %v10365, %v10364
  %v10406 = vpack.c.b16 %v10367, %v10366
  %v10407 = vpack.c.b16 %v10369, %v10368
  %v10408 = vpack.c.b16 %v10371, %v10370
  %v10409 = vpack.c.b16 %v10373, %v10372
  %v10410 = vpack.c.b16 %v10375, %v10374
  %v10411 = vpack.c.b16 %v10377, %v10376
  %v10412 = vpack.c.b16 %v10379, %v10378
  %v10413 = vpack.c.b16 %v10381, %v10380
  %v10418 = vunpack.c.l.b16 %v10314
  %v10419 = vunpack.c.l.b16 %v10315
  %v10420 = vunpack.c.l.b16 %v10316
  %v10421 = vunpack.c.l.b16 %v10317
  %v10422 = vpack.c.b16 %v10419, %v10418
  %v10423 = vpack.c.b16 %v10421, %v10420
  %v10427 = vsel %vm2993, %v10382, 0
  %v10430 = vsel %vm2993, %v10383, 0
  %v10433 = vsel %vm2993, %v10384, 0
  %v10436 = vsel %vm2993, %v10385, 0
  %v10439 = vsel %vm2993, %v10386, 0
  %v10442 = vsel %vm2993, %v10387, 0
  %v10445 = vsel %vm2993, %v10388, 0
  %v10448 = vsel %vm2993, %v10389, 0
  %v10451 = vsel %vm2993, %v10390, 0
  %v10454 = vsel %vm2993, %v10391, 0
  %v10457 = vsel %vm2993, %v10392, 0
  %v10460 = vsel %vm2993, %v10393, 0
  %v10463 = vsel %vm2993, %v10394, 0
  %v10466 = vsel %vm2993, %v10395, 0
  %v10469 = vsel %vm2993, %v10396, 0
  %v10472 = vsel %vm2993, %v10397, 0
  %v10475 = vsel %vm2993, %v10398, 0
  %v10478 = vsel %vm2993, %v10399, 0
  %v10481 = vsel %vm2993, %v10400, 0
  %v10484 = vsel %vm2993, %v10401, 0
  %v10487 = vsel %vm2993, %v10402, 0
  %v10490 = vsel %vm2993, %v10403, 0
  %v10493 = vsel %vm2993, %v10404, 0
  %v10496 = vsel %vm2993, %v10405, 0
  %v10499 = vsel %vm2993, %v10406, 0
  %v10502 = vsel %vm2993, %v10407, 0
  %v10505 = vsel %vm2993, %v10408, 0
  %v10508 = vsel %vm2993, %v10409, 0
  %v10511 = vsel %vm2993, %v10410, 0
  %v10514 = vsel %vm2993, %v10411, 0
  %v10517 = vsel %vm2993, %v10412, 0
  %v10520 = vsel %vm2993, %v10413, 0
  %10522 = vmatprep.subr.bf16.mxu0 0
  %10523 = vmatpush1.bf16.msra.mxu0 %v10422
  %10524 = vmatprep.subr.bf16.mxu0 0
  %10525 = vmatpush1.bf16.msra.mxu0 %v10423
  %10526 = vmatprep.subr.bf16.mxu0 0
  %10527 = vmatpush1.bf16.msra.mxu0 0
  %10528 = vmatprep.subr.bf16.mxu0 0
  %10529 = vmatpush1.bf16.msra.mxu0 0
  %10530 = vmatprep.subr.bf16.mxu0 0
  %10531 = vmatpush1.bf16.msra.mxu0 0
  %10532 = vmatprep.subr.bf16.mxu0 0
  %10533 = vmatpush1.bf16.msra.mxu0 0
  %10534 = vmatprep.subr.bf16.mxu0 0
  %10535 = vmatpush1.bf16.msra.mxu0 0
  %10536 = vmatprep.subr.bf16.mxu0 0
  %10537 = vmatpush1.bf16.msra.mxu0 0
  %10538 = vmatprep.subr.bf16.mxu0 0
  %10539 = vmatpush1.bf16.msra.mxu0 0
  %10540 = vmatprep.subr.bf16.mxu0 0
  %10541 = vmatpush1.bf16.msra.mxu0 0
  %10542 = vmatprep.subr.bf16.mxu0 0
  %10543 = vmatpush1.bf16.msra.mxu0 0
  %10544 = vmatprep.subr.bf16.mxu0 0
  %10545 = vmatpush1.bf16.msra.mxu0 0
  %10546 = vmatprep.subr.bf16.mxu0 0
  %10547 = vmatpush1.bf16.msra.mxu0 0
  %10548 = vmatprep.subr.bf16.mxu0 0
  %10549 = vmatpush1.bf16.msra.mxu0 0
  %10550 = vmatprep.subr.bf16.mxu0 0
  %10551 = vmatpush1.bf16.msra.mxu0 0
  %10552 = vmatprep.subr.bf16.mxu0 0
  %10553 = vmatpush1.bf16.msra.mxu0 0
  %10554 = vmatprep.mubr.bf16.mxu0 0
  %10555 = vmatmul.mubr.bf16.gmra.mrb[0].mxu0 %v10427
  %v10556 = vpop.f32.mrb[0].mxu0
  %v10557 = vadd.f32 0.0, %v10556
  %v10558 = vpop.f32.mrb[0].mxu0
  %v10559 = vpop.f32.mrb[0].mxu0
  %v10560 = vadd.f32 0.0, %v10559
  %v10561 = vpop.f32.mrb[0].mxu0
  %10562 = vmatprep.mubr.bf16.mxu0 0
  %10563 = vmatmul.mubr.bf16.gmra.mrb[0].mxu0 %v10430
  %v10564 = vpop.f32.mrb[0].mxu0
  %v10565 = vadd.f32 0.0, %v10564
  %v10566 = vpop.f32.mrb[0].mxu0
  %v10567 = vpop.f32.mrb[0].mxu0
  %v10568 = vadd.f32 0.0, %v10567
  %v10569 = vpop.f32.mrb[0].mxu0
  %10570 = vmatprep.mubr.bf16.mxu0 0
  %10571 = vmatmul.mubr.bf16.gmra.mrb[0].mxu0 %v10433
  %v10572 = vpop.f32.mrb[0].mxu0
  %v10573 = vadd.f32 0.0, %v10572
  %v10574 = vpop.f32.mrb[0].mxu0
  %v10575 = vpop.f32.mrb[0].mxu0
  %v10576 = vadd.f32 0.0, %v10575
  %v10577 = vpop.f32.mrb[0].mxu0
  %10578 = vmatprep.mubr.bf16.mxu0 0
  %10579 = vmatmul.mubr.bf16.gmra.mrb[0].mxu0 %v10436
  %v10580 = vpop.f32.mrb[0].mxu0
  %v10581 = vadd.f32 0.0, %v10580
  %v10582 = vpop.f32.mrb[0].mxu0
  %v10583 = vpop.f32.mrb[0].mxu0
  %v10584 = vadd.f32 0.0, %v10583
  %v10585 = vpop.f32.mrb[0].mxu0
  %10586 = vmatprep.mubr.bf16.mxu0 0
  %10587 = vmatmul.mubr.bf16.gmra.mrb[0].mxu0 %v10439
  %v10588 = vpop.f32.mrb[0].mxu0
  %v10589 = vadd.f32 0.0, %v10588
  %v10590 = vpop.f32.mrb[0].mxu0
  %v10591 = vpop.f32.mrb[0].mxu0
  %v10592 = vadd.f32 0.0, %v10591
  %v10593 = vpop.f32.mrb[0].mxu0
  %10594 = vmatprep.mubr.bf16.mxu0 0
  %10595 = vmatmul.mubr.bf16.gmra.mrb[0].mxu0 %v10442
  %v10596 = vpop.f32.mrb[0].mxu0
  %v10597 = vadd.f32 0.0, %v10596
  %v10598 = vpop.f32.mrb[0].mxu0
  %v10599 = vpop.f32.mrb[0].mxu0
  %v10600 = vadd.f32 0.0, %v10599
  %v10601 = vpop.f32.mrb[0].mxu0
  %10602 = vmatprep.mubr.bf16.mxu0 0
  %10603 = vmatmul.mubr.bf16.gmra.mrb[0].mxu0 %v10445
  %v10604 = vpop.f32.mrb[0].mxu0
  %v10605 = vadd.f32 0.0, %v10604
  %v10606 = vpop.f32.mrb[0].mxu0
  %v10607 = vpop.f32.mrb[0].mxu0
  %v10608 = vadd.f32 0.0, %v10607
  %v10609 = vpop.f32.mrb[0].mxu0
  %10610 = vmatprep.mubr.bf16.mxu0 0
  %10611 = vmatmul.mubr.bf16.gmra.mrb[0].mxu0 %v10448
  %v10612 = vpop.f32.mrb[0].mxu0
  %v10613 = vadd.f32 0.0, %v10612
  %v10614 = vpop.f32.mrb[0].mxu0
  %v10615 = vpop.f32.mrb[0].mxu0
  %v10616 = vadd.f32 0.0, %v10615
  %v10617 = vpop.f32.mrb[0].mxu0
  %10618 = vmatprep.mubr.bf16.mxu0 0
  %10619 = vmatmul.mubr.bf16.gmra.mrb[0].mxu0 %v10451
  %v10620 = vpop.f32.mrb[0].mxu0
  %v10621 = vadd.f32 0.0, %v10620
  %v10622 = vpop.f32.mrb[0].mxu0
  %v10623 = vpop.f32.mrb[0].mxu0
  %v10624 = vadd.f32 0.0, %v10623
  %v10625 = vpop.f32.mrb[0].mxu0
  %10626 = vmatprep.mubr.bf16.mxu0 0
  %10627 = vmatmul.mubr.bf16.gmra.mrb[0].mxu0 %v10454
  %v10628 = vpop.f32.mrb[0].mxu0
  %v10629 = vadd.f32 0.0, %v10628
  %v10630 = vpop.f32.mrb[0].mxu0
  %v10631 = vpop.f32.mrb[0].mxu0
  %v10632 = vadd.f32 0.0, %v10631
  %v10633 = vpop.f32.mrb[0].mxu0
  %10634 = vmatprep.mubr.bf16.mxu0 0
  %10635 = vmatmul.mubr.bf16.gmra.mrb[0].mxu0 %v10457
  %v10636 = vpop.f32.mrb[0].mxu0
  %v10637 = vadd.f32 0.0, %v10636
  %v10638 = vpop.f32.mrb[0].mxu0
  %v10639 = vpop.f32.mrb[0].mxu0
  %v10640 = vadd.f32 0.0, %v10639
  %v10641 = vpop.f32.mrb[0].mxu0
  %10642 = vmatprep.mubr.bf16.mxu0 0
  %10643 = vmatmul.mubr.bf16.gmra.mrb[0].mxu0 %v10460
  %v10644 = vpop.f32.mrb[0].mxu0
  %v10645 = vadd.f32 0.0, %v10644
  %v10646 = vpop.f32.mrb[0].mxu0
  %v10647 = vpop.f32.mrb[0].mxu0
  %v10648 = vadd.f32 0.0, %v10647
  %v10649 = vpop.f32.mrb[0].mxu0
  %10650 = vmatprep.mubr.bf16.mxu0 0
  %10651 = vmatmul.mubr.bf16.gmra.mrb[0].mxu0 %v10463
  %v10652 = vpop.f32.mrb[0].mxu0
  %v10653 = vadd.f32 0.0, %v10652
  %v10654 = vpop.f32.mrb[0].mxu0
  %v10655 = vpop.f32.mrb[0].mxu0
  %v10656 = vadd.f32 0.0, %v10655
  %v10657 = vpop.f32.mrb[0].mxu0
  %10658 = vmatprep.mubr.bf16.mxu0 0
  %10659 = vmatmul.mubr.bf16.gmra.mrb[0].mxu0 %v10466
  %v10660 = vpop.f32.mrb[0].mxu0
  %v10661 = vadd.f32 0.0, %v10660
  %v10662 = vpop.f32.mrb[0].mxu0
  %v10663 = vpop.f32.mrb[0].mxu0
  %v10664 = vadd.f32 0.0, %v10663
  %v10665 = vpop.f32.mrb[0].mxu0
  %10666 = vmatprep.mubr.bf16.mxu0 0
  %10667 = vmatmul.mubr.bf16.gmra.mrb[0].mxu0 %v10469
  %v10668 = vpop.f32.mrb[0].mxu0
  %v10669 = vadd.f32 0.0, %v10668
  %v10670 = vpop.f32.mrb[0].mxu0
  %v10671 = vpop.f32.mrb[0].mxu0
  %v10672 = vadd.f32 0.0, %v10671
  %v10673 = vpop.f32.mrb[0].mxu0
  %10674 = vmatprep.mubr.bf16.mxu0 0
  %10675 = vmatmul.mubr.bf16.gmra.mrb[0].mxu0 %v10472
  %v10676 = vpop.f32.mrb[0].mxu0
  %v10677 = vadd.f32 0.0, %v10676
  %v10678 = vpop.f32.mrb[0].mxu0
  %v10679 = vpop.f32.mrb[0].mxu0
  %v10680 = vadd.f32 0.0, %v10679
  %v10681 = vpop.f32.mrb[0].mxu0
  %10682 = vmatprep.mubr.bf16.mxu0 0
  %10683 = vmatmul.mubr.bf16.gmra.mrb[0].mxu0 %v10475
  %v10684 = vpop.f32.mrb[0].mxu0
  %v10685 = vadd.f32 0.0, %v10684
  %v10686 = vpop.f32.mrb[0].mxu0
  %v10687 = vpop.f32.mrb[0].mxu0
  %v10688 = vadd.f32 0.0, %v10687
  %v10689 = vpop.f32.mrb[0].mxu0
  %10690 = vmatprep.mubr.bf16.mxu0 0
  %10691 = vmatmul.mubr.bf16.gmra.mrb[0].mxu0 %v10478
  %v10692 = vpop.f32.mrb[0].mxu0
  %v10693 = vadd.f32 0.0, %v10692
  %v10694 = vpop.f32.mrb[0].mxu0
  %v10695 = vpop.f32.mrb[0].mxu0
  %v10696 = vadd.f32 0.0, %v10695
  %v10697 = vpop.f32.mrb[0].mxu0
  %10698 = vmatprep.mubr.bf16.mxu0 0
  %10699 = vmatmul.mubr.bf16.gmra.mrb[0].mxu0 %v10481
  %v10700 = vpop.f32.mrb[0].mxu0
  %v10701 = vadd.f32 0.0, %v10700
  %v10702 = vpop.f32.mrb[0].mxu0
  %v10703 = vpop.f32.mrb[0].mxu0
  %v10704 = vadd.f32 0.0, %v10703
  %v10705 = vpop.f32.mrb[0].mxu0
  %10706 = vmatprep.mubr.bf16.mxu0 0
  %10707 = vmatmul.mubr.bf16.gmra.mrb[0].mxu0 %v10484
  %v10708 = vpop.f32.mrb[0].mxu0
  %v10709 = vadd.f32 0.0, %v10708
  %v10710 = vpop.f32.mrb[0].mxu0
  %v10711 = vpop.f32.mrb[0].mxu0
  %v10712 = vadd.f32 0.0, %v10711
  %v10713 = vpop.f32.mrb[0].mxu0
  %10714 = vmatprep.mubr.bf16.mxu0 0
  %10715 = vmatmul.mubr.bf16.gmra.mrb[0].mxu0 %v10487
  %v10716 = vpop.f32.mrb[0].mxu0
  %v10717 = vadd.f32 0.0, %v10716
  %v10718 = vpop.f32.mrb[0].mxu0
  %v10719 = vpop.f32.mrb[0].mxu0
  %v10720 = vadd.f32 0.0, %v10719
  %v10721 = vpop.f32.mrb[0].mxu0
  %10722 = vmatprep.mubr.bf16.mxu0 0
  %10723 = vmatmul.mubr.bf16.gmra.mrb[0].mxu0 %v10490
  %v10724 = vpop.f32.mrb[0].mxu0
  %v10725 = vadd.f32 0.0, %v10724
  %v10726 = vpop.f32.mrb[0].mxu0
  %v10727 = vpop.f32.mrb[0].mxu0
  %v10728 = vadd.f32 0.0, %v10727
  %v10729 = vpop.f32.mrb[0].mxu0
  %10730 = vmatprep.mubr.bf16.mxu0 0
  %10731 = vmatmul.mubr.bf16.gmra.mrb[0].mxu0 %v10493
  %v10732 = vpop.f32.mrb[0].mxu0
  %v10733 = vadd.f32 0.0, %v10732
  %v10734 = vpop.f32.mrb[0].mxu0
  %v10735 = vpop.f32.mrb[0].mxu0
  %v10736 = vadd.f32 0.0, %v10735
  %v10737 = vpop.f32.mrb[0].mxu0
  %10738 = vmatprep.mubr.bf16.mxu0 0
  %10739 = vmatmul.mubr.bf16.gmra.mrb[0].mxu0 %v10496
  %v10740 = vpop.f32.mrb[0].mxu0
  %v10741 = vadd.f32 0.0, %v10740
  %v10742 = vpop.f32.mrb[0].mxu0
  %v10743 = vpop.f32.mrb[0].mxu0
  %v10744 = vadd.f32 0.0, %v10743
  %v10745 = vpop.f32.mrb[0].mxu0
  %10746 = vmatprep.mubr.bf16.mxu0 0
  %10747 = vmatmul.mubr.bf16.gmra.mrb[0].mxu0 %v10499
  %v10748 = vpop.f32.mrb[0].mxu0
  %v10749 = vadd.f32 0.0, %v10748
  %v10750 = vpop.f32.mrb[0].mxu0
  %v10751 = vpop.f32.mrb[0].mxu0
  %v10752 = vadd.f32 0.0, %v10751
  %v10753 = vpop.f32.mrb[0].mxu0
  %10754 = vmatprep.mubr.bf16.mxu0 0
  %10755 = vmatmul.mubr.bf16.gmra.mrb[0].mxu0 %v10502
  %v10756 = vpop.f32.mrb[0].mxu0
  %v10757 = vadd.f32 0.0, %v10756
  %v10758 = vpop.f32.mrb[0].mxu0
  %v10759 = vpop.f32.mrb[0].mxu0
  %v10760 = vadd.f32 0.0, %v10759
  %v10761 = vpop.f32.mrb[0].mxu0
  %10762 = vmatprep.mubr.bf16.mxu0 0
  %10763 = vmatmul.mubr.bf16.gmra.mrb[0].mxu0 %v10505
  %v10764 = vpop.f32.mrb[0].mxu0
  %v10765 = vadd.f32 0.0, %v10764
  %v10766 = vpop.f32.mrb[0].mxu0
  %v10767 = vpop.f32.mrb[0].mxu0
  %v10768 = vadd.f32 0.0, %v10767
  %v10769 = vpop.f32.mrb[0].mxu0
  %10770 = vmatprep.mubr.bf16.mxu0 0
  %10771 = vmatmul.mubr.bf16.gmra.mrb[0].mxu0 %v10508
  %v10772 = vpop.f32.mrb[0].mxu0
  %v10773 = vadd.f32 0.0, %v10772
  %v10774 = vpop.f32.mrb[0].mxu0
  %v10775 = vpop.f32.mrb[0].mxu0
  %v10776 = vadd.f32 0.0, %v10775
  %v10777 = vpop.f32.mrb[0].mxu0
  %10778 = vmatprep.mubr.bf16.mxu0 0
  %10779 = vmatmul.mubr.bf16.gmra.mrb[0].mxu0 %v10511
  %v10780 = vpop.f32.mrb[0].mxu0
  %v10781 = vadd.f32 0.0, %v10780
  %v10782 = vpop.f32.mrb[0].mxu0
  %v10783 = vpop.f32.mrb[0].mxu0
  %v10784 = vadd.f32 0.0, %v10783
  %v10785 = vpop.f32.mrb[0].mxu0
  %10786 = vmatprep.mubr.bf16.mxu0 0
  %10787 = vmatmul.mubr.bf16.gmra.mrb[0].mxu0 %v10514
  %v10788 = vpop.f32.mrb[0].mxu0
  %v10789 = vadd.f32 0.0, %v10788
  %v10790 = vpop.f32.mrb[0].mxu0
  %v10791 = vpop.f32.mrb[0].mxu0
  %v10792 = vadd.f32 0.0, %v10791
  %v10793 = vpop.f32.mrb[0].mxu0
  %10794 = vmatprep.mubr.bf16.mxu0 0
  %10795 = vmatmul.mubr.bf16.gmra.mrb[0].mxu0 %v10517
  %v10796 = vpop.f32.mrb[0].mxu0
  %v10797 = vadd.f32 0.0, %v10796
  %v10798 = vpop.f32.mrb[0].mxu0
  %v10799 = vpop.f32.mrb[0].mxu0
  %v10800 = vadd.f32 0.0, %v10799
  %v10801 = vpop.f32.mrb[0].mxu0
  %10802 = vmatprep.mubr.bf16.mxu0 0
  %10803 = vmatmul.mubr.bf16.gmra.mrb[0].mxu0 %v10520
  %v10804 = vpop.f32.mrb[0].mxu0
  %v10805 = vadd.f32 0.0, %v10804
  %v10806 = vpop.f32.mrb[0].mxu0
  %v10807 = vpop.f32.mrb[0].mxu0
  %v10808 = vadd.f32 0.0, %v10807
  %v10809 = vpop.f32.mrb[0].mxu0
  %10810 = vdwg.mxu0
  %v10811 = vadd.f32 %v9898, %v10557
  %v10812 = vadd.f32 %v9899, %v10560
  %v10813 = vadd.f32 %v9900, %v10565
  %v10814 = vadd.f32 %v9901, %v10568
  %v10815 = vadd.f32 %v9902, %v10573
  %v10816 = vadd.f32 %v9903, %v10576
  %v10817 = vadd.f32 %v9904, %v10581
  %v10818 = vadd.f32 %v9905, %v10584
  %v10819 = vadd.f32 %v9906, %v10589
  %v10820 = vadd.f32 %v9907, %v10592
  %v10821 = vadd.f32 %v9908, %v10597
  %v10822 = vadd.f32 %v9909, %v10600
  %v10823 = vadd.f32 %v9910, %v10605
  %v10824 = vadd.f32 %v9911, %v10608
  %v10825 = vadd.f32 %v9912, %v10613
  %v10826 = vadd.f32 %v9913, %v10616
  %v10827 = vadd.f32 %v9914, %v10621
  %v10828 = vadd.f32 %v9915, %v10624
  %v10829 = vadd.f32 %v9916, %v10629
  %v10830 = vadd.f32 %v9917, %v10632
  %v10831 = vadd.f32 %v9918, %v10637
  %v10832 = vadd.f32 %v9919, %v10640
  %v10833 = vadd.f32 %v9920, %v10645
  %v10834 = vadd.f32 %v9921, %v10648
  %v10835 = vadd.f32 %v9922, %v10653
  %v10836 = vadd.f32 %v9923, %v10656
  %v10837 = vadd.f32 %v9924, %v10661
  %v10838 = vadd.f32 %v9925, %v10664
  %v10839 = vadd.f32 %v9926, %v10669
  %v10840 = vadd.f32 %v9927, %v10672
  %v10841 = vadd.f32 %v9928, %v10677
  %v10842 = vadd.f32 %v9929, %v10680
  %v10843 = vadd.f32 %v9930, %v10685
  %v10844 = vadd.f32 %v9931, %v10688
  %v10845 = vadd.f32 %v9932, %v10693
  %v10846 = vadd.f32 %v9933, %v10696
  %v10847 = vadd.f32 %v9934, %v10701
  %v10848 = vadd.f32 %v9935, %v10704
  %v10849 = vadd.f32 %v9936, %v10709
  %v10850 = vadd.f32 %v9937, %v10712
  %v10851 = vadd.f32 %v9938, %v10717
  %v10852 = vadd.f32 %v9939, %v10720
  %v10853 = vadd.f32 %v9940, %v10725
  %v10854 = vadd.f32 %v9941, %v10728
  %v10855 = vadd.f32 %v9942, %v10733
  %v10856 = vadd.f32 %v9943, %v10736
  %v10857 = vadd.f32 %v9944, %v10741
  %v10858 = vadd.f32 %v9945, %v10744
  %v10859 = vadd.f32 %v9946, %v10749
  %v10860 = vadd.f32 %v9947, %v10752
  %v10861 = vadd.f32 %v9948, %v10757
  %v10862 = vadd.f32 %v9949, %v10760
  %v10863 = vadd.f32 %v9950, %v10765
  %v10864 = vadd.f32 %v9951, %v10768
  %v10865 = vadd.f32 %v9952, %v10773
  %v10866 = vadd.f32 %v9953, %v10776
  %v10867 = vadd.f32 %v9954, %v10781
  %v10868 = vadd.f32 %v9955, %v10784
  %v10869 = vadd.f32 %v9956, %v10789
  %v10870 = vadd.f32 %v9957, %v10792
  %v10871 = vadd.f32 %v9958, %v10797
  %v10872 = vadd.f32 %v9959, %v10800
  %v10873 = vadd.f32 %v9960, %v10805
  %v10874 = vadd.f32 %v9961, %v10808
  %v10875 = vmax.f32 %v10811, 0.0
  %v10876 = vmax.f32 %v10812, 0.0
  %v10877 = vmax.f32 %v10813, 0.0
  %v10878 = vmax.f32 %v10814, 0.0
  %v10879 = vmax.f32 %v10815, 0.0
  %v10880 = vmax.f32 %v10816, 0.0
  %v10881 = vmax.f32 %v10817, 0.0
  %v10882 = vmax.f32 %v10818, 0.0
  %v10883 = vmax.f32 %v10819, 0.0
  %v10884 = vmax.f32 %v10820, 0.0
  %v10885 = vmax.f32 %v10821, 0.0
  %v10886 = vmax.f32 %v10822, 0.0
  %v10887 = vmax.f32 %v10823, 0.0
  %v10888 = vmax.f32 %v10824, 0.0
  %v10889 = vmax.f32 %v10825, 0.0
  %v10890 = vmax.f32 %v10826, 0.0
  %v10891 = vmax.f32 %v10827, 0.0
  %v10892 = vmax.f32 %v10828, 0.0
  %v10893 = vmax.f32 %v10829, 0.0
  %v10894 = vmax.f32 %v10830, 0.0
  %v10895 = vmax.f32 %v10831, 0.0
  %v10896 = vmax.f32 %v10832, 0.0
  %v10897 = vmax.f32 %v10833, 0.0
  %v10898 = vmax.f32 %v10834, 0.0
  %v10899 = vmax.f32 %v10835, 0.0
  %v10900 = vmax.f32 %v10836, 0.0
  %v10901 = vmax.f32 %v10837, 0.0
  %v10902 = vmax.f32 %v10838, 0.0
  %v10903 = vmax.f32 %v10839, 0.0
  %v10904 = vmax.f32 %v10840, 0.0
  %v10905 = vmax.f32 %v10841, 0.0
  %v10906 = vmax.f32 %v10842, 0.0
  %v10907 = vmax.f32 %v10843, 0.0
  %v10908 = vmax.f32 %v10844, 0.0
  %v10909 = vmax.f32 %v10845, 0.0
  %v10910 = vmax.f32 %v10846, 0.0
  %v10911 = vmax.f32 %v10847, 0.0
  %v10912 = vmax.f32 %v10848, 0.0
  %v10913 = vmax.f32 %v10849, 0.0
  %v10914 = vmax.f32 %v10850, 0.0
  %v10915 = vmax.f32 %v10851, 0.0
  %v10916 = vmax.f32 %v10852, 0.0
  %v10917 = vmax.f32 %v10853, 0.0
  %v10918 = vmax.f32 %v10854, 0.0
  %v10919 = vmax.f32 %v10855, 0.0
  %v10920 = vmax.f32 %v10856, 0.0
  %v10921 = vmax.f32 %v10857, 0.0
  %v10922 = vmax.f32 %v10858, 0.0
  %v10923 = vmax.f32 %v10859, 0.0
  %v10924 = vmax.f32 %v10860, 0.0
  %v10925 = vmax.f32 %v10861, 0.0
  %v10926 = vmax.f32 %v10862, 0.0
  %v10927 = vmax.f32 %v10863, 0.0
  %v10928 = vmax.f32 %v10864, 0.0
  %v10929 = vmax.f32 %v10865, 0.0
  %v10930 = vmax.f32 %v10866, 0.0
  %v10931 = vmax.f32 %v10867, 0.0
  %v10932 = vmax.f32 %v10868, 0.0
  %v10933 = vmax.f32 %v10869, 0.0
  %v10934 = vmax.f32 %v10870, 0.0
  %v10935 = vmax.f32 %v10871, 0.0
  %v10936 = vmax.f32 %v10872, 0.0
  %v10937 = vmax.f32 %v10873, 0.0
  %v10938 = vmax.f32 %v10874, 0.0
  %10939 = vst.msk [vmem:[%s3] sm:$0xff] %vm2993, %v10875
  %10940 = vst.msk [vmem:[%s3 + $0x8] sm:$0xff] %vm2993, %v10876
  %10941 = vst.msk [vmem:[%s3 + $0x10] sm:$0xff] %vm2993, %v10877
  %10942 = vst.msk [vmem:[%s3 + $0x18] sm:$0xff] %vm2993, %v10878
  %10943 = vst.msk [vmem:[%s3 + $0x20] sm:$0xff] %vm2993, %v10879
  %10944 = vst.msk [vmem:[%s3 + $0x28] sm:$0xff] %vm2993, %v10880
  %10945 = vst.msk [vmem:[%s3 + $0x30] sm:$0xff] %vm2993, %v10881
  %10946 = vst.msk [vmem:[%s3 + $0x38] sm:$0xff] %vm2993, %v10882
  %10947 = vst.msk [vmem:[%s3 + $0x40] sm:$0xff] %vm2993, %v10883
  %10948 = vst.msk [vmem:[%s3 + $0x48] sm:$0xff] %vm2993, %v10884
  %10949 = vst.msk [vmem:[%s3 + $0x50] sm:$0xff] %vm2993, %v10885
  %10950 = vst.msk [vmem:[%s3 + $0x58] sm:$0xff] %vm2993, %v10886
  %10951 = vst.msk [vmem:[%s3 + $0x60] sm:$0xff] %vm2993, %v10887
  %10952 = vst.msk [vmem:[%s3 + $0x68] sm:$0xff] %vm2993, %v10888
  %10953 = vst.msk [vmem:[%s3 + $0x70] sm:$0xff] %vm2993, %v10889
  %10954 = vst.msk [vmem:[%s3 + $0x78] sm:$0xff] %vm2993, %v10890
  %10955 = vst.msk [vmem:[%s3 + $0x80] sm:$0xff] %vm2993, %v10891
  %10956 = vst.msk [vmem:[%s3 + $0x88] sm:$0xff] %vm2993, %v10892
  %10957 = vst.msk [vmem:[%s3 + $0x90] sm:$0xff] %vm2993, %v10893
  %10958 = vst.msk [vmem:[%s3 + $0x98] sm:$0xff] %vm2993, %v10894
  %10959 = vst.msk [vmem:[%s3 + $0xa0] sm:$0xff] %vm2993, %v10895
  %10960 = vst.msk [vmem:[%s3 + $0xa8] sm:$0xff] %vm2993, %v10896
  %10961 = vst.msk [vmem:[%s3 + $0xb0] sm:$0xff] %vm2993, %v10897
  %10962 = vst.msk [vmem:[%s3 + $0xb8] sm:$0xff] %vm2993, %v10898
  %10963 = vst.msk [vmem:[%s3 + $0xc0] sm:$0xff] %vm2993, %v10899
  %10964 = vst.msk [vmem:[%s3 + $0xc8] sm:$0xff] %vm2993, %v10900
  %10965 = vst.msk [vmem:[%s3 + $0xd0] sm:$0xff] %vm2993, %v10901
  %10966 = vst.msk [vmem:[%s3 + $0xd8] sm:$0xff] %vm2993, %v10902
  %10967 = vst.msk [vmem:[%s3 + $0xe0] sm:$0xff] %vm2993, %v10903
  %10968 = vst.msk [vmem:[%s3 + $0xe8] sm:$0xff] %vm2993, %v10904
  %10969 = vst.msk [vmem:[%s3 + $0xf0] sm:$0xff] %vm2993, %v10905
  %10970 = vst.msk [vmem:[%s3 + $0xf8] sm:$0xff] %vm2993, %v10906
  %10971 = vst.msk [vmem:[%s3 + $0x100] sm:$0xff] %vm2993, %v10907
  %10972 = vst.msk [vmem:[%s3 + $0x108] sm:$0xff] %vm2993, %v10908
  %10973 = vst.msk [vmem:[%s3 + $0x110] sm:$0xff] %vm2993, %v10909
  %10974 = vst.msk [vmem:[%s3 + $0x118] sm:$0xff] %vm2993, %v10910
  %10975 = vst.msk [vmem:[%s3 + $0x120] sm:$0xff] %vm2993, %v10911
  %10976 = vst.msk [vmem:[%s3 + $0x128] sm:$0xff] %vm2993, %v10912
  %10977 = vst.msk [vmem:[%s3 + $0x130] sm:$0xff] %vm2993, %v10913
  %10978 = vst.msk [vmem:[%s3 + $0x138] sm:$0xff] %vm2993, %v10914
  %10979 = vst.msk [vmem:[%s3 + $0x140] sm:$0xff] %vm2993, %v10915
  %10980 = vst.msk [vmem:[%s3 + $0x148] sm:$0xff] %vm2993, %v10916
  %10981 = vst.msk [vmem:[%s3 + $0x150] sm:$0xff] %vm2993, %v10917
  %10982 = vst.msk [vmem:[%s3 + $0x158] sm:$0xff] %vm2993, %v10918
  %10983 = vst.msk [vmem:[%s3 + $0x160] sm:$0xff] %vm2993, %v10919
  %10984 = vst.msk [vmem:[%s3 + $0x168] sm:$0xff] %vm2993, %v10920
  %10985 = vst.msk [vmem:[%s3 + $0x170] sm:$0xff] %vm2993, %v10921
  %10986 = vst.msk [vmem:[%s3 + $0x178] sm:$0xff] %vm2993, %v10922
  %10987 = vst.msk [vmem:[%s3 + $0x180] sm:$0xff] %vm2993, %v10923
  %10988 = vst.msk [vmem:[%s3 + $0x188] sm:$0xff] %vm2993, %v10924
  %10989 = vst.msk [vmem:[%s3 + $0x190] sm:$0xff] %vm2993, %v10925
  %10990 = vst.msk [vmem:[%s3 + $0x198] sm:$0xff] %vm2993, %v10926
  %10991 = vst.msk [vmem:[%s3 + $0x1a0] sm:$0xff] %vm2993, %v10927
  %10992 = vst.msk [vmem:[%s3 + $0x1a8] sm:$0xff] %vm2993, %v10928
  %10993 = vst.msk [vmem:[%s3 + $0x1b0] sm:$0xff] %vm2993, %v10929
  %10994 = vst.msk [vmem:[%s3 + $0x1b8] sm:$0xff] %vm2993, %v10930
  %10995 = vst.msk [vmem:[%s3 + $0x1c0] sm:$0xff] %vm2993, %v10931
  %10996 = vst.msk [vmem:[%s3 + $0x1c8] sm:$0xff] %vm2993, %v10932
  %10997 = vst.msk [vmem:[%s3 + $0x1d0] sm:$0xff] %vm2993, %v10933
  %10998 = vst.msk [vmem:[%s3 + $0x1d8] sm:$0xff] %vm2993, %v10934
  %10999 = vst.msk [vmem:[%s3 + $0x1e0] sm:$0xff] %vm2993, %v10935
  %11000 = vst.msk [vmem:[%s3 + $0x1e8] sm:$0xff] %vm2993, %v10936
  %11001 = vst.msk [vmem:[%s3 + $0x1f0] sm:$0xff] %vm2993, %v10937
  %11002 = vst.msk [vmem:[%s3 + $0x1f8] sm:$0xff] %vm2993, %v10938
  // Predicated region
  $region14: #{conv_module_forward.1} parent=0 // pred_check
    _
  $region15: #{conv_module_forward.1} parent=0 // pred_check_branch
    %11004 = sbr.rel (0) target = $region17
  $region16: #{conv_module_forward.1} parent=0 // pred_region
    _
  $region17: #{conv_module_forward.1} parent=0 // pred_fallthru
    _
  // Predicated region
  $region18: #{conv_module_forward.1} parent=0 // pred_check
    _
  $region19: #{conv_module_forward.1} parent=0 // pred_check_branch
    %11006 = sbr.rel (0) target = $region21
  $region20: #{conv_module_forward.1} parent=0 // pred_region
    _
  $region21: #{conv_module_forward.1} parent=0 // pred_fallthru
    _

</llo_original>
